<compile_context>
chip_gen: v7x
topology: tpu7x:2x2x1
jax: 0.10.0
libtpu: 0.0.40
codegen_flags: <defaults>
</compile_context>

<pallas_src>
import functools

import jax
import jax.numpy as jnp
from jax import lax
from jax.experimental import pallas as pl
from jax.experimental.pallas import tpu as pltpu


def _round_up(a, m):
    return ((a + m - 1) // m) * m


# --------------------------------------------------------------------------- #
# Kernel
# --------------------------------------------------------------------------- #
def encoder_kernel(x_ref, w1_ref, b1_ref, w2_ref, b2_ref, gamma_ref, beta_ref,
                   wh_ref, bh_ref, eps_ref, z_ref, acc_ref, *, b_real, head_half):
    k = pl.program_id(0)

    @pl.when(k == 0)
    def _init():
        acc_ref[...] = jnp.zeros_like(acc_ref)

    # ---- Linear1, streamed over K: bf16 operands (pre-cast), f32 MXU accumulate
    acc_ref[...] += jnp.dot(x_ref[...], w1_ref[...],
                            preferred_element_type=jnp.float32)

    @pl.when(k == pl.num_programs(0) - 1)
    def _finalize():
        # ---- Linear1 bias + LeakyReLU(0.2) ----
        h1 = acc_ref[...] + b1_ref[...]
        h1 = jnp.where(h1 > 0, h1, 0.2 * h1)

        # ---- Linear2 ----
        h2 = jnp.dot(h1.astype(jnp.bfloat16), w2_ref[...],
                     preferred_element_type=jnp.float32) + b2_ref[...]

        # ---- BatchNorm1d (training mode): masked, centered two-pass batch stats
        #      over the REAL batch rows only (padded rows excluded), biased var,
        #      eps=1e-5
        row = lax.broadcasted_iota(jnp.int32, h2.shape, 0)
        mask = (row < b_real).astype(jnp.float32)
        inv_n = 1.0 / float(b_real)
        mean = jnp.sum(h2 * mask, axis=0, keepdims=True) * inv_n
        centered = (h2 - mean) * mask
        var = jnp.sum(centered * centered, axis=0, keepdims=True) * inv_n
        h2n = (h2 - mean) * lax.rsqrt(var + 1e-5)
        h2n = h2n * gamma_ref[...] + beta_ref[...]

        # ---- LeakyReLU(0.2) ----
        h2n = jnp.where(h2n > 0, h2n, 0.2 * h2n)

        # ---- fused (mu | logvar) head, each lane-padded to head_half ----
        head = jnp.dot(h2n.astype(jnp.bfloat16), wh_ref[...],
                       preferred_element_type=jnp.float32) + bh_ref[...]
        mu = head[:, :head_half]
        logvar = head[:, head_half:]

        # ---- reparameterization: z = eps * exp(logvar / 2) + mu ----
        z_ref[...] = eps_ref[...] * jnp.exp(logvar * 0.5) + mu


# --------------------------------------------------------------------------- #
# One-time parameter packing (OUTSIDE the hot path)
# --------------------------------------------------------------------------- #
def pack_params(params, in_dim, *, tk_max=2048):
    """Pad / cast the Encoder weights once so the per-call path is repack-free."""
    (w1, b1, w2, b2, gamma, beta, wmu, bmu, wlv, blv) = params
    hidden = w1.shape[1]
    latent = wmu.shape[1]

    head_half = max(128, _round_up(latent, 128))          # lane-dense head/output
    tk = min(tk_max, max(128, _round_up(in_dim, 128)))    # K tile for Linear1
    k_pad = _round_up(in_dim, tk)

    # big weights streamed as bf16 (f32 accumulation on the MXU)
    w1_b = jnp.pad(w1, ((0, k_pad - in_dim), (0, 0))).astype(jnp.bfloat16)
    w2_b = w2.astype(jnp.bfloat16)

    # fused, lane-padded (mu | logvar) head:
    #   lanes [0:latent) = wmu, lanes [head_half:head_half+latent) = wlv, rest 0
    pad_c = head_half - latent
    wh_b = jnp.concatenate(
        [jnp.pad(wmu, ((0, 0), (0, pad_c))),
         jnp.pad(wlv, ((0, 0), (0, pad_c)))], axis=1).astype(jnp.bfloat16)
    bh = jnp.concatenate(
        [jnp.pad(bmu, ((0, 0), (0, pad_c))),
         jnp.pad(blv, ((0, 0), (0, pad_c)))], axis=1).astype(jnp.float32)

    arrays = (w1_b, b1, w2_b, b2, gamma, beta, wh_b, bh)
    meta = dict(in_dim=in_dim, hidden=hidden, latent=latent,
                tk=tk, k_pad=k_pad, head_half=head_half)
    return arrays, meta


# --------------------------------------------------------------------------- #
# pallas_call construction + jitted hot path
# --------------------------------------------------------------------------- #
def _build_encoder_call(*, b_pad, b_real, hidden, tk, k_pad, head_half,
                        use_buffered):
    n_k = k_pad // tk
    kernel = functools.partial(encoder_kernel, b_real=b_real,
                               head_half=head_half)

    def const_spec(shape):
        # constant-index resident operands: no need to double-buffer
        if use_buffered:
            return pl.BlockSpec(shape, lambda k: (0, 0),
                                pipeline_mode=pl.Buffered(1))
        return pl.BlockSpec(shape, lambda k: (0, 0))

    flops = 2 * b_pad * (k_pad * hidden + hidden * hidden
                         + hidden * 2 * head_half)
    bytes_accessed = (
        b_pad * k_pad * 2                     # x (bf16)
        + k_pad * hidden * 2                  # w1 (bf16)
        + hidden * hidden * 2                 # w2 (bf16)
        + hidden * 2 * head_half * 2          # fused head W (bf16)
        + (4 * hidden + 2 * head_half) * 4    # biases / BN params (f32)
        + b_pad * head_half * 4               # eps (f32)
        + b_pad * head_half * 4)              # z (f32)
    cost = pl.CostEstimate(flops=flops,
                           transcendentals=b_pad * (hidden + head_half),
                           bytes_accessed=bytes_accessed)

    return pl.pallas_call(
        kernel,
        out_shape=jax.ShapeDtypeStruct((b_pad, head_half), jnp.float32),
        grid_spec=pltpu.PrefetchScalarGridSpec(
            num_scalar_prefetch=0,
            grid=(n_k,),
            in_specs=[
                pl.BlockSpec((b_pad, tk), lambda k: (0, k)),   # x  (bf16, K-streamed)
                pl.BlockSpec((tk, hidden), lambda k: (k, 0)),  # w1 (bf16, K-streamed)
                const_spec((1, hidden)),                       # b1
                const_spec((hidden, hidden)),                  # w2 (resident)
                const_spec((1, hidden)),                       # b2
                const_spec((1, hidden)),                       # gamma
                const_spec((1, hidden)),                       # beta
                const_spec((hidden, 2 * head_half)),           # fused head W
                const_spec((1, 2 * head_half)),                # fused head b
                const_spec((b_pad, head_half)),                # eps
            ],
            out_specs=pl.BlockSpec((b_pad, head_half), lambda k: (0, 0)),
            scratch_shapes=[pltpu.VMEM((b_pad, hidden), jnp.float32)],
        ),
        compiler_params=pltpu.CompilerParams(
            dimension_semantics=("arbitrary",),   # K is a reduction axis
        ),
        cost_estimate=cost,
    )


@functools.partial(
    jax.jit,
    static_argnames=("b_real", "hidden", "tk", "k_pad", "head_half",
                     "use_buffered"))
def _encoder_forward_impl(x_p, eps_p, w1_b, b1, w2_b, b2, gamma, beta, wh_b, bh,
                          *, b_real, hidden, tk, k_pad, head_half, use_buffered):
    b_pad = x_p.shape[0]
    call = _build_encoder_call(b_pad=b_pad, b_real=b_real, hidden=hidden, tk=tk,
                               k_pad=k_pad, head_half=head_half,
                               use_buffered=use_buffered)
    return call(x_p, w1_b, b1, w2_b, b2, gamma, beta, wh_b, bh, eps_p)


def encoder_forward(img, packed, eps):
    """img: (B, C, H, W) f32, eps: (B, latent) f32 -> z: (B, latent) f32."""
    arrays, meta = packed
    (w1_b, b1, w2_b, b2, gamma, beta, wh_b, bh) = arrays
    in_dim = meta["in_dim"]
    hidden = meta["hidden"]
    latent = meta["latent"]
    tk = meta["tk"]
    k_pad = meta["k_pad"]
    head_half = meta["head_half"]

    B = img.shape[0]
    b_pad = max(8, _round_up(B, 8))          # sublane-friendly batch

    # Per-call activation prep (tiny): flatten, cast bf16, pad to TPU layout.
    x = img.reshape(B, -1).astype(jnp.bfloat16)   # matches torch img.view(B, -1)
    x_p = jnp.pad(x, ((0, b_pad - B), (0, k_pad - in_dim)))
    eps_p = jnp.pad(eps.astype(jnp.float32),
                    ((0, b_pad - B), (0, head_half - latent)))

    static = dict(b_real=B, hidden=hidden, tk=tk, k_pad=k_pad,
                  head_half=head_half)
    try:
        z_p = _encoder_forward_impl(x_p, eps_p, w1_b, b1, w2_b, b2, gamma, beta,
                                    wh_b, bh, use_buffered=True, **static)
    except Exception:
        # Fallback for environments where pipeline_mode=pl.Buffered(1) is not
        # accepted on constant-index operands (only costs ~0.75 MiB extra VMEM).
        z_p = _encoder_forward_impl(x_p, eps_p, w1_b, b1, w2_b, b2, gamma, beta,
                                    wh_b, bh, use_buffered=False, **static)

    # slice away batch / lane padding (lane-dense store inside the kernel)
    return z_p[:B, :latent]


# --------------------------------------------------------------------------- #
# Parameters / reference
# --------------------------------------------------------------------------- #
def init_params(key, in_dim, hidden, latent_dim):
    """Deterministic synthetic parameters (PyTorch-like uniform fan-in init)."""
    ks = jax.random.split(key, 8)

    def lin(kw, kb, fan_in, fan_out):
        bound = 1.0 / jnp.sqrt(jnp.float32(fan_in))
        w = jax.random.uniform(kw, (fan_in, fan_out), jnp.float32, -bound, bound)
        b = jax.random.uniform(kb, (1, fan_out), jnp.float32, -bound, bound)
        return w, b

    w1, b1 = lin(ks[0], ks[1], in_dim, hidden)
    w2, b2 = lin(ks[2], ks[3], hidden, hidden)
    gamma = jnp.ones((1, hidden), jnp.float32)   # BatchNorm1d weight init
    beta = jnp.zeros((1, hidden), jnp.float32)   # BatchNorm1d bias init
    wmu, bmu = lin(ks[4], ks[5], hidden, latent_dim)
    wlv, blv = lin(ks[6], ks[7], hidden, latent_dim)
    return (w1, b1, w2, b2, gamma, beta, wmu, bmu, wlv, blv)


def reference_forward(img, params, eps):
    """Pure-JAX reference mirroring the PyTorch forward with the kernel's
    precision policy (bf16 matmul operands, f32 accumulation, centered
    biased-variance BN over the batch)."""
    (w1, b1, w2, b2, gamma, beta, wmu, bmu, wlv, blv) = params
    bf, f32 = jnp.bfloat16, jnp.float32
    x = img.reshape(img.shape[0], -1)
    h = jnp.dot(x.astype(bf), w1.astype(bf), preferred_element_type=f32) + b1
    h = jnp.where(h > 0, h, 0.2 * h)
    h = jnp.dot(h.astype(bf), w2.astype(bf), preferred_element_type=f32) + b2
    mean = jnp.mean(h, axis=0, keepdims=True)
    var = jnp.mean((h - mean) ** 2, axis=0, keepdims=True)
    h = (h - mean) * lax.rsqrt(var + 1e-5) * gamma + beta
    h = jnp.where(h > 0, h, 0.2 * h)
    mu = jnp.dot(h.astype(bf), wmu.astype(bf), preferred_element_type=f32) + bmu
    logvar = jnp.dot(h.astype(bf), wlv.astype(bf), preferred_element_type=f32) + blv
    return eps * jnp.exp(logvar / 2) + mu


if __name__ == "__main__":
    # Small config consistent with the module: args.channels=4, args.img_size=16,
    # args.latent_dim=32; hidden = 512 as in the module definition.
    B, C, H, W = 2, 4, 16, 16
    HIDDEN = 512
    LATENT = 32
    IN_DIM = C * H * W

    key = jax.random.PRNGKey(0)
    k_img, k_param, k_eps = jax.random.split(key, 3)

    img = jax.random.normal(k_img, (B, C, H, W), jnp.float32)
    params = init_params(k_param, IN_DIM, HIDDEN, LATENT)
    # np.random.normal(0, 1, (B, latent_dim)) in the torch code -> explicit input.
    eps = jax.random.normal(k_eps, (B, LATENT), jnp.float32)

    # One-time packing (outside the hot path / reused across calls).
    packed = pack_params(params, IN_DIM)

    z = jax.block_until_ready(encoder_forward(img, packed, eps))
    z_ref = jax.block_until_ready(reference_forward(img, params, eps))

    assert z.shape == (B, LATENT), z.shape
    max_err = float(jnp.max(jnp.abs(z - z_ref)))
    # tolerance reflects intentional bf16 weight/activation streaming (see header)
    assert jnp.allclose(z, z_ref, atol=2e-2, rtol=2e-2), max_err
    print("KERNEL_OK")
</pallas_src>

<mosaic_0001>
module attributes {stable_mosaic.version = 11 : i64} {
  func.func @encoder_kernel(%arg0: i32, %arg1: memref<8x1024xbf16, #tpu.memory_space<vmem>>, %arg2: memref<1024x512xbf16, #tpu.memory_space<vmem>>, %arg3: memref<1x512xf32, #tpu.memory_space<vmem>>, %arg4: memref<512x512xbf16, #tpu.memory_space<vmem>>, %arg5: memref<1x512xf32, #tpu.memory_space<vmem>>, %arg6: memref<1x512xf32, #tpu.memory_space<vmem>>, %arg7: memref<1x512xf32, #tpu.memory_space<vmem>>, %arg8: memref<512x256xbf16, #tpu.memory_space<vmem>>, %arg9: memref<1x256xf32, #tpu.memory_space<vmem>>, %arg10: memref<8x128xf32, #tpu.memory_space<vmem>>, %arg11: memref<8x128xf32, #tpu.memory_space<vmem>>, %arg12: memref<8x512xf32, #tpu.memory_space<vmem>>) attributes {dimension_semantics = [#tpu.dimension_semantics<arbitrary>], iteration_bounds = array<i64: 1>, scalar_prefetch = 0 : i64, scratch_operands = 1 : i64, tpu.core_type = #tpu.core_type<tc>, window_params = [{transform_indices = @transform_0, window_bounds = array<i64: 8, 1024>}, {transform_indices = @transform_1, window_bounds = array<i64: 1024, 512>}, {pipeline_mode = #tpu.pipeline_mode<synchronous>, transform_indices = @transform_2, window_bounds = array<i64: 1, 512>}, {pipeline_mode = #tpu.pipeline_mode<synchronous>, transform_indices = @transform_3, window_bounds = array<i64: 512, 512>}, {pipeline_mode = #tpu.pipeline_mode<synchronous>, transform_indices = @transform_4, window_bounds = array<i64: 1, 512>}, {pipeline_mode = #tpu.pipeline_mode<synchronous>, transform_indices = @transform_5, window_bounds = array<i64: 1, 512>}, {pipeline_mode = #tpu.pipeline_mode<synchronous>, transform_indices = @transform_6, window_bounds = array<i64: 1, 512>}, {pipeline_mode = #tpu.pipeline_mode<synchronous>, transform_indices = @transform_7, window_bounds = array<i64: 512, 256>}, {pipeline_mode = #tpu.pipeline_mode<synchronous>, transform_indices = @transform_8, window_bounds = array<i64: 1, 256>}, {pipeline_mode = #tpu.pipeline_mode<synchronous>, transform_indices = @transform_9, window_bounds = array<i64: 8, 128>}, {pipeline_mode = #tpu.pipeline_mode<synchronous>, transform_indices = @transform_10, window_bounds = array<i64: 8, 128>}]} {
    %c0_i32 = arith.constant 0 : i32
    %0 = arith.cmpi eq, %arg0, %c0_i32 : i32
    %1 = arith.extui %0 : i1 to i32
    %c0_i32_0 = arith.constant 0 : i32
    %2 = arith.cmpi ne, %1, %c0_i32_0 : i32
    scf.if %2 {
      %cst_10 = arith.constant 0.000000e+00 : f32
      %12 = vector.broadcast %cst_10 : f32 to vector<8x512xf32>
      %c0_11 = arith.constant 0 : index
      %c0_12 = arith.constant 0 : index
      %13 = vector.load %arg12[%c0_11, %c0_12] : memref<8x512xf32, #tpu.memory_space<vmem>>, vector<8x512xf32>
      tpu.vector_store %arg12[%c0_11, %c0_12], %12 {strides = array<i32>} : memref<8x512xf32, #tpu.memory_space<vmem>>, vector<8x512xf32>,
    } else {
    }
    %c0 = arith.constant 0 : index
    %c0_1 = arith.constant 0 : index
    %3 = vector.load %arg12[%c0, %c0_1] : memref<8x512xf32, #tpu.memory_space<vmem>>, vector<8x512xf32>
    %c0_2 = arith.constant 0 : index
    %c0_3 = arith.constant 0 : index
    %4 = vector.load %arg1[%c0_2, %c0_3] : memref<8x1024xbf16, #tpu.memory_space<vmem>>, vector<8x1024xbf16>
    %c0_4 = arith.constant 0 : index
    %c0_5 = arith.constant 0 : index
    %5 = vector.load %arg2[%c0_4, %c0_5] : memref<1024x512xbf16, #tpu.memory_space<vmem>>, vector<1024x512xbf16>
    %cst = arith.constant dense<0.000000e+00> : vector<8x512xf32>
    %6 = tpu.matmul %4, %5, %cst {dimension_numbers = #tpu.dot_dimension_numbers<[1], [0], [0], [1], [0, 0, 1, 1], [], []>} : vector<8x1024xbf16>, vector<1024x512xbf16>, vector<8x512xf32> -> vector<8x512xf32>
    %7 = arith.addf %3, %6 : vector<8x512xf32>
    %c0_6 = arith.constant 0 : index
    %c0_7 = arith.constant 0 : index
    %8 = vector.load %arg12[%c0_6, %c0_7] : memref<8x512xf32, #tpu.memory_space<vmem>>, vector<8x512xf32>
    tpu.vector_store %arg12[%c0_6, %c0_7], %7 {strides = array<i32>} : memref<8x512xf32, #tpu.memory_space<vmem>>, vector<8x512xf32>,
    %c0_i32_8 = arith.constant 0 : i32
    %9 = arith.cmpi eq, %arg0, %c0_i32_8 : i32
    %10 = arith.extui %9 : i1 to i32
    %c0_i32_9 = arith.constant 0 : i32
    %11 = arith.cmpi ne, %10, %c0_i32_9 : i32
    scf.if %11 {
      %c0_10 = arith.constant 0 : index
      %c0_11 = arith.constant 0 : index
      %12 = vector.load %arg12[%c0_10, %c0_11] : memref<8x512xf32, #tpu.memory_space<vmem>>, vector<8x512xf32>
      %c0_12 = arith.constant 0 : index
      %c0_13 = arith.constant 0 : index
      %13 = vector.load %arg3[%c0_12, %c0_13] : memref<1x512xf32, #tpu.memory_space<vmem>>, vector<1x512xf32>
      %14 = vector.broadcast %13 : vector<1x512xf32> to vector<8x512xf32>
      %15 = arith.addf %12, %14 : vector<8x512xf32>
      %cst_14 = arith.constant 0.000000e+00 : f32
      %16 = vector.broadcast %cst_14 : f32 to vector<8x512xf32>
      %17 = arith.cmpf ogt, %15, %16 : vector<8x512xf32>
      %cst_15 = arith.constant 2.000000e-01 : f32
      %18 = vector.broadcast %cst_15 : f32 to vector<8x512xf32>
      %19 = arith.mulf %18, %15 : vector<8x512xf32>
      %20 = arith.select %17, %15, %19 : vector<8x512xi1>, vector<8x512xf32>
      %21 = arith.truncf %20 : vector<8x512xf32> to vector<8x512xbf16>
      %c0_16 = arith.constant 0 : index
      %c0_17 = arith.constant 0 : index
      %22 = vector.load %arg4[%c0_16, %c0_17] : memref<512x512xbf16, #tpu.memory_space<vmem>>, vector<512x512xbf16>
      %cst_18 = arith.constant dense<0.000000e+00> : vector<8x512xf32>
      %23 = tpu.matmul %21, %22, %cst_18 {dimension_numbers = #tpu.dot_dimension_numbers<[1], [0], [0], [1], [0, 0, 1, 1], [], []>} : vector<8x512xbf16>, vector<512x512xbf16>, vector<8x512xf32> -> vector<8x512xf32>
      %c0_19 = arith.constant 0 : index
      %c0_20 = arith.constant 0 : index
      %24 = vector.load %arg5[%c0_19, %c0_20] : memref<1x512xf32, #tpu.memory_space<vmem>>, vector<1x512xf32>
      %25 = vector.broadcast %24 : vector<1x512xf32> to vector<8x512xf32>
      %26 = arith.addf %23, %25 : vector<8x512xf32>
      %27 = tpu.iota {dimensions = array<i32: 0>} : vector<8x512xi32>
      %c2_i32 = arith.constant 2 : i32
      %28 = vector.broadcast %c2_i32 : i32 to vector<8x512xi32>
      %29 = arith.cmpi slt, %27, %28 : vector<8x512xi32>
      %30 = arith.extui %29 : vector<8x512xi1> to vector<8x512xi32>
      %31 = arith.sitofp %30 : vector<8x512xi32> to vector<8x512xf32>
      %32 = arith.mulf %26, %31 : vector<8x512xf32>
      %cst_21 = arith.constant dense<0.000000e+00> : vector<512xf32>
      %33 = vector.multi_reduction <add>, %32, %cst_21 [0] : vector<8x512xf32> to vector<512xf32>
      %34 = vector.shape_cast %33 : vector<512xf32> to vector<1x512xf32>
      %cst_22 = arith.constant 5.000000e-01 : f32
      %35 = vector.broadcast %cst_22 : f32 to vector<1x512xf32>
      %36 = arith.mulf %34, %35 : vector<1x512xf32>
      %37 = vector.broadcast %36 : vector<1x512xf32> to vector<8x512xf32>
      %38 = arith.subf %26, %37 : vector<8x512xf32>
      %39 = arith.mulf %38, %31 : vector<8x512xf32>
      %40 = arith.mulf %39, %39 : vector<8x512xf32>
      %cst_23 = arith.constant dense<0.000000e+00> : vector<512xf32>
      %41 = vector.multi_reduction <add>, %40, %cst_23 [0] : vector<8x512xf32> to vector<512xf32>
      %42 = vector.shape_cast %41 : vector<512xf32> to vector<1x512xf32>
      %cst_24 = arith.constant 5.000000e-01 : f32
      %43 = vector.broadcast %cst_24 : f32 to vector<1x512xf32>
      %44 = arith.mulf %42, %43 : vector<1x512xf32>
      %45 = vector.broadcast %36 : vector<1x512xf32> to vector<8x512xf32>
      %46 = arith.subf %26, %45 : vector<8x512xf32>
      %cst_25 = arith.constant 9.99999974E-6 : f32
      %47 = vector.broadcast %cst_25 : f32 to vector<1x512xf32>
      %48 = arith.addf %44, %47 : vector<1x512xf32>
      %49 = math.rsqrt %48 : vector<1x512xf32>
      %50 = vector.broadcast %49 : vector<1x512xf32> to vector<8x512xf32>
      %51 = arith.mulf %46, %50 : vector<8x512xf32>
      %c0_26 = arith.constant 0 : index
      %c0_27 = arith.constant 0 : index
      %52 = vector.load %arg6[%c0_26, %c0_27] : memref<1x512xf32, #tpu.memory_space<vmem>>, vector<1x512xf32>
      %53 = vector.broadcast %52 : vector<1x512xf32> to vector<8x512xf32>
      %54 = arith.mulf %51, %53 : vector<8x512xf32>
      %c0_28 = arith.constant 0 : index
      %c0_29 = arith.constant 0 : index
      %55 = vector.load %arg7[%c0_28, %c0_29] : memref<1x512xf32, #tpu.memory_space<vmem>>, vector<1x512xf32>
      %56 = vector.broadcast %55 : vector<1x512xf32> to vector<8x512xf32>
      %57 = arith.addf %54, %56 : vector<8x512xf32>
      %cst_30 = arith.constant 0.000000e+00 : f32
      %58 = vector.broadcast %cst_30 : f32 to vector<8x512xf32>
      %59 = arith.cmpf ogt, %57, %58 : vector<8x512xf32>
      %cst_31 = arith.constant 2.000000e-01 : f32
      %60 = vector.broadcast %cst_31 : f32 to vector<8x512xf32>
      %61 = arith.mulf %60, %57 : vector<8x512xf32>
      %62 = arith.select %59, %57, %61 : vector<8x512xi1>, vector<8x512xf32>
      %63 = arith.truncf %62 : vector<8x512xf32> to vector<8x512xbf16>
      %c0_32 = arith.constant 0 : index
      %c0_33 = arith.constant 0 : index
      %64 = vector.load %arg8[%c0_32, %c0_33] : memref<512x256xbf16, #tpu.memory_space<vmem>>, vector<512x256xbf16>
      %cst_34 = arith.constant dense<0.000000e+00> : vector<8x256xf32>
      %65 = tpu.matmul %63, %64, %cst_34 {dimension_numbers = #tpu.dot_dimension_numbers<[1], [0], [0], [1], [0, 0, 1, 1], [], []>} : vector<8x512xbf16>, vector<512x256xbf16>, vector<8x256xf32> -> vector<8x256xf32>
      %c0_35 = arith.constant 0 : index
      %c0_36 = arith.constant 0 : index
      %66 = vector.load %arg9[%c0_35, %c0_36] : memref<1x256xf32, #tpu.memory_space<vmem>>, vector<1x256xf32>
      %67 = vector.broadcast %66 : vector<1x256xf32> to vector<8x256xf32>
      %68 = arith.addf %65, %67 : vector<8x256xf32>
      %69 = vector.extract_strided_slice %68 {offsets = [0, 0], sizes = [8, 128], strides = [1, 1]} : vector<8x256xf32> to vector<8x128xf32>
      %70 = vector.extract_strided_slice %68 {offsets = [0, 128], sizes = [8, 128], strides = [1, 1]} : vector<8x256xf32> to vector<8x128xf32>
      %c0_37 = arith.constant 0 : index
      %c0_38 = arith.constant 0 : index
      %71 = vector.load %arg10[%c0_37, %c0_38] : memref<8x128xf32, #tpu.memory_space<vmem>>, vector<8x128xf32>
      %cst_39 = arith.constant 5.000000e-01 : f32
      %72 = vector.broadcast %cst_39 : f32 to vector<8x128xf32>
      %73 = arith.mulf %70, %72 : vector<8x128xf32>
      %74 = math.exp %73 : vector<8x128xf32>
      %75 = arith.mulf %71, %74 : vector<8x128xf32>
      %76 = arith.addf %75, %69 : vector<8x128xf32>
      %c0_40 = arith.constant 0 : index
      %c0_41 = arith.constant 0 : index
      %77 = vector.load %arg11[%c0_40, %c0_41] : memref<8x128xf32, #tpu.memory_space<vmem>>, vector<8x128xf32>
      tpu.vector_store %arg11[%c0_40, %c0_41], %76 {strides = array<i32>} : memref<8x128xf32, #tpu.memory_space<vmem>>, vector<8x128xf32>,
    } else {
    }
    return
  }
  func.func @transform_0(%arg0: i32) -> (i32, i32) {
    %c0_i32 = arith.constant 0 : i32
    %c0_i32_0 = arith.constant 0 : i32
    return %c0_i32, %arg0 : i32, i32
  }
  func.func @transform_1(%arg0: i32) -> (i32, i32) {
    %c0_i32 = arith.constant 0 : i32
    %c0_i32_0 = arith.constant 0 : i32
    return %arg0, %c0_i32 : i32, i32
  }
  func.func @transform_2(%arg0: i32) -> (i32, i32) {
    %c0_i32 = arith.constant 0 : i32
    %c0_i32_0 = arith.constant 0 : i32
    %c0_i32_1 = arith.constant 0 : i32
    return %c0_i32, %c0_i32_0 : i32, i32
  }
  func.func @transform_3(%arg0: i32) -> (i32, i32) {
    %c0_i32 = arith.constant 0 : i32
    %c0_i32_0 = arith.constant 0 : i32
    %c0_i32_1 = arith.constant 0 : i32
    return %c0_i32, %c0_i32_0 : i32, i32
  }
  func.func @transform_4(%arg0: i32) -> (i32, i32) {
    %c0_i32 = arith.constant 0 : i32
    %c0_i32_0 = arith.constant 0 : i32
    %c0_i32_1 = arith.constant 0 : i32
    return %c0_i32, %c0_i32_0 : i32, i32
  }
  func.func @transform_5(%arg0: i32) -> (i32, i32) {
    %c0_i32 = arith.constant 0 : i32
    %c0_i32_0 = arith.constant 0 : i32
    %c0_i32_1 = arith.constant 0 : i32
    return %c0_i32, %c0_i32_0 : i32, i32
  }
  func.func @transform_6(%arg0: i32) -> (i32, i32) {
    %c0_i32 = arith.constant 0 : i32
    %c0_i32_0 = arith.constant 0 : i32
    %c0_i32_1 = arith.constant 0 : i32
    return %c0_i32, %c0_i32_0 : i32, i32
  }
  func.func @transform_7(%arg0: i32) -> (i32, i32) {
    %c0_i32 = arith.constant 0 : i32
    %c0_i32_0 = arith.constant 0 : i32
    %c0_i32_1 = arith.constant 0 : i32
    return %c0_i32, %c0_i32_0 : i32, i32
  }
  func.func @transform_8(%arg0: i32) -> (i32, i32) {
    %c0_i32 = arith.constant 0 : i32
    %c0_i32_0 = arith.constant 0 : i32
    %c0_i32_1 = arith.constant 0 : i32
    return %c0_i32, %c0_i32_0 : i32, i32
  }
  func.func @transform_9(%arg0: i32) -> (i32, i32) {
    %c0_i32 = arith.constant 0 : i32
    %c0_i32_0 = arith.constant 0 : i32
    %c0_i32_1 = arith.constant 0 : i32
    return %c0_i32, %c0_i32_0 : i32, i32
  }
  func.func @transform_10(%arg0: i32) -> (i32, i32) {
    %c0_i32 = arith.constant 0 : i32
    %c0_i32_0 = arith.constant 0 : i32
    %c0_i32_1 = arith.constant 0 : i32
    return %c0_i32, %c0_i32_0 : i32, i32
  }
}

module attributes {stable_mosaic.version = 11 : i64} {
  func.func @encoder_kernel(%arg0: i32, %arg1: memref<8x1024xbf16, #tpu.memory_space<vmem>>, %arg2: memref<1024x512xbf16, #tpu.memory_space<vmem>>, %arg3: memref<1x512xf32, #tpu.memory_space<vmem>>, %arg4: memref<512x512xbf16, #tpu.memory_space<vmem>>, %arg5: memref<1x512xf32, #tpu.memory_space<vmem>>, %arg6: memref<1x512xf32, #tpu.memory_space<vmem>>, %arg7: memref<1x512xf32, #tpu.memory_space<vmem>>, %arg8: memref<512x256xbf16, #tpu.memory_space<vmem>>, %arg9: memref<1x256xf32, #tpu.memory_space<vmem>>, %arg10: memref<8x128xf32, #tpu.memory_space<vmem>>, %arg11: memref<8x128xf32, #tpu.memory_space<vmem>>, %arg12: memref<8x512xf32, #tpu.memory_space<vmem>>) attributes {dimension_semantics = [#tpu.dimension_semantics<arbitrary>], iteration_bounds = array<i64: 1>, scalar_prefetch = 0 : i64, scratch_operands = 1 : i64, tpu.core_type = #tpu.core_type<tc>, window_params = [{transform_indices = @transform_0, window_bounds = array<i64: 8, 1024>}, {transform_indices = @transform_1, window_bounds = array<i64: 1024, 512>}, {pipeline_mode = #tpu.pipeline_mode<synchronous>, transform_indices = @transform_2, window_bounds = array<i64: 1, 512>}, {pipeline_mode = #tpu.pipeline_mode<synchronous>, transform_indices = @transform_3, window_bounds = array<i64: 512, 512>}, {pipeline_mode = #tpu.pipeline_mode<synchronous>, transform_indices = @transform_4, window_bounds = array<i64: 1, 512>}, {pipeline_mode = #tpu.pipeline_mode<synchronous>, transform_indices = @transform_5, window_bounds = array<i64: 1, 512>}, {pipeline_mode = #tpu.pipeline_mode<synchronous>, transform_indices = @transform_6, window_bounds = array<i64: 1, 512>}, {pipeline_mode = #tpu.pipeline_mode<synchronous>, transform_indices = @transform_7, window_bounds = array<i64: 512, 256>}, {pipeline_mode = #tpu.pipeline_mode<synchronous>, transform_indices = @transform_8, window_bounds = array<i64: 1, 256>}, {pipeline_mode = #tpu.pipeline_mode<synchronous>, transform_indices = @transform_9, window_bounds = array<i64: 8, 128>}, {pipeline_mode = #tpu.pipeline_mode<synchronous>, transform_indices = @transform_10, window_bounds = array<i64: 8, 128>}]} {
    %c0_i32 = arith.constant 0 : i32
    %0 = arith.cmpi eq, %arg0, %c0_i32 : i32
    %1 = arith.extui %0 : i1 to i32
    %c0_i32_0 = arith.constant 0 : i32
    %2 = arith.cmpi ne, %1, %c0_i32_0 : i32
    scf.if %2 {
      %cst_10 = arith.constant 0.000000e+00 : f32
      %12 = vector.broadcast %cst_10 : f32 to vector<8x512xf32>
      %c0_11 = arith.constant 0 : index
      %c0_12 = arith.constant 0 : index
      %13 = vector.load %arg12[%c0_11, %c0_12] : memref<8x512xf32, #tpu.memory_space<vmem>>, vector<8x512xf32>
      tpu.vector_store %arg12[%c0_11, %c0_12], %12 {strides = array<i32>} : memref<8x512xf32, #tpu.memory_space<vmem>>, vector<8x512xf32>,
    } else {
    }
    %c0 = arith.constant 0 : index
    %c0_1 = arith.constant 0 : index
    %3 = vector.load %arg12[%c0, %c0_1] : memref<8x512xf32, #tpu.memory_space<vmem>>, vector<8x512xf32>
    %c0_2 = arith.constant 0 : index
    %c0_3 = arith.constant 0 : index
    %4 = vector.load %arg1[%c0_2, %c0_3] : memref<8x1024xbf16, #tpu.memory_space<vmem>>, vector<8x1024xbf16>
    %c0_4 = arith.constant 0 : index
    %c0_5 = arith.constant 0 : index
    %5 = vector.load %arg2[%c0_4, %c0_5] : memref<1024x512xbf16, #tpu.memory_space<vmem>>, vector<1024x512xbf16>
    %cst = arith.constant dense<0.000000e+00> : vector<8x512xf32>
    %6 = tpu.matmul %4, %5, %cst {dimension_numbers = #tpu.dot_dimension_numbers<[1], [0], [0], [1], [0, 0, 1, 1], [], []>} : vector<8x1024xbf16>, vector<1024x512xbf16>, vector<8x512xf32> -> vector<8x512xf32>
    %7 = arith.addf %3, %6 : vector<8x512xf32>
    %c0_6 = arith.constant 0 : index
    %c0_7 = arith.constant 0 : index
    %8 = vector.load %arg12[%c0_6, %c0_7] : memref<8x512xf32, #tpu.memory_space<vmem>>, vector<8x512xf32>
    tpu.vector_store %arg12[%c0_6, %c0_7], %7 {strides = array<i32>} : memref<8x512xf32, #tpu.memory_space<vmem>>, vector<8x512xf32>,
    %c0_i32_8 = arith.constant 0 : i32
    %9 = arith.cmpi eq, %arg0, %c0_i32_8 : i32
    %10 = arith.extui %9 : i1 to i32
    %c0_i32_9 = arith.constant 0 : i32
    %11 = arith.cmpi ne, %10, %c0_i32_9 : i32
    scf.if %11 {
      %c0_10 = arith.constant 0 : index
      %c0_11 = arith.constant 0 : index
      %12 = vector.load %arg12[%c0_10, %c0_11] : memref<8x512xf32, #tpu.memory_space<vmem>>, vector<8x512xf32>
      %c0_12 = arith.constant 0 : index
      %c0_13 = arith.constant 0 : index
      %13 = vector.load %arg3[%c0_12, %c0_13] : memref<1x512xf32, #tpu.memory_space<vmem>>, vector<1x512xf32>
      %14 = vector.broadcast %13 : vector<1x512xf32> to vector<8x512xf32>
      %15 = arith.addf %12, %14 : vector<8x512xf32>
      %cst_14 = arith.constant 0.000000e+00 : f32
      %16 = vector.broadcast %cst_14 : f32 to vector<8x512xf32>
      %17 = arith.cmpf ogt, %15, %16 : vector<8x512xf32>
      %cst_15 = arith.constant 2.000000e-01 : f32
      %18 = vector.broadcast %cst_15 : f32 to vector<8x512xf32>
      %19 = arith.mulf %18, %15 : vector<8x512xf32>
      %20 = arith.select %17, %15, %19 : vector<8x512xi1>, vector<8x512xf32>
      %21 = arith.truncf %20 : vector<8x512xf32> to vector<8x512xbf16>
      %c0_16 = arith.constant 0 : index
      %c0_17 = arith.constant 0 : index
      %22 = vector.load %arg4[%c0_16, %c0_17] : memref<512x512xbf16, #tpu.memory_space<vmem>>, vector<512x512xbf16>
      %cst_18 = arith.constant dense<0.000000e+00> : vector<8x512xf32>
      %23 = tpu.matmul %21, %22, %cst_18 {dimension_numbers = #tpu.dot_dimension_numbers<[1], [0], [0], [1], [0, 0, 1, 1], [], []>} : vector<8x512xbf16>, vector<512x512xbf16>, vector<8x512xf32> -> vector<8x512xf32>
      %c0_19 = arith.constant 0 : index
      %c0_20 = arith.constant 0 : index
      %24 = vector.load %arg5[%c0_19, %c0_20] : memref<1x512xf32, #tpu.memory_space<vmem>>, vector<1x512xf32>
      %25 = vector.broadcast %24 : vector<1x512xf32> to vector<8x512xf32>
      %26 = arith.addf %23, %25 : vector<8x512xf32>
      %27 = tpu.iota {dimensions = array<i32: 0>} : vector<8x512xi32>
      %c2_i32 = arith.constant 2 : i32
      %28 = vector.broadcast %c2_i32 : i32 to vector<8x512xi32>
      %29 = arith.cmpi slt, %27, %28 : vector<8x512xi32>
      %30 = arith.extui %29 : vector<8x512xi1> to vector<8x512xi32>
      %31 = arith.sitofp %30 : vector<8x512xi32> to vector<8x512xf32>
      %32 = arith.mulf %26, %31 : vector<8x512xf32>
      %cst_21 = arith.constant dense<0.000000e+00> : vector<512xf32>
      %33 = vector.multi_reduction <add>, %32, %cst_21 [0] : vector<8x512xf32> to vector<512xf32>
      %34 = vector.shape_cast %33 : vector<512xf32> to vector<1x512xf32>
      %cst_22 = arith.constant 5.000000e-01 : f32
      %35 = vector.broadcast %cst_22 : f32 to vector<1x512xf32>
      %36 = arith.mulf %34, %35 : vector<1x512xf32>
      %37 = vector.broadcast %36 : vector<1x512xf32> to vector<8x512xf32>
      %38 = arith.subf %26, %37 : vector<8x512xf32>
      %39 = arith.mulf %38, %31 : vector<8x512xf32>
      %40 = arith.mulf %39, %39 : vector<8x512xf32>
      %cst_23 = arith.constant dense<0.000000e+00> : vector<512xf32>
      %41 = vector.multi_reduction <add>, %40, %cst_23 [0] : vector<8x512xf32> to vector<512xf32>
      %42 = vector.shape_cast %41 : vector<512xf32> to vector<1x512xf32>
      %cst_24 = arith.constant 5.000000e-01 : f32
      %43 = vector.broadcast %cst_24 : f32 to vector<1x512xf32>
      %44 = arith.mulf %42, %43 : vector<1x512xf32>
      %45 = vector.broadcast %36 : vector<1x512xf32> to vector<8x512xf32>
      %46 = arith.subf %26, %45 : vector<8x512xf32>
      %cst_25 = arith.constant 9.99999974E-6 : f32
      %47 = vector.broadcast %cst_25 : f32 to vector<1x512xf32>
      %48 = arith.addf %44, %47 : vector<1x512xf32>
      %49 = math.rsqrt %48 : vector<1x512xf32>
      %50 = vector.broadcast %49 : vector<1x512xf32> to vector<8x512xf32>
      %51 = arith.mulf %46, %50 : vector<8x512xf32>
      %c0_26 = arith.constant 0 : index
      %c0_27 = arith.constant 0 : index
      %52 = vector.load %arg6[%c0_26, %c0_27] : memref<1x512xf32, #tpu.memory_space<vmem>>, vector<1x512xf32>
      %53 = vector.broadcast %52 : vector<1x512xf32> to vector<8x512xf32>
      %54 = arith.mulf %51, %53 : vector<8x512xf32>
      %c0_28 = arith.constant 0 : index
      %c0_29 = arith.constant 0 : index
      %55 = vector.load %arg7[%c0_28, %c0_29] : memref<1x512xf32, #tpu.memory_space<vmem>>, vector<1x512xf32>
      %56 = vector.broadcast %55 : vector<1x512xf32> to vector<8x512xf32>
      %57 = arith.addf %54, %56 : vector<8x512xf32>
      %cst_30 = arith.constant 0.000000e+00 : f32
      %58 = vector.broadcast %cst_30 : f32 to vector<8x512xf32>
      %59 = arith.cmpf ogt, %57, %58 : vector<8x512xf32>
      %cst_31 = arith.constant 2.000000e-01 : f32
      %60 = vector.broadcast %cst_31 : f32 to vector<8x512xf32>
      %61 = arith.mulf %60, %57 : vector<8x512xf32>
      %62 = arith.select %59, %57, %61 : vector<8x512xi1>, vector<8x512xf32>
      %63 = arith.truncf %62 : vector<8x512xf32> to vector<8x512xbf16>
      %c0_32 = arith.constant 0 : index
      %c0_33 = arith.constant 0 : index
      %64 = vector.load %arg8[%c0_32, %c0_33] : memref<512x256xbf16, #tpu.memory_space<vmem>>, vector<512x256xbf16>
      %cst_34 = arith.constant dense<0.000000e+00> : vector<8x256xf32>
      %65 = tpu.matmul %63, %64, %cst_34 {dimension_numbers = #tpu.dot_dimension_numbers<[1], [0], [0], [1], [0, 0, 1, 1], [], []>} : vector<8x512xbf16>, vector<512x256xbf16>, vector<8x256xf32> -> vector<8x256xf32>
      %c0_35 = arith.constant 0 : index
      %c0_36 = arith.constant 0 : index
      %66 = vector.load %arg9[%c0_35, %c0_36] : memref<1x256xf32, #tpu.memory_space<vmem>>, vector<1x256xf32>
      %67 = vector.broadcast %66 : vector<1x256xf32> to vector<8x256xf32>
      %68 = arith.addf %65, %67 : vector<8x256xf32>
      %69 = vector.extract_strided_slice %68 {offsets = [0, 0], sizes = [8, 128], strides = [1, 1]} : vector<8x256xf32> to vector<8x128xf32>
      %70 = vector.extract_strided_slice %68 {offsets = [0, 128], sizes = [8, 128], strides = [1, 1]} : vector<8x256xf32> to vector<8x128xf32>
      %c0_37 = arith.constant 0 : index
      %c0_38 = arith.constant 0 : index
      %71 = vector.load %arg10[%c0_37, %c0_38] : memref<8x128xf32, #tpu.memory_space<vmem>>, vector<8x128xf32>
      %cst_39 = arith.constant 5.000000e-01 : f32
      %72 = vector.broadcast %cst_39 : f32 to vector<8x128xf32>
      %73 = arith.mulf %70, %72 : vector<8x128xf32>
      %74 = math.exp %73 : vector<8x128xf32>
      %75 = arith.mulf %71, %74 : vector<8x128xf32>
      %76 = arith.addf %75, %69 : vector<8x128xf32>
      %c0_40 = arith.constant 0 : index
      %c0_41 = arith.constant 0 : index
      %77 = vector.load %arg11[%c0_40, %c0_41] : memref<8x128xf32, #tpu.memory_space<vmem>>, vector<8x128xf32>
      tpu.vector_store %arg11[%c0_40, %c0_41], %76 {strides = array<i32>} : memref<8x128xf32, #tpu.memory_space<vmem>>, vector<8x128xf32>,
    } else {
    }
    return
  }
  func.func @transform_0(%arg0: i32) -> (i32, i32) {
    %c0_i32 = arith.constant 0 : i32
    %c0_i32_0 = arith.constant 0 : i32
    return %c0_i32, %arg0 : i32, i32
  }
  func.func @transform_1(%arg0: i32) -> (i32, i32) {
    %c0_i32 = arith.constant 0 : i32
    %c0_i32_0 = arith.constant 0 : i32
    return %arg0, %c0_i32 : i32, i32
  }
  func.func @transform_2(%arg0: i32) -> (i32, i32) {
    %c0_i32 = arith.constant 0 : i32
    %c0_i32_0 = arith.constant 0 : i32
    %c0_i32_1 = arith.constant 0 : i32
    return %c0_i32, %c0_i32_0 : i32, i32
  }
  func.func @transform_3(%arg0: i32) -> (i32, i32) {
    %c0_i32 = arith.constant 0 : i32
    %c0_i32_0 = arith.constant 0 : i32
    %c0_i32_1 = arith.constant 0 : i32
    return %c0_i32, %c0_i32_0 : i32, i32
  }
  func.func @transform_4(%arg0: i32) -> (i32, i32) {
    %c0_i32 = arith.constant 0 : i32
    %c0_i32_0 = arith.constant 0 : i32
    %c0_i32_1 = arith.constant 0 : i32
    return %c0_i32, %c0_i32_0 : i32, i32
  }
  func.func @transform_5(%arg0: i32) -> (i32, i32) {
    %c0_i32 = arith.constant 0 : i32
    %c0_i32_0 = arith.constant 0 : i32
    %c0_i32_1 = arith.constant 0 : i32
    return %c0_i32, %c0_i32_0 : i32, i32
  }
  func.func @transform_6(%arg0: i32) -> (i32, i32) {
    %c0_i32 = arith.constant 0 : i32
    %c0_i32_0 = arith.constant 0 : i32
    %c0_i32_1 = arith.constant 0 : i32
    return %c0_i32, %c0_i32_0 : i32, i32
  }
  func.func @transform_7(%arg0: i32) -> (i32, i32) {
    %c0_i32 = arith.constant 0 : i32
    %c0_i32_0 = arith.constant 0 : i32
    %c0_i32_1 = arith.constant 0 : i32
    return %c0_i32, %c0_i32_0 : i32, i32
  }
  func.func @transform_8(%arg0: i32) -> (i32, i32) {
    %c0_i32 = arith.constant 0 : i32
    %c0_i32_0 = arith.constant 0 : i32
    %c0_i32_1 = arith.constant 0 : i32
    return %c0_i32, %c0_i32_0 : i32, i32
  }
  func.func @transform_9(%arg0: i32) -> (i32, i32) {
    %c0_i32 = arith.constant 0 : i32
    %c0_i32_0 = arith.constant 0 : i32
    %c0_i32_1 = arith.constant 0 : i32
    return %c0_i32, %c0_i32_0 : i32, i32
  }
  func.func @transform_10(%arg0: i32) -> (i32, i32) {
    %c0_i32 = arith.constant 0 : i32
    %c0_i32_0 = arith.constant 0 : i32
    %c0_i32_1 = arith.constant 0 : i32
    return %c0_i32, %c0_i32_0 : i32, i32
  }
}

</mosaic_0001>

<llo_original>
// kernel: _encoder_forward_impl.1
$region0: #{_encoder_forward_impl.1}
  #allocation0 [shape = 'u32[]', space=smem, size = 0x4, offset = 0x4, fixed_abs, tag = 'smem constant byte address 0x4 - core index']
  #allocation1 [shape = 'u32[144,128]{1,0:T(1,128)}', space=vmem, size = 0x12000, scoped, tag = 'internal scratch']
  #allocation2 [shape = 'f32[8,512]{1,0:T(8,128)}', space=vmem, size = 0x4000, scoped, tag = 'scratch operand']
  %s0 = inlined_call_operand.hbm [shape: bf16[8,1024], index: 0, kind: input, shape index: {}]
  %s1 = inlined_call_operand.hbm [shape: bf16[1024,512], index: 1, kind: input, shape index: {}]
  %s2 = inlined_call_operand.vmem [shape: f32[1,512], index: 2, kind: input, shape index: {}]
  %s3 = inlined_call_operand.hbm [shape: bf16[512,512], index: 3, kind: input, shape index: {}]
  %s4 = inlined_call_operand.vmem [shape: f32[1,512], index: 4, kind: input, shape index: {}]
  %s5 = inlined_call_operand.vmem [shape: f32[1,512], index: 5, kind: input, shape index: {}]
  %s6 = inlined_call_operand.vmem [shape: f32[1,512], index: 6, kind: input, shape index: {}]
  %s7 = inlined_call_operand.hbm [shape: bf16[512,256], index: 7, kind: input, shape index: {}]
  %s8 = inlined_call_operand.vmem [shape: f32[1,256], index: 8, kind: input, shape index: {}]
  %s9 = inlined_call_operand.hbm [shape: f32[8,128], index: 9, kind: input, shape index: {}]
  %s10 = inlined_call_operand.hbm [shape: f32[8,128], index: 10, kind: output, shape index: {}]
  %s11 = sld [smem:[#allocation0]]
  $region78: #{_encoder_forward_impl.1} parent=0
    _
  %s13 = ssub.s32 1, %s11
  %s14 = scalar_select 0, %s13, %s11
  $region1: #{_encoder_forward_impl.1} parent=0
    #allocation3 [shape = 'u8[16384]{0}', space=vmem, size = 0x4000, scoped, tag = 'input window, operand 0, single buffered']
    #allocation4 [shape = 's32[1]{0}', space=sflag, size = 0x4, scoped, tag = 'scoped memory for _encoder_forward_impl.1']
    #allocation5 [shape = 's32[1]{0}', space=sflag, size = 0x4, scoped, tag = 'scoped memory for _encoder_forward_impl.1']
    #allocation6 [shape = 'u8[1048576]{0}', space=vmem, size = 0x100000, scoped, tag = 'input window, operand 1, single buffered']
    #allocation7 [shape = 's32[1]{0}', space=sflag, size = 0x4, scoped, tag = 'scoped memory for _encoder_forward_impl.1']
    #allocation8 [shape = 'u8[524288]{0}', space=vmem, size = 0x80000, scoped, tag = 'input window, operand 3, single buffered']
    #allocation9 [shape = 'u8[262144]{0}', space=vmem, size = 0x40000, scoped, tag = 'input window, operand 7, single buffered']
    #allocation10 [shape = 's32[1]{0}', space=sflag, size = 0x4, scoped, tag = 'scoped memory for _encoder_forward_impl.1']
    #allocation11 [shape = 'u8[4096]{0}', space=vmem, size = 0x1000, scoped, tag = 'input window, operand 9, single buffered']
    #allocation12 [shape = 'u8[4096]{0}', space=vmem, size = 0x1000, scoped, tag = 'output window, operand 0, single buffered']
    %15 = vsyncpa [#allocation4], 0
    %16 = vsyncpa [#allocation7], 0
    %17 = vsyncpa [#allocation10], 0
    %18 = vsyncpa [#allocation5], 0
    // Predicated region
    $region2: #{_encoder_forward_impl.1} parent=1 // pred_check
      _
    $region3: #{_encoder_forward_impl.1} parent=1 // pred_check_branch
      %20 = sbr.rel (0) target = $region5
    $region4: #{_encoder_forward_impl.1} parent=1 // pred_region
      %s22 = ssub.s32 512, 512
      %23 = vsyncadd [#allocation4], %s22
      %s25 = sshll.u32 [#allocation3], 4
      %s26 = int_to_ptr.vmem [resolvable:$true] %s25
      %28 = dma.hbm_to_vmem [thread:$0]  %s0, 512, %s26, [#allocation4]
    $region5: #{_encoder_forward_impl.1} parent=1 // pred_fallthru
      _
    // Predicated region
    $region6: #{_encoder_forward_impl.1} parent=1 // pred_check
      _
    $region7: #{_encoder_forward_impl.1} parent=1 // pred_check_branch
      %30 = sbr.rel (0) target = $region9
    $region8: #{_encoder_forward_impl.1} parent=1 // pred_region
      %s32 = ssub.s32 32768, 32768
      %33 = vsyncadd [#allocation7], %s32
      %s34 = sshll.u32 [#allocation6], 4
      %s35 = int_to_ptr.vmem [resolvable:$true] %s34
      %40 = dma.hbm_to_vmem [thread:$0]  %s1, 32768, %s35, [#allocation7], 256, 256, 16
    $region9: #{_encoder_forward_impl.1} parent=1 // pred_fallthru
      _
    // Predicated region
    $region10: #{_encoder_forward_impl.1} parent=1 // pred_check
      _
    $region11: #{_encoder_forward_impl.1} parent=1 // pred_check_branch
      %42 = sbr.rel (0) target = $region13
    $region12: #{_encoder_forward_impl.1} parent=1 // pred_region
      _
    $region13: #{_encoder_forward_impl.1} parent=1 // pred_fallthru
      _
    // Predicated region
    $region14: #{_encoder_forward_impl.1} parent=1 // pred_check
      _
    $region15: #{_encoder_forward_impl.1} parent=1 // pred_check_branch
      %44 = sbr.rel (0) target = $region17
    $region16: #{_encoder_forward_impl.1} parent=1 // pred_region
      %s46 = ssub.s32 16384, 16384
      %47 = vsyncadd [#allocation7], %s46
      %s48 = sshll.u32 [#allocation8], 4
      %s49 = int_to_ptr.vmem [resolvable:$true] %s48
      %54 = dma.hbm_to_vmem [thread:$0]  %s3, 16384, %s49, [#allocation7], 256, 256, 16
    $region17: #{_encoder_forward_impl.1} parent=1 // pred_fallthru
      _
    // Predicated region
    $region18: #{_encoder_forward_impl.1} parent=1 // pred_check
      _
    $region19: #{_encoder_forward_impl.1} parent=1 // pred_check_branch
      %56 = sbr.rel (0) target = $region21
    $region20: #{_encoder_forward_impl.1} parent=1 // pred_region
      _
    $region21: #{_encoder_forward_impl.1} parent=1 // pred_fallthru
      _
    // Predicated region
    $region22: #{_encoder_forward_impl.1} parent=1 // pred_check
      _
    $region23: #{_encoder_forward_impl.1} parent=1 // pred_check_branch
      %58 = sbr.rel (0) target = $region25
    $region24: #{_encoder_forward_impl.1} parent=1 // pred_region
      _
    $region25: #{_encoder_forward_impl.1} parent=1 // pred_fallthru
      _
    // Predicated region
    $region26: #{_encoder_forward_impl.1} parent=1 // pred_check
      _
    $region27: #{_encoder_forward_impl.1} parent=1 // pred_check_branch
      %60 = sbr.rel (0) target = $region29
    $region28: #{_encoder_forward_impl.1} parent=1 // pred_region
      _
    $region29: #{_encoder_forward_impl.1} parent=1 // pred_fallthru
      _
    // Predicated region
    $region30: #{_encoder_forward_impl.1} parent=1 // pred_check
      _
    $region31: #{_encoder_forward_impl.1} parent=1 // pred_check_branch
      %62 = sbr.rel (0) target = $region33
    $region32: #{_encoder_forward_impl.1} parent=1 // pred_region
      %s64 = ssub.s32 8192, 8192
      %65 = vsyncadd [#allocation10], %s64
      %s66 = sshll.u32 [#allocation9], 4
      %s67 = int_to_ptr.vmem [resolvable:$true] %s66
      %72 = dma.hbm_to_vmem [thread:$0]  %s7, 8192, %s67, [#allocation10], 128, 128, 8
    $region33: #{_encoder_forward_impl.1} parent=1 // pred_fallthru
      _
    // Predicated region
    $region34: #{_encoder_forward_impl.1} parent=1 // pred_check
      _
    $region35: #{_encoder_forward_impl.1} parent=1 // pred_check_branch
      %74 = sbr.rel (0) target = $region37
    $region36: #{_encoder_forward_impl.1} parent=1 // pred_region
      _
    $region37: #{_encoder_forward_impl.1} parent=1 // pred_fallthru
      _
    // Predicated region
    $region38: #{_encoder_forward_impl.1} parent=1 // pred_check
      _
    $region39: #{_encoder_forward_impl.1} parent=1 // pred_check_branch
      %76 = sbr.rel (0) target = $region41
    $region40: #{_encoder_forward_impl.1} parent=1 // pred_region
      %s78 = ssub.s32 128, 128
      %79 = vsyncadd [#allocation10], %s78
      %s81 = sshll.u32 [#allocation11], 4
      %s82 = int_to_ptr.vmem [resolvable:$true] %s81
      %84 = dma.hbm_to_vmem [thread:$0]  %s9, 128, %s82, [#allocation10]
    $region41: #{_encoder_forward_impl.1} parent=1 // pred_fallthru
      _
    // Predicated region
    $region42: #{_encoder_forward_impl.1} parent=1 // pred_check
      _
    $region43: #{_encoder_forward_impl.1} parent=1 // pred_check_branch
      %86 = sbr.rel (0) target = $region45
    $region44: #{_encoder_forward_impl.1} parent=1 // pred_region
      %87 = dma.done [#allocation4], 512
    $region45: #{_encoder_forward_impl.1} parent=1 // pred_fallthru
      _
    // Predicated region
    $region46: #{_encoder_forward_impl.1} parent=1 // pred_check
      _
    $region47: #{_encoder_forward_impl.1} parent=1 // pred_check_branch
      %89 = sbr.rel (0) target = $region49
    $region48: #{_encoder_forward_impl.1} parent=1 // pred_region
      %90 = dma.done [#allocation7], 32768
    $region49: #{_encoder_forward_impl.1} parent=1 // pred_fallthru
      _
    // Predicated region
    $region50: #{_encoder_forward_impl.1} parent=1 // pred_check
      _
    $region51: #{_encoder_forward_impl.1} parent=1 // pred_check_branch
      %92 = sbr.rel (0) target = $region53
    $region52: #{_encoder_forward_impl.1} parent=1 // pred_region
      %93 = dma.done [#allocation7], 16384
    $region53: #{_encoder_forward_impl.1} parent=1 // pred_fallthru
      _
    // Predicated region
    $region54: #{_encoder_forward_impl.1} parent=1 // pred_check
      _
    $region55: #{_encoder_forward_impl.1} parent=1 // pred_check_branch
      %95 = sbr.rel (0) target = $region57
    $region56: #{_encoder_forward_impl.1} parent=1 // pred_region
      %96 = dma.done [#allocation10], 8192
    $region57: #{_encoder_forward_impl.1} parent=1 // pred_fallthru
      _
    // Predicated region
    $region58: #{_encoder_forward_impl.1} parent=1 // pred_check
      _
    $region59: #{_encoder_forward_impl.1} parent=1 // pred_check_branch
      %98 = sbr.rel (0) target = $region61
    $region60: #{_encoder_forward_impl.1} parent=1 // pred_region
      %99 = dma.done [#allocation10], 128
    $region61: #{_encoder_forward_impl.1} parent=1 // pred_fallthru
      _
    %p100 = scmp.eq.s32.totalorder 0, 0
    // Predicated region
    $region62: #{_encoder_forward_impl.1} parent=1 // pred_check
      %p101 = pneg %p100
    $region63: #{_encoder_forward_impl.1} parent=1 // pred_check_branch
      %103 = sbr.rel (%p101) target = $region65
    $region64: #{_encoder_forward_impl.1} parent=1 // pred_region
      %104 = vst [vmem:[#allocation2] sm:$0xff] 0.0
      %105 = vst [vmem:[#allocation2 + $0x8] sm:$0xff] 0.0
      %106 = vst [vmem:[#allocation2 + $0x10] sm:$0xff] 0.0
      %107 = vst [vmem:[#allocation2 + $0x18] sm:$0xff] 0.0
    $region65: #{_encoder_forward_impl.1} parent=1 // pred_fallthru
      _
    %v108 = vld [vmem:[#allocation2] sm:$0xff]
    %v109 = vld [vmem:[#allocation2 + $0x8] sm:$0xff]
    %v110 = vld [vmem:[#allocation2 + $0x10] sm:$0xff]
    %v111 = vld [vmem:[#allocation2 + $0x18] sm:$0xff]
    %v112 = vld [vmem:[#allocation3] sm:$0xff]
    %v113 = vld [vmem:[#allocation3 + $0x8] sm:$0xff]
    %v114 = vld [vmem:[#allocation3 + $0x10] sm:$0xff]
    %v115 = vld [vmem:[#allocation3 + $0x18] sm:$0xff]
    %v116 = vld [vmem:[#allocation6] sm:$0xff]
    %v117 = vld [vmem:[#allocation6 + $0x8] sm:$0xff]
    %v118 = vld [vmem:[#allocation6 + $0x10] sm:$0xff]
    %v119 = vld [vmem:[#allocation6 + $0x18] sm:$0xff]
    %v120 = vld [vmem:[#allocation6 + $0x20] sm:$0xff]
    %v121 = vld [vmem:[#allocation6 + $0x28] sm:$0xff]
    %v122 = vld [vmem:[#allocation6 + $0x30] sm:$0xff]
    %v123 = vld [vmem:[#allocation6 + $0x38] sm:$0xff]
    %v124 = vld [vmem:[#allocation6 + $0x40] sm:$0xff]
    %v125 = vld [vmem:[#allocation6 + $0x48] sm:$0xff]
    %v126 = vld [vmem:[#allocation6 + $0x50] sm:$0xff]
    %v127 = vld [vmem:[#allocation6 + $0x58] sm:$0xff]
    %v128 = vld [vmem:[#allocation6 + $0x60] sm:$0xff]
    %v129 = vld [vmem:[#allocation6 + $0x68] sm:$0xff]
    %v130 = vld [vmem:[#allocation6 + $0x70] sm:$0xff]
    %v131 = vld [vmem:[#allocation6 + $0x78] sm:$0xff]
    %v132 = vld [vmem:[#allocation6 + $0x80] sm:$0xff]
    %v133 = vld [vmem:[#allocation6 + $0x88] sm:$0xff]
    %v134 = vld [vmem:[#allocation6 + $0x90] sm:$0xff]
    %v135 = vld [vmem:[#allocation6 + $0x98] sm:$0xff]
    %v136 = vld [vmem:[#allocation6 + $0xa0] sm:$0xff]
    %v137 = vld [vmem:[#allocation6 + $0xa8] sm:$0xff]
    %v138 = vld [vmem:[#allocation6 + $0xb0] sm:$0xff]
    %v139 = vld [vmem:[#allocation6 + $0xb8] sm:$0xff]
    %v140 = vld [vmem:[#allocation6 + $0xc0] sm:$0xff]
    %v141 = vld [vmem:[#allocation6 + $0xc8] sm:$0xff]
    %v142 = vld [vmem:[#allocation6 + $0xd0] sm:$0xff]
    %v143 = vld [vmem:[#allocation6 + $0xd8] sm:$0xff]
    %v144 = vld [vmem:[#allocation6 + $0xe0] sm:$0xff]
    %v145 = vld [vmem:[#allocation6 + $0xe8] sm:$0xff]
    %v146 = vld [vmem:[#allocation6 + $0xf0] sm:$0xff]
    %v147 = vld [vmem:[#allocation6 + $0xf8] sm:$0xff]
    %v148 = vld [vmem:[#allocation6 + $0x100] sm:$0xff]
    %v149 = vld [vmem:[#allocation6 + $0x108] sm:$0xff]
    %v150 = vld [vmem:[#allocation6 + $0x110] sm:$0xff]
    %v151 = vld [vmem:[#allocation6 + $0x118] sm:$0xff]
    %v152 = vld [vmem:[#allocation6 + $0x120] sm:$0xff]
    %v153 = vld [vmem:[#allocation6 + $0x128] sm:$0xff]
    %v154 = vld [vmem:[#allocation6 + $0x130] sm:$0xff]
    %v155 = vld [vmem:[#allocation6 + $0x138] sm:$0xff]
    %v156 = vld [vmem:[#allocation6 + $0x140] sm:$0xff]
    %v157 = vld [vmem:[#allocation6 + $0x148] sm:$0xff]
    %v158 = vld [vmem:[#allocation6 + $0x150] sm:$0xff]
    %v159 = vld [vmem:[#allocation6 + $0x158] sm:$0xff]
    %v160 = vld [vmem:[#allocation6 + $0x160] sm:$0xff]
    %v161 = vld [vmem:[#allocation6 + $0x168] sm:$0xff]
    %v162 = vld [vmem:[#allocation6 + $0x170] sm:$0xff]
    %v163 = vld [vmem:[#allocation6 + $0x178] sm:$0xff]
    %v164 = vld [vmem:[#allocation6 + $0x180] sm:$0xff]
    %v165 = vld [vmem:[#allocation6 + $0x188] sm:$0xff]
    %v166 = vld [vmem:[#allocation6 + $0x190] sm:$0xff]
    %v167 = vld [vmem:[#allocation6 + $0x198] sm:$0xff]
    %v168 = vld [vmem:[#allocation6 + $0x1a0] sm:$0xff]
    %v169 = vld [vmem:[#allocation6 + $0x1a8] sm:$0xff]
    %v170 = vld [vmem:[#allocation6 + $0x1b0] sm:$0xff]
    %v171 = vld [vmem:[#allocation6 + $0x1b8] sm:$0xff]
    %v172 = vld [vmem:[#allocation6 + $0x1c0] sm:$0xff]
    %v173 = vld [vmem:[#allocation6 + $0x1c8] sm:$0xff]
    %v174 = vld [vmem:[#allocation6 + $0x1d0] sm:$0xff]
    %v175 = vld [vmem:[#allocation6 + $0x1d8] sm:$0xff]
    %v176 = vld [vmem:[#allocation6 + $0x1e0] sm:$0xff]
    %v177 = vld [vmem:[#allocation6 + $0x1e8] sm:$0xff]
    %v178 = vld [vmem:[#allocation6 + $0x1f0] sm:$0xff]
    %v179 = vld [vmem:[#allocation6 + $0x1f8] sm:$0xff]
    %v180 = vld [vmem:[#allocation6 + $0x200] sm:$0xff]
    %v181 = vld [vmem:[#allocation6 + $0x208] sm:$0xff]
    %v182 = vld [vmem:[#allocation6 + $0x210] sm:$0xff]
    %v183 = vld [vmem:[#allocation6 + $0x218] sm:$0xff]
    %v184 = vld [vmem:[#allocation6 + $0x220] sm:$0xff]
    %v185 = vld [vmem:[#allocation6 + $0x228] sm:$0xff]
    %v186 = vld [vmem:[#allocation6 + $0x230] sm:$0xff]
    %v187 = vld [vmem:[#allocation6 + $0x238] sm:$0xff]
    %v188 = vld [vmem:[#allocation6 + $0x240] sm:$0xff]
    %v189 = vld [vmem:[#allocation6 + $0x248] sm:$0xff]
    %v190 = vld [vmem:[#allocation6 + $0x250] sm:$0xff]
    %v191 = vld [vmem:[#allocation6 + $0x258] sm:$0xff]
    %v192 = vld [vmem:[#allocation6 + $0x260] sm:$0xff]
    %v193 = vld [vmem:[#allocation6 + $0x268] sm:$0xff]
    %v194 = vld [vmem:[#allocation6 + $0x270] sm:$0xff]
    %v195 = vld [vmem:[#allocation6 + $0x278] sm:$0xff]
    %v196 = vld [vmem:[#allocation6 + $0x280] sm:$0xff]
    %v197 = vld [vmem:[#allocation6 + $0x288] sm:$0xff]
    %v198 = vld [vmem:[#allocation6 + $0x290] sm:$0xff]
    %v199 = vld [vmem:[#allocation6 + $0x298] sm:$0xff]
    %v200 = vld [vmem:[#allocation6 + $0x2a0] sm:$0xff]
    %v201 = vld [vmem:[#allocation6 + $0x2a8] sm:$0xff]
    %v202 = vld [vmem:[#allocation6 + $0x2b0] sm:$0xff]
    %v203 = vld [vmem:[#allocation6 + $0x2b8] sm:$0xff]
    %v204 = vld [vmem:[#allocation6 + $0x2c0] sm:$0xff]
    %v205 = vld [vmem:[#allocation6 + $0x2c8] sm:$0xff]
    %v206 = vld [vmem:[#allocation6 + $0x2d0] sm:$0xff]
    %v207 = vld [vmem:[#allocation6 + $0x2d8] sm:$0xff]
    %v208 = vld [vmem:[#allocation6 + $0x2e0] sm:$0xff]
    %v209 = vld [vmem:[#allocation6 + $0x2e8] sm:$0xff]
    %v210 = vld [vmem:[#allocation6 + $0x2f0] sm:$0xff]
    %v211 = vld [vmem:[#allocation6 + $0x2f8] sm:$0xff]
    %v212 = vld [vmem:[#allocation6 + $0x300] sm:$0xff]
    %v213 = vld [vmem:[#allocation6 + $0x308] sm:$0xff]
    %v214 = vld [vmem:[#allocation6 + $0x310] sm:$0xff]
    %v215 = vld [vmem:[#allocation6 + $0x318] sm:$0xff]
    %v216 = vld [vmem:[#allocation6 + $0x320] sm:$0xff]
    %v217 = vld [vmem:[#allocation6 + $0x328] sm:$0xff]
    %v218 = vld [vmem:[#allocation6 + $0x330] sm:$0xff]
    %v219 = vld [vmem:[#allocation6 + $0x338] sm:$0xff]
    %v220 = vld [vmem:[#allocation6 + $0x340] sm:$0xff]
    %v221 = vld [vmem:[#allocation6 + $0x348] sm:$0xff]
    %v222 = vld [vmem:[#allocation6 + $0x350] sm:$0xff]
    %v223 = vld [vmem:[#allocation6 + $0x358] sm:$0xff]
    %v224 = vld [vmem:[#allocation6 + $0x360] sm:$0xff]
    %v225 = vld [vmem:[#allocation6 + $0x368] sm:$0xff]
    %v226 = vld [vmem:[#allocation6 + $0x370] sm:$0xff]
    %v227 = vld [vmem:[#allocation6 + $0x378] sm:$0xff]
    %v228 = vld [vmem:[#allocation6 + $0x380] sm:$0xff]
    %v229 = vld [vmem:[#allocation6 + $0x388] sm:$0xff]
    %v230 = vld [vmem:[#allocation6 + $0x390] sm:$0xff]
    %v231 = vld [vmem:[#allocation6 + $0x398] sm:$0xff]
    %v232 = vld [vmem:[#allocation6 + $0x3a0] sm:$0xff]
    %v233 = vld [vmem:[#allocation6 + $0x3a8] sm:$0xff]
    %v234 = vld [vmem:[#allocation6 + $0x3b0] sm:$0xff]
    %v235 = vld [vmem:[#allocation6 + $0x3b8] sm:$0xff]
    %v236 = vld [vmem:[#allocation6 + $0x3c0] sm:$0xff]
    %v237 = vld [vmem:[#allocation6 + $0x3c8] sm:$0xff]
    %v238 = vld [vmem:[#allocation6 + $0x3d0] sm:$0xff]
    %v239 = vld [vmem:[#allocation6 + $0x3d8] sm:$0xff]
    %v240 = vld [vmem:[#allocation6 + $0x3e0] sm:$0xff]
    %v241 = vld [vmem:[#allocation6 + $0x3e8] sm:$0xff]
    %v242 = vld [vmem:[#allocation6 + $0x3f0] sm:$0xff]
    %v243 = vld [vmem:[#allocation6 + $0x3f8] sm:$0xff]
    %v244 = vld [vmem:[#allocation6 + $0x400] sm:$0xff]
    %v245 = vld [vmem:[#allocation6 + $0x408] sm:$0xff]
    %v246 = vld [vmem:[#allocation6 + $0x410] sm:$0xff]
    %v247 = vld [vmem:[#allocation6 + $0x418] sm:$0xff]
    %v248 = vld [vmem:[#allocation6 + $0x420] sm:$0xff]
    %v249 = vld [vmem:[#allocation6 + $0x428] sm:$0xff]
    %v250 = vld [vmem:[#allocation6 + $0x430] sm:$0xff]
    %v251 = vld [vmem:[#allocation6 + $0x438] sm:$0xff]
    %v252 = vld [vmem:[#allocation6 + $0x440] sm:$0xff]
    %v253 = vld [vmem:[#allocation6 + $0x448] sm:$0xff]
    %v254 = vld [vmem:[#allocation6 + $0x450] sm:$0xff]
    %v255 = vld [vmem:[#allocation6 + $0x458] sm:$0xff]
    %v256 = vld [vmem:[#allocation6 + $0x460] sm:$0xff]
    %v257 = vld [vmem:[#allocation6 + $0x468] sm:$0xff]
    %v258 = vld [vmem:[#allocation6 + $0x470] sm:$0xff]
    %v259 = vld [vmem:[#allocation6 + $0x478] sm:$0xff]
    %v260 = vld [vmem:[#allocation6 + $0x480] sm:$0xff]
    %v261 = vld [vmem:[#allocation6 + $0x488] sm:$0xff]
    %v262 = vld [vmem:[#allocation6 + $0x490] sm:$0xff]
    %v263 = vld [vmem:[#allocation6 + $0x498] sm:$0xff]
    %v264 = vld [vmem:[#allocation6 + $0x4a0] sm:$0xff]
    %v265 = vld [vmem:[#allocation6 + $0x4a8] sm:$0xff]
    %v266 = vld [vmem:[#allocation6 + $0x4b0] sm:$0xff]
    %v267 = vld [vmem:[#allocation6 + $0x4b8] sm:$0xff]
    %v268 = vld [vmem:[#allocation6 + $0x4c0] sm:$0xff]
    %v269 = vld [vmem:[#allocation6 + $0x4c8] sm:$0xff]
    %v270 = vld [vmem:[#allocation6 + $0x4d0] sm:$0xff]
    %v271 = vld [vmem:[#allocation6 + $0x4d8] sm:$0xff]
    %v272 = vld [vmem:[#allocation6 + $0x4e0] sm:$0xff]
    %v273 = vld [vmem:[#allocation6 + $0x4e8] sm:$0xff]
    %v274 = vld [vmem:[#allocation6 + $0x4f0] sm:$0xff]
    %v275 = vld [vmem:[#allocation6 + $0x4f8] sm:$0xff]
    %v276 = vld [vmem:[#allocation6 + $0x500] sm:$0xff]
    %v277 = vld [vmem:[#allocation6 + $0x508] sm:$0xff]
    %v278 = vld [vmem:[#allocation6 + $0x510] sm:$0xff]
    %v279 = vld [vmem:[#allocation6 + $0x518] sm:$0xff]
    %v280 = vld [vmem:[#allocation6 + $0x520] sm:$0xff]
    %v281 = vld [vmem:[#allocation6 + $0x528] sm:$0xff]
    %v282 = vld [vmem:[#allocation6 + $0x530] sm:$0xff]
    %v283 = vld [vmem:[#allocation6 + $0x538] sm:$0xff]
    %v284 = vld [vmem:[#allocation6 + $0x540] sm:$0xff]
    %v285 = vld [vmem:[#allocation6 + $0x548] sm:$0xff]
    %v286 = vld [vmem:[#allocation6 + $0x550] sm:$0xff]
    %v287 = vld [vmem:[#allocation6 + $0x558] sm:$0xff]
    %v288 = vld [vmem:[#allocation6 + $0x560] sm:$0xff]
    %v289 = vld [vmem:[#allocation6 + $0x568] sm:$0xff]
    %v290 = vld [vmem:[#allocation6 + $0x570] sm:$0xff]
    %v291 = vld [vmem:[#allocation6 + $0x578] sm:$0xff]
    %v292 = vld [vmem:[#allocation6 + $0x580] sm:$0xff]
    %v293 = vld [vmem:[#allocation6 + $0x588] sm:$0xff]
    %v294 = vld [vmem:[#allocation6 + $0x590] sm:$0xff]
    %v295 = vld [vmem:[#allocation6 + $0x598] sm:$0xff]
    %v296 = vld [vmem:[#allocation6 + $0x5a0] sm:$0xff]
    %v297 = vld [vmem:[#allocation6 + $0x5a8] sm:$0xff]
    %v298 = vld [vmem:[#allocation6 + $0x5b0] sm:$0xff]
    %v299 = vld [vmem:[#allocation6 + $0x5b8] sm:$0xff]
    %v300 = vld [vmem:[#allocation6 + $0x5c0] sm:$0xff]
    %v301 = vld [vmem:[#allocation6 + $0x5c8] sm:$0xff]
    %v302 = vld [vmem:[#allocation6 + $0x5d0] sm:$0xff]
    %v303 = vld [vmem:[#allocation6 + $0x5d8] sm:$0xff]
    %v304 = vld [vmem:[#allocation6 + $0x5e0] sm:$0xff]
    %v305 = vld [vmem:[#allocation6 + $0x5e8] sm:$0xff]
    %v306 = vld [vmem:[#allocation6 + $0x5f0] sm:$0xff]
    %v307 = vld [vmem:[#allocation6 + $0x5f8] sm:$0xff]
    %v308 = vld [vmem:[#allocation6 + $0x600] sm:$0xff]
    %v309 = vld [vmem:[#allocation6 + $0x608] sm:$0xff]
    %v310 = vld [vmem:[#allocation6 + $0x610] sm:$0xff]
    %v311 = vld [vmem:[#allocation6 + $0x618] sm:$0xff]
    %v312 = vld [vmem:[#allocation6 + $0x620] sm:$0xff]
    %v313 = vld [vmem:[#allocation6 + $0x628] sm:$0xff]
    %v314 = vld [vmem:[#allocation6 + $0x630] sm:$0xff]
    %v315 = vld [vmem:[#allocation6 + $0x638] sm:$0xff]
    %v316 = vld [vmem:[#allocation6 + $0x640] sm:$0xff]
    %v317 = vld [vmem:[#allocation6 + $0x648] sm:$0xff]
    %v318 = vld [vmem:[#allocation6 + $0x650] sm:$0xff]
    %v319 = vld [vmem:[#allocation6 + $0x658] sm:$0xff]
    %v320 = vld [vmem:[#allocation6 + $0x660] sm:$0xff]
    %v321 = vld [vmem:[#allocation6 + $0x668] sm:$0xff]
    %v322 = vld [vmem:[#allocation6 + $0x670] sm:$0xff]
    %v323 = vld [vmem:[#allocation6 + $0x678] sm:$0xff]
    %v324 = vld [vmem:[#allocation6 + $0x680] sm:$0xff]
    %v325 = vld [vmem:[#allocation6 + $0x688] sm:$0xff]
    %v326 = vld [vmem:[#allocation6 + $0x690] sm:$0xff]
    %v327 = vld [vmem:[#allocation6 + $0x698] sm:$0xff]
    %v328 = vld [vmem:[#allocation6 + $0x6a0] sm:$0xff]
    %v329 = vld [vmem:[#allocation6 + $0x6a8] sm:$0xff]
    %v330 = vld [vmem:[#allocation6 + $0x6b0] sm:$0xff]
    %v331 = vld [vmem:[#allocation6 + $0x6b8] sm:$0xff]
    %v332 = vld [vmem:[#allocation6 + $0x6c0] sm:$0xff]
    %v333 = vld [vmem:[#allocation6 + $0x6c8] sm:$0xff]
    %v334 = vld [vmem:[#allocation6 + $0x6d0] sm:$0xff]
    %v335 = vld [vmem:[#allocation6 + $0x6d8] sm:$0xff]
    %v336 = vld [vmem:[#allocation6 + $0x6e0] sm:$0xff]
    %v337 = vld [vmem:[#allocation6 + $0x6e8] sm:$0xff]
    %v338 = vld [vmem:[#allocation6 + $0x6f0] sm:$0xff]
    %v339 = vld [vmem:[#allocation6 + $0x6f8] sm:$0xff]
    %v340 = vld [vmem:[#allocation6 + $0x700] sm:$0xff]
    %v341 = vld [vmem:[#allocation6 + $0x708] sm:$0xff]
    %v342 = vld [vmem:[#allocation6 + $0x710] sm:$0xff]
    %v343 = vld [vmem:[#allocation6 + $0x718] sm:$0xff]
    %v344 = vld [vmem:[#allocation6 + $0x720] sm:$0xff]
    %v345 = vld [vmem:[#allocation6 + $0x728] sm:$0xff]
    %v346 = vld [vmem:[#allocation6 + $0x730] sm:$0xff]
    %v347 = vld [vmem:[#allocation6 + $0x738] sm:$0xff]
    %v348 = vld [vmem:[#allocation6 + $0x740] sm:$0xff]
    %v349 = vld [vmem:[#allocation6 + $0x748] sm:$0xff]
    %v350 = vld [vmem:[#allocation6 + $0x750] sm:$0xff]
    %v351 = vld [vmem:[#allocation6 + $0x758] sm:$0xff]
    %v352 = vld [vmem:[#allocation6 + $0x760] sm:$0xff]
    %v353 = vld [vmem:[#allocation6 + $0x768] sm:$0xff]
    %v354 = vld [vmem:[#allocation6 + $0x770] sm:$0xff]
    %v355 = vld [vmem:[#allocation6 + $0x778] sm:$0xff]
    %v356 = vld [vmem:[#allocation6 + $0x780] sm:$0xff]
    %v357 = vld [vmem:[#allocation6 + $0x788] sm:$0xff]
    %v358 = vld [vmem:[#allocation6 + $0x790] sm:$0xff]
    %v359 = vld [vmem:[#allocation6 + $0x798] sm:$0xff]
    %v360 = vld [vmem:[#allocation6 + $0x7a0] sm:$0xff]
    %v361 = vld [vmem:[#allocation6 + $0x7a8] sm:$0xff]
    %v362 = vld [vmem:[#allocation6 + $0x7b0] sm:$0xff]
    %v363 = vld [vmem:[#allocation6 + $0x7b8] sm:$0xff]
    %v364 = vld [vmem:[#allocation6 + $0x7c0] sm:$0xff]
    %v365 = vld [vmem:[#allocation6 + $0x7c8] sm:$0xff]
    %v366 = vld [vmem:[#allocation6 + $0x7d0] sm:$0xff]
    %v367 = vld [vmem:[#allocation6 + $0x7d8] sm:$0xff]
    %v368 = vld [vmem:[#allocation6 + $0x7e0] sm:$0xff]
    %v369 = vld [vmem:[#allocation6 + $0x7e8] sm:$0xff]
    %v370 = vld [vmem:[#allocation6 + $0x7f0] sm:$0xff]
    %v371 = vld [vmem:[#allocation6 + $0x7f8] sm:$0xff]
    %v376 = vunpack.c.l.b16 %v112
    %v377 = vunpack.c.h.b16 %v112
    %v378 = vunpack.c.l.b16 %v113
    %v379 = vunpack.c.h.b16 %v113
    %v380 = vunpack.c.l.b16 %v114
    %v381 = vunpack.c.h.b16 %v114
    %v382 = vunpack.c.l.b16 %v115
    %v383 = vunpack.c.h.b16 %v115
    %v384 = vpack.c.b16 %v376, %v376
    %v385 = vpack.c.b16 %v377, %v377
    %v386 = vpack.c.b16 %v378, %v378
    %v387 = vpack.c.b16 %v379, %v379
    %v388 = vpack.c.b16 %v380, %v380
    %v389 = vpack.c.b16 %v381, %v381
    %v390 = vpack.c.b16 %v382, %v382
    %v391 = vpack.c.b16 %v383, %v383
    %v656 = vunpack.c.l.b16 %v116
    %v657 = vunpack.c.h.b16 %v116
    %v658 = vunpack.c.l.b16 %v117
    %v659 = vunpack.c.h.b16 %v117
    %v660 = vunpack.c.l.b16 %v118
    %v661 = vunpack.c.h.b16 %v118
    %v662 = vunpack.c.l.b16 %v119
    %v663 = vunpack.c.h.b16 %v119
    %v664 = vunpack.c.l.b16 %v120
    %v665 = vunpack.c.h.b16 %v120
    %v666 = vunpack.c.l.b16 %v121
    %v667 = vunpack.c.h.b16 %v121
    %v668 = vunpack.c.l.b16 %v122
    %v669 = vunpack.c.h.b16 %v122
    %v670 = vunpack.c.l.b16 %v123
    %v671 = vunpack.c.h.b16 %v123
    %v672 = vunpack.c.l.b16 %v124
    %v673 = vunpack.c.h.b16 %v124
    %v674 = vunpack.c.l.b16 %v125
    %v675 = vunpack.c.h.b16 %v125
    %v676 = vunpack.c.l.b16 %v126
    %v677 = vunpack.c.h.b16 %v126
    %v678 = vunpack.c.l.b16 %v127
    %v679 = vunpack.c.h.b16 %v127
    %v680 = vunpack.c.l.b16 %v128
    %v681 = vunpack.c.h.b16 %v128
    %v682 = vunpack.c.l.b16 %v129
    %v683 = vunpack.c.h.b16 %v129
    %v684 = vunpack.c.l.b16 %v130
    %v685 = vunpack.c.h.b16 %v130
    %v686 = vunpack.c.l.b16 %v131
    %v687 = vunpack.c.h.b16 %v131
    %v688 = vunpack.c.l.b16 %v132
    %v689 = vunpack.c.h.b16 %v132
    %v690 = vunpack.c.l.b16 %v133
    %v691 = vunpack.c.h.b16 %v133
    %v692 = vunpack.c.l.b16 %v134
    %v693 = vunpack.c.h.b16 %v134
    %v694 = vunpack.c.l.b16 %v135
    %v695 = vunpack.c.h.b16 %v135
    %v696 = vunpack.c.l.b16 %v136
    %v697 = vunpack.c.h.b16 %v136
    %v698 = vunpack.c.l.b16 %v137
    %v699 = vunpack.c.h.b16 %v137
    %v700 = vunpack.c.l.b16 %v138
    %v701 = vunpack.c.h.b16 %v138
    %v702 = vunpack.c.l.b16 %v139
    %v703 = vunpack.c.h.b16 %v139
    %v704 = vunpack.c.l.b16 %v140
    %v705 = vunpack.c.h.b16 %v140
    %v706 = vunpack.c.l.b16 %v141
    %v707 = vunpack.c.h.b16 %v141
    %v708 = vunpack.c.l.b16 %v142
    %v709 = vunpack.c.h.b16 %v142
    %v710 = vunpack.c.l.b16 %v143
    %v711 = vunpack.c.h.b16 %v143
    %v712 = vunpack.c.l.b16 %v144
    %v713 = vunpack.c.h.b16 %v144
    %v714 = vunpack.c.l.b16 %v145
    %v715 = vunpack.c.h.b16 %v145
    %v716 = vunpack.c.l.b16 %v146
    %v717 = vunpack.c.h.b16 %v146
    %v718 = vunpack.c.l.b16 %v147
    %v719 = vunpack.c.h.b16 %v147
    %v720 = vunpack.c.l.b16 %v148
    %v721 = vunpack.c.h.b16 %v148
    %v722 = vunpack.c.l.b16 %v149
    %v723 = vunpack.c.h.b16 %v149
    %v724 = vunpack.c.l.b16 %v150
    %v725 = vunpack.c.h.b16 %v150
    %v726 = vunpack.c.l.b16 %v151
    %v727 = vunpack.c.h.b16 %v151
    %v728 = vunpack.c.l.b16 %v152
    %v729 = vunpack.c.h.b16 %v152
    %v730 = vunpack.c.l.b16 %v153
    %v731 = vunpack.c.h.b16 %v153
    %v732 = vunpack.c.l.b16 %v154
    %v733 = vunpack.c.h.b16 %v154
    %v734 = vunpack.c.l.b16 %v155
    %v735 = vunpack.c.h.b16 %v155
    %v736 = vunpack.c.l.b16 %v156
    %v737 = vunpack.c.h.b16 %v156
    %v738 = vunpack.c.l.b16 %v157
    %v739 = vunpack.c.h.b16 %v157
    %v740 = vunpack.c.l.b16 %v158
    %v741 = vunpack.c.h.b16 %v158
    %v742 = vunpack.c.l.b16 %v159
    %v743 = vunpack.c.h.b16 %v159
    %v744 = vunpack.c.l.b16 %v160
    %v745 = vunpack.c.h.b16 %v160
    %v746 = vunpack.c.l.b16 %v161
    %v747 = vunpack.c.h.b16 %v161
    %v748 = vunpack.c.l.b16 %v162
    %v749 = vunpack.c.h.b16 %v162
    %v750 = vunpack.c.l.b16 %v163
    %v751 = vunpack.c.h.b16 %v163
    %v752 = vunpack.c.l.b16 %v164
    %v753 = vunpack.c.h.b16 %v164
    %v754 = vunpack.c.l.b16 %v165
    %v755 = vunpack.c.h.b16 %v165
    %v756 = vunpack.c.l.b16 %v166
    %v757 = vunpack.c.h.b16 %v166
    %v758 = vunpack.c.l.b16 %v167
    %v759 = vunpack.c.h.b16 %v167
    %v760 = vunpack.c.l.b16 %v168
    %v761 = vunpack.c.h.b16 %v168
    %v762 = vunpack.c.l.b16 %v169
    %v763 = vunpack.c.h.b16 %v169
    %v764 = vunpack.c.l.b16 %v170
    %v765 = vunpack.c.h.b16 %v170
    %v766 = vunpack.c.l.b16 %v171
    %v767 = vunpack.c.h.b16 %v171
    %v768 = vunpack.c.l.b16 %v172
    %v769 = vunpack.c.h.b16 %v172
    %v770 = vunpack.c.l.b16 %v173
    %v771 = vunpack.c.h.b16 %v173
    %v772 = vunpack.c.l.b16 %v174
    %v773 = vunpack.c.h.b16 %v174
    %v774 = vunpack.c.l.b16 %v175
    %v775 = vunpack.c.h.b16 %v175
    %v776 = vunpack.c.l.b16 %v176
    %v777 = vunpack.c.h.b16 %v176
    %v778 = vunpack.c.l.b16 %v177
    %v779 = vunpack.c.h.b16 %v177
    %v780 = vunpack.c.l.b16 %v178
    %v781 = vunpack.c.h.b16 %v178
    %v782 = vunpack.c.l.b16 %v179
    %v783 = vunpack.c.h.b16 %v179
    %v784 = vunpack.c.l.b16 %v180
    %v785 = vunpack.c.h.b16 %v180
    %v786 = vunpack.c.l.b16 %v181
    %v787 = vunpack.c.h.b16 %v181
    %v788 = vunpack.c.l.b16 %v182
    %v789 = vunpack.c.h.b16 %v182
    %v790 = vunpack.c.l.b16 %v183
    %v791 = vunpack.c.h.b16 %v183
    %v792 = vunpack.c.l.b16 %v184
    %v793 = vunpack.c.h.b16 %v184
    %v794 = vunpack.c.l.b16 %v185
    %v795 = vunpack.c.h.b16 %v185
    %v796 = vunpack.c.l.b16 %v186
    %v797 = vunpack.c.h.b16 %v186
    %v798 = vunpack.c.l.b16 %v187
    %v799 = vunpack.c.h.b16 %v187
    %v800 = vunpack.c.l.b16 %v188
    %v801 = vunpack.c.h.b16 %v188
    %v802 = vunpack.c.l.b16 %v189
    %v803 = vunpack.c.h.b16 %v189
    %v804 = vunpack.c.l.b16 %v190
    %v805 = vunpack.c.h.b16 %v190
    %v806 = vunpack.c.l.b16 %v191
    %v807 = vunpack.c.h.b16 %v191
    %v808 = vunpack.c.l.b16 %v192
    %v809 = vunpack.c.h.b16 %v192
    %v810 = vunpack.c.l.b16 %v193
    %v811 = vunpack.c.h.b16 %v193
    %v812 = vunpack.c.l.b16 %v194
    %v813 = vunpack.c.h.b16 %v194
    %v814 = vunpack.c.l.b16 %v195
    %v815 = vunpack.c.h.b16 %v195
    %v816 = vunpack.c.l.b16 %v196
    %v817 = vunpack.c.h.b16 %v196
    %v818 = vunpack.c.l.b16 %v197
    %v819 = vunpack.c.h.b16 %v197
    %v820 = vunpack.c.l.b16 %v198
    %v821 = vunpack.c.h.b16 %v198
    %v822 = vunpack.c.l.b16 %v199
    %v823 = vunpack.c.h.b16 %v199
    %v824 = vunpack.c.l.b16 %v200
    %v825 = vunpack.c.h.b16 %v200
    %v826 = vunpack.c.l.b16 %v201
    %v827 = vunpack.c.h.b16 %v201
    %v828 = vunpack.c.l.b16 %v202
    %v829 = vunpack.c.h.b16 %v202
    %v830 = vunpack.c.l.b16 %v203
    %v831 = vunpack.c.h.b16 %v203
    %v832 = vunpack.c.l.b16 %v204
    %v833 = vunpack.c.h.b16 %v204
    %v834 = vunpack.c.l.b16 %v205
    %v835 = vunpack.c.h.b16 %v205
    %v836 = vunpack.c.l.b16 %v206
    %v837 = vunpack.c.h.b16 %v206
    %v838 = vunpack.c.l.b16 %v207
    %v839 = vunpack.c.h.b16 %v207
    %v840 = vunpack.c.l.b16 %v208
    %v841 = vunpack.c.h.b16 %v208
    %v842 = vunpack.c.l.b16 %v209
    %v843 = vunpack.c.h.b16 %v209
    %v844 = vunpack.c.l.b16 %v210
    %v845 = vunpack.c.h.b16 %v210
    %v846 = vunpack.c.l.b16 %v211
    %v847 = vunpack.c.h.b16 %v211
    %v848 = vunpack.c.l.b16 %v212
    %v849 = vunpack.c.h.b16 %v212
    %v850 = vunpack.c.l.b16 %v213
    %v851 = vunpack.c.h.b16 %v213
    %v852 = vunpack.c.l.b16 %v214
    %v853 = vunpack.c.h.b16 %v214
    %v854 = vunpack.c.l.b16 %v215
    %v855 = vunpack.c.h.b16 %v215
    %v856 = vunpack.c.l.b16 %v216
    %v857 = vunpack.c.h.b16 %v216
    %v858 = vunpack.c.l.b16 %v217
    %v859 = vunpack.c.h.b16 %v217
    %v860 = vunpack.c.l.b16 %v218
    %v861 = vunpack.c.h.b16 %v218
    %v862 = vunpack.c.l.b16 %v219
    %v863 = vunpack.c.h.b16 %v219
    %v864 = vunpack.c.l.b16 %v220
    %v865 = vunpack.c.h.b16 %v220
    %v866 = vunpack.c.l.b16 %v221
    %v867 = vunpack.c.h.b16 %v221
    %v868 = vunpack.c.l.b16 %v222
    %v869 = vunpack.c.h.b16 %v222
    %v870 = vunpack.c.l.b16 %v223
    %v871 = vunpack.c.h.b16 %v223
    %v872 = vunpack.c.l.b16 %v224
    %v873 = vunpack.c.h.b16 %v224
    %v874 = vunpack.c.l.b16 %v225
    %v875 = vunpack.c.h.b16 %v225
    %v876 = vunpack.c.l.b16 %v226
    %v877 = vunpack.c.h.b16 %v226
    %v878 = vunpack.c.l.b16 %v227
    %v879 = vunpack.c.h.b16 %v227
    %v880 = vunpack.c.l.b16 %v228
    %v881 = vunpack.c.h.b16 %v228
    %v882 = vunpack.c.l.b16 %v229
    %v883 = vunpack.c.h.b16 %v229
    %v884 = vunpack.c.l.b16 %v230
    %v885 = vunpack.c.h.b16 %v230
    %v886 = vunpack.c.l.b16 %v231
    %v887 = vunpack.c.h.b16 %v231
    %v888 = vunpack.c.l.b16 %v232
    %v889 = vunpack.c.h.b16 %v232
    %v890 = vunpack.c.l.b16 %v233
    %v891 = vunpack.c.h.b16 %v233
    %v892 = vunpack.c.l.b16 %v234
    %v893 = vunpack.c.h.b16 %v234
    %v894 = vunpack.c.l.b16 %v235
    %v895 = vunpack.c.h.b16 %v235
    %v896 = vunpack.c.l.b16 %v236
    %v897 = vunpack.c.h.b16 %v236
    %v898 = vunpack.c.l.b16 %v237
    %v899 = vunpack.c.h.b16 %v237
    %v900 = vunpack.c.l.b16 %v238
    %v901 = vunpack.c.h.b16 %v238
    %v902 = vunpack.c.l.b16 %v239
    %v903 = vunpack.c.h.b16 %v239
    %v904 = vunpack.c.l.b16 %v240
    %v905 = vunpack.c.h.b16 %v240
    %v906 = vunpack.c.l.b16 %v241
    %v907 = vunpack.c.h.b16 %v241
    %v908 = vunpack.c.l.b16 %v242
    %v909 = vunpack.c.h.b16 %v242
    %v910 = vunpack.c.l.b16 %v243
    %v911 = vunpack.c.h.b16 %v243
    %v912 = vunpack.c.l.b16 %v244
    %v913 = vunpack.c.h.b16 %v244
    %v914 = vunpack.c.l.b16 %v245
    %v915 = vunpack.c.h.b16 %v245
    %v916 = vunpack.c.l.b16 %v246
    %v917 = vunpack.c.h.b16 %v246
    %v918 = vunpack.c.l.b16 %v247
    %v919 = vunpack.c.h.b16 %v247
    %v920 = vunpack.c.l.b16 %v248
    %v921 = vunpack.c.h.b16 %v248
    %v922 = vunpack.c.l.b16 %v249
    %v923 = vunpack.c.h.b16 %v249
    %v924 = vunpack.c.l.b16 %v250
    %v925 = vunpack.c.h.b16 %v250
    %v926 = vunpack.c.l.b16 %v251
    %v927 = vunpack.c.h.b16 %v251
    %v928 = vunpack.c.l.b16 %v252
    %v929 = vunpack.c.h.b16 %v252
    %v930 = vunpack.c.l.b16 %v253
    %v931 = vunpack.c.h.b16 %v253
    %v932 = vunpack.c.l.b16 %v254
    %v933 = vunpack.c.h.b16 %v254
    %v934 = vunpack.c.l.b16 %v255
    %v935 = vunpack.c.h.b16 %v255
    %v936 = vunpack.c.l.b16 %v256
    %v937 = vunpack.c.h.b16 %v256
    %v938 = vunpack.c.l.b16 %v257
    %v939 = vunpack.c.h.b16 %v257
    %v940 = vunpack.c.l.b16 %v258
    %v941 = vunpack.c.h.b16 %v258
    %v942 = vunpack.c.l.b16 %v259
    %v943 = vunpack.c.h.b16 %v259
    %v944 = vunpack.c.l.b16 %v260
    %v945 = vunpack.c.h.b16 %v260
    %v946 = vunpack.c.l.b16 %v261
    %v947 = vunpack.c.h.b16 %v261
    %v948 = vunpack.c.l.b16 %v262
    %v949 = vunpack.c.h.b16 %v262
    %v950 = vunpack.c.l.b16 %v263
    %v951 = vunpack.c.h.b16 %v263
    %v952 = vunpack.c.l.b16 %v264
    %v953 = vunpack.c.h.b16 %v264
    %v954 = vunpack.c.l.b16 %v265
    %v955 = vunpack.c.h.b16 %v265
    %v956 = vunpack.c.l.b16 %v266
    %v957 = vunpack.c.h.b16 %v266
    %v958 = vunpack.c.l.b16 %v267
    %v959 = vunpack.c.h.b16 %v267
    %v960 = vunpack.c.l.b16 %v268
    %v961 = vunpack.c.h.b16 %v268
    %v962 = vunpack.c.l.b16 %v269
    %v963 = vunpack.c.h.b16 %v269
    %v964 = vunpack.c.l.b16 %v270
    %v965 = vunpack.c.h.b16 %v270
    %v966 = vunpack.c.l.b16 %v271
    %v967 = vunpack.c.h.b16 %v271
    %v968 = vunpack.c.l.b16 %v272
    %v969 = vunpack.c.h.b16 %v272
    %v970 = vunpack.c.l.b16 %v273
    %v971 = vunpack.c.h.b16 %v273
    %v972 = vunpack.c.l.b16 %v274
    %v973 = vunpack.c.h.b16 %v274
    %v974 = vunpack.c.l.b16 %v275
    %v975 = vunpack.c.h.b16 %v275
    %v976 = vunpack.c.l.b16 %v276
    %v977 = vunpack.c.h.b16 %v276
    %v978 = vunpack.c.l.b16 %v277
    %v979 = vunpack.c.h.b16 %v277
    %v980 = vunpack.c.l.b16 %v278
    %v981 = vunpack.c.h.b16 %v278
    %v982 = vunpack.c.l.b16 %v279
    %v983 = vunpack.c.h.b16 %v279
    %v984 = vunpack.c.l.b16 %v280
    %v985 = vunpack.c.h.b16 %v280
    %v986 = vunpack.c.l.b16 %v281
    %v987 = vunpack.c.h.b16 %v281
    %v988 = vunpack.c.l.b16 %v282
    %v989 = vunpack.c.h.b16 %v282
    %v990 = vunpack.c.l.b16 %v283
    %v991 = vunpack.c.h.b16 %v283
    %v992 = vunpack.c.l.b16 %v284
    %v993 = vunpack.c.h.b16 %v284
    %v994 = vunpack.c.l.b16 %v285
    %v995 = vunpack.c.h.b16 %v285
    %v996 = vunpack.c.l.b16 %v286
    %v997 = vunpack.c.h.b16 %v286
    %v998 = vunpack.c.l.b16 %v287
    %v999 = vunpack.c.h.b16 %v287
    %v1000 = vunpack.c.l.b16 %v288
    %v1001 = vunpack.c.h.b16 %v288
    %v1002 = vunpack.c.l.b16 %v289
    %v1003 = vunpack.c.h.b16 %v289
    %v1004 = vunpack.c.l.b16 %v290
    %v1005 = vunpack.c.h.b16 %v290
    %v1006 = vunpack.c.l.b16 %v291
    %v1007 = vunpack.c.h.b16 %v291
    %v1008 = vunpack.c.l.b16 %v292
    %v1009 = vunpack.c.h.b16 %v292
    %v1010 = vunpack.c.l.b16 %v293
    %v1011 = vunpack.c.h.b16 %v293
    %v1012 = vunpack.c.l.b16 %v294
    %v1013 = vunpack.c.h.b16 %v294
    %v1014 = vunpack.c.l.b16 %v295
    %v1015 = vunpack.c.h.b16 %v295
    %v1016 = vunpack.c.l.b16 %v296
    %v1017 = vunpack.c.h.b16 %v296
    %v1018 = vunpack.c.l.b16 %v297
    %v1019 = vunpack.c.h.b16 %v297
    %v1020 = vunpack.c.l.b16 %v298
    %v1021 = vunpack.c.h.b16 %v298
    %v1022 = vunpack.c.l.b16 %v299
    %v1023 = vunpack.c.h.b16 %v299
    %v1024 = vunpack.c.l.b16 %v300
    %v1025 = vunpack.c.h.b16 %v300
    %v1026 = vunpack.c.l.b16 %v301
    %v1027 = vunpack.c.h.b16 %v301
    %v1028 = vunpack.c.l.b16 %v302
    %v1029 = vunpack.c.h.b16 %v302
    %v1030 = vunpack.c.l.b16 %v303
    %v1031 = vunpack.c.h.b16 %v303
    %v1032 = vunpack.c.l.b16 %v304
    %v1033 = vunpack.c.h.b16 %v304
    %v1034 = vunpack.c.l.b16 %v305
    %v1035 = vunpack.c.h.b16 %v305
    %v1036 = vunpack.c.l.b16 %v306
    %v1037 = vunpack.c.h.b16 %v306
    %v1038 = vunpack.c.l.b16 %v307
    %v1039 = vunpack.c.h.b16 %v307
    %v1040 = vunpack.c.l.b16 %v308
    %v1041 = vunpack.c.h.b16 %v308
    %v1042 = vunpack.c.l.b16 %v309
    %v1043 = vunpack.c.h.b16 %v309
    %v1044 = vunpack.c.l.b16 %v310
    %v1045 = vunpack.c.h.b16 %v310
    %v1046 = vunpack.c.l.b16 %v311
    %v1047 = vunpack.c.h.b16 %v311
    %v1048 = vunpack.c.l.b16 %v312
    %v1049 = vunpack.c.h.b16 %v312
    %v1050 = vunpack.c.l.b16 %v313
    %v1051 = vunpack.c.h.b16 %v313
    %v1052 = vunpack.c.l.b16 %v314
    %v1053 = vunpack.c.h.b16 %v314
    %v1054 = vunpack.c.l.b16 %v315
    %v1055 = vunpack.c.h.b16 %v315
    %v1056 = vunpack.c.l.b16 %v316
    %v1057 = vunpack.c.h.b16 %v316
    %v1058 = vunpack.c.l.b16 %v317
    %v1059 = vunpack.c.h.b16 %v317
    %v1060 = vunpack.c.l.b16 %v318
    %v1061 = vunpack.c.h.b16 %v318
    %v1062 = vunpack.c.l.b16 %v319
    %v1063 = vunpack.c.h.b16 %v319
    %v1064 = vunpack.c.l.b16 %v320
    %v1065 = vunpack.c.h.b16 %v320
    %v1066 = vunpack.c.l.b16 %v321
    %v1067 = vunpack.c.h.b16 %v321
    %v1068 = vunpack.c.l.b16 %v322
    %v1069 = vunpack.c.h.b16 %v322
    %v1070 = vunpack.c.l.b16 %v323
    %v1071 = vunpack.c.h.b16 %v323
    %v1072 = vunpack.c.l.b16 %v324
    %v1073 = vunpack.c.h.b16 %v324
    %v1074 = vunpack.c.l.b16 %v325
    %v1075 = vunpack.c.h.b16 %v325
    %v1076 = vunpack.c.l.b16 %v326
    %v1077 = vunpack.c.h.b16 %v326
    %v1078 = vunpack.c.l.b16 %v327
    %v1079 = vunpack.c.h.b16 %v327
    %v1080 = vunpack.c.l.b16 %v328
    %v1081 = vunpack.c.h.b16 %v328
    %v1082 = vunpack.c.l.b16 %v329
    %v1083 = vunpack.c.h.b16 %v329
    %v1084 = vunpack.c.l.b16 %v330
    %v1085 = vunpack.c.h.b16 %v330
    %v1086 = vunpack.c.l.b16 %v331
    %v1087 = vunpack.c.h.b16 %v331
    %v1088 = vunpack.c.l.b16 %v332
    %v1089 = vunpack.c.h.b16 %v332
    %v1090 = vunpack.c.l.b16 %v333
    %v1091 = vunpack.c.h.b16 %v333
    %v1092 = vunpack.c.l.b16 %v334
    %v1093 = vunpack.c.h.b16 %v334
    %v1094 = vunpack.c.l.b16 %v335
    %v1095 = vunpack.c.h.b16 %v335
    %v1096 = vunpack.c.l.b16 %v336
    %v1097 = vunpack.c.h.b16 %v336
    %v1098 = vunpack.c.l.b16 %v337
    %v1099 = vunpack.c.h.b16 %v337
    %v1100 = vunpack.c.l.b16 %v338
    %v1101 = vunpack.c.h.b16 %v338
    %v1102 = vunpack.c.l.b16 %v339
    %v1103 = vunpack.c.h.b16 %v339
    %v1104 = vunpack.c.l.b16 %v340
    %v1105 = vunpack.c.h.b16 %v340
    %v1106 = vunpack.c.l.b16 %v341
    %v1107 = vunpack.c.h.b16 %v341
    %v1108 = vunpack.c.l.b16 %v342
    %v1109 = vunpack.c.h.b16 %v342
    %v1110 = vunpack.c.l.b16 %v343
    %v1111 = vunpack.c.h.b16 %v343
    %v1112 = vunpack.c.l.b16 %v344
    %v1113 = vunpack.c.h.b16 %v344
    %v1114 = vunpack.c.l.b16 %v345
    %v1115 = vunpack.c.h.b16 %v345
    %v1116 = vunpack.c.l.b16 %v346
    %v1117 = vunpack.c.h.b16 %v346
    %v1118 = vunpack.c.l.b16 %v347
    %v1119 = vunpack.c.h.b16 %v347
    %v1120 = vunpack.c.l.b16 %v348
    %v1121 = vunpack.c.h.b16 %v348
    %v1122 = vunpack.c.l.b16 %v349
    %v1123 = vunpack.c.h.b16 %v349
    %v1124 = vunpack.c.l.b16 %v350
    %v1125 = vunpack.c.h.b16 %v350
    %v1126 = vunpack.c.l.b16 %v351
    %v1127 = vunpack.c.h.b16 %v351
    %v1128 = vunpack.c.l.b16 %v352
    %v1129 = vunpack.c.h.b16 %v352
    %v1130 = vunpack.c.l.b16 %v353
    %v1131 = vunpack.c.h.b16 %v353
    %v1132 = vunpack.c.l.b16 %v354
    %v1133 = vunpack.c.h.b16 %v354
    %v1134 = vunpack.c.l.b16 %v355
    %v1135 = vunpack.c.h.b16 %v355
    %v1136 = vunpack.c.l.b16 %v356
    %v1137 = vunpack.c.h.b16 %v356
    %v1138 = vunpack.c.l.b16 %v357
    %v1139 = vunpack.c.h.b16 %v357
    %v1140 = vunpack.c.l.b16 %v358
    %v1141 = vunpack.c.h.b16 %v358
    %v1142 = vunpack.c.l.b16 %v359
    %v1143 = vunpack.c.h.b16 %v359
    %v1144 = vunpack.c.l.b16 %v360
    %v1145 = vunpack.c.h.b16 %v360
    %v1146 = vunpack.c.l.b16 %v361
    %v1147 = vunpack.c.h.b16 %v361
    %v1148 = vunpack.c.l.b16 %v362
    %v1149 = vunpack.c.h.b16 %v362
    %v1150 = vunpack.c.l.b16 %v363
    %v1151 = vunpack.c.h.b16 %v363
    %v1152 = vunpack.c.l.b16 %v364
    %v1153 = vunpack.c.h.b16 %v364
    %v1154 = vunpack.c.l.b16 %v365
    %v1155 = vunpack.c.h.b16 %v365
    %v1156 = vunpack.c.l.b16 %v366
    %v1157 = vunpack.c.h.b16 %v366
    %v1158 = vunpack.c.l.b16 %v367
    %v1159 = vunpack.c.h.b16 %v367
    %v1160 = vunpack.c.l.b16 %v368
    %v1161 = vunpack.c.h.b16 %v368
    %v1162 = vunpack.c.l.b16 %v369
    %v1163 = vunpack.c.h.b16 %v369
    %v1164 = vunpack.c.l.b16 %v370
    %v1165 = vunpack.c.h.b16 %v370
    %v1166 = vunpack.c.l.b16 %v371
    %v1167 = vunpack.c.h.b16 %v371
    %v1168 = vpack.c.b16 %v660, %v656
    %v1169 = vpack.c.b16 %v661, %v657
    %v1170 = vpack.c.b16 %v662, %v658
    %v1171 = vpack.c.b16 %v663, %v659
    %v1172 = vpack.c.b16 %v668, %v664
    %v1173 = vpack.c.b16 %v669, %v665
    %v1174 = vpack.c.b16 %v670, %v666
    %v1175 = vpack.c.b16 %v671, %v667
    %v1176 = vpack.c.b16 %v676, %v672
    %v1177 = vpack.c.b16 %v677, %v673
    %v1178 = vpack.c.b16 %v678, %v674
    %v1179 = vpack.c.b16 %v679, %v675
    %v1180 = vpack.c.b16 %v684, %v680
    %v1181 = vpack.c.b16 %v685, %v681
    %v1182 = vpack.c.b16 %v686, %v682
    %v1183 = vpack.c.b16 %v687, %v683
    %v1184 = vpack.c.b16 %v692, %v688
    %v1185 = vpack.c.b16 %v693, %v689
    %v1186 = vpack.c.b16 %v694, %v690
    %v1187 = vpack.c.b16 %v695, %v691
    %v1188 = vpack.c.b16 %v700, %v696
    %v1189 = vpack.c.b16 %v701, %v697
    %v1190 = vpack.c.b16 %v702, %v698
    %v1191 = vpack.c.b16 %v703, %v699
    %v1192 = vpack.c.b16 %v708, %v704
    %v1193 = vpack.c.b16 %v709, %v705
    %v1194 = vpack.c.b16 %v710, %v706
    %v1195 = vpack.c.b16 %v711, %v707
    %v1196 = vpack.c.b16 %v716, %v712
    %v1197 = vpack.c.b16 %v717, %v713
    %v1198 = vpack.c.b16 %v718, %v714
    %v1199 = vpack.c.b16 %v719, %v715
    %v1200 = vpack.c.b16 %v724, %v720
    %v1201 = vpack.c.b16 %v725, %v721
    %v1202 = vpack.c.b16 %v726, %v722
    %v1203 = vpack.c.b16 %v727, %v723
    %v1204 = vpack.c.b16 %v732, %v728
    %v1205 = vpack.c.b16 %v733, %v729
    %v1206 = vpack.c.b16 %v734, %v730
    %v1207 = vpack.c.b16 %v735, %v731
    %v1208 = vpack.c.b16 %v740, %v736
    %v1209 = vpack.c.b16 %v741, %v737
    %v1210 = vpack.c.b16 %v742, %v738
    %v1211 = vpack.c.b16 %v743, %v739
    %v1212 = vpack.c.b16 %v748, %v744
    %v1213 = vpack.c.b16 %v749, %v745
    %v1214 = vpack.c.b16 %v750, %v746
    %v1215 = vpack.c.b16 %v751, %v747
    %v1216 = vpack.c.b16 %v756, %v752
    %v1217 = vpack.c.b16 %v757, %v753
    %v1218 = vpack.c.b16 %v758, %v754
    %v1219 = vpack.c.b16 %v759, %v755
    %v1220 = vpack.c.b16 %v764, %v760
    %v1221 = vpack.c.b16 %v765, %v761
    %v1222 = vpack.c.b16 %v766, %v762
    %v1223 = vpack.c.b16 %v767, %v763
    %v1224 = vpack.c.b16 %v772, %v768
    %v1225 = vpack.c.b16 %v773, %v769
    %v1226 = vpack.c.b16 %v774, %v770
    %v1227 = vpack.c.b16 %v775, %v771
    %v1228 = vpack.c.b16 %v780, %v776
    %v1229 = vpack.c.b16 %v781, %v777
    %v1230 = vpack.c.b16 %v782, %v778
    %v1231 = vpack.c.b16 %v783, %v779
    %v1232 = vpack.c.b16 %v788, %v784
    %v1233 = vpack.c.b16 %v789, %v785
    %v1234 = vpack.c.b16 %v790, %v786
    %v1235 = vpack.c.b16 %v791, %v787
    %v1236 = vpack.c.b16 %v796, %v792
    %v1237 = vpack.c.b16 %v797, %v793
    %v1238 = vpack.c.b16 %v798, %v794
    %v1239 = vpack.c.b16 %v799, %v795
    %v1240 = vpack.c.b16 %v804, %v800
    %v1241 = vpack.c.b16 %v805, %v801
    %v1242 = vpack.c.b16 %v806, %v802
    %v1243 = vpack.c.b16 %v807, %v803
    %v1244 = vpack.c.b16 %v812, %v808
    %v1245 = vpack.c.b16 %v813, %v809
    %v1246 = vpack.c.b16 %v814, %v810
    %v1247 = vpack.c.b16 %v815, %v811
    %v1248 = vpack.c.b16 %v820, %v816
    %v1249 = vpack.c.b16 %v821, %v817
    %v1250 = vpack.c.b16 %v822, %v818
    %v1251 = vpack.c.b16 %v823, %v819
    %v1252 = vpack.c.b16 %v828, %v824
    %v1253 = vpack.c.b16 %v829, %v825
    %v1254 = vpack.c.b16 %v830, %v826
    %v1255 = vpack.c.b16 %v831, %v827
    %v1256 = vpack.c.b16 %v836, %v832
    %v1257 = vpack.c.b16 %v837, %v833
    %v1258 = vpack.c.b16 %v838, %v834
    %v1259 = vpack.c.b16 %v839, %v835
    %v1260 = vpack.c.b16 %v844, %v840
    %v1261 = vpack.c.b16 %v845, %v841
    %v1262 = vpack.c.b16 %v846, %v842
    %v1263 = vpack.c.b16 %v847, %v843
    %v1264 = vpack.c.b16 %v852, %v848
    %v1265 = vpack.c.b16 %v853, %v849
    %v1266 = vpack.c.b16 %v854, %v850
    %v1267 = vpack.c.b16 %v855, %v851
    %v1268 = vpack.c.b16 %v860, %v856
    %v1269 = vpack.c.b16 %v861, %v857
    %v1270 = vpack.c.b16 %v862, %v858
    %v1271 = vpack.c.b16 %v863, %v859
    %v1272 = vpack.c.b16 %v868, %v864
    %v1273 = vpack.c.b16 %v869, %v865
    %v1274 = vpack.c.b16 %v870, %v866
    %v1275 = vpack.c.b16 %v871, %v867
    %v1276 = vpack.c.b16 %v876, %v872
    %v1277 = vpack.c.b16 %v877, %v873
    %v1278 = vpack.c.b16 %v878, %v874
    %v1279 = vpack.c.b16 %v879, %v875
    %v1280 = vpack.c.b16 %v884, %v880
    %v1281 = vpack.c.b16 %v885, %v881
    %v1282 = vpack.c.b16 %v886, %v882
    %v1283 = vpack.c.b16 %v887, %v883
    %v1284 = vpack.c.b16 %v892, %v888
    %v1285 = vpack.c.b16 %v893, %v889
    %v1286 = vpack.c.b16 %v894, %v890
    %v1287 = vpack.c.b16 %v895, %v891
    %v1288 = vpack.c.b16 %v900, %v896
    %v1289 = vpack.c.b16 %v901, %v897
    %v1290 = vpack.c.b16 %v902, %v898
    %v1291 = vpack.c.b16 %v903, %v899
    %v1292 = vpack.c.b16 %v908, %v904
    %v1293 = vpack.c.b16 %v909, %v905
    %v1294 = vpack.c.b16 %v910, %v906
    %v1295 = vpack.c.b16 %v911, %v907
    %v1296 = vpack.c.b16 %v916, %v912
    %v1297 = vpack.c.b16 %v917, %v913
    %v1298 = vpack.c.b16 %v918, %v914
    %v1299 = vpack.c.b16 %v919, %v915
    %v1300 = vpack.c.b16 %v924, %v920
    %v1301 = vpack.c.b16 %v925, %v921
    %v1302 = vpack.c.b16 %v926, %v922
    %v1303 = vpack.c.b16 %v927, %v923
    %v1304 = vpack.c.b16 %v932, %v928
    %v1305 = vpack.c.b16 %v933, %v929
    %v1306 = vpack.c.b16 %v934, %v930
    %v1307 = vpack.c.b16 %v935, %v931
    %v1308 = vpack.c.b16 %v940, %v936
    %v1309 = vpack.c.b16 %v941, %v937
    %v1310 = vpack.c.b16 %v942, %v938
    %v1311 = vpack.c.b16 %v943, %v939
    %v1312 = vpack.c.b16 %v948, %v944
    %v1313 = vpack.c.b16 %v949, %v945
    %v1314 = vpack.c.b16 %v950, %v946
    %v1315 = vpack.c.b16 %v951, %v947
    %v1316 = vpack.c.b16 %v956, %v952
    %v1317 = vpack.c.b16 %v957, %v953
    %v1318 = vpack.c.b16 %v958, %v954
    %v1319 = vpack.c.b16 %v959, %v955
    %v1320 = vpack.c.b16 %v964, %v960
    %v1321 = vpack.c.b16 %v965, %v961
    %v1322 = vpack.c.b16 %v966, %v962
    %v1323 = vpack.c.b16 %v967, %v963
    %v1324 = vpack.c.b16 %v972, %v968
    %v1325 = vpack.c.b16 %v973, %v969
    %v1326 = vpack.c.b16 %v974, %v970
    %v1327 = vpack.c.b16 %v975, %v971
    %v1328 = vpack.c.b16 %v980, %v976
    %v1329 = vpack.c.b16 %v981, %v977
    %v1330 = vpack.c.b16 %v982, %v978
    %v1331 = vpack.c.b16 %v983, %v979
    %v1332 = vpack.c.b16 %v988, %v984
    %v1333 = vpack.c.b16 %v989, %v985
    %v1334 = vpack.c.b16 %v990, %v986
    %v1335 = vpack.c.b16 %v991, %v987
    %v1336 = vpack.c.b16 %v996, %v992
    %v1337 = vpack.c.b16 %v997, %v993
    %v1338 = vpack.c.b16 %v998, %v994
    %v1339 = vpack.c.b16 %v999, %v995
    %v1340 = vpack.c.b16 %v1004, %v1000
    %v1341 = vpack.c.b16 %v1005, %v1001
    %v1342 = vpack.c.b16 %v1006, %v1002
    %v1343 = vpack.c.b16 %v1007, %v1003
    %v1344 = vpack.c.b16 %v1012, %v1008
    %v1345 = vpack.c.b16 %v1013, %v1009
    %v1346 = vpack.c.b16 %v1014, %v1010
    %v1347 = vpack.c.b16 %v1015, %v1011
    %v1348 = vpack.c.b16 %v1020, %v1016
    %v1349 = vpack.c.b16 %v1021, %v1017
    %v1350 = vpack.c.b16 %v1022, %v1018
    %v1351 = vpack.c.b16 %v1023, %v1019
    %v1352 = vpack.c.b16 %v1028, %v1024
    %v1353 = vpack.c.b16 %v1029, %v1025
    %v1354 = vpack.c.b16 %v1030, %v1026
    %v1355 = vpack.c.b16 %v1031, %v1027
    %v1356 = vpack.c.b16 %v1036, %v1032
    %v1357 = vpack.c.b16 %v1037, %v1033
    %v1358 = vpack.c.b16 %v1038, %v1034
    %v1359 = vpack.c.b16 %v1039, %v1035
    %v1360 = vpack.c.b16 %v1044, %v1040
    %v1361 = vpack.c.b16 %v1045, %v1041
    %v1362 = vpack.c.b16 %v1046, %v1042
    %v1363 = vpack.c.b16 %v1047, %v1043
    %v1364 = vpack.c.b16 %v1052, %v1048
    %v1365 = vpack.c.b16 %v1053, %v1049
    %v1366 = vpack.c.b16 %v1054, %v1050
    %v1367 = vpack.c.b16 %v1055, %v1051
    %v1368 = vpack.c.b16 %v1060, %v1056
    %v1369 = vpack.c.b16 %v1061, %v1057
    %v1370 = vpack.c.b16 %v1062, %v1058
    %v1371 = vpack.c.b16 %v1063, %v1059
    %v1372 = vpack.c.b16 %v1068, %v1064
    %v1373 = vpack.c.b16 %v1069, %v1065
    %v1374 = vpack.c.b16 %v1070, %v1066
    %v1375 = vpack.c.b16 %v1071, %v1067
    %v1376 = vpack.c.b16 %v1076, %v1072
    %v1377 = vpack.c.b16 %v1077, %v1073
    %v1378 = vpack.c.b16 %v1078, %v1074
    %v1379 = vpack.c.b16 %v1079, %v1075
    %v1380 = vpack.c.b16 %v1084, %v1080
    %v1381 = vpack.c.b16 %v1085, %v1081
    %v1382 = vpack.c.b16 %v1086, %v1082
    %v1383 = vpack.c.b16 %v1087, %v1083
    %v1384 = vpack.c.b16 %v1092, %v1088
    %v1385 = vpack.c.b16 %v1093, %v1089
    %v1386 = vpack.c.b16 %v1094, %v1090
    %v1387 = vpack.c.b16 %v1095, %v1091
    %v1388 = vpack.c.b16 %v1100, %v1096
    %v1389 = vpack.c.b16 %v1101, %v1097
    %v1390 = vpack.c.b16 %v1102, %v1098
    %v1391 = vpack.c.b16 %v1103, %v1099
    %v1392 = vpack.c.b16 %v1108, %v1104
    %v1393 = vpack.c.b16 %v1109, %v1105
    %v1394 = vpack.c.b16 %v1110, %v1106
    %v1395 = vpack.c.b16 %v1111, %v1107
    %v1396 = vpack.c.b16 %v1116, %v1112
    %v1397 = vpack.c.b16 %v1117, %v1113
    %v1398 = vpack.c.b16 %v1118, %v1114
    %v1399 = vpack.c.b16 %v1119, %v1115
    %v1400 = vpack.c.b16 %v1124, %v1120
    %v1401 = vpack.c.b16 %v1125, %v1121
    %v1402 = vpack.c.b16 %v1126, %v1122
    %v1403 = vpack.c.b16 %v1127, %v1123
    %v1404 = vpack.c.b16 %v1132, %v1128
    %v1405 = vpack.c.b16 %v1133, %v1129
    %v1406 = vpack.c.b16 %v1134, %v1130
    %v1407 = vpack.c.b16 %v1135, %v1131
    %v1408 = vpack.c.b16 %v1140, %v1136
    %v1409 = vpack.c.b16 %v1141, %v1137
    %v1410 = vpack.c.b16 %v1142, %v1138
    %v1411 = vpack.c.b16 %v1143, %v1139
    %v1412 = vpack.c.b16 %v1148, %v1144
    %v1413 = vpack.c.b16 %v1149, %v1145
    %v1414 = vpack.c.b16 %v1150, %v1146
    %v1415 = vpack.c.b16 %v1151, %v1147
    %v1416 = vpack.c.b16 %v1156, %v1152
    %v1417 = vpack.c.b16 %v1157, %v1153
    %v1418 = vpack.c.b16 %v1158, %v1154
    %v1419 = vpack.c.b16 %v1159, %v1155
    %v1420 = vpack.c.b16 %v1164, %v1160
    %v1421 = vpack.c.b16 %v1165, %v1161
    %v1422 = vpack.c.b16 %v1166, %v1162
    %v1423 = vpack.c.b16 %v1167, %v1163
    %1680 = vmatprep.subr.bf16.mxu0 %v1169
    %1681 = vmatpush1.bf16.msra.mxu0 %v1168
    %1682 = vmatprep.subr.bf16.mxu0 %v1173
    %1683 = vmatpush1.bf16.msra.mxu0 %v1172
    %1684 = vmatprep.subr.bf16.mxu0 %v1177
    %1685 = vmatpush1.bf16.msra.mxu0 %v1176
    %1686 = vmatprep.subr.bf16.mxu0 %v1181
    %1687 = vmatpush1.bf16.msra.mxu0 %v1180
    %1688 = vmatprep.subr.bf16.mxu0 %v1185
    %1689 = vmatpush1.bf16.msra.mxu0 %v1184
    %1690 = vmatprep.subr.bf16.mxu0 %v1189
    %1691 = vmatpush1.bf16.msra.mxu0 %v1188
    %1692 = vmatprep.subr.bf16.mxu0 %v1193
    %1693 = vmatpush1.bf16.msra.mxu0 %v1192
    %1694 = vmatprep.subr.bf16.mxu0 %v1197
    %1695 = vmatpush1.bf16.msra.mxu0 %v1196
    %1696 = vmatprep.subr.bf16.mxu0 %v1201
    %1697 = vmatpush1.bf16.msra.mxu0 %v1200
    %1698 = vmatprep.subr.bf16.mxu0 %v1205
    %1699 = vmatpush1.bf16.msra.mxu0 %v1204
    %1700 = vmatprep.subr.bf16.mxu0 %v1209
    %1701 = vmatpush1.bf16.msra.mxu0 %v1208
    %1702 = vmatprep.subr.bf16.mxu0 %v1213
    %1703 = vmatpush1.bf16.msra.mxu0 %v1212
    %1704 = vmatprep.subr.bf16.mxu0 %v1217
    %1705 = vmatpush1.bf16.msra.mxu0 %v1216
    %1706 = vmatprep.subr.bf16.mxu0 %v1221
    %1707 = vmatpush1.bf16.msra.mxu0 %v1220
    %1708 = vmatprep.subr.bf16.mxu0 %v1225
    %1709 = vmatpush1.bf16.msra.mxu0 %v1224
    %1710 = vmatprep.subr.bf16.mxu0 %v1229
    %1711 = vmatpush1.bf16.msra.mxu0 %v1228
    %1712 = vmatprep.mubr.bf16.mxu0 %v385
    %1713 = vmatmul.mubr.bf16.gmra.mrb[0].mxu0 %v384
    %v1714 = vpop.f32.mrb[0].mxu0
    %v1715 = vadd.f32 0.0, %v1714
    %v1716 = vpop.f32.mrb[0].mxu0
    %v1717 = vadd.f32 0.0, %v1716
    %v1718 = vpop.f32.mrb[0].mxu0
    %v1719 = vpop.f32.mrb[0].mxu0
    %1720 = vdwg.mxu0
    %1721 = vmatprep.subr.bf16.mxu0 %v1233
    %1722 = vmatpush1.bf16.msra.mxu0 %v1232
    %1723 = vmatprep.subr.bf16.mxu0 %v1237
    %1724 = vmatpush1.bf16.msra.mxu0 %v1236
    %1725 = vmatprep.subr.bf16.mxu0 %v1241
    %1726 = vmatpush1.bf16.msra.mxu0 %v1240
    %1727 = vmatprep.subr.bf16.mxu0 %v1245
    %1728 = vmatpush1.bf16.msra.mxu0 %v1244
    %1729 = vmatprep.subr.bf16.mxu0 %v1249
    %1730 = vmatpush1.bf16.msra.mxu0 %v1248
    %1731 = vmatprep.subr.bf16.mxu0 %v1253
    %1732 = vmatpush1.bf16.msra.mxu0 %v1252
    %1733 = vmatprep.subr.bf16.mxu0 %v1257
    %1734 = vmatpush1.bf16.msra.mxu0 %v1256
    %1735 = vmatprep.subr.bf16.mxu0 %v1261
    %1736 = vmatpush1.bf16.msra.mxu0 %v1260
    %1737 = vmatprep.subr.bf16.mxu0 %v1265
    %1738 = vmatpush1.bf16.msra.mxu0 %v1264
    %1739 = vmatprep.subr.bf16.mxu0 %v1269
    %1740 = vmatpush1.bf16.msra.mxu0 %v1268
    %1741 = vmatprep.subr.bf16.mxu0 %v1273
    %1742 = vmatpush1.bf16.msra.mxu0 %v1272
    %1743 = vmatprep.subr.bf16.mxu0 %v1277
    %1744 = vmatpush1.bf16.msra.mxu0 %v1276
    %1745 = vmatprep.subr.bf16.mxu0 %v1281
    %1746 = vmatpush1.bf16.msra.mxu0 %v1280
    %1747 = vmatprep.subr.bf16.mxu0 %v1285
    %1748 = vmatpush1.bf16.msra.mxu0 %v1284
    %1749 = vmatprep.subr.bf16.mxu0 %v1289
    %1750 = vmatpush1.bf16.msra.mxu0 %v1288
    %1751 = vmatprep.subr.bf16.mxu0 %v1293
    %1752 = vmatpush1.bf16.msra.mxu0 %v1292
    %1753 = vmatprep.mubr.bf16.mxu0 %v387
    %1754 = vmatmul.mubr.bf16.gmra.mrb[0].mxu0 %v386
    %v1755 = vpop.f32.mrb[0].mxu0
    %v1756 = vadd.f32 %v1715, %v1755
    %v1757 = vpop.f32.mrb[0].mxu0
    %v1758 = vadd.f32 %v1717, %v1757
    %v1759 = vpop.f32.mrb[0].mxu0
    %v1760 = vpop.f32.mrb[0].mxu0
    %1761 = vdwg.mxu0
    %1762 = vmatprep.subr.bf16.mxu0 %v1297
    %1763 = vmatpush1.bf16.msra.mxu0 %v1296
    %1764 = vmatprep.subr.bf16.mxu0 %v1301
    %1765 = vmatpush1.bf16.msra.mxu0 %v1300
    %1766 = vmatprep.subr.bf16.mxu0 %v1305
    %1767 = vmatpush1.bf16.msra.mxu0 %v1304
    %1768 = vmatprep.subr.bf16.mxu0 %v1309
    %1769 = vmatpush1.bf16.msra.mxu0 %v1308
    %1770 = vmatprep.subr.bf16.mxu0 %v1313
    %1771 = vmatpush1.bf16.msra.mxu0 %v1312
    %1772 = vmatprep.subr.bf16.mxu0 %v1317
    %1773 = vmatpush1.bf16.msra.mxu0 %v1316
    %1774 = vmatprep.subr.bf16.mxu0 %v1321
    %1775 = vmatpush1.bf16.msra.mxu0 %v1320
    %1776 = vmatprep.subr.bf16.mxu0 %v1325
    %1777 = vmatpush1.bf16.msra.mxu0 %v1324
    %1778 = vmatprep.subr.bf16.mxu0 %v1329
    %1779 = vmatpush1.bf16.msra.mxu0 %v1328
    %1780 = vmatprep.subr.bf16.mxu0 %v1333
    %1781 = vmatpush1.bf16.msra.mxu0 %v1332
    %1782 = vmatprep.subr.bf16.mxu0 %v1337
    %1783 = vmatpush1.bf16.msra.mxu0 %v1336
    %1784 = vmatprep.subr.bf16.mxu0 %v1341
    %1785 = vmatpush1.bf16.msra.mxu0 %v1340
    %1786 = vmatprep.subr.bf16.mxu0 %v1345
    %1787 = vmatpush1.bf16.msra.mxu0 %v1344
    %1788 = vmatprep.subr.bf16.mxu0 %v1349
    %1789 = vmatpush1.bf16.msra.mxu0 %v1348
    %1790 = vmatprep.subr.bf16.mxu0 %v1353
    %1791 = vmatpush1.bf16.msra.mxu0 %v1352
    %1792 = vmatprep.subr.bf16.mxu0 %v1357
    %1793 = vmatpush1.bf16.msra.mxu0 %v1356
    %1794 = vmatprep.mubr.bf16.mxu0 %v389
    %1795 = vmatmul.mubr.bf16.gmra.mrb[0].mxu0 %v388
    %v1796 = vpop.f32.mrb[0].mxu0
    %v1797 = vadd.f32 %v1756, %v1796
    %v1798 = vpop.f32.mrb[0].mxu0
    %v1799 = vadd.f32 %v1758, %v1798
    %v1800 = vpop.f32.mrb[0].mxu0
    %v1801 = vpop.f32.mrb[0].mxu0
    %1802 = vdwg.mxu0
    %1803 = vmatprep.subr.bf16.mxu0 %v1361
    %1804 = vmatpush1.bf16.msra.mxu0 %v1360
    %1805 = vmatprep.subr.bf16.mxu0 %v1365
    %1806 = vmatpush1.bf16.msra.mxu0 %v1364
    %1807 = vmatprep.subr.bf16.mxu0 %v1369
    %1808 = vmatpush1.bf16.msra.mxu0 %v1368
    %1809 = vmatprep.subr.bf16.mxu0 %v1373
    %1810 = vmatpush1.bf16.msra.mxu0 %v1372
    %1811 = vmatprep.subr.bf16.mxu0 %v1377
    %1812 = vmatpush1.bf16.msra.mxu0 %v1376
    %1813 = vmatprep.subr.bf16.mxu0 %v1381
    %1814 = vmatpush1.bf16.msra.mxu0 %v1380
    %1815 = vmatprep.subr.bf16.mxu0 %v1385
    %1816 = vmatpush1.bf16.msra.mxu0 %v1384
    %1817 = vmatprep.subr.bf16.mxu0 %v1389
    %1818 = vmatpush1.bf16.msra.mxu0 %v1388
    %1819 = vmatprep.subr.bf16.mxu0 %v1393
    %1820 = vmatpush1.bf16.msra.mxu0 %v1392
    %1821 = vmatprep.subr.bf16.mxu0 %v1397
    %1822 = vmatpush1.bf16.msra.mxu0 %v1396
    %1823 = vmatprep.subr.bf16.mxu0 %v1401
    %1824 = vmatpush1.bf16.msra.mxu0 %v1400
    %1825 = vmatprep.subr.bf16.mxu0 %v1405
    %1826 = vmatpush1.bf16.msra.mxu0 %v1404
    %1827 = vmatprep.subr.bf16.mxu0 %v1409
    %1828 = vmatpush1.bf16.msra.mxu0 %v1408
    %1829 = vmatprep.subr.bf16.mxu0 %v1413
    %1830 = vmatpush1.bf16.msra.mxu0 %v1412
    %1831 = vmatprep.subr.bf16.mxu0 %v1417
    %1832 = vmatpush1.bf16.msra.mxu0 %v1416
    %1833 = vmatprep.subr.bf16.mxu0 %v1421
    %1834 = vmatpush1.bf16.msra.mxu0 %v1420
    %1835 = vmatprep.mubr.bf16.mxu0 %v391
    %1836 = vmatmul.mubr.bf16.gmra.mrb[0].mxu0 %v390
    %v1837 = vpop.f32.mrb[0].mxu0
    %v1838 = vadd.f32 %v1797, %v1837
    %v1839 = vpop.f32.mrb[0].mxu0
    %v1840 = vadd.f32 %v1799, %v1839
    %v1841 = vpop.f32.mrb[0].mxu0
    %v1842 = vpop.f32.mrb[0].mxu0
    %1843 = vdwg.mxu0
    %1844 = vmatprep.subr.bf16.mxu0 %v1171
    %1845 = vmatpush1.bf16.msra.mxu0 %v1170
    %1846 = vmatprep.subr.bf16.mxu0 %v1175
    %1847 = vmatpush1.bf16.msra.mxu0 %v1174
    %1848 = vmatprep.subr.bf16.mxu0 %v1179
    %1849 = vmatpush1.bf16.msra.mxu0 %v1178
    %1850 = vmatprep.subr.bf16.mxu0 %v1183
    %1851 = vmatpush1.bf16.msra.mxu0 %v1182
    %1852 = vmatprep.subr.bf16.mxu0 %v1187
    %1853 = vmatpush1.bf16.msra.mxu0 %v1186
    %1854 = vmatprep.subr.bf16.mxu0 %v1191
    %1855 = vmatpush1.bf16.msra.mxu0 %v1190
    %1856 = vmatprep.subr.bf16.mxu0 %v1195
    %1857 = vmatpush1.bf16.msra.mxu0 %v1194
    %1858 = vmatprep.subr.bf16.mxu0 %v1199
    %1859 = vmatpush1.bf16.msra.mxu0 %v1198
    %1860 = vmatprep.subr.bf16.mxu0 %v1203
    %1861 = vmatpush1.bf16.msra.mxu0 %v1202
    %1862 = vmatprep.subr.bf16.mxu0 %v1207
    %1863 = vmatpush1.bf16.msra.mxu0 %v1206
    %1864 = vmatprep.subr.bf16.mxu0 %v1211
    %1865 = vmatpush1.bf16.msra.mxu0 %v1210
    %1866 = vmatprep.subr.bf16.mxu0 %v1215
    %1867 = vmatpush1.bf16.msra.mxu0 %v1214
    %1868 = vmatprep.subr.bf16.mxu0 %v1219
    %1869 = vmatpush1.bf16.msra.mxu0 %v1218
    %1870 = vmatprep.subr.bf16.mxu0 %v1223
    %1871 = vmatpush1.bf16.msra.mxu0 %v1222
    %1872 = vmatprep.subr.bf16.mxu0 %v1227
    %1873 = vmatpush1.bf16.msra.mxu0 %v1226
    %1874 = vmatprep.subr.bf16.mxu0 %v1231
    %1875 = vmatpush1.bf16.msra.mxu0 %v1230
    %1876 = vmatprep.mubr.bf16.mxu0 %v385
    %1877 = vmatmul.mubr.bf16.gmra.mrb[0].mxu0 %v384
    %v1878 = vpop.f32.mrb[0].mxu0
    %v1879 = vadd.f32 0.0, %v1878
    %v1880 = vpop.f32.mrb[0].mxu0
    %v1881 = vadd.f32 0.0, %v1880
    %v1882 = vpop.f32.mrb[0].mxu0
    %v1883 = vpop.f32.mrb[0].mxu0
    %1884 = vdwg.mxu0
    %1885 = vmatprep.subr.bf16.mxu0 %v1235
    %1886 = vmatpush1.bf16.msra.mxu0 %v1234
    %1887 = vmatprep.subr.bf16.mxu0 %v1239
    %1888 = vmatpush1.bf16.msra.mxu0 %v1238
    %1889 = vmatprep.subr.bf16.mxu0 %v1243
    %1890 = vmatpush1.bf16.msra.mxu0 %v1242
    %1891 = vmatprep.subr.bf16.mxu0 %v1247
    %1892 = vmatpush1.bf16.msra.mxu0 %v1246
    %1893 = vmatprep.subr.bf16.mxu0 %v1251
    %1894 = vmatpush1.bf16.msra.mxu0 %v1250
    %1895 = vmatprep.subr.bf16.mxu0 %v1255
    %1896 = vmatpush1.bf16.msra.mxu0 %v1254
    %1897 = vmatprep.subr.bf16.mxu0 %v1259
    %1898 = vmatpush1.bf16.msra.mxu0 %v1258
    %1899 = vmatprep.subr.bf16.mxu0 %v1263
    %1900 = vmatpush1.bf16.msra.mxu0 %v1262
    %1901 = vmatprep.subr.bf16.mxu0 %v1267
    %1902 = vmatpush1.bf16.msra.mxu0 %v1266
    %1903 = vmatprep.subr.bf16.mxu0 %v1271
    %1904 = vmatpush1.bf16.msra.mxu0 %v1270
    %1905 = vmatprep.subr.bf16.mxu0 %v1275
    %1906 = vmatpush1.bf16.msra.mxu0 %v1274
    %1907 = vmatprep.subr.bf16.mxu0 %v1279
    %1908 = vmatpush1.bf16.msra.mxu0 %v1278
    %1909 = vmatprep.subr.bf16.mxu0 %v1283
    %1910 = vmatpush1.bf16.msra.mxu0 %v1282
    %1911 = vmatprep.subr.bf16.mxu0 %v1287
    %1912 = vmatpush1.bf16.msra.mxu0 %v1286
    %1913 = vmatprep.subr.bf16.mxu0 %v1291
    %1914 = vmatpush1.bf16.msra.mxu0 %v1290
    %1915 = vmatprep.subr.bf16.mxu0 %v1295
    %1916 = vmatpush1.bf16.msra.mxu0 %v1294
    %1917 = vmatprep.mubr.bf16.mxu0 %v387
    %1918 = vmatmul.mubr.bf16.gmra.mrb[0].mxu0 %v386
    %v1919 = vpop.f32.mrb[0].mxu0
    %v1920 = vadd.f32 %v1879, %v1919
    %v1921 = vpop.f32.mrb[0].mxu0
    %v1922 = vadd.f32 %v1881, %v1921
    %v1923 = vpop.f32.mrb[0].mxu0
    %v1924 = vpop.f32.mrb[0].mxu0
    %1925 = vdwg.mxu0
    %1926 = vmatprep.subr.bf16.mxu0 %v1299
    %1927 = vmatpush1.bf16.msra.mxu0 %v1298
    %1928 = vmatprep.subr.bf16.mxu0 %v1303
    %1929 = vmatpush1.bf16.msra.mxu0 %v1302
    %1930 = vmatprep.subr.bf16.mxu0 %v1307
    %1931 = vmatpush1.bf16.msra.mxu0 %v1306
    %1932 = vmatprep.subr.bf16.mxu0 %v1311
    %1933 = vmatpush1.bf16.msra.mxu0 %v1310
    %1934 = vmatprep.subr.bf16.mxu0 %v1315
    %1935 = vmatpush1.bf16.msra.mxu0 %v1314
    %1936 = vmatprep.subr.bf16.mxu0 %v1319
    %1937 = vmatpush1.bf16.msra.mxu0 %v1318
    %1938 = vmatprep.subr.bf16.mxu0 %v1323
    %1939 = vmatpush1.bf16.msra.mxu0 %v1322
    %1940 = vmatprep.subr.bf16.mxu0 %v1327
    %1941 = vmatpush1.bf16.msra.mxu0 %v1326
    %1942 = vmatprep.subr.bf16.mxu0 %v1331
    %1943 = vmatpush1.bf16.msra.mxu0 %v1330
    %1944 = vmatprep.subr.bf16.mxu0 %v1335
    %1945 = vmatpush1.bf16.msra.mxu0 %v1334
    %1946 = vmatprep.subr.bf16.mxu0 %v1339
    %1947 = vmatpush1.bf16.msra.mxu0 %v1338
    %1948 = vmatprep.subr.bf16.mxu0 %v1343
    %1949 = vmatpush1.bf16.msra.mxu0 %v1342
    %1950 = vmatprep.subr.bf16.mxu0 %v1347
    %1951 = vmatpush1.bf16.msra.mxu0 %v1346
    %1952 = vmatprep.subr.bf16.mxu0 %v1351
    %1953 = vmatpush1.bf16.msra.mxu0 %v1350
    %1954 = vmatprep.subr.bf16.mxu0 %v1355
    %1955 = vmatpush1.bf16.msra.mxu0 %v1354
    %1956 = vmatprep.subr.bf16.mxu0 %v1359
    %1957 = vmatpush1.bf16.msra.mxu0 %v1358
    %1958 = vmatprep.mubr.bf16.mxu0 %v389
    %1959 = vmatmul.mubr.bf16.gmra.mrb[0].mxu0 %v388
    %v1960 = vpop.f32.mrb[0].mxu0
    %v1961 = vadd.f32 %v1920, %v1960
    %v1962 = vpop.f32.mrb[0].mxu0
    %v1963 = vadd.f32 %v1922, %v1962
    %v1964 = vpop.f32.mrb[0].mxu0
    %v1965 = vpop.f32.mrb[0].mxu0
    %1966 = vdwg.mxu0
    %1967 = vmatprep.subr.bf16.mxu0 %v1363
    %1968 = vmatpush1.bf16.msra.mxu0 %v1362
    %1969 = vmatprep.subr.bf16.mxu0 %v1367
    %1970 = vmatpush1.bf16.msra.mxu0 %v1366
    %1971 = vmatprep.subr.bf16.mxu0 %v1371
    %1972 = vmatpush1.bf16.msra.mxu0 %v1370
    %1973 = vmatprep.subr.bf16.mxu0 %v1375
    %1974 = vmatpush1.bf16.msra.mxu0 %v1374
    %1975 = vmatprep.subr.bf16.mxu0 %v1379
    %1976 = vmatpush1.bf16.msra.mxu0 %v1378
    %1977 = vmatprep.subr.bf16.mxu0 %v1383
    %1978 = vmatpush1.bf16.msra.mxu0 %v1382
    %1979 = vmatprep.subr.bf16.mxu0 %v1387
    %1980 = vmatpush1.bf16.msra.mxu0 %v1386
    %1981 = vmatprep.subr.bf16.mxu0 %v1391
    %1982 = vmatpush1.bf16.msra.mxu0 %v1390
    %1983 = vmatprep.subr.bf16.mxu0 %v1395
    %1984 = vmatpush1.bf16.msra.mxu0 %v1394
    %1985 = vmatprep.subr.bf16.mxu0 %v1399
    %1986 = vmatpush1.bf16.msra.mxu0 %v1398
    %1987 = vmatprep.subr.bf16.mxu0 %v1403
    %1988 = vmatpush1.bf16.msra.mxu0 %v1402
    %1989 = vmatprep.subr.bf16.mxu0 %v1407
    %1990 = vmatpush1.bf16.msra.mxu0 %v1406
    %1991 = vmatprep.subr.bf16.mxu0 %v1411
    %1992 = vmatpush1.bf16.msra.mxu0 %v1410
    %1993 = vmatprep.subr.bf16.mxu0 %v1415
    %1994 = vmatpush1.bf16.msra.mxu0 %v1414
    %1995 = vmatprep.subr.bf16.mxu0 %v1419
    %1996 = vmatpush1.bf16.msra.mxu0 %v1418
    %1997 = vmatprep.subr.bf16.mxu0 %v1423
    %1998 = vmatpush1.bf16.msra.mxu0 %v1422
    %1999 = vmatprep.mubr.bf16.mxu0 %v391
    %2000 = vmatmul.mubr.bf16.gmra.mrb[0].mxu0 %v390
    %v2001 = vpop.f32.mrb[0].mxu0
    %v2002 = vadd.f32 %v1961, %v2001
    %v2003 = vpop.f32.mrb[0].mxu0
    %v2004 = vadd.f32 %v1963, %v2003
    %v2005 = vpop.f32.mrb[0].mxu0
    %v2006 = vpop.f32.mrb[0].mxu0
    %2007 = vdwg.mxu0
    %v2008 = vadd.f32 %v108, %v1838
    %v2009 = vadd.f32 %v109, %v1840
    %v2010 = vadd.f32 %v110, %v2002
    %v2011 = vadd.f32 %v111, %v2004
    %2012 = vst [vmem:[#allocation2] sm:$0xff] %v2008
    %2013 = vst [vmem:[#allocation2 + $0x8] sm:$0xff] %v2009
    %2014 = vst [vmem:[#allocation2 + $0x10] sm:$0xff] %v2010
    %2015 = vst [vmem:[#allocation2 + $0x18] sm:$0xff] %v2011
    // Predicated region
    $region66: #{_encoder_forward_impl.1} parent=1 // pred_check
      %p2016 = pneg %p100
    $region67: #{_encoder_forward_impl.1} parent=1 // pred_check_branch
      %2018 = sbr.rel (%p2016) target = $region69
    $region68: #{_encoder_forward_impl.1} parent=1 // pred_region
      %v2019 = vld [vmem:[#allocation2] sm:$0xff]
      %v2020 = vld [vmem:[#allocation2 + $0x8] sm:$0xff]
      %v2021 = vld [vmem:[#allocation2 + $0x10] sm:$0xff]
      %v2022 = vld [vmem:[#allocation2 + $0x18] sm:$0xff]
      %v2023 = vld [vmem:[%s2] sm:$0xf]
      %v2025 = vlaneseq
      %v2026 = vshrl.u32 %v2025, 7
      %v2027 = vsub.s32 0, %v2026
      %v2028 = vrot.slane %v2023, %v2027
      %v2029 = vlaneseq
      %v2030 = vshrl.u32 %v2029, 7
      %v2031 = vsub.s32 1, %v2030
      %v2032 = vrot.slane %v2023, %v2031
      %v2033 = vlaneseq
      %v2034 = vshrl.u32 %v2033, 7
      %v2035 = vsub.s32 2, %v2034
      %v2036 = vrot.slane %v2023, %v2035
      %v2037 = vlaneseq
      %v2038 = vshrl.u32 %v2037, 7
      %v2039 = vsub.s32 3, %v2038
      %v2040 = vrot.slane %v2023, %v2039
      %v2045 = vadd.f32 %v2019, %v2028
      %v2046 = vadd.f32 %v2020, %v2032
      %v2047 = vadd.f32 %v2021, %v2036
      %v2048 = vadd.f32 %v2022, %v2040
      %vm2049 = vcmp.gt.f32.partialorder %v2045, 0.0
      %vm2050 = vcmp.gt.f32.partialorder %v2046, 0.0
      %vm2051 = vcmp.gt.f32.partialorder %v2047, 0.0
      %vm2052 = vcmp.gt.f32.partialorder %v2048, 0.0
      %v2053 = vmul.f32 %v2045, 0.2
      %v2054 = vmul.f32 %v2046, 0.2
      %v2055 = vmul.f32 %v2047, 0.2
      %v2056 = vmul.f32 %v2048, 0.2
      %v2057 = vsel %vm2049, %v2045, %v2053
      %v2058 = vsel %vm2050, %v2046, %v2054
      %v2059 = vsel %vm2051, %v2047, %v2055
      %v2060 = vsel %vm2052, %v2048, %v2056
      %v2061 = vpack.c.bf16 %v2057, %v2057
      %v2062 = vpack.c.bf16 %v2058, %v2058
      %v2063 = vpack.c.bf16 %v2059, %v2059
      %v2064 = vpack.c.bf16 %v2060, %v2060
      %v2065 = vld [vmem:[#allocation8] sm:$0xff]
      %v2066 = vld [vmem:[#allocation8 + $0x8] sm:$0xff]
      %v2067 = vld [vmem:[#allocation8 + $0x10] sm:$0xff]
      %v2068 = vld [vmem:[#allocation8 + $0x18] sm:$0xff]
      %v2069 = vld [vmem:[#allocation8 + $0x20] sm:$0xff]
      %v2070 = vld [vmem:[#allocation8 + $0x28] sm:$0xff]
      %v2071 = vld [vmem:[#allocation8 + $0x30] sm:$0xff]
      %v2072 = vld [vmem:[#allocation8 + $0x38] sm:$0xff]
      %v2073 = vld [vmem:[#allocation8 + $0x40] sm:$0xff]
      %v2074 = vld [vmem:[#allocation8 + $0x48] sm:$0xff]
      %v2075 = vld [vmem:[#allocation8 + $0x50] sm:$0xff]
      %v2076 = vld [vmem:[#allocation8 + $0x58] sm:$0xff]
      %v2077 = vld [vmem:[#allocation8 + $0x60] sm:$0xff]
      %v2078 = vld [vmem:[#allocation8 + $0x68] sm:$0xff]
      %v2079 = vld [vmem:[#allocation8 + $0x70] sm:$0xff]
      %v2080 = vld [vmem:[#allocation8 + $0x78] sm:$0xff]
      %v2081 = vld [vmem:[#allocation8 + $0x80] sm:$0xff]
      %v2082 = vld [vmem:[#allocation8 + $0x88] sm:$0xff]
      %v2083 = vld [vmem:[#allocation8 + $0x90] sm:$0xff]
      %v2084 = vld [vmem:[#allocation8 + $0x98] sm:$0xff]
      %v2085 = vld [vmem:[#allocation8 + $0xa0] sm:$0xff]
      %v2086 = vld [vmem:[#allocation8 + $0xa8] sm:$0xff]
      %v2087 = vld [vmem:[#allocation8 + $0xb0] sm:$0xff]
      %v2088 = vld [vmem:[#allocation8 + $0xb8] sm:$0xff]
      %v2089 = vld [vmem:[#allocation8 + $0xc0] sm:$0xff]
      %v2090 = vld [vmem:[#allocation8 + $0xc8] sm:$0xff]
      %v2091 = vld [vmem:[#allocation8 + $0xd0] sm:$0xff]
      %v2092 = vld [vmem:[#allocation8 + $0xd8] sm:$0xff]
      %v2093 = vld [vmem:[#allocation8 + $0xe0] sm:$0xff]
      %v2094 = vld [vmem:[#allocation8 + $0xe8] sm:$0xff]
      %v2095 = vld [vmem:[#allocation8 + $0xf0] sm:$0xff]
      %v2096 = vld [vmem:[#allocation8 + $0xf8] sm:$0xff]
      %v2097 = vld [vmem:[#allocation8 + $0x100] sm:$0xff]
      %v2098 = vld [vmem:[#allocation8 + $0x108] sm:$0xff]
      %v2099 = vld [vmem:[#allocation8 + $0x110] sm:$0xff]
      %v2100 = vld [vmem:[#allocation8 + $0x118] sm:$0xff]
      %v2101 = vld [vmem:[#allocation8 + $0x120] sm:$0xff]
      %v2102 = vld [vmem:[#allocation8 + $0x128] sm:$0xff]
      %v2103 = vld [vmem:[#allocation8 + $0x130] sm:$0xff]
      %v2104 = vld [vmem:[#allocation8 + $0x138] sm:$0xff]
      %v2105 = vld [vmem:[#allocation8 + $0x140] sm:$0xff]
      %v2106 = vld [vmem:[#allocation8 + $0x148] sm:$0xff]
      %v2107 = vld [vmem:[#allocation8 + $0x150] sm:$0xff]
      %v2108 = vld [vmem:[#allocation8 + $0x158] sm:$0xff]
      %v2109 = vld [vmem:[#allocation8 + $0x160] sm:$0xff]
      %v2110 = vld [vmem:[#allocation8 + $0x168] sm:$0xff]
      %v2111 = vld [vmem:[#allocation8 + $0x170] sm:$0xff]
      %v2112 = vld [vmem:[#allocation8 + $0x178] sm:$0xff]
      %v2113 = vld [vmem:[#allocation8 + $0x180] sm:$0xff]
      %v2114 = vld [vmem:[#allocation8 + $0x188] sm:$0xff]
      %v2115 = vld [vmem:[#allocation8 + $0x190] sm:$0xff]
      %v2116 = vld [vmem:[#allocation8 + $0x198] sm:$0xff]
      %v2117 = vld [vmem:[#allocation8 + $0x1a0] sm:$0xff]
      %v2118 = vld [vmem:[#allocation8 + $0x1a8] sm:$0xff]
      %v2119 = vld [vmem:[#allocation8 + $0x1b0] sm:$0xff]
      %v2120 = vld [vmem:[#allocation8 + $0x1b8] sm:$0xff]
      %v2121 = vld [vmem:[#allocation8 + $0x1c0] sm:$0xff]
      %v2122 = vld [vmem:[#allocation8 + $0x1c8] sm:$0xff]
      %v2123 = vld [vmem:[#allocation8 + $0x1d0] sm:$0xff]
      %v2124 = vld [vmem:[#allocation8 + $0x1d8] sm:$0xff]
      %v2125 = vld [vmem:[#allocation8 + $0x1e0] sm:$0xff]
      %v2126 = vld [vmem:[#allocation8 + $0x1e8] sm:$0xff]
      %v2127 = vld [vmem:[#allocation8 + $0x1f0] sm:$0xff]
      %v2128 = vld [vmem:[#allocation8 + $0x1f8] sm:$0xff]
      %v2129 = vld [vmem:[#allocation8 + $0x200] sm:$0xff]
      %v2130 = vld [vmem:[#allocation8 + $0x208] sm:$0xff]
      %v2131 = vld [vmem:[#allocation8 + $0x210] sm:$0xff]
      %v2132 = vld [vmem:[#allocation8 + $0x218] sm:$0xff]
      %v2133 = vld [vmem:[#allocation8 + $0x220] sm:$0xff]
      %v2134 = vld [vmem:[#allocation8 + $0x228] sm:$0xff]
      %v2135 = vld [vmem:[#allocation8 + $0x230] sm:$0xff]
      %v2136 = vld [vmem:[#allocation8 + $0x238] sm:$0xff]
      %v2137 = vld [vmem:[#allocation8 + $0x240] sm:$0xff]
      %v2138 = vld [vmem:[#allocation8 + $0x248] sm:$0xff]
      %v2139 = vld [vmem:[#allocation8 + $0x250] sm:$0xff]
      %v2140 = vld [vmem:[#allocation8 + $0x258] sm:$0xff]
      %v2141 = vld [vmem:[#allocation8 + $0x260] sm:$0xff]
      %v2142 = vld [vmem:[#allocation8 + $0x268] sm:$0xff]
      %v2143 = vld [vmem:[#allocation8 + $0x270] sm:$0xff]
      %v2144 = vld [vmem:[#allocation8 + $0x278] sm:$0xff]
      %v2145 = vld [vmem:[#allocation8 + $0x280] sm:$0xff]
      %v2146 = vld [vmem:[#allocation8 + $0x288] sm:$0xff]
      %v2147 = vld [vmem:[#allocation8 + $0x290] sm:$0xff]
      %v2148 = vld [vmem:[#allocation8 + $0x298] sm:$0xff]
      %v2149 = vld [vmem:[#allocation8 + $0x2a0] sm:$0xff]
      %v2150 = vld [vmem:[#allocation8 + $0x2a8] sm:$0xff]
      %v2151 = vld [vmem:[#allocation8 + $0x2b0] sm:$0xff]
      %v2152 = vld [vmem:[#allocation8 + $0x2b8] sm:$0xff]
      %v2153 = vld [vmem:[#allocation8 + $0x2c0] sm:$0xff]
      %v2154 = vld [vmem:[#allocation8 + $0x2c8] sm:$0xff]
      %v2155 = vld [vmem:[#allocation8 + $0x2d0] sm:$0xff]
      %v2156 = vld [vmem:[#allocation8 + $0x2d8] sm:$0xff]
      %v2157 = vld [vmem:[#allocation8 + $0x2e0] sm:$0xff]
      %v2158 = vld [vmem:[#allocation8 + $0x2e8] sm:$0xff]
      %v2159 = vld [vmem:[#allocation8 + $0x2f0] sm:$0xff]
      %v2160 = vld [vmem:[#allocation8 + $0x2f8] sm:$0xff]
      %v2161 = vld [vmem:[#allocation8 + $0x300] sm:$0xff]
      %v2162 = vld [vmem:[#allocation8 + $0x308] sm:$0xff]
      %v2163 = vld [vmem:[#allocation8 + $0x310] sm:$0xff]
      %v2164 = vld [vmem:[#allocation8 + $0x318] sm:$0xff]
      %v2165 = vld [vmem:[#allocation8 + $0x320] sm:$0xff]
      %v2166 = vld [vmem:[#allocation8 + $0x328] sm:$0xff]
      %v2167 = vld [vmem:[#allocation8 + $0x330] sm:$0xff]
      %v2168 = vld [vmem:[#allocation8 + $0x338] sm:$0xff]
      %v2169 = vld [vmem:[#allocation8 + $0x340] sm:$0xff]
      %v2170 = vld [vmem:[#allocation8 + $0x348] sm:$0xff]
      %v2171 = vld [vmem:[#allocation8 + $0x350] sm:$0xff]
      %v2172 = vld [vmem:[#allocation8 + $0x358] sm:$0xff]
      %v2173 = vld [vmem:[#allocation8 + $0x360] sm:$0xff]
      %v2174 = vld [vmem:[#allocation8 + $0x368] sm:$0xff]
      %v2175 = vld [vmem:[#allocation8 + $0x370] sm:$0xff]
      %v2176 = vld [vmem:[#allocation8 + $0x378] sm:$0xff]
      %v2177 = vld [vmem:[#allocation8 + $0x380] sm:$0xff]
      %v2178 = vld [vmem:[#allocation8 + $0x388] sm:$0xff]
      %v2179 = vld [vmem:[#allocation8 + $0x390] sm:$0xff]
      %v2180 = vld [vmem:[#allocation8 + $0x398] sm:$0xff]
      %v2181 = vld [vmem:[#allocation8 + $0x3a0] sm:$0xff]
      %v2182 = vld [vmem:[#allocation8 + $0x3a8] sm:$0xff]
      %v2183 = vld [vmem:[#allocation8 + $0x3b0] sm:$0xff]
      %v2184 = vld [vmem:[#allocation8 + $0x3b8] sm:$0xff]
      %v2185 = vld [vmem:[#allocation8 + $0x3c0] sm:$0xff]
      %v2186 = vld [vmem:[#allocation8 + $0x3c8] sm:$0xff]
      %v2187 = vld [vmem:[#allocation8 + $0x3d0] sm:$0xff]
      %v2188 = vld [vmem:[#allocation8 + $0x3d8] sm:$0xff]
      %v2189 = vld [vmem:[#allocation8 + $0x3e0] sm:$0xff]
      %v2190 = vld [vmem:[#allocation8 + $0x3e8] sm:$0xff]
      %v2191 = vld [vmem:[#allocation8 + $0x3f0] sm:$0xff]
      %v2192 = vld [vmem:[#allocation8 + $0x3f8] sm:$0xff]
      %v2193 = vld [vmem:[%s4] sm:$0xf]
      %v2195 = vlaneseq
      %v2196 = vshrl.u32 %v2195, 7
      %v2197 = vsub.s32 0, %v2196
      %v2198 = vrot.slane %v2193, %v2197
      %v2199 = vlaneseq
      %v2200 = vshrl.u32 %v2199, 7
      %v2201 = vsub.s32 1, %v2200
      %v2202 = vrot.slane %v2193, %v2201
      %v2203 = vlaneseq
      %v2204 = vshrl.u32 %v2203, 7
      %v2205 = vsub.s32 2, %v2204
      %v2206 = vrot.slane %v2193, %v2205
      %v2207 = vlaneseq
      %v2208 = vshrl.u32 %v2207, 7
      %v2209 = vsub.s32 3, %v2208
      %v2210 = vrot.slane %v2193, %v2209
      %v2343 = vunpack.c.l.b16 %v2065
      %v2344 = vunpack.c.h.b16 %v2065
      %v2345 = vunpack.c.l.b16 %v2066
      %v2346 = vunpack.c.h.b16 %v2066
      %v2347 = vunpack.c.l.b16 %v2067
      %v2348 = vunpack.c.h.b16 %v2067
      %v2349 = vunpack.c.l.b16 %v2068
      %v2350 = vunpack.c.h.b16 %v2068
      %v2351 = vunpack.c.l.b16 %v2069
      %v2352 = vunpack.c.h.b16 %v2069
      %v2353 = vunpack.c.l.b16 %v2070
      %v2354 = vunpack.c.h.b16 %v2070
      %v2355 = vunpack.c.l.b16 %v2071
      %v2356 = vunpack.c.h.b16 %v2071
      %v2357 = vunpack.c.l.b16 %v2072
      %v2358 = vunpack.c.h.b16 %v2072
      %v2359 = vunpack.c.l.b16 %v2073
      %v2360 = vunpack.c.h.b16 %v2073
      %v2361 = vunpack.c.l.b16 %v2074
      %v2362 = vunpack.c.h.b16 %v2074
      %v2363 = vunpack.c.l.b16 %v2075
      %v2364 = vunpack.c.h.b16 %v2075
      %v2365 = vunpack.c.l.b16 %v2076
      %v2366 = vunpack.c.h.b16 %v2076
      %v2367 = vunpack.c.l.b16 %v2077
      %v2368 = vunpack.c.h.b16 %v2077
      %v2369 = vunpack.c.l.b16 %v2078
      %v2370 = vunpack.c.h.b16 %v2078
      %v2371 = vunpack.c.l.b16 %v2079
      %v2372 = vunpack.c.h.b16 %v2079
      %v2373 = vunpack.c.l.b16 %v2080
      %v2374 = vunpack.c.h.b16 %v2080
      %v2375 = vunpack.c.l.b16 %v2081
      %v2376 = vunpack.c.h.b16 %v2081
      %v2377 = vunpack.c.l.b16 %v2082
      %v2378 = vunpack.c.h.b16 %v2082
      %v2379 = vunpack.c.l.b16 %v2083
      %v2380 = vunpack.c.h.b16 %v2083
      %v2381 = vunpack.c.l.b16 %v2084
      %v2382 = vunpack.c.h.b16 %v2084
      %v2383 = vunpack.c.l.b16 %v2085
      %v2384 = vunpack.c.h.b16 %v2085
      %v2385 = vunpack.c.l.b16 %v2086
      %v2386 = vunpack.c.h.b16 %v2086
      %v2387 = vunpack.c.l.b16 %v2087
      %v2388 = vunpack.c.h.b16 %v2087
      %v2389 = vunpack.c.l.b16 %v2088
      %v2390 = vunpack.c.h.b16 %v2088
      %v2391 = vunpack.c.l.b16 %v2089
      %v2392 = vunpack.c.h.b16 %v2089
      %v2393 = vunpack.c.l.b16 %v2090
      %v2394 = vunpack.c.h.b16 %v2090
      %v2395 = vunpack.c.l.b16 %v2091
      %v2396 = vunpack.c.h.b16 %v2091
      %v2397 = vunpack.c.l.b16 %v2092
      %v2398 = vunpack.c.h.b16 %v2092
      %v2399 = vunpack.c.l.b16 %v2093
      %v2400 = vunpack.c.h.b16 %v2093
      %v2401 = vunpack.c.l.b16 %v2094
      %v2402 = vunpack.c.h.b16 %v2094
      %v2403 = vunpack.c.l.b16 %v2095
      %v2404 = vunpack.c.h.b16 %v2095
      %v2405 = vunpack.c.l.b16 %v2096
      %v2406 = vunpack.c.h.b16 %v2096
      %v2407 = vunpack.c.l.b16 %v2097
      %v2408 = vunpack.c.h.b16 %v2097
      %v2409 = vunpack.c.l.b16 %v2098
      %v2410 = vunpack.c.h.b16 %v2098
      %v2411 = vunpack.c.l.b16 %v2099
      %v2412 = vunpack.c.h.b16 %v2099
      %v2413 = vunpack.c.l.b16 %v2100
      %v2414 = vunpack.c.h.b16 %v2100
      %v2415 = vunpack.c.l.b16 %v2101
      %v2416 = vunpack.c.h.b16 %v2101
      %v2417 = vunpack.c.l.b16 %v2102
      %v2418 = vunpack.c.h.b16 %v2102
      %v2419 = vunpack.c.l.b16 %v2103
      %v2420 = vunpack.c.h.b16 %v2103
      %v2421 = vunpack.c.l.b16 %v2104
      %v2422 = vunpack.c.h.b16 %v2104
      %v2423 = vunpack.c.l.b16 %v2105
      %v2424 = vunpack.c.h.b16 %v2105
      %v2425 = vunpack.c.l.b16 %v2106
      %v2426 = vunpack.c.h.b16 %v2106
      %v2427 = vunpack.c.l.b16 %v2107
      %v2428 = vunpack.c.h.b16 %v2107
      %v2429 = vunpack.c.l.b16 %v2108
      %v2430 = vunpack.c.h.b16 %v2108
      %v2431 = vunpack.c.l.b16 %v2109
      %v2432 = vunpack.c.h.b16 %v2109
      %v2433 = vunpack.c.l.b16 %v2110
      %v2434 = vunpack.c.h.b16 %v2110
      %v2435 = vunpack.c.l.b16 %v2111
      %v2436 = vunpack.c.h.b16 %v2111
      %v2437 = vunpack.c.l.b16 %v2112
      %v2438 = vunpack.c.h.b16 %v2112
      %v2439 = vunpack.c.l.b16 %v2113
      %v2440 = vunpack.c.h.b16 %v2113
      %v2441 = vunpack.c.l.b16 %v2114
      %v2442 = vunpack.c.h.b16 %v2114
      %v2443 = vunpack.c.l.b16 %v2115
      %v2444 = vunpack.c.h.b16 %v2115
      %v2445 = vunpack.c.l.b16 %v2116
      %v2446 = vunpack.c.h.b16 %v2116
      %v2447 = vunpack.c.l.b16 %v2117
      %v2448 = vunpack.c.h.b16 %v2117
      %v2449 = vunpack.c.l.b16 %v2118
      %v2450 = vunpack.c.h.b16 %v2118
      %v2451 = vunpack.c.l.b16 %v2119
      %v2452 = vunpack.c.h.b16 %v2119
      %v2453 = vunpack.c.l.b16 %v2120
      %v2454 = vunpack.c.h.b16 %v2120
      %v2455 = vunpack.c.l.b16 %v2121
      %v2456 = vunpack.c.h.b16 %v2121
      %v2457 = vunpack.c.l.b16 %v2122
      %v2458 = vunpack.c.h.b16 %v2122
      %v2459 = vunpack.c.l.b16 %v2123
      %v2460 = vunpack.c.h.b16 %v2123
      %v2461 = vunpack.c.l.b16 %v2124
      %v2462 = vunpack.c.h.b16 %v2124
      %v2463 = vunpack.c.l.b16 %v2125
      %v2464 = vunpack.c.h.b16 %v2125
      %v2465 = vunpack.c.l.b16 %v2126
      %v2466 = vunpack.c.h.b16 %v2126
      %v2467 = vunpack.c.l.b16 %v2127
      %v2468 = vunpack.c.h.b16 %v2127
      %v2469 = vunpack.c.l.b16 %v2128
      %v2470 = vunpack.c.h.b16 %v2128
      %v2471 = vunpack.c.l.b16 %v2129
      %v2472 = vunpack.c.h.b16 %v2129
      %v2473 = vunpack.c.l.b16 %v2130
      %v2474 = vunpack.c.h.b16 %v2130
      %v2475 = vunpack.c.l.b16 %v2131
      %v2476 = vunpack.c.h.b16 %v2131
      %v2477 = vunpack.c.l.b16 %v2132
      %v2478 = vunpack.c.h.b16 %v2132
      %v2479 = vunpack.c.l.b16 %v2133
      %v2480 = vunpack.c.h.b16 %v2133
      %v2481 = vunpack.c.l.b16 %v2134
      %v2482 = vunpack.c.h.b16 %v2134
      %v2483 = vunpack.c.l.b16 %v2135
      %v2484 = vunpack.c.h.b16 %v2135
      %v2485 = vunpack.c.l.b16 %v2136
      %v2486 = vunpack.c.h.b16 %v2136
      %v2487 = vunpack.c.l.b16 %v2137
      %v2488 = vunpack.c.h.b16 %v2137
      %v2489 = vunpack.c.l.b16 %v2138
      %v2490 = vunpack.c.h.b16 %v2138
      %v2491 = vunpack.c.l.b16 %v2139
      %v2492 = vunpack.c.h.b16 %v2139
      %v2493 = vunpack.c.l.b16 %v2140
      %v2494 = vunpack.c.h.b16 %v2140
      %v2495 = vunpack.c.l.b16 %v2141
      %v2496 = vunpack.c.h.b16 %v2141
      %v2497 = vunpack.c.l.b16 %v2142
      %v2498 = vunpack.c.h.b16 %v2142
      %v2499 = vunpack.c.l.b16 %v2143
      %v2500 = vunpack.c.h.b16 %v2143
      %v2501 = vunpack.c.l.b16 %v2144
      %v2502 = vunpack.c.h.b16 %v2144
      %v2503 = vunpack.c.l.b16 %v2145
      %v2504 = vunpack.c.h.b16 %v2145
      %v2505 = vunpack.c.l.b16 %v2146
      %v2506 = vunpack.c.h.b16 %v2146
      %v2507 = vunpack.c.l.b16 %v2147
      %v2508 = vunpack.c.h.b16 %v2147
      %v2509 = vunpack.c.l.b16 %v2148
      %v2510 = vunpack.c.h.b16 %v2148
      %v2511 = vunpack.c.l.b16 %v2149
      %v2512 = vunpack.c.h.b16 %v2149
      %v2513 = vunpack.c.l.b16 %v2150
      %v2514 = vunpack.c.h.b16 %v2150
      %v2515 = vunpack.c.l.b16 %v2151
      %v2516 = vunpack.c.h.b16 %v2151
      %v2517 = vunpack.c.l.b16 %v2152
      %v2518 = vunpack.c.h.b16 %v2152
      %v2519 = vunpack.c.l.b16 %v2153
      %v2520 = vunpack.c.h.b16 %v2153
      %v2521 = vunpack.c.l.b16 %v2154
      %v2522 = vunpack.c.h.b16 %v2154
      %v2523 = vunpack.c.l.b16 %v2155
      %v2524 = vunpack.c.h.b16 %v2155
      %v2525 = vunpack.c.l.b16 %v2156
      %v2526 = vunpack.c.h.b16 %v2156
      %v2527 = vunpack.c.l.b16 %v2157
      %v2528 = vunpack.c.h.b16 %v2157
      %v2529 = vunpack.c.l.b16 %v2158
      %v2530 = vunpack.c.h.b16 %v2158
      %v2531 = vunpack.c.l.b16 %v2159
      %v2532 = vunpack.c.h.b16 %v2159
      %v2533 = vunpack.c.l.b16 %v2160
      %v2534 = vunpack.c.h.b16 %v2160
      %v2535 = vunpack.c.l.b16 %v2161
      %v2536 = vunpack.c.h.b16 %v2161
      %v2537 = vunpack.c.l.b16 %v2162
      %v2538 = vunpack.c.h.b16 %v2162
      %v2539 = vunpack.c.l.b16 %v2163
      %v2540 = vunpack.c.h.b16 %v2163
      %v2541 = vunpack.c.l.b16 %v2164
      %v2542 = vunpack.c.h.b16 %v2164
      %v2543 = vunpack.c.l.b16 %v2165
      %v2544 = vunpack.c.h.b16 %v2165
      %v2545 = vunpack.c.l.b16 %v2166
      %v2546 = vunpack.c.h.b16 %v2166
      %v2547 = vunpack.c.l.b16 %v2167
      %v2548 = vunpack.c.h.b16 %v2167
      %v2549 = vunpack.c.l.b16 %v2168
      %v2550 = vunpack.c.h.b16 %v2168
      %v2551 = vunpack.c.l.b16 %v2169
      %v2552 = vunpack.c.h.b16 %v2169
      %v2553 = vunpack.c.l.b16 %v2170
      %v2554 = vunpack.c.h.b16 %v2170
      %v2555 = vunpack.c.l.b16 %v2171
      %v2556 = vunpack.c.h.b16 %v2171
      %v2557 = vunpack.c.l.b16 %v2172
      %v2558 = vunpack.c.h.b16 %v2172
      %v2559 = vunpack.c.l.b16 %v2173
      %v2560 = vunpack.c.h.b16 %v2173
      %v2561 = vunpack.c.l.b16 %v2174
      %v2562 = vunpack.c.h.b16 %v2174
      %v2563 = vunpack.c.l.b16 %v2175
      %v2564 = vunpack.c.h.b16 %v2175
      %v2565 = vunpack.c.l.b16 %v2176
      %v2566 = vunpack.c.h.b16 %v2176
      %v2567 = vunpack.c.l.b16 %v2177
      %v2568 = vunpack.c.h.b16 %v2177
      %v2569 = vunpack.c.l.b16 %v2178
      %v2570 = vunpack.c.h.b16 %v2178
      %v2571 = vunpack.c.l.b16 %v2179
      %v2572 = vunpack.c.h.b16 %v2179
      %v2573 = vunpack.c.l.b16 %v2180
      %v2574 = vunpack.c.h.b16 %v2180
      %v2575 = vunpack.c.l.b16 %v2181
      %v2576 = vunpack.c.h.b16 %v2181
      %v2577 = vunpack.c.l.b16 %v2182
      %v2578 = vunpack.c.h.b16 %v2182
      %v2579 = vunpack.c.l.b16 %v2183
      %v2580 = vunpack.c.h.b16 %v2183
      %v2581 = vunpack.c.l.b16 %v2184
      %v2582 = vunpack.c.h.b16 %v2184
      %v2583 = vunpack.c.l.b16 %v2185
      %v2584 = vunpack.c.h.b16 %v2185
      %v2585 = vunpack.c.l.b16 %v2186
      %v2586 = vunpack.c.h.b16 %v2186
      %v2587 = vunpack.c.l.b16 %v2187
      %v2588 = vunpack.c.h.b16 %v2187
      %v2589 = vunpack.c.l.b16 %v2188
      %v2590 = vunpack.c.h.b16 %v2188
      %v2591 = vunpack.c.l.b16 %v2189
      %v2592 = vunpack.c.h.b16 %v2189
      %v2593 = vunpack.c.l.b16 %v2190
      %v2594 = vunpack.c.h.b16 %v2190
      %v2595 = vunpack.c.l.b16 %v2191
      %v2596 = vunpack.c.h.b16 %v2191
      %v2597 = vunpack.c.l.b16 %v2192
      %v2598 = vunpack.c.h.b16 %v2192
      %v2599 = vpack.c.b16 %v2347, %v2343
      %v2600 = vpack.c.b16 %v2348, %v2344
      %v2601 = vpack.c.b16 %v2349, %v2345
      %v2602 = vpack.c.b16 %v2350, %v2346
      %v2603 = vpack.c.b16 %v2355, %v2351
      %v2604 = vpack.c.b16 %v2356, %v2352
      %v2605 = vpack.c.b16 %v2357, %v2353
      %v2606 = vpack.c.b16 %v2358, %v2354
      %v2607 = vpack.c.b16 %v2363, %v2359
      %v2608 = vpack.c.b16 %v2364, %v2360
      %v2609 = vpack.c.b16 %v2365, %v2361
      %v2610 = vpack.c.b16 %v2366, %v2362
      %v2611 = vpack.c.b16 %v2371, %v2367
      %v2612 = vpack.c.b16 %v2372, %v2368
      %v2613 = vpack.c.b16 %v2373, %v2369
      %v2614 = vpack.c.b16 %v2374, %v2370
      %v2615 = vpack.c.b16 %v2379, %v2375
      %v2616 = vpack.c.b16 %v2380, %v2376
      %v2617 = vpack.c.b16 %v2381, %v2377
      %v2618 = vpack.c.b16 %v2382, %v2378
      %v2619 = vpack.c.b16 %v2387, %v2383
      %v2620 = vpack.c.b16 %v2388, %v2384
      %v2621 = vpack.c.b16 %v2389, %v2385
      %v2622 = vpack.c.b16 %v2390, %v2386
      %v2623 = vpack.c.b16 %v2395, %v2391
      %v2624 = vpack.c.b16 %v2396, %v2392
      %v2625 = vpack.c.b16 %v2397, %v2393
      %v2626 = vpack.c.b16 %v2398, %v2394
      %v2627 = vpack.c.b16 %v2403, %v2399
      %v2628 = vpack.c.b16 %v2404, %v2400
      %v2629 = vpack.c.b16 %v2405, %v2401
      %v2630 = vpack.c.b16 %v2406, %v2402
      %v2631 = vpack.c.b16 %v2411, %v2407
      %v2632 = vpack.c.b16 %v2412, %v2408
      %v2633 = vpack.c.b16 %v2413, %v2409
      %v2634 = vpack.c.b16 %v2414, %v2410
      %v2635 = vpack.c.b16 %v2419, %v2415
      %v2636 = vpack.c.b16 %v2420, %v2416
      %v2637 = vpack.c.b16 %v2421, %v2417
      %v2638 = vpack.c.b16 %v2422, %v2418
      %v2639 = vpack.c.b16 %v2427, %v2423
      %v2640 = vpack.c.b16 %v2428, %v2424
      %v2641 = vpack.c.b16 %v2429, %v2425
      %v2642 = vpack.c.b16 %v2430, %v2426
      %v2643 = vpack.c.b16 %v2435, %v2431
      %v2644 = vpack.c.b16 %v2436, %v2432
      %v2645 = vpack.c.b16 %v2437, %v2433
      %v2646 = vpack.c.b16 %v2438, %v2434
      %v2647 = vpack.c.b16 %v2443, %v2439
      %v2648 = vpack.c.b16 %v2444, %v2440
      %v2649 = vpack.c.b16 %v2445, %v2441
      %v2650 = vpack.c.b16 %v2446, %v2442
      %v2651 = vpack.c.b16 %v2451, %v2447
      %v2652 = vpack.c.b16 %v2452, %v2448
      %v2653 = vpack.c.b16 %v2453, %v2449
      %v2654 = vpack.c.b16 %v2454, %v2450
      %v2655 = vpack.c.b16 %v2459, %v2455
      %v2656 = vpack.c.b16 %v2460, %v2456
      %v2657 = vpack.c.b16 %v2461, %v2457
      %v2658 = vpack.c.b16 %v2462, %v2458
      %v2659 = vpack.c.b16 %v2467, %v2463
      %v2660 = vpack.c.b16 %v2468, %v2464
      %v2661 = vpack.c.b16 %v2469, %v2465
      %v2662 = vpack.c.b16 %v2470, %v2466
      %v2663 = vpack.c.b16 %v2475, %v2471
      %v2664 = vpack.c.b16 %v2476, %v2472
      %v2665 = vpack.c.b16 %v2477, %v2473
      %v2666 = vpack.c.b16 %v2478, %v2474
      %v2667 = vpack.c.b16 %v2483, %v2479
      %v2668 = vpack.c.b16 %v2484, %v2480
      %v2669 = vpack.c.b16 %v2485, %v2481
      %v2670 = vpack.c.b16 %v2486, %v2482
      %v2671 = vpack.c.b16 %v2491, %v2487
      %v2672 = vpack.c.b16 %v2492, %v2488
      %v2673 = vpack.c.b16 %v2493, %v2489
      %v2674 = vpack.c.b16 %v2494, %v2490
      %v2675 = vpack.c.b16 %v2499, %v2495
      %v2676 = vpack.c.b16 %v2500, %v2496
      %v2677 = vpack.c.b16 %v2501, %v2497
      %v2678 = vpack.c.b16 %v2502, %v2498
      %v2679 = vpack.c.b16 %v2507, %v2503
      %v2680 = vpack.c.b16 %v2508, %v2504
      %v2681 = vpack.c.b16 %v2509, %v2505
      %v2682 = vpack.c.b16 %v2510, %v2506
      %v2683 = vpack.c.b16 %v2515, %v2511
      %v2684 = vpack.c.b16 %v2516, %v2512
      %v2685 = vpack.c.b16 %v2517, %v2513
      %v2686 = vpack.c.b16 %v2518, %v2514
      %v2687 = vpack.c.b16 %v2523, %v2519
      %v2688 = vpack.c.b16 %v2524, %v2520
      %v2689 = vpack.c.b16 %v2525, %v2521
      %v2690 = vpack.c.b16 %v2526, %v2522
      %v2691 = vpack.c.b16 %v2531, %v2527
      %v2692 = vpack.c.b16 %v2532, %v2528
      %v2693 = vpack.c.b16 %v2533, %v2529
      %v2694 = vpack.c.b16 %v2534, %v2530
      %v2695 = vpack.c.b16 %v2539, %v2535
      %v2696 = vpack.c.b16 %v2540, %v2536
      %v2697 = vpack.c.b16 %v2541, %v2537
      %v2698 = vpack.c.b16 %v2542, %v2538
      %v2699 = vpack.c.b16 %v2547, %v2543
      %v2700 = vpack.c.b16 %v2548, %v2544
      %v2701 = vpack.c.b16 %v2549, %v2545
      %v2702 = vpack.c.b16 %v2550, %v2546
      %v2703 = vpack.c.b16 %v2555, %v2551
      %v2704 = vpack.c.b16 %v2556, %v2552
      %v2705 = vpack.c.b16 %v2557, %v2553
      %v2706 = vpack.c.b16 %v2558, %v2554
      %v2707 = vpack.c.b16 %v2563, %v2559
      %v2708 = vpack.c.b16 %v2564, %v2560
      %v2709 = vpack.c.b16 %v2565, %v2561
      %v2710 = vpack.c.b16 %v2566, %v2562
      %v2711 = vpack.c.b16 %v2571, %v2567
      %v2712 = vpack.c.b16 %v2572, %v2568
      %v2713 = vpack.c.b16 %v2573, %v2569
      %v2714 = vpack.c.b16 %v2574, %v2570
      %v2715 = vpack.c.b16 %v2579, %v2575
      %v2716 = vpack.c.b16 %v2580, %v2576
      %v2717 = vpack.c.b16 %v2581, %v2577
      %v2718 = vpack.c.b16 %v2582, %v2578
      %v2719 = vpack.c.b16 %v2587, %v2583
      %v2720 = vpack.c.b16 %v2588, %v2584
      %v2721 = vpack.c.b16 %v2589, %v2585
      %v2722 = vpack.c.b16 %v2590, %v2586
      %v2723 = vpack.c.b16 %v2595, %v2591
      %v2724 = vpack.c.b16 %v2596, %v2592
      %v2725 = vpack.c.b16 %v2597, %v2593
      %v2726 = vpack.c.b16 %v2598, %v2594
      %2855 = vmatprep.subr.bf16.mxu0 %v2600
      %2856 = vmatpush1.bf16.msra.mxu0 %v2599
      %2857 = vmatprep.subr.bf16.mxu0 %v2604
      %2858 = vmatpush1.bf16.msra.mxu0 %v2603
      %2859 = vmatprep.subr.bf16.mxu0 %v2608
      %2860 = vmatpush1.bf16.msra.mxu0 %v2607
      %2861 = vmatprep.subr.bf16.mxu0 %v2612
      %2862 = vmatpush1.bf16.msra.mxu0 %v2611
      %2863 = vmatprep.subr.bf16.mxu0 %v2616
      %2864 = vmatpush1.bf16.msra.mxu0 %v2615
      %2865 = vmatprep.subr.bf16.mxu0 %v2620
      %2866 = vmatpush1.bf16.msra.mxu0 %v2619
      %2867 = vmatprep.subr.bf16.mxu0 %v2624
      %2868 = vmatpush1.bf16.msra.mxu0 %v2623
      %2869 = vmatprep.subr.bf16.mxu0 %v2628
      %2870 = vmatpush1.bf16.msra.mxu0 %v2627
      %2871 = vmatprep.subr.bf16.mxu0 %v2632
      %2872 = vmatpush1.bf16.msra.mxu0 %v2631
      %2873 = vmatprep.subr.bf16.mxu0 %v2636
      %2874 = vmatpush1.bf16.msra.mxu0 %v2635
      %2875 = vmatprep.subr.bf16.mxu0 %v2640
      %2876 = vmatpush1.bf16.msra.mxu0 %v2639
      %2877 = vmatprep.subr.bf16.mxu0 %v2644
      %2878 = vmatpush1.bf16.msra.mxu0 %v2643
      %2879 = vmatprep.subr.bf16.mxu0 %v2648
      %2880 = vmatpush1.bf16.msra.mxu0 %v2647
      %2881 = vmatprep.subr.bf16.mxu0 %v2652
      %2882 = vmatpush1.bf16.msra.mxu0 %v2651
      %2883 = vmatprep.subr.bf16.mxu0 %v2656
      %2884 = vmatpush1.bf16.msra.mxu0 %v2655
      %2885 = vmatprep.subr.bf16.mxu0 %v2660
      %2886 = vmatpush1.bf16.msra.mxu0 %v2659
      %2887 = vmatprep.mubr.bf16.mxu0 %v2062
      %2888 = vmatmul.mubr.bf16.gmra.mrb[0].mxu0 %v2061
      %v2889 = vpop.f32.mrb[0].mxu0
      %v2890 = vadd.f32 %v2198, %v2889
      %v2891 = vpop.f32.mrb[0].mxu0
      %v2892 = vadd.f32 %v2202, %v2891
      %v2893 = vpop.f32.mrb[0].mxu0
      %v2894 = vpop.f32.mrb[0].mxu0
      %2895 = vdwg.mxu0
      %2896 = vmatprep.subr.bf16.mxu0 %v2664
      %2897 = vmatpush1.bf16.msra.mxu0 %v2663
      %2898 = vmatprep.subr.bf16.mxu0 %v2668
      %2899 = vmatpush1.bf16.msra.mxu0 %v2667
      %2900 = vmatprep.subr.bf16.mxu0 %v2672
      %2901 = vmatpush1.bf16.msra.mxu0 %v2671
      %2902 = vmatprep.subr.bf16.mxu0 %v2676
      %2903 = vmatpush1.bf16.msra.mxu0 %v2675
      %2904 = vmatprep.subr.bf16.mxu0 %v2680
      %2905 = vmatpush1.bf16.msra.mxu0 %v2679
      %2906 = vmatprep.subr.bf16.mxu0 %v2684
      %2907 = vmatpush1.bf16.msra.mxu0 %v2683
      %2908 = vmatprep.subr.bf16.mxu0 %v2688
      %2909 = vmatpush1.bf16.msra.mxu0 %v2687
      %2910 = vmatprep.subr.bf16.mxu0 %v2692
      %2911 = vmatpush1.bf16.msra.mxu0 %v2691
      %2912 = vmatprep.subr.bf16.mxu0 %v2696
      %2913 = vmatpush1.bf16.msra.mxu0 %v2695
      %2914 = vmatprep.subr.bf16.mxu0 %v2700
      %2915 = vmatpush1.bf16.msra.mxu0 %v2699
      %2916 = vmatprep.subr.bf16.mxu0 %v2704
      %2917 = vmatpush1.bf16.msra.mxu0 %v2703
      %2918 = vmatprep.subr.bf16.mxu0 %v2708
      %2919 = vmatpush1.bf16.msra.mxu0 %v2707
      %2920 = vmatprep.subr.bf16.mxu0 %v2712
      %2921 = vmatpush1.bf16.msra.mxu0 %v2711
      %2922 = vmatprep.subr.bf16.mxu0 %v2716
      %2923 = vmatpush1.bf16.msra.mxu0 %v2715
      %2924 = vmatprep.subr.bf16.mxu0 %v2720
      %2925 = vmatpush1.bf16.msra.mxu0 %v2719
      %2926 = vmatprep.subr.bf16.mxu0 %v2724
      %2927 = vmatpush1.bf16.msra.mxu0 %v2723
      %2928 = vmatprep.mubr.bf16.mxu0 %v2064
      %2929 = vmatmul.mubr.bf16.gmra.mrb[0].mxu0 %v2063
      %v2930 = vpop.f32.mrb[0].mxu0
      %v2931 = vadd.f32 %v2890, %v2930
      %v2932 = vpop.f32.mrb[0].mxu0
      %v2933 = vadd.f32 %v2892, %v2932
      %v2934 = vpop.f32.mrb[0].mxu0
      %v2935 = vpop.f32.mrb[0].mxu0
      %2936 = vdwg.mxu0
      %2937 = vmatprep.subr.bf16.mxu0 %v2602
      %2938 = vmatpush1.bf16.msra.mxu0 %v2601
      %2939 = vmatprep.subr.bf16.mxu0 %v2606
      %2940 = vmatpush1.bf16.msra.mxu0 %v2605
      %2941 = vmatprep.subr.bf16.mxu0 %v2610
      %2942 = vmatpush1.bf16.msra.mxu0 %v2609
      %2943 = vmatprep.subr.bf16.mxu0 %v2614
      %2944 = vmatpush1.bf16.msra.mxu0 %v2613
      %2945 = vmatprep.subr.bf16.mxu0 %v2618
      %2946 = vmatpush1.bf16.msra.mxu0 %v2617
      %2947 = vmatprep.subr.bf16.mxu0 %v2622
      %2948 = vmatpush1.bf16.msra.mxu0 %v2621
      %2949 = vmatprep.subr.bf16.mxu0 %v2626
      %2950 = vmatpush1.bf16.msra.mxu0 %v2625
      %2951 = vmatprep.subr.bf16.mxu0 %v2630
      %2952 = vmatpush1.bf16.msra.mxu0 %v2629
      %2953 = vmatprep.subr.bf16.mxu0 %v2634
      %2954 = vmatpush1.bf16.msra.mxu0 %v2633
      %2955 = vmatprep.subr.bf16.mxu0 %v2638
      %2956 = vmatpush1.bf16.msra.mxu0 %v2637
      %2957 = vmatprep.subr.bf16.mxu0 %v2642
      %2958 = vmatpush1.bf16.msra.mxu0 %v2641
      %2959 = vmatprep.subr.bf16.mxu0 %v2646
      %2960 = vmatpush1.bf16.msra.mxu0 %v2645
      %2961 = vmatprep.subr.bf16.mxu0 %v2650
      %2962 = vmatpush1.bf16.msra.mxu0 %v2649
      %2963 = vmatprep.subr.bf16.mxu0 %v2654
      %2964 = vmatpush1.bf16.msra.mxu0 %v2653
      %2965 = vmatprep.subr.bf16.mxu0 %v2658
      %2966 = vmatpush1.bf16.msra.mxu0 %v2657
      %2967 = vmatprep.subr.bf16.mxu0 %v2662
      %2968 = vmatpush1.bf16.msra.mxu0 %v2661
      %2969 = vmatprep.mubr.bf16.mxu0 %v2062
      %2970 = vmatmul.mubr.bf16.gmra.mrb[0].mxu0 %v2061
      %v2971 = vpop.f32.mrb[0].mxu0
      %v2972 = vadd.f32 %v2206, %v2971
      %v2973 = vpop.f32.mrb[0].mxu0
      %v2974 = vadd.f32 %v2210, %v2973
      %v2975 = vpop.f32.mrb[0].mxu0
      %v2976 = vpop.f32.mrb[0].mxu0
      %2977 = vdwg.mxu0
      %2978 = vmatprep.subr.bf16.mxu0 %v2666
      %2979 = vmatpush1.bf16.msra.mxu0 %v2665
      %2980 = vmatprep.subr.bf16.mxu0 %v2670
      %2981 = vmatpush1.bf16.msra.mxu0 %v2669
      %2982 = vmatprep.subr.bf16.mxu0 %v2674
      %2983 = vmatpush1.bf16.msra.mxu0 %v2673
      %2984 = vmatprep.subr.bf16.mxu0 %v2678
      %2985 = vmatpush1.bf16.msra.mxu0 %v2677
      %2986 = vmatprep.subr.bf16.mxu0 %v2682
      %2987 = vmatpush1.bf16.msra.mxu0 %v2681
      %2988 = vmatprep.subr.bf16.mxu0 %v2686
      %2989 = vmatpush1.bf16.msra.mxu0 %v2685
      %2990 = vmatprep.subr.bf16.mxu0 %v2690
      %2991 = vmatpush1.bf16.msra.mxu0 %v2689
      %2992 = vmatprep.subr.bf16.mxu0 %v2694
      %2993 = vmatpush1.bf16.msra.mxu0 %v2693
      %2994 = vmatprep.subr.bf16.mxu0 %v2698
      %2995 = vmatpush1.bf16.msra.mxu0 %v2697
      %2996 = vmatprep.subr.bf16.mxu0 %v2702
      %2997 = vmatpush1.bf16.msra.mxu0 %v2701
      %2998 = vmatprep.subr.bf16.mxu0 %v2706
      %2999 = vmatpush1.bf16.msra.mxu0 %v2705
      %3000 = vmatprep.subr.bf16.mxu0 %v2710
      %3001 = vmatpush1.bf16.msra.mxu0 %v2709
      %3002 = vmatprep.subr.bf16.mxu0 %v2714
      %3003 = vmatpush1.bf16.msra.mxu0 %v2713
      %3004 = vmatprep.subr.bf16.mxu0 %v2718
      %3005 = vmatpush1.bf16.msra.mxu0 %v2717
      %3006 = vmatprep.subr.bf16.mxu0 %v2722
      %3007 = vmatpush1.bf16.msra.mxu0 %v2721
      %3008 = vmatprep.subr.bf16.mxu0 %v2726
      %3009 = vmatpush1.bf16.msra.mxu0 %v2725
      %3010 = vmatprep.mubr.bf16.mxu0 %v2064
      %3011 = vmatmul.mubr.bf16.gmra.mrb[0].mxu0 %v2063
      %v3012 = vpop.f32.mrb[0].mxu0
      %v3013 = vadd.f32 %v2972, %v3012
      %v3014 = vpop.f32.mrb[0].mxu0
      %v3015 = vadd.f32 %v2974, %v3014
      %v3016 = vpop.f32.mrb[0].mxu0
      %v3017 = vpop.f32.mrb[0].mxu0
      %3018 = vdwg.mxu0
      %v3019 = vlaneseq
      %v3020 = vshrl.u32 %v3019, 7
      %vm3021 = vcmp.lt.s32.totalorder %v3020, 2
      %v3022 = vsel %vm3021, 1, 0
      %v3023 = vcvt.s32.f32 %v3022
      %v3024 = vmul.f32 %v2931, %v3023
      %v3025 = vmul.f32 %v2933, %v3023
      %v3026 = vmul.f32 %v3013, %v3023
      %v3027 = vmul.f32 %v3015, %v3023
      %v3028 = vrot.slane %v3024, 4
      %v3029 = vadd.f32 %v3024, %v3028
      %v3030 = vrot.slane %v3029, 2
      %v3031 = vadd.f32 %v3029, %v3030
      %v3032 = vrot.slane %v3031, 1
      %v3033 = vadd.f32 %v3031, %v3032
      %v3034 = vrot.slane %v3025, 4
      %v3035 = vadd.f32 %v3025, %v3034
      %v3036 = vrot.slane %v3035, 2
      %v3037 = vadd.f32 %v3035, %v3036
      %v3038 = vrot.slane %v3037, 1
      %v3039 = vadd.f32 %v3037, %v3038
      %v3040 = vrot.slane %v3026, 4
      %v3041 = vadd.f32 %v3026, %v3040
      %v3042 = vrot.slane %v3041, 2
      %v3043 = vadd.f32 %v3041, %v3042
      %v3044 = vrot.slane %v3043, 1
      %v3045 = vadd.f32 %v3043, %v3044
      %v3046 = vrot.slane %v3027, 4
      %v3047 = vadd.f32 %v3027, %v3046
      %v3048 = vrot.slane %v3047, 2
      %v3049 = vadd.f32 %v3047, %v3048
      %v3050 = vrot.slane %v3049, 1
      %v3051 = vadd.f32 %v3049, %v3050
      %v3052 = vmul.f32 %v3033, 0.5
      %v3053 = vmul.f32 %v3039, 0.5
      %v3054 = vmul.f32 %v3045, 0.5
      %v3055 = vmul.f32 %v3051, 0.5
      %v3056 = vsub.f32 %v2931, %v3052
      %v3057 = vsub.f32 %v2933, %v3053
      %v3058 = vsub.f32 %v3013, %v3054
      %v3059 = vsub.f32 %v3015, %v3055
      %v3060 = vmul.f32 %v3056, %v3023
      %v3061 = vmul.f32 %v3057, %v3023
      %v3062 = vmul.f32 %v3058, %v3023
      %v3063 = vmul.f32 %v3059, %v3023
      %v3064 = vmul.f32 %v3060, %v3060
      %v3065 = vmul.f32 %v3061, %v3061
      %v3066 = vmul.f32 %v3062, %v3062
      %v3067 = vmul.f32 %v3063, %v3063
      %v3068 = vrot.slane %v3064, 4
      %v3069 = vadd.f32 %v3064, %v3068
      %v3070 = vrot.slane %v3069, 2
      %v3071 = vadd.f32 %v3069, %v3070
      %v3072 = vrot.slane %v3071, 1
      %v3073 = vadd.f32 %v3071, %v3072
      %v3074 = vrot.slane %v3065, 4
      %v3075 = vadd.f32 %v3065, %v3074
      %v3076 = vrot.slane %v3075, 2
      %v3077 = vadd.f32 %v3075, %v3076
      %v3078 = vrot.slane %v3077, 1
      %v3079 = vadd.f32 %v3077, %v3078
      %v3080 = vrot.slane %v3066, 4
      %v3081 = vadd.f32 %v3066, %v3080
      %v3082 = vrot.slane %v3081, 2
      %v3083 = vadd.f32 %v3081, %v3082
      %v3084 = vrot.slane %v3083, 1
      %v3085 = vadd.f32 %v3083, %v3084
      %v3086 = vrot.slane %v3067, 4
      %v3087 = vadd.f32 %v3067, %v3086
      %v3088 = vrot.slane %v3087, 2
      %v3089 = vadd.f32 %v3087, %v3088
      %v3090 = vrot.slane %v3089, 1
      %v3091 = vadd.f32 %v3089, %v3090
      %v3092 = vmul.f32 %v3073, 0.5
      %v3093 = vmul.f32 %v3079, 0.5
      %v3094 = vmul.f32 %v3085, 0.5
      %v3095 = vmul.f32 %v3091, 0.5
      %v3096 = vadd.f32 %v3092, 1e-05
      %v3097 = vadd.f32 %v3093, 1e-05
      %v3098 = vadd.f32 %v3094, 1e-05
      %v3099 = vadd.f32 %v3095, 1e-05
      %v3100 = vrsqrt.pop %v3096
      %v3101 = vrsqrt.pop %v3097
      %v3102 = vrsqrt.pop %v3098
      %v3103 = vrsqrt.pop %v3099
      %v3104 = vmul.f32 %v3056, %v3100
      %v3105 = vmul.f32 %v3057, %v3101
      %v3106 = vmul.f32 %v3058, %v3102
      %v3107 = vmul.f32 %v3059, %v3103
      %v3108 = vld [vmem:[%s5] sm:$0xf]
      %v3110 = vlaneseq
      %v3111 = vshrl.u32 %v3110, 7
      %v3112 = vsub.s32 0, %v3111
      %v3113 = vrot.slane %v3108, %v3112
      %v3114 = vlaneseq
      %v3115 = vshrl.u32 %v3114, 7
      %v3116 = vsub.s32 1, %v3115
      %v3117 = vrot.slane %v3108, %v3116
      %v3118 = vlaneseq
      %v3119 = vshrl.u32 %v3118, 7
      %v3120 = vsub.s32 2, %v3119
      %v3121 = vrot.slane %v3108, %v3120
      %v3122 = vlaneseq
      %v3123 = vshrl.u32 %v3122, 7
      %v3124 = vsub.s32 3, %v3123
      %v3125 = vrot.slane %v3108, %v3124
      %v3130 = vmul.f32 %v3104, %v3113
      %v3131 = vmul.f32 %v3105, %v3117
      %v3132 = vmul.f32 %v3106, %v3121
      %v3133 = vmul.f32 %v3107, %v3125
      %v3134 = vld [vmem:[%s6] sm:$0xf]
      %v3136 = vlaneseq
      %v3137 = vshrl.u32 %v3136, 7
      %v3138 = vsub.s32 0, %v3137
      %v3139 = vrot.slane %v3134, %v3138
      %v3140 = vlaneseq
      %v3141 = vshrl.u32 %v3140, 7
      %v3142 = vsub.s32 1, %v3141
      %v3143 = vrot.slane %v3134, %v3142
      %v3144 = vlaneseq
      %v3145 = vshrl.u32 %v3144, 7
      %v3146 = vsub.s32 2, %v3145
      %v3147 = vrot.slane %v3134, %v3146
      %v3148 = vlaneseq
      %v3149 = vshrl.u32 %v3148, 7
      %v3150 = vsub.s32 3, %v3149
      %v3151 = vrot.slane %v3134, %v3150
      %v3156 = vadd.f32 %v3130, %v3139
      %v3157 = vadd.f32 %v3131, %v3143
      %v3158 = vadd.f32 %v3132, %v3147
      %v3159 = vadd.f32 %v3133, %v3151
      %vm3160 = vcmp.gt.f32.partialorder %v3156, 0.0
      %vm3161 = vcmp.gt.f32.partialorder %v3157, 0.0
      %vm3162 = vcmp.gt.f32.partialorder %v3158, 0.0
      %vm3163 = vcmp.gt.f32.partialorder %v3159, 0.0
      %v3164 = vmul.f32 %v3156, 0.2
      %v3165 = vmul.f32 %v3157, 0.2
      %v3166 = vmul.f32 %v3158, 0.2
      %v3167 = vmul.f32 %v3159, 0.2
      %v3168 = vsel %vm3160, %v3156, %v3164
      %v3169 = vsel %vm3161, %v3157, %v3165
      %v3170 = vsel %vm3162, %v3158, %v3166
      %v3171 = vsel %vm3163, %v3159, %v3167
      %v3172 = vpack.c.bf16 %v3168, %v3168
      %v3173 = vpack.c.bf16 %v3169, %v3169
      %v3174 = vpack.c.bf16 %v3170, %v3170
      %v3175 = vpack.c.bf16 %v3171, %v3171
      %v3176 = vld [vmem:[#allocation9] sm:$0xff]
      %v3177 = vld [vmem:[#allocation9 + $0x8] sm:$0xff]
      %v3178 = vld [vmem:[#allocation9 + $0x10] sm:$0xff]
      %v3179 = vld [vmem:[#allocation9 + $0x18] sm:$0xff]
      %v3180 = vld [vmem:[#allocation9 + $0x20] sm:$0xff]
      %v3181 = vld [vmem:[#allocation9 + $0x28] sm:$0xff]
      %v3182 = vld [vmem:[#allocation9 + $0x30] sm:$0xff]
      %v3183 = vld [vmem:[#allocation9 + $0x38] sm:$0xff]
      %v3184 = vld [vmem:[#allocation9 + $0x40] sm:$0xff]
      %v3185 = vld [vmem:[#allocation9 + $0x48] sm:$0xff]
      %v3186 = vld [vmem:[#allocation9 + $0x50] sm:$0xff]
      %v3187 = vld [vmem:[#allocation9 + $0x58] sm:$0xff]
      %v3188 = vld [vmem:[#allocation9 + $0x60] sm:$0xff]
      %v3189 = vld [vmem:[#allocation9 + $0x68] sm:$0xff]
      %v3190 = vld [vmem:[#allocation9 + $0x70] sm:$0xff]
      %v3191 = vld [vmem:[#allocation9 + $0x78] sm:$0xff]
      %v3192 = vld [vmem:[#allocation9 + $0x80] sm:$0xff]
      %v3193 = vld [vmem:[#allocation9 + $0x88] sm:$0xff]
      %v3194 = vld [vmem:[#allocation9 + $0x90] sm:$0xff]
      %v3195 = vld [vmem:[#allocation9 + $0x98] sm:$0xff]
      %v3196 = vld [vmem:[#allocation9 + $0xa0] sm:$0xff]
      %v3197 = vld [vmem:[#allocation9 + $0xa8] sm:$0xff]
      %v3198 = vld [vmem:[#allocation9 + $0xb0] sm:$0xff]
      %v3199 = vld [vmem:[#allocation9 + $0xb8] sm:$0xff]
      %v3200 = vld [vmem:[#allocation9 + $0xc0] sm:$0xff]
      %v3201 = vld [vmem:[#allocation9 + $0xc8] sm:$0xff]
      %v3202 = vld [vmem:[#allocation9 + $0xd0] sm:$0xff]
      %v3203 = vld [vmem:[#allocation9 + $0xd8] sm:$0xff]
      %v3204 = vld [vmem:[#allocation9 + $0xe0] sm:$0xff]
      %v3205 = vld [vmem:[#allocation9 + $0xe8] sm:$0xff]
      %v3206 = vld [vmem:[#allocation9 + $0xf0] sm:$0xff]
      %v3207 = vld [vmem:[#allocation9 + $0xf8] sm:$0xff]
      %v3208 = vld [vmem:[#allocation9 + $0x100] sm:$0xff]
      %v3209 = vld [vmem:[#allocation9 + $0x108] sm:$0xff]
      %v3210 = vld [vmem:[#allocation9 + $0x110] sm:$0xff]
      %v3211 = vld [vmem:[#allocation9 + $0x118] sm:$0xff]
      %v3212 = vld [vmem:[#allocation9 + $0x120] sm:$0xff]
      %v3213 = vld [vmem:[#allocation9 + $0x128] sm:$0xff]
      %v3214 = vld [vmem:[#allocation9 + $0x130] sm:$0xff]
      %v3215 = vld [vmem:[#allocation9 + $0x138] sm:$0xff]
      %v3216 = vld [vmem:[#allocation9 + $0x140] sm:$0xff]
      %v3217 = vld [vmem:[#allocation9 + $0x148] sm:$0xff]
      %v3218 = vld [vmem:[#allocation9 + $0x150] sm:$0xff]
      %v3219 = vld [vmem:[#allocation9 + $0x158] sm:$0xff]
      %v3220 = vld [vmem:[#allocation9 + $0x160] sm:$0xff]
      %v3221 = vld [vmem:[#allocation9 + $0x168] sm:$0xff]
      %v3222 = vld [vmem:[#allocation9 + $0x170] sm:$0xff]
      %v3223 = vld [vmem:[#allocation9 + $0x178] sm:$0xff]
      %v3224 = vld [vmem:[#allocation9 + $0x180] sm:$0xff]
      %v3225 = vld [vmem:[#allocation9 + $0x188] sm:$0xff]
      %v3226 = vld [vmem:[#allocation9 + $0x190] sm:$0xff]
      %v3227 = vld [vmem:[#allocation9 + $0x198] sm:$0xff]
      %v3228 = vld [vmem:[#allocation9 + $0x1a0] sm:$0xff]
      %v3229 = vld [vmem:[#allocation9 + $0x1a8] sm:$0xff]
      %v3230 = vld [vmem:[#allocation9 + $0x1b0] sm:$0xff]
      %v3231 = vld [vmem:[#allocation9 + $0x1b8] sm:$0xff]
      %v3232 = vld [vmem:[#allocation9 + $0x1c0] sm:$0xff]
      %v3233 = vld [vmem:[#allocation9 + $0x1c8] sm:$0xff]
      %v3234 = vld [vmem:[#allocation9 + $0x1d0] sm:$0xff]
      %v3235 = vld [vmem:[#allocation9 + $0x1d8] sm:$0xff]
      %v3236 = vld [vmem:[#allocation9 + $0x1e0] sm:$0xff]
      %v3237 = vld [vmem:[#allocation9 + $0x1e8] sm:$0xff]
      %v3238 = vld [vmem:[#allocation9 + $0x1f0] sm:$0xff]
      %v3239 = vld [vmem:[#allocation9 + $0x1f8] sm:$0xff]
      %v3240 = vld [vmem:[%s8] sm:$0x3]
      %v3242 = vlaneseq
      %v3243 = vshrl.u32 %v3242, 7
      %v3244 = vsub.s32 0, %v3243
      %v3245 = vrot.slane %v3240, %v3244
      %v3246 = vlaneseq
      %v3247 = vshrl.u32 %v3246, 7
      %v3248 = vsub.s32 1, %v3247
      %v3249 = vrot.slane %v3240, %v3248
      %v3316 = vunpack.c.l.b16 %v3176
      %v3317 = vunpack.c.h.b16 %v3176
      %v3318 = vunpack.c.l.b16 %v3177
      %v3319 = vunpack.c.h.b16 %v3177
      %v3320 = vunpack.c.l.b16 %v3178
      %v3321 = vunpack.c.h.b16 %v3178
      %v3322 = vunpack.c.l.b16 %v3179
      %v3323 = vunpack.c.h.b16 %v3179
      %v3324 = vunpack.c.l.b16 %v3180
      %v3325 = vunpack.c.h.b16 %v3180
      %v3326 = vunpack.c.l.b16 %v3181
      %v3327 = vunpack.c.h.b16 %v3181
      %v3328 = vunpack.c.l.b16 %v3182
      %v3329 = vunpack.c.h.b16 %v3182
      %v3330 = vunpack.c.l.b16 %v3183
      %v3331 = vunpack.c.h.b16 %v3183
      %v3332 = vunpack.c.l.b16 %v3184
      %v3333 = vunpack.c.h.b16 %v3184
      %v3334 = vunpack.c.l.b16 %v3185
      %v3335 = vunpack.c.h.b16 %v3185
      %v3336 = vunpack.c.l.b16 %v3186
      %v3337 = vunpack.c.h.b16 %v3186
      %v3338 = vunpack.c.l.b16 %v3187
      %v3339 = vunpack.c.h.b16 %v3187
      %v3340 = vunpack.c.l.b16 %v3188
      %v3341 = vunpack.c.h.b16 %v3188
      %v3342 = vunpack.c.l.b16 %v3189
      %v3343 = vunpack.c.h.b16 %v3189
      %v3344 = vunpack.c.l.b16 %v3190
      %v3345 = vunpack.c.h.b16 %v3190
      %v3346 = vunpack.c.l.b16 %v3191
      %v3347 = vunpack.c.h.b16 %v3191
      %v3348 = vunpack.c.l.b16 %v3192
      %v3349 = vunpack.c.h.b16 %v3192
      %v3350 = vunpack.c.l.b16 %v3193
      %v3351 = vunpack.c.h.b16 %v3193
      %v3352 = vunpack.c.l.b16 %v3194
      %v3353 = vunpack.c.h.b16 %v3194
      %v3354 = vunpack.c.l.b16 %v3195
      %v3355 = vunpack.c.h.b16 %v3195
      %v3356 = vunpack.c.l.b16 %v3196
      %v3357 = vunpack.c.h.b16 %v3196
      %v3358 = vunpack.c.l.b16 %v3197
      %v3359 = vunpack.c.h.b16 %v3197
      %v3360 = vunpack.c.l.b16 %v3198
      %v3361 = vunpack.c.h.b16 %v3198
      %v3362 = vunpack.c.l.b16 %v3199
      %v3363 = vunpack.c.h.b16 %v3199
      %v3364 = vunpack.c.l.b16 %v3200
      %v3365 = vunpack.c.h.b16 %v3200
      %v3366 = vunpack.c.l.b16 %v3201
      %v3367 = vunpack.c.h.b16 %v3201
      %v3368 = vunpack.c.l.b16 %v3202
      %v3369 = vunpack.c.h.b16 %v3202
      %v3370 = vunpack.c.l.b16 %v3203
      %v3371 = vunpack.c.h.b16 %v3203
      %v3372 = vunpack.c.l.b16 %v3204
      %v3373 = vunpack.c.h.b16 %v3204
      %v3374 = vunpack.c.l.b16 %v3205
      %v3375 = vunpack.c.h.b16 %v3205
      %v3376 = vunpack.c.l.b16 %v3206
      %v3377 = vunpack.c.h.b16 %v3206
      %v3378 = vunpack.c.l.b16 %v3207
      %v3379 = vunpack.c.h.b16 %v3207
      %v3380 = vunpack.c.l.b16 %v3208
      %v3381 = vunpack.c.h.b16 %v3208
      %v3382 = vunpack.c.l.b16 %v3209
      %v3383 = vunpack.c.h.b16 %v3209
      %v3384 = vunpack.c.l.b16 %v3210
      %v3385 = vunpack.c.h.b16 %v3210
      %v3386 = vunpack.c.l.b16 %v3211
      %v3387 = vunpack.c.h.b16 %v3211
      %v3388 = vunpack.c.l.b16 %v3212
      %v3389 = vunpack.c.h.b16 %v3212
      %v3390 = vunpack.c.l.b16 %v3213
      %v3391 = vunpack.c.h.b16 %v3213
      %v3392 = vunpack.c.l.b16 %v3214
      %v3393 = vunpack.c.h.b16 %v3214
      %v3394 = vunpack.c.l.b16 %v3215
      %v3395 = vunpack.c.h.b16 %v3215
      %v3396 = vunpack.c.l.b16 %v3216
      %v3397 = vunpack.c.h.b16 %v3216
      %v3398 = vunpack.c.l.b16 %v3217
      %v3399 = vunpack.c.h.b16 %v3217
      %v3400 = vunpack.c.l.b16 %v3218
      %v3401 = vunpack.c.h.b16 %v3218
      %v3402 = vunpack.c.l.b16 %v3219
      %v3403 = vunpack.c.h.b16 %v3219
      %v3404 = vunpack.c.l.b16 %v3220
      %v3405 = vunpack.c.h.b16 %v3220
      %v3406 = vunpack.c.l.b16 %v3221
      %v3407 = vunpack.c.h.b16 %v3221
      %v3408 = vunpack.c.l.b16 %v3222
      %v3409 = vunpack.c.h.b16 %v3222
      %v3410 = vunpack.c.l.b16 %v3223
      %v3411 = vunpack.c.h.b16 %v3223
      %v3412 = vunpack.c.l.b16 %v3224
      %v3413 = vunpack.c.h.b16 %v3224
      %v3414 = vunpack.c.l.b16 %v3225
      %v3415 = vunpack.c.h.b16 %v3225
      %v3416 = vunpack.c.l.b16 %v3226
      %v3417 = vunpack.c.h.b16 %v3226
      %v3418 = vunpack.c.l.b16 %v3227
      %v3419 = vunpack.c.h.b16 %v3227
      %v3420 = vunpack.c.l.b16 %v3228
      %v3421 = vunpack.c.h.b16 %v3228
      %v3422 = vunpack.c.l.b16 %v3229
      %v3423 = vunpack.c.h.b16 %v3229
      %v3424 = vunpack.c.l.b16 %v3230
      %v3425 = vunpack.c.h.b16 %v3230
      %v3426 = vunpack.c.l.b16 %v3231
      %v3427 = vunpack.c.h.b16 %v3231
      %v3428 = vunpack.c.l.b16 %v3232
      %v3429 = vunpack.c.h.b16 %v3232
      %v3430 = vunpack.c.l.b16 %v3233
      %v3431 = vunpack.c.h.b16 %v3233
      %v3432 = vunpack.c.l.b16 %v3234
      %v3433 = vunpack.c.h.b16 %v3234
      %v3434 = vunpack.c.l.b16 %v3235
      %v3435 = vunpack.c.h.b16 %v3235
      %v3436 = vunpack.c.l.b16 %v3236
      %v3437 = vunpack.c.h.b16 %v3236
      %v3438 = vunpack.c.l.b16 %v3237
      %v3439 = vunpack.c.h.b16 %v3237
      %v3440 = vunpack.c.l.b16 %v3238
      %v3441 = vunpack.c.h.b16 %v3238
      %v3442 = vunpack.c.l.b16 %v3239
      %v3443 = vunpack.c.h.b16 %v3239
      %v3444 = vpack.c.b16 %v3318, %v3316
      %v3445 = vpack.c.b16 %v3319, %v3317
      %v3446 = vpack.c.b16 %v3322, %v3320
      %v3447 = vpack.c.b16 %v3323, %v3321
      %v3448 = vpack.c.b16 %v3326, %v3324
      %v3449 = vpack.c.b16 %v3327, %v3325
      %v3450 = vpack.c.b16 %v3330, %v3328
      %v3451 = vpack.c.b16 %v3331, %v3329
      %v3452 = vpack.c.b16 %v3334, %v3332
      %v3453 = vpack.c.b16 %v3335, %v3333
      %v3454 = vpack.c.b16 %v3338, %v3336
      %v3455 = vpack.c.b16 %v3339, %v3337
      %v3456 = vpack.c.b16 %v3342, %v3340
      %v3457 = vpack.c.b16 %v3343, %v3341
      %v3458 = vpack.c.b16 %v3346, %v3344
      %v3459 = vpack.c.b16 %v3347, %v3345
      %v3460 = vpack.c.b16 %v3350, %v3348
      %v3461 = vpack.c.b16 %v3351, %v3349
      %v3462 = vpack.c.b16 %v3354, %v3352
      %v3463 = vpack.c.b16 %v3355, %v3353
      %v3464 = vpack.c.b16 %v3358, %v3356
      %v3465 = vpack.c.b16 %v3359, %v3357
      %v3466 = vpack.c.b16 %v3362, %v3360
      %v3467 = vpack.c.b16 %v3363, %v3361
      %v3468 = vpack.c.b16 %v3366, %v3364
      %v3469 = vpack.c.b16 %v3367, %v3365
      %v3470 = vpack.c.b16 %v3370, %v3368
      %v3471 = vpack.c.b16 %v3371, %v3369
      %v3472 = vpack.c.b16 %v3374, %v3372
      %v3473 = vpack.c.b16 %v3375, %v3373
      %v3474 = vpack.c.b16 %v3378, %v3376
      %v3475 = vpack.c.b16 %v3379, %v3377
      %v3476 = vpack.c.b16 %v3382, %v3380
      %v3477 = vpack.c.b16 %v3383, %v3381
      %v3478 = vpack.c.b16 %v3386, %v3384
      %v3479 = vpack.c.b16 %v3387, %v3385
      %v3480 = vpack.c.b16 %v3390, %v3388
      %v3481 = vpack.c.b16 %v3391, %v3389
      %v3482 = vpack.c.b16 %v3394, %v3392
      %v3483 = vpack.c.b16 %v3395, %v3393
      %v3484 = vpack.c.b16 %v3398, %v3396
      %v3485 = vpack.c.b16 %v3399, %v3397
      %v3486 = vpack.c.b16 %v3402, %v3400
      %v3487 = vpack.c.b16 %v3403, %v3401
      %v3488 = vpack.c.b16 %v3406, %v3404
      %v3489 = vpack.c.b16 %v3407, %v3405
      %v3490 = vpack.c.b16 %v3410, %v3408
      %v3491 = vpack.c.b16 %v3411, %v3409
      %v3492 = vpack.c.b16 %v3414, %v3412
      %v3493 = vpack.c.b16 %v3415, %v3413
      %v3494 = vpack.c.b16 %v3418, %v3416
      %v3495 = vpack.c.b16 %v3419, %v3417
      %v3496 = vpack.c.b16 %v3422, %v3420
      %v3497 = vpack.c.b16 %v3423, %v3421
      %v3498 = vpack.c.b16 %v3426, %v3424
      %v3499 = vpack.c.b16 %v3427, %v3425
      %v3500 = vpack.c.b16 %v3430, %v3428
      %v3501 = vpack.c.b16 %v3431, %v3429
      %v3502 = vpack.c.b16 %v3434, %v3432
      %v3503 = vpack.c.b16 %v3435, %v3433
      %v3504 = vpack.c.b16 %v3438, %v3436
      %v3505 = vpack.c.b16 %v3439, %v3437
      %v3506 = vpack.c.b16 %v3442, %v3440
      %v3507 = vpack.c.b16 %v3443, %v3441
      %3572 = vmatprep.subr.bf16.mxu0 %v3445
      %3573 = vmatpush1.bf16.msra.mxu0 %v3444
      %3574 = vmatprep.subr.bf16.mxu0 %v3447
      %3575 = vmatpush1.bf16.msra.mxu0 %v3446
      %3576 = vmatprep.subr.bf16.mxu0 %v3449
      %3577 = vmatpush1.bf16.msra.mxu0 %v3448
      %3578 = vmatprep.subr.bf16.mxu0 %v3451
      %3579 = vmatpush1.bf16.msra.mxu0 %v3450
      %3580 = vmatprep.subr.bf16.mxu0 %v3453
      %3581 = vmatpush1.bf16.msra.mxu0 %v3452
      %3582 = vmatprep.subr.bf16.mxu0 %v3455
      %3583 = vmatpush1.bf16.msra.mxu0 %v3454
      %3584 = vmatprep.subr.bf16.mxu0 %v3457
      %3585 = vmatpush1.bf16.msra.mxu0 %v3456
      %3586 = vmatprep.subr.bf16.mxu0 %v3459
      %3587 = vmatpush1.bf16.msra.mxu0 %v3458
      %3588 = vmatprep.subr.bf16.mxu0 %v3461
      %3589 = vmatpush1.bf16.msra.mxu0 %v3460
      %3590 = vmatprep.subr.bf16.mxu0 %v3463
      %3591 = vmatpush1.bf16.msra.mxu0 %v3462
      %3592 = vmatprep.subr.bf16.mxu0 %v3465
      %3593 = vmatpush1.bf16.msra.mxu0 %v3464
      %3594 = vmatprep.subr.bf16.mxu0 %v3467
      %3595 = vmatpush1.bf16.msra.mxu0 %v3466
      %3596 = vmatprep.subr.bf16.mxu0 %v3469
      %3597 = vmatpush1.bf16.msra.mxu0 %v3468
      %3598 = vmatprep.subr.bf16.mxu0 %v3471
      %3599 = vmatpush1.bf16.msra.mxu0 %v3470
      %3600 = vmatprep.subr.bf16.mxu0 %v3473
      %3601 = vmatpush1.bf16.msra.mxu0 %v3472
      %3602 = vmatprep.subr.bf16.mxu0 %v3475
      %3603 = vmatpush1.bf16.msra.mxu0 %v3474
      %3604 = vmatprep.mubr.bf16.mxu0 %v3173
      %3605 = vmatmul.mubr.bf16.gmra.mrb[0].mxu0 %v3172
      %v3606 = vpop.f32.mrb[0].mxu0
      %v3607 = vadd.f32 %v3245, %v3606
      %v3608 = vpop.f32.mrb[0].mxu0
      %v3609 = vadd.f32 %v3249, %v3608
      %v3610 = vpop.f32.mrb[0].mxu0
      %v3611 = vpop.f32.mrb[0].mxu0
      %3612 = vdwg.mxu0
      %3613 = vmatprep.subr.bf16.mxu0 %v3477
      %3614 = vmatpush1.bf16.msra.mxu0 %v3476
      %3615 = vmatprep.subr.bf16.mxu0 %v3479
      %3616 = vmatpush1.bf16.msra.mxu0 %v3478
      %3617 = vmatprep.subr.bf16.mxu0 %v3481
      %3618 = vmatpush1.bf16.msra.mxu0 %v3480
      %3619 = vmatprep.subr.bf16.mxu0 %v3483
      %3620 = vmatpush1.bf16.msra.mxu0 %v3482
      %3621 = vmatprep.subr.bf16.mxu0 %v3485
      %3622 = vmatpush1.bf16.msra.mxu0 %v3484
      %3623 = vmatprep.subr.bf16.mxu0 %v3487
      %3624 = vmatpush1.bf16.msra.mxu0 %v3486
      %3625 = vmatprep.subr.bf16.mxu0 %v3489
      %3626 = vmatpush1.bf16.msra.mxu0 %v3488
      %3627 = vmatprep.subr.bf16.mxu0 %v3491
      %3628 = vmatpush1.bf16.msra.mxu0 %v3490
      %3629 = vmatprep.subr.bf16.mxu0 %v3493
      %3630 = vmatpush1.bf16.msra.mxu0 %v3492
      %3631 = vmatprep.subr.bf16.mxu0 %v3495
      %3632 = vmatpush1.bf16.msra.mxu0 %v3494
      %3633 = vmatprep.subr.bf16.mxu0 %v3497
      %3634 = vmatpush1.bf16.msra.mxu0 %v3496
      %3635 = vmatprep.subr.bf16.mxu0 %v3499
      %3636 = vmatpush1.bf16.msra.mxu0 %v3498
      %3637 = vmatprep.subr.bf16.mxu0 %v3501
      %3638 = vmatpush1.bf16.msra.mxu0 %v3500
      %3639 = vmatprep.subr.bf16.mxu0 %v3503
      %3640 = vmatpush1.bf16.msra.mxu0 %v3502
      %3641 = vmatprep.subr.bf16.mxu0 %v3505
      %3642 = vmatpush1.bf16.msra.mxu0 %v3504
      %3643 = vmatprep.subr.bf16.mxu0 %v3507
      %3644 = vmatpush1.bf16.msra.mxu0 %v3506
      %3645 = vmatprep.mubr.bf16.mxu0 %v3175
      %3646 = vmatmul.mubr.bf16.gmra.mrb[0].mxu0 %v3174
      %v3647 = vpop.f32.mrb[0].mxu0
      %v3648 = vadd.f32 %v3607, %v3647
      %v3649 = vpop.f32.mrb[0].mxu0
      %v3650 = vadd.f32 %v3609, %v3649
      %v3651 = vpop.f32.mrb[0].mxu0
      %v3652 = vpop.f32.mrb[0].mxu0
      %3653 = vdwg.mxu0
      %v3654 = vld [vmem:[#allocation11] sm:$0xff]
      %v3655 = vmul.f32 %v3650, 0.5
      %v3656 = vmul.f32 %v3655, 1.442695
      %v3657 = vpow.pop %v3656
      %v3658 = vmul.f32 %v3654, %v3657
      %v3659 = vadd.f32 %v3658, %v3648
      %3660 = vst [vmem:[#allocation12] sm:$0xff] %v3659
    $region69: #{_encoder_forward_impl.1} parent=1 // pred_fallthru
      _
    // Predicated region
    $region70: #{_encoder_forward_impl.1} parent=1 // pred_check
      _
    $region71: #{_encoder_forward_impl.1} parent=1 // pred_check_branch
      %3662 = sbr.rel (0) target = $region73
    $region72: #{_encoder_forward_impl.1} parent=1 // pred_region
      %s3664 = ssub.s32 128, 128
      %3665 = vsyncadd [#allocation5], %s3664
      %s3667 = sshll.u32 [#allocation12], 4
      %s3668 = int_to_ptr.vmem [resolvable:$true] %s3667
      %3670 = dma.vmem_to_hbm [thread:$0]  %s3668, 128, %s10, [#allocation5]
    $region73: #{_encoder_forward_impl.1} parent=1 // pred_fallthru
      _
    // Predicated region
    $region74: #{_encoder_forward_impl.1} parent=1 // pred_check
      _
    $region75: #{_encoder_forward_impl.1} parent=1 // pred_check_branch
      %3672 = sbr.rel (0) target = $region77
    $region76: #{_encoder_forward_impl.1} parent=1 // pred_region
      %3673 = dma.done [#allocation5], 128
    $region77: #{_encoder_forward_impl.1} parent=1 // pred_fallthru
      _
    %3674 = vsyncpa [#allocation4], 1
    %3675 = vsyncpa [#allocation7], 1
    %3676 = vsyncpa [#allocation10], 1
    %3677 = vsyncpa [#allocation5], 1

// kernel: _encoder_forward_impl.1
$region0: #{_encoder_forward_impl.1}
  #allocation0 [shape = 'u32[]', space=smem, size = 0x4, offset = 0x4, fixed_abs, tag = 'smem constant byte address 0x4 - core index']
  #allocation1 [shape = 'u32[144,128]{1,0:T(1,128)}', space=vmem, size = 0x12000, scoped, tag = 'internal scratch']
  #allocation2 [shape = 'f32[8,512]{1,0:T(8,128)}', space=vmem, size = 0x4000, scoped, tag = 'scratch operand']
  %s0 = inlined_call_operand.hbm [shape: bf16[8,1024], index: 0, kind: input, shape index: {}]
  %s1 = inlined_call_operand.hbm [shape: bf16[1024,512], index: 1, kind: input, shape index: {}]
  %s2 = inlined_call_operand.vmem [shape: f32[1,512], index: 2, kind: input, shape index: {}]
  %s3 = inlined_call_operand.hbm [shape: bf16[512,512], index: 3, kind: input, shape index: {}]
  %s4 = inlined_call_operand.vmem [shape: f32[1,512], index: 4, kind: input, shape index: {}]
  %s5 = inlined_call_operand.vmem [shape: f32[1,512], index: 5, kind: input, shape index: {}]
  %s6 = inlined_call_operand.vmem [shape: f32[1,512], index: 6, kind: input, shape index: {}]
  %s7 = inlined_call_operand.hbm [shape: bf16[512,256], index: 7, kind: input, shape index: {}]
  %s8 = inlined_call_operand.vmem [shape: f32[1,256], index: 8, kind: input, shape index: {}]
  %s9 = inlined_call_operand.hbm [shape: f32[8,128], index: 9, kind: input, shape index: {}]
  %s10 = inlined_call_operand.hbm [shape: f32[8,128], index: 10, kind: output, shape index: {}]
  %s11 = sld [smem:[#allocation0]]
  $region78: #{_encoder_forward_impl.1} parent=0
    _
  %s13 = ssub.s32 1, %s11
  %s14 = scalar_select 0, %s13, %s11
  $region1: #{_encoder_forward_impl.1} parent=0
    #allocation3 [shape = 'u8[16384]{0}', space=vmem, size = 0x4000, scoped, tag = 'input window, operand 0, single buffered']
    #allocation4 [shape = 's32[1]{0}', space=sflag, size = 0x4, scoped, tag = 'scoped memory for _encoder_forward_impl.1']
    #allocation5 [shape = 's32[1]{0}', space=sflag, size = 0x4, scoped, tag = 'scoped memory for _encoder_forward_impl.1']
    #allocation6 [shape = 'u8[1048576]{0}', space=vmem, size = 0x100000, scoped, tag = 'input window, operand 1, single buffered']
    #allocation7 [shape = 's32[1]{0}', space=sflag, size = 0x4, scoped, tag = 'scoped memory for _encoder_forward_impl.1']
    #allocation8 [shape = 'u8[524288]{0}', space=vmem, size = 0x80000, scoped, tag = 'input window, operand 3, single buffered']
    #allocation9 [shape = 'u8[262144]{0}', space=vmem, size = 0x40000, scoped, tag = 'input window, operand 7, single buffered']
    #allocation10 [shape = 's32[1]{0}', space=sflag, size = 0x4, scoped, tag = 'scoped memory for _encoder_forward_impl.1']
    #allocation11 [shape = 'u8[4096]{0}', space=vmem, size = 0x1000, scoped, tag = 'input window, operand 9, single buffered']
    #allocation12 [shape = 'u8[4096]{0}', space=vmem, size = 0x1000, scoped, tag = 'output window, operand 0, single buffered']
    %15 = vsyncpa [#allocation4], 0
    %16 = vsyncpa [#allocation7], 0
    %17 = vsyncpa [#allocation10], 0
    %18 = vsyncpa [#allocation5], 0
    // Predicated region
    $region2: #{_encoder_forward_impl.1} parent=1 // pred_check
      _
    $region3: #{_encoder_forward_impl.1} parent=1 // pred_check_branch
      %20 = sbr.rel (0) target = $region5
    $region4: #{_encoder_forward_impl.1} parent=1 // pred_region
      %s22 = ssub.s32 512, 512
      %23 = vsyncadd [#allocation4], %s22
      %s25 = sshll.u32 [#allocation3], 4
      %s26 = int_to_ptr.vmem [resolvable:$true] %s25
      %28 = dma.hbm_to_vmem [thread:$0]  %s0, 512, %s26, [#allocation4]
    $region5: #{_encoder_forward_impl.1} parent=1 // pred_fallthru
      _
    // Predicated region
    $region6: #{_encoder_forward_impl.1} parent=1 // pred_check
      _
    $region7: #{_encoder_forward_impl.1} parent=1 // pred_check_branch
      %30 = sbr.rel (0) target = $region9
    $region8: #{_encoder_forward_impl.1} parent=1 // pred_region
      %s32 = ssub.s32 32768, 32768
      %33 = vsyncadd [#allocation7], %s32
      %s34 = sshll.u32 [#allocation6], 4
      %s35 = int_to_ptr.vmem [resolvable:$true] %s34
      %40 = dma.hbm_to_vmem [thread:$0]  %s1, 32768, %s35, [#allocation7], 256, 256, 16
    $region9: #{_encoder_forward_impl.1} parent=1 // pred_fallthru
      _
    // Predicated region
    $region10: #{_encoder_forward_impl.1} parent=1 // pred_check
      _
    $region11: #{_encoder_forward_impl.1} parent=1 // pred_check_branch
      %42 = sbr.rel (0) target = $region13
    $region12: #{_encoder_forward_impl.1} parent=1 // pred_region
      _
    $region13: #{_encoder_forward_impl.1} parent=1 // pred_fallthru
      _
    // Predicated region
    $region14: #{_encoder_forward_impl.1} parent=1 // pred_check
      _
    $region15: #{_encoder_forward_impl.1} parent=1 // pred_check_branch
      %44 = sbr.rel (0) target = $region17
    $region16: #{_encoder_forward_impl.1} parent=1 // pred_region
      %s46 = ssub.s32 16384, 16384
      %47 = vsyncadd [#allocation7], %s46
      %s48 = sshll.u32 [#allocation8], 4
      %s49 = int_to_ptr.vmem [resolvable:$true] %s48
      %54 = dma.hbm_to_vmem [thread:$0]  %s3, 16384, %s49, [#allocation7], 256, 256, 16
    $region17: #{_encoder_forward_impl.1} parent=1 // pred_fallthru
      _
    // Predicated region
    $region18: #{_encoder_forward_impl.1} parent=1 // pred_check
      _
    $region19: #{_encoder_forward_impl.1} parent=1 // pred_check_branch
      %56 = sbr.rel (0) target = $region21
    $region20: #{_encoder_forward_impl.1} parent=1 // pred_region
      _
    $region21: #{_encoder_forward_impl.1} parent=1 // pred_fallthru
      _
    // Predicated region
    $region22: #{_encoder_forward_impl.1} parent=1 // pred_check
      _
    $region23: #{_encoder_forward_impl.1} parent=1 // pred_check_branch
      %58 = sbr.rel (0) target = $region25
    $region24: #{_encoder_forward_impl.1} parent=1 // pred_region
      _
    $region25: #{_encoder_forward_impl.1} parent=1 // pred_fallthru
      _
    // Predicated region
    $region26: #{_encoder_forward_impl.1} parent=1 // pred_check
      _
    $region27: #{_encoder_forward_impl.1} parent=1 // pred_check_branch
      %60 = sbr.rel (0) target = $region29
    $region28: #{_encoder_forward_impl.1} parent=1 // pred_region
      _
    $region29: #{_encoder_forward_impl.1} parent=1 // pred_fallthru
      _
    // Predicated region
    $region30: #{_encoder_forward_impl.1} parent=1 // pred_check
      _
    $region31: #{_encoder_forward_impl.1} parent=1 // pred_check_branch
      %62 = sbr.rel (0) target = $region33
    $region32: #{_encoder_forward_impl.1} parent=1 // pred_region
      %s64 = ssub.s32 8192, 8192
      %65 = vsyncadd [#allocation10], %s64
      %s66 = sshll.u32 [#allocation9], 4
      %s67 = int_to_ptr.vmem [resolvable:$true] %s66
      %72 = dma.hbm_to_vmem [thread:$0]  %s7, 8192, %s67, [#allocation10], 128, 128, 8
    $region33: #{_encoder_forward_impl.1} parent=1 // pred_fallthru
      _
    // Predicated region
    $region34: #{_encoder_forward_impl.1} parent=1 // pred_check
      _
    $region35: #{_encoder_forward_impl.1} parent=1 // pred_check_branch
      %74 = sbr.rel (0) target = $region37
    $region36: #{_encoder_forward_impl.1} parent=1 // pred_region
      _
    $region37: #{_encoder_forward_impl.1} parent=1 // pred_fallthru
      _
    // Predicated region
    $region38: #{_encoder_forward_impl.1} parent=1 // pred_check
      _
    $region39: #{_encoder_forward_impl.1} parent=1 // pred_check_branch
      %76 = sbr.rel (0) target = $region41
    $region40: #{_encoder_forward_impl.1} parent=1 // pred_region
      %s78 = ssub.s32 128, 128
      %79 = vsyncadd [#allocation10], %s78
      %s81 = sshll.u32 [#allocation11], 4
      %s82 = int_to_ptr.vmem [resolvable:$true] %s81
      %84 = dma.hbm_to_vmem [thread:$0]  %s9, 128, %s82, [#allocation10]
    $region41: #{_encoder_forward_impl.1} parent=1 // pred_fallthru
      _
    // Predicated region
    $region42: #{_encoder_forward_impl.1} parent=1 // pred_check
      _
    $region43: #{_encoder_forward_impl.1} parent=1 // pred_check_branch
      %86 = sbr.rel (0) target = $region45
    $region44: #{_encoder_forward_impl.1} parent=1 // pred_region
      %87 = dma.done [#allocation4], 512
    $region45: #{_encoder_forward_impl.1} parent=1 // pred_fallthru
      _
    // Predicated region
    $region46: #{_encoder_forward_impl.1} parent=1 // pred_check
      _
    $region47: #{_encoder_forward_impl.1} parent=1 // pred_check_branch
      %89 = sbr.rel (0) target = $region49
    $region48: #{_encoder_forward_impl.1} parent=1 // pred_region
      %90 = dma.done [#allocation7], 32768
    $region49: #{_encoder_forward_impl.1} parent=1 // pred_fallthru
      _
    // Predicated region
    $region50: #{_encoder_forward_impl.1} parent=1 // pred_check
      _
    $region51: #{_encoder_forward_impl.1} parent=1 // pred_check_branch
      %92 = sbr.rel (0) target = $region53
    $region52: #{_encoder_forward_impl.1} parent=1 // pred_region
      %93 = dma.done [#allocation7], 16384
    $region53: #{_encoder_forward_impl.1} parent=1 // pred_fallthru
      _
    // Predicated region
    $region54: #{_encoder_forward_impl.1} parent=1 // pred_check
      _
    $region55: #{_encoder_forward_impl.1} parent=1 // pred_check_branch
      %95 = sbr.rel (0) target = $region57
    $region56: #{_encoder_forward_impl.1} parent=1 // pred_region
      %96 = dma.done [#allocation10], 8192
    $region57: #{_encoder_forward_impl.1} parent=1 // pred_fallthru
      _
    // Predicated region
    $region58: #{_encoder_forward_impl.1} parent=1 // pred_check
      _
    $region59: #{_encoder_forward_impl.1} parent=1 // pred_check_branch
      %98 = sbr.rel (0) target = $region61
    $region60: #{_encoder_forward_impl.1} parent=1 // pred_region
      %99 = dma.done [#allocation10], 128
    $region61: #{_encoder_forward_impl.1} parent=1 // pred_fallthru
      _
    %p100 = scmp.eq.s32.totalorder 0, 0
    // Predicated region
    $region62: #{_encoder_forward_impl.1} parent=1 // pred_check
      %p101 = pneg %p100
    $region63: #{_encoder_forward_impl.1} parent=1 // pred_check_branch
      %103 = sbr.rel (%p101) target = $region65
    $region64: #{_encoder_forward_impl.1} parent=1 // pred_region
      %104 = vst [vmem:[#allocation2] sm:$0xff] 0.0
      %105 = vst [vmem:[#allocation2 + $0x8] sm:$0xff] 0.0
      %106 = vst [vmem:[#allocation2 + $0x10] sm:$0xff] 0.0
      %107 = vst [vmem:[#allocation2 + $0x18] sm:$0xff] 0.0
    $region65: #{_encoder_forward_impl.1} parent=1 // pred_fallthru
      _
    %v108 = vld [vmem:[#allocation2] sm:$0xff]
    %v109 = vld [vmem:[#allocation2 + $0x8] sm:$0xff]
    %v110 = vld [vmem:[#allocation2 + $0x10] sm:$0xff]
    %v111 = vld [vmem:[#allocation2 + $0x18] sm:$0xff]
    %v112 = vld [vmem:[#allocation3] sm:$0xff]
    %v113 = vld [vmem:[#allocation3 + $0x8] sm:$0xff]
    %v114 = vld [vmem:[#allocation3 + $0x10] sm:$0xff]
    %v115 = vld [vmem:[#allocation3 + $0x18] sm:$0xff]
    %v116 = vld [vmem:[#allocation6] sm:$0xff]
    %v117 = vld [vmem:[#allocation6 + $0x8] sm:$0xff]
    %v118 = vld [vmem:[#allocation6 + $0x10] sm:$0xff]
    %v119 = vld [vmem:[#allocation6 + $0x18] sm:$0xff]
    %v120 = vld [vmem:[#allocation6 + $0x20] sm:$0xff]
    %v121 = vld [vmem:[#allocation6 + $0x28] sm:$0xff]
    %v122 = vld [vmem:[#allocation6 + $0x30] sm:$0xff]
    %v123 = vld [vmem:[#allocation6 + $0x38] sm:$0xff]
    %v124 = vld [vmem:[#allocation6 + $0x40] sm:$0xff]
    %v125 = vld [vmem:[#allocation6 + $0x48] sm:$0xff]
    %v126 = vld [vmem:[#allocation6 + $0x50] sm:$0xff]
    %v127 = vld [vmem:[#allocation6 + $0x58] sm:$0xff]
    %v128 = vld [vmem:[#allocation6 + $0x60] sm:$0xff]
    %v129 = vld [vmem:[#allocation6 + $0x68] sm:$0xff]
    %v130 = vld [vmem:[#allocation6 + $0x70] sm:$0xff]
    %v131 = vld [vmem:[#allocation6 + $0x78] sm:$0xff]
    %v132 = vld [vmem:[#allocation6 + $0x80] sm:$0xff]
    %v133 = vld [vmem:[#allocation6 + $0x88] sm:$0xff]
    %v134 = vld [vmem:[#allocation6 + $0x90] sm:$0xff]
    %v135 = vld [vmem:[#allocation6 + $0x98] sm:$0xff]
    %v136 = vld [vmem:[#allocation6 + $0xa0] sm:$0xff]
    %v137 = vld [vmem:[#allocation6 + $0xa8] sm:$0xff]
    %v138 = vld [vmem:[#allocation6 + $0xb0] sm:$0xff]
    %v139 = vld [vmem:[#allocation6 + $0xb8] sm:$0xff]
    %v140 = vld [vmem:[#allocation6 + $0xc0] sm:$0xff]
    %v141 = vld [vmem:[#allocation6 + $0xc8] sm:$0xff]
    %v142 = vld [vmem:[#allocation6 + $0xd0] sm:$0xff]
    %v143 = vld [vmem:[#allocation6 + $0xd8] sm:$0xff]
    %v144 = vld [vmem:[#allocation6 + $0xe0] sm:$0xff]
    %v145 = vld [vmem:[#allocation6 + $0xe8] sm:$0xff]
    %v146 = vld [vmem:[#allocation6 + $0xf0] sm:$0xff]
    %v147 = vld [vmem:[#allocation6 + $0xf8] sm:$0xff]
    %v148 = vld [vmem:[#allocation6 + $0x100] sm:$0xff]
    %v149 = vld [vmem:[#allocation6 + $0x108] sm:$0xff]
    %v150 = vld [vmem:[#allocation6 + $0x110] sm:$0xff]
    %v151 = vld [vmem:[#allocation6 + $0x118] sm:$0xff]
    %v152 = vld [vmem:[#allocation6 + $0x120] sm:$0xff]
    %v153 = vld [vmem:[#allocation6 + $0x128] sm:$0xff]
    %v154 = vld [vmem:[#allocation6 + $0x130] sm:$0xff]
    %v155 = vld [vmem:[#allocation6 + $0x138] sm:$0xff]
    %v156 = vld [vmem:[#allocation6 + $0x140] sm:$0xff]
    %v157 = vld [vmem:[#allocation6 + $0x148] sm:$0xff]
    %v158 = vld [vmem:[#allocation6 + $0x150] sm:$0xff]
    %v159 = vld [vmem:[#allocation6 + $0x158] sm:$0xff]
    %v160 = vld [vmem:[#allocation6 + $0x160] sm:$0xff]
    %v161 = vld [vmem:[#allocation6 + $0x168] sm:$0xff]
    %v162 = vld [vmem:[#allocation6 + $0x170] sm:$0xff]
    %v163 = vld [vmem:[#allocation6 + $0x178] sm:$0xff]
    %v164 = vld [vmem:[#allocation6 + $0x180] sm:$0xff]
    %v165 = vld [vmem:[#allocation6 + $0x188] sm:$0xff]
    %v166 = vld [vmem:[#allocation6 + $0x190] sm:$0xff]
    %v167 = vld [vmem:[#allocation6 + $0x198] sm:$0xff]
    %v168 = vld [vmem:[#allocation6 + $0x1a0] sm:$0xff]
    %v169 = vld [vmem:[#allocation6 + $0x1a8] sm:$0xff]
    %v170 = vld [vmem:[#allocation6 + $0x1b0] sm:$0xff]
    %v171 = vld [vmem:[#allocation6 + $0x1b8] sm:$0xff]
    %v172 = vld [vmem:[#allocation6 + $0x1c0] sm:$0xff]
    %v173 = vld [vmem:[#allocation6 + $0x1c8] sm:$0xff]
    %v174 = vld [vmem:[#allocation6 + $0x1d0] sm:$0xff]
    %v175 = vld [vmem:[#allocation6 + $0x1d8] sm:$0xff]
    %v176 = vld [vmem:[#allocation6 + $0x1e0] sm:$0xff]
    %v177 = vld [vmem:[#allocation6 + $0x1e8] sm:$0xff]
    %v178 = vld [vmem:[#allocation6 + $0x1f0] sm:$0xff]
    %v179 = vld [vmem:[#allocation6 + $0x1f8] sm:$0xff]
    %v180 = vld [vmem:[#allocation6 + $0x200] sm:$0xff]
    %v181 = vld [vmem:[#allocation6 + $0x208] sm:$0xff]
    %v182 = vld [vmem:[#allocation6 + $0x210] sm:$0xff]
    %v183 = vld [vmem:[#allocation6 + $0x218] sm:$0xff]
    %v184 = vld [vmem:[#allocation6 + $0x220] sm:$0xff]
    %v185 = vld [vmem:[#allocation6 + $0x228] sm:$0xff]
    %v186 = vld [vmem:[#allocation6 + $0x230] sm:$0xff]
    %v187 = vld [vmem:[#allocation6 + $0x238] sm:$0xff]
    %v188 = vld [vmem:[#allocation6 + $0x240] sm:$0xff]
    %v189 = vld [vmem:[#allocation6 + $0x248] sm:$0xff]
    %v190 = vld [vmem:[#allocation6 + $0x250] sm:$0xff]
    %v191 = vld [vmem:[#allocation6 + $0x258] sm:$0xff]
    %v192 = vld [vmem:[#allocation6 + $0x260] sm:$0xff]
    %v193 = vld [vmem:[#allocation6 + $0x268] sm:$0xff]
    %v194 = vld [vmem:[#allocation6 + $0x270] sm:$0xff]
    %v195 = vld [vmem:[#allocation6 + $0x278] sm:$0xff]
    %v196 = vld [vmem:[#allocation6 + $0x280] sm:$0xff]
    %v197 = vld [vmem:[#allocation6 + $0x288] sm:$0xff]
    %v198 = vld [vmem:[#allocation6 + $0x290] sm:$0xff]
    %v199 = vld [vmem:[#allocation6 + $0x298] sm:$0xff]
    %v200 = vld [vmem:[#allocation6 + $0x2a0] sm:$0xff]
    %v201 = vld [vmem:[#allocation6 + $0x2a8] sm:$0xff]
    %v202 = vld [vmem:[#allocation6 + $0x2b0] sm:$0xff]
    %v203 = vld [vmem:[#allocation6 + $0x2b8] sm:$0xff]
    %v204 = vld [vmem:[#allocation6 + $0x2c0] sm:$0xff]
    %v205 = vld [vmem:[#allocation6 + $0x2c8] sm:$0xff]
    %v206 = vld [vmem:[#allocation6 + $0x2d0] sm:$0xff]
    %v207 = vld [vmem:[#allocation6 + $0x2d8] sm:$0xff]
    %v208 = vld [vmem:[#allocation6 + $0x2e0] sm:$0xff]
    %v209 = vld [vmem:[#allocation6 + $0x2e8] sm:$0xff]
    %v210 = vld [vmem:[#allocation6 + $0x2f0] sm:$0xff]
    %v211 = vld [vmem:[#allocation6 + $0x2f8] sm:$0xff]
    %v212 = vld [vmem:[#allocation6 + $0x300] sm:$0xff]
    %v213 = vld [vmem:[#allocation6 + $0x308] sm:$0xff]
    %v214 = vld [vmem:[#allocation6 + $0x310] sm:$0xff]
    %v215 = vld [vmem:[#allocation6 + $0x318] sm:$0xff]
    %v216 = vld [vmem:[#allocation6 + $0x320] sm:$0xff]
    %v217 = vld [vmem:[#allocation6 + $0x328] sm:$0xff]
    %v218 = vld [vmem:[#allocation6 + $0x330] sm:$0xff]
    %v219 = vld [vmem:[#allocation6 + $0x338] sm:$0xff]
    %v220 = vld [vmem:[#allocation6 + $0x340] sm:$0xff]
    %v221 = vld [vmem:[#allocation6 + $0x348] sm:$0xff]
    %v222 = vld [vmem:[#allocation6 + $0x350] sm:$0xff]
    %v223 = vld [vmem:[#allocation6 + $0x358] sm:$0xff]
    %v224 = vld [vmem:[#allocation6 + $0x360] sm:$0xff]
    %v225 = vld [vmem:[#allocation6 + $0x368] sm:$0xff]
    %v226 = vld [vmem:[#allocation6 + $0x370] sm:$0xff]
    %v227 = vld [vmem:[#allocation6 + $0x378] sm:$0xff]
    %v228 = vld [vmem:[#allocation6 + $0x380] sm:$0xff]
    %v229 = vld [vmem:[#allocation6 + $0x388] sm:$0xff]
    %v230 = vld [vmem:[#allocation6 + $0x390] sm:$0xff]
    %v231 = vld [vmem:[#allocation6 + $0x398] sm:$0xff]
    %v232 = vld [vmem:[#allocation6 + $0x3a0] sm:$0xff]
    %v233 = vld [vmem:[#allocation6 + $0x3a8] sm:$0xff]
    %v234 = vld [vmem:[#allocation6 + $0x3b0] sm:$0xff]
    %v235 = vld [vmem:[#allocation6 + $0x3b8] sm:$0xff]
    %v236 = vld [vmem:[#allocation6 + $0x3c0] sm:$0xff]
    %v237 = vld [vmem:[#allocation6 + $0x3c8] sm:$0xff]
    %v238 = vld [vmem:[#allocation6 + $0x3d0] sm:$0xff]
    %v239 = vld [vmem:[#allocation6 + $0x3d8] sm:$0xff]
    %v240 = vld [vmem:[#allocation6 + $0x3e0] sm:$0xff]
    %v241 = vld [vmem:[#allocation6 + $0x3e8] sm:$0xff]
    %v242 = vld [vmem:[#allocation6 + $0x3f0] sm:$0xff]
    %v243 = vld [vmem:[#allocation6 + $0x3f8] sm:$0xff]
    %v244 = vld [vmem:[#allocation6 + $0x400] sm:$0xff]
    %v245 = vld [vmem:[#allocation6 + $0x408] sm:$0xff]
    %v246 = vld [vmem:[#allocation6 + $0x410] sm:$0xff]
    %v247 = vld [vmem:[#allocation6 + $0x418] sm:$0xff]
    %v248 = vld [vmem:[#allocation6 + $0x420] sm:$0xff]
    %v249 = vld [vmem:[#allocation6 + $0x428] sm:$0xff]
    %v250 = vld [vmem:[#allocation6 + $0x430] sm:$0xff]
    %v251 = vld [vmem:[#allocation6 + $0x438] sm:$0xff]
    %v252 = vld [vmem:[#allocation6 + $0x440] sm:$0xff]
    %v253 = vld [vmem:[#allocation6 + $0x448] sm:$0xff]
    %v254 = vld [vmem:[#allocation6 + $0x450] sm:$0xff]
    %v255 = vld [vmem:[#allocation6 + $0x458] sm:$0xff]
    %v256 = vld [vmem:[#allocation6 + $0x460] sm:$0xff]
    %v257 = vld [vmem:[#allocation6 + $0x468] sm:$0xff]
    %v258 = vld [vmem:[#allocation6 + $0x470] sm:$0xff]
    %v259 = vld [vmem:[#allocation6 + $0x478] sm:$0xff]
    %v260 = vld [vmem:[#allocation6 + $0x480] sm:$0xff]
    %v261 = vld [vmem:[#allocation6 + $0x488] sm:$0xff]
    %v262 = vld [vmem:[#allocation6 + $0x490] sm:$0xff]
    %v263 = vld [vmem:[#allocation6 + $0x498] sm:$0xff]
    %v264 = vld [vmem:[#allocation6 + $0x4a0] sm:$0xff]
    %v265 = vld [vmem:[#allocation6 + $0x4a8] sm:$0xff]
    %v266 = vld [vmem:[#allocation6 + $0x4b0] sm:$0xff]
    %v267 = vld [vmem:[#allocation6 + $0x4b8] sm:$0xff]
    %v268 = vld [vmem:[#allocation6 + $0x4c0] sm:$0xff]
    %v269 = vld [vmem:[#allocation6 + $0x4c8] sm:$0xff]
    %v270 = vld [vmem:[#allocation6 + $0x4d0] sm:$0xff]
    %v271 = vld [vmem:[#allocation6 + $0x4d8] sm:$0xff]
    %v272 = vld [vmem:[#allocation6 + $0x4e0] sm:$0xff]
    %v273 = vld [vmem:[#allocation6 + $0x4e8] sm:$0xff]
    %v274 = vld [vmem:[#allocation6 + $0x4f0] sm:$0xff]
    %v275 = vld [vmem:[#allocation6 + $0x4f8] sm:$0xff]
    %v276 = vld [vmem:[#allocation6 + $0x500] sm:$0xff]
    %v277 = vld [vmem:[#allocation6 + $0x508] sm:$0xff]
    %v278 = vld [vmem:[#allocation6 + $0x510] sm:$0xff]
    %v279 = vld [vmem:[#allocation6 + $0x518] sm:$0xff]
    %v280 = vld [vmem:[#allocation6 + $0x520] sm:$0xff]
    %v281 = vld [vmem:[#allocation6 + $0x528] sm:$0xff]
    %v282 = vld [vmem:[#allocation6 + $0x530] sm:$0xff]
    %v283 = vld [vmem:[#allocation6 + $0x538] sm:$0xff]
    %v284 = vld [vmem:[#allocation6 + $0x540] sm:$0xff]
    %v285 = vld [vmem:[#allocation6 + $0x548] sm:$0xff]
    %v286 = vld [vmem:[#allocation6 + $0x550] sm:$0xff]
    %v287 = vld [vmem:[#allocation6 + $0x558] sm:$0xff]
    %v288 = vld [vmem:[#allocation6 + $0x560] sm:$0xff]
    %v289 = vld [vmem:[#allocation6 + $0x568] sm:$0xff]
    %v290 = vld [vmem:[#allocation6 + $0x570] sm:$0xff]
    %v291 = vld [vmem:[#allocation6 + $0x578] sm:$0xff]
    %v292 = vld [vmem:[#allocation6 + $0x580] sm:$0xff]
    %v293 = vld [vmem:[#allocation6 + $0x588] sm:$0xff]
    %v294 = vld [vmem:[#allocation6 + $0x590] sm:$0xff]
    %v295 = vld [vmem:[#allocation6 + $0x598] sm:$0xff]
    %v296 = vld [vmem:[#allocation6 + $0x5a0] sm:$0xff]
    %v297 = vld [vmem:[#allocation6 + $0x5a8] sm:$0xff]
    %v298 = vld [vmem:[#allocation6 + $0x5b0] sm:$0xff]
    %v299 = vld [vmem:[#allocation6 + $0x5b8] sm:$0xff]
    %v300 = vld [vmem:[#allocation6 + $0x5c0] sm:$0xff]
    %v301 = vld [vmem:[#allocation6 + $0x5c8] sm:$0xff]
    %v302 = vld [vmem:[#allocation6 + $0x5d0] sm:$0xff]
    %v303 = vld [vmem:[#allocation6 + $0x5d8] sm:$0xff]
    %v304 = vld [vmem:[#allocation6 + $0x5e0] sm:$0xff]
    %v305 = vld [vmem:[#allocation6 + $0x5e8] sm:$0xff]
    %v306 = vld [vmem:[#allocation6 + $0x5f0] sm:$0xff]
    %v307 = vld [vmem:[#allocation6 + $0x5f8] sm:$0xff]
    %v308 = vld [vmem:[#allocation6 + $0x600] sm:$0xff]
    %v309 = vld [vmem:[#allocation6 + $0x608] sm:$0xff]
    %v310 = vld [vmem:[#allocation6 + $0x610] sm:$0xff]
    %v311 = vld [vmem:[#allocation6 + $0x618] sm:$0xff]
    %v312 = vld [vmem:[#allocation6 + $0x620] sm:$0xff]
    %v313 = vld [vmem:[#allocation6 + $0x628] sm:$0xff]
    %v314 = vld [vmem:[#allocation6 + $0x630] sm:$0xff]
    %v315 = vld [vmem:[#allocation6 + $0x638] sm:$0xff]
    %v316 = vld [vmem:[#allocation6 + $0x640] sm:$0xff]
    %v317 = vld [vmem:[#allocation6 + $0x648] sm:$0xff]
    %v318 = vld [vmem:[#allocation6 + $0x650] sm:$0xff]
    %v319 = vld [vmem:[#allocation6 + $0x658] sm:$0xff]
    %v320 = vld [vmem:[#allocation6 + $0x660] sm:$0xff]
    %v321 = vld [vmem:[#allocation6 + $0x668] sm:$0xff]
    %v322 = vld [vmem:[#allocation6 + $0x670] sm:$0xff]
    %v323 = vld [vmem:[#allocation6 + $0x678] sm:$0xff]
    %v324 = vld [vmem:[#allocation6 + $0x680] sm:$0xff]
    %v325 = vld [vmem:[#allocation6 + $0x688] sm:$0xff]
    %v326 = vld [vmem:[#allocation6 + $0x690] sm:$0xff]
    %v327 = vld [vmem:[#allocation6 + $0x698] sm:$0xff]
    %v328 = vld [vmem:[#allocation6 + $0x6a0] sm:$0xff]
    %v329 = vld [vmem:[#allocation6 + $0x6a8] sm:$0xff]
    %v330 = vld [vmem:[#allocation6 + $0x6b0] sm:$0xff]
    %v331 = vld [vmem:[#allocation6 + $0x6b8] sm:$0xff]
    %v332 = vld [vmem:[#allocation6 + $0x6c0] sm:$0xff]
    %v333 = vld [vmem:[#allocation6 + $0x6c8] sm:$0xff]
    %v334 = vld [vmem:[#allocation6 + $0x6d0] sm:$0xff]
    %v335 = vld [vmem:[#allocation6 + $0x6d8] sm:$0xff]
    %v336 = vld [vmem:[#allocation6 + $0x6e0] sm:$0xff]
    %v337 = vld [vmem:[#allocation6 + $0x6e8] sm:$0xff]
    %v338 = vld [vmem:[#allocation6 + $0x6f0] sm:$0xff]
    %v339 = vld [vmem:[#allocation6 + $0x6f8] sm:$0xff]
    %v340 = vld [vmem:[#allocation6 + $0x700] sm:$0xff]
    %v341 = vld [vmem:[#allocation6 + $0x708] sm:$0xff]
    %v342 = vld [vmem:[#allocation6 + $0x710] sm:$0xff]
    %v343 = vld [vmem:[#allocation6 + $0x718] sm:$0xff]
    %v344 = vld [vmem:[#allocation6 + $0x720] sm:$0xff]
    %v345 = vld [vmem:[#allocation6 + $0x728] sm:$0xff]
    %v346 = vld [vmem:[#allocation6 + $0x730] sm:$0xff]
    %v347 = vld [vmem:[#allocation6 + $0x738] sm:$0xff]
    %v348 = vld [vmem:[#allocation6 + $0x740] sm:$0xff]
    %v349 = vld [vmem:[#allocation6 + $0x748] sm:$0xff]
    %v350 = vld [vmem:[#allocation6 + $0x750] sm:$0xff]
    %v351 = vld [vmem:[#allocation6 + $0x758] sm:$0xff]
    %v352 = vld [vmem:[#allocation6 + $0x760] sm:$0xff]
    %v353 = vld [vmem:[#allocation6 + $0x768] sm:$0xff]
    %v354 = vld [vmem:[#allocation6 + $0x770] sm:$0xff]
    %v355 = vld [vmem:[#allocation6 + $0x778] sm:$0xff]
    %v356 = vld [vmem:[#allocation6 + $0x780] sm:$0xff]
    %v357 = vld [vmem:[#allocation6 + $0x788] sm:$0xff]
    %v358 = vld [vmem:[#allocation6 + $0x790] sm:$0xff]
    %v359 = vld [vmem:[#allocation6 + $0x798] sm:$0xff]
    %v360 = vld [vmem:[#allocation6 + $0x7a0] sm:$0xff]
    %v361 = vld [vmem:[#allocation6 + $0x7a8] sm:$0xff]
    %v362 = vld [vmem:[#allocation6 + $0x7b0] sm:$0xff]
    %v363 = vld [vmem:[#allocation6 + $0x7b8] sm:$0xff]
    %v364 = vld [vmem:[#allocation6 + $0x7c0] sm:$0xff]
    %v365 = vld [vmem:[#allocation6 + $0x7c8] sm:$0xff]
    %v366 = vld [vmem:[#allocation6 + $0x7d0] sm:$0xff]
    %v367 = vld [vmem:[#allocation6 + $0x7d8] sm:$0xff]
    %v368 = vld [vmem:[#allocation6 + $0x7e0] sm:$0xff]
    %v369 = vld [vmem:[#allocation6 + $0x7e8] sm:$0xff]
    %v370 = vld [vmem:[#allocation6 + $0x7f0] sm:$0xff]
    %v371 = vld [vmem:[#allocation6 + $0x7f8] sm:$0xff]
    %v376 = vunpack.c.l.b16 %v112
    %v377 = vunpack.c.h.b16 %v112
    %v378 = vunpack.c.l.b16 %v113
    %v379 = vunpack.c.h.b16 %v113
    %v380 = vunpack.c.l.b16 %v114
    %v381 = vunpack.c.h.b16 %v114
    %v382 = vunpack.c.l.b16 %v115
    %v383 = vunpack.c.h.b16 %v115
    %v384 = vpack.c.b16 %v376, %v376
    %v385 = vpack.c.b16 %v377, %v377
    %v386 = vpack.c.b16 %v378, %v378
    %v387 = vpack.c.b16 %v379, %v379
    %v388 = vpack.c.b16 %v380, %v380
    %v389 = vpack.c.b16 %v381, %v381
    %v390 = vpack.c.b16 %v382, %v382
    %v391 = vpack.c.b16 %v383, %v383
    %v656 = vunpack.c.l.b16 %v116
    %v657 = vunpack.c.h.b16 %v116
    %v658 = vunpack.c.l.b16 %v117
    %v659 = vunpack.c.h.b16 %v117
    %v660 = vunpack.c.l.b16 %v118
    %v661 = vunpack.c.h.b16 %v118
    %v662 = vunpack.c.l.b16 %v119
    %v663 = vunpack.c.h.b16 %v119
    %v664 = vunpack.c.l.b16 %v120
    %v665 = vunpack.c.h.b16 %v120
    %v666 = vunpack.c.l.b16 %v121
    %v667 = vunpack.c.h.b16 %v121
    %v668 = vunpack.c.l.b16 %v122
    %v669 = vunpack.c.h.b16 %v122
    %v670 = vunpack.c.l.b16 %v123
    %v671 = vunpack.c.h.b16 %v123
    %v672 = vunpack.c.l.b16 %v124
    %v673 = vunpack.c.h.b16 %v124
    %v674 = vunpack.c.l.b16 %v125
    %v675 = vunpack.c.h.b16 %v125
    %v676 = vunpack.c.l.b16 %v126
    %v677 = vunpack.c.h.b16 %v126
    %v678 = vunpack.c.l.b16 %v127
    %v679 = vunpack.c.h.b16 %v127
    %v680 = vunpack.c.l.b16 %v128
    %v681 = vunpack.c.h.b16 %v128
    %v682 = vunpack.c.l.b16 %v129
    %v683 = vunpack.c.h.b16 %v129
    %v684 = vunpack.c.l.b16 %v130
    %v685 = vunpack.c.h.b16 %v130
    %v686 = vunpack.c.l.b16 %v131
    %v687 = vunpack.c.h.b16 %v131
    %v688 = vunpack.c.l.b16 %v132
    %v689 = vunpack.c.h.b16 %v132
    %v690 = vunpack.c.l.b16 %v133
    %v691 = vunpack.c.h.b16 %v133
    %v692 = vunpack.c.l.b16 %v134
    %v693 = vunpack.c.h.b16 %v134
    %v694 = vunpack.c.l.b16 %v135
    %v695 = vunpack.c.h.b16 %v135
    %v696 = vunpack.c.l.b16 %v136
    %v697 = vunpack.c.h.b16 %v136
    %v698 = vunpack.c.l.b16 %v137
    %v699 = vunpack.c.h.b16 %v137
    %v700 = vunpack.c.l.b16 %v138
    %v701 = vunpack.c.h.b16 %v138
    %v702 = vunpack.c.l.b16 %v139
    %v703 = vunpack.c.h.b16 %v139
    %v704 = vunpack.c.l.b16 %v140
    %v705 = vunpack.c.h.b16 %v140
    %v706 = vunpack.c.l.b16 %v141
    %v707 = vunpack.c.h.b16 %v141
    %v708 = vunpack.c.l.b16 %v142
    %v709 = vunpack.c.h.b16 %v142
    %v710 = vunpack.c.l.b16 %v143
    %v711 = vunpack.c.h.b16 %v143
    %v712 = vunpack.c.l.b16 %v144
    %v713 = vunpack.c.h.b16 %v144
    %v714 = vunpack.c.l.b16 %v145
    %v715 = vunpack.c.h.b16 %v145
    %v716 = vunpack.c.l.b16 %v146
    %v717 = vunpack.c.h.b16 %v146
    %v718 = vunpack.c.l.b16 %v147
    %v719 = vunpack.c.h.b16 %v147
    %v720 = vunpack.c.l.b16 %v148
    %v721 = vunpack.c.h.b16 %v148
    %v722 = vunpack.c.l.b16 %v149
    %v723 = vunpack.c.h.b16 %v149
    %v724 = vunpack.c.l.b16 %v150
    %v725 = vunpack.c.h.b16 %v150
    %v726 = vunpack.c.l.b16 %v151
    %v727 = vunpack.c.h.b16 %v151
    %v728 = vunpack.c.l.b16 %v152
    %v729 = vunpack.c.h.b16 %v152
    %v730 = vunpack.c.l.b16 %v153
    %v731 = vunpack.c.h.b16 %v153
    %v732 = vunpack.c.l.b16 %v154
    %v733 = vunpack.c.h.b16 %v154
    %v734 = vunpack.c.l.b16 %v155
    %v735 = vunpack.c.h.b16 %v155
    %v736 = vunpack.c.l.b16 %v156
    %v737 = vunpack.c.h.b16 %v156
    %v738 = vunpack.c.l.b16 %v157
    %v739 = vunpack.c.h.b16 %v157
    %v740 = vunpack.c.l.b16 %v158
    %v741 = vunpack.c.h.b16 %v158
    %v742 = vunpack.c.l.b16 %v159
    %v743 = vunpack.c.h.b16 %v159
    %v744 = vunpack.c.l.b16 %v160
    %v745 = vunpack.c.h.b16 %v160
    %v746 = vunpack.c.l.b16 %v161
    %v747 = vunpack.c.h.b16 %v161
    %v748 = vunpack.c.l.b16 %v162
    %v749 = vunpack.c.h.b16 %v162
    %v750 = vunpack.c.l.b16 %v163
    %v751 = vunpack.c.h.b16 %v163
    %v752 = vunpack.c.l.b16 %v164
    %v753 = vunpack.c.h.b16 %v164
    %v754 = vunpack.c.l.b16 %v165
    %v755 = vunpack.c.h.b16 %v165
    %v756 = vunpack.c.l.b16 %v166
    %v757 = vunpack.c.h.b16 %v166
    %v758 = vunpack.c.l.b16 %v167
    %v759 = vunpack.c.h.b16 %v167
    %v760 = vunpack.c.l.b16 %v168
    %v761 = vunpack.c.h.b16 %v168
    %v762 = vunpack.c.l.b16 %v169
    %v763 = vunpack.c.h.b16 %v169
    %v764 = vunpack.c.l.b16 %v170
    %v765 = vunpack.c.h.b16 %v170
    %v766 = vunpack.c.l.b16 %v171
    %v767 = vunpack.c.h.b16 %v171
    %v768 = vunpack.c.l.b16 %v172
    %v769 = vunpack.c.h.b16 %v172
    %v770 = vunpack.c.l.b16 %v173
    %v771 = vunpack.c.h.b16 %v173
    %v772 = vunpack.c.l.b16 %v174
    %v773 = vunpack.c.h.b16 %v174
    %v774 = vunpack.c.l.b16 %v175
    %v775 = vunpack.c.h.b16 %v175
    %v776 = vunpack.c.l.b16 %v176
    %v777 = vunpack.c.h.b16 %v176
    %v778 = vunpack.c.l.b16 %v177
    %v779 = vunpack.c.h.b16 %v177
    %v780 = vunpack.c.l.b16 %v178
    %v781 = vunpack.c.h.b16 %v178
    %v782 = vunpack.c.l.b16 %v179
    %v783 = vunpack.c.h.b16 %v179
    %v784 = vunpack.c.l.b16 %v180
    %v785 = vunpack.c.h.b16 %v180
    %v786 = vunpack.c.l.b16 %v181
    %v787 = vunpack.c.h.b16 %v181
    %v788 = vunpack.c.l.b16 %v182
    %v789 = vunpack.c.h.b16 %v182
    %v790 = vunpack.c.l.b16 %v183
    %v791 = vunpack.c.h.b16 %v183
    %v792 = vunpack.c.l.b16 %v184
    %v793 = vunpack.c.h.b16 %v184
    %v794 = vunpack.c.l.b16 %v185
    %v795 = vunpack.c.h.b16 %v185
    %v796 = vunpack.c.l.b16 %v186
    %v797 = vunpack.c.h.b16 %v186
    %v798 = vunpack.c.l.b16 %v187
    %v799 = vunpack.c.h.b16 %v187
    %v800 = vunpack.c.l.b16 %v188
    %v801 = vunpack.c.h.b16 %v188
    %v802 = vunpack.c.l.b16 %v189
    %v803 = vunpack.c.h.b16 %v189
    %v804 = vunpack.c.l.b16 %v190
    %v805 = vunpack.c.h.b16 %v190
    %v806 = vunpack.c.l.b16 %v191
    %v807 = vunpack.c.h.b16 %v191
    %v808 = vunpack.c.l.b16 %v192
    %v809 = vunpack.c.h.b16 %v192
    %v810 = vunpack.c.l.b16 %v193
    %v811 = vunpack.c.h.b16 %v193
    %v812 = vunpack.c.l.b16 %v194
    %v813 = vunpack.c.h.b16 %v194
    %v814 = vunpack.c.l.b16 %v195
    %v815 = vunpack.c.h.b16 %v195
    %v816 = vunpack.c.l.b16 %v196
    %v817 = vunpack.c.h.b16 %v196
    %v818 = vunpack.c.l.b16 %v197
    %v819 = vunpack.c.h.b16 %v197
    %v820 = vunpack.c.l.b16 %v198
    %v821 = vunpack.c.h.b16 %v198
    %v822 = vunpack.c.l.b16 %v199
    %v823 = vunpack.c.h.b16 %v199
    %v824 = vunpack.c.l.b16 %v200
    %v825 = vunpack.c.h.b16 %v200
    %v826 = vunpack.c.l.b16 %v201
    %v827 = vunpack.c.h.b16 %v201
    %v828 = vunpack.c.l.b16 %v202
    %v829 = vunpack.c.h.b16 %v202
    %v830 = vunpack.c.l.b16 %v203
    %v831 = vunpack.c.h.b16 %v203
    %v832 = vunpack.c.l.b16 %v204
    %v833 = vunpack.c.h.b16 %v204
    %v834 = vunpack.c.l.b16 %v205
    %v835 = vunpack.c.h.b16 %v205
    %v836 = vunpack.c.l.b16 %v206
    %v837 = vunpack.c.h.b16 %v206
    %v838 = vunpack.c.l.b16 %v207
    %v839 = vunpack.c.h.b16 %v207
    %v840 = vunpack.c.l.b16 %v208
    %v841 = vunpack.c.h.b16 %v208
    %v842 = vunpack.c.l.b16 %v209
    %v843 = vunpack.c.h.b16 %v209
    %v844 = vunpack.c.l.b16 %v210
    %v845 = vunpack.c.h.b16 %v210
    %v846 = vunpack.c.l.b16 %v211
    %v847 = vunpack.c.h.b16 %v211
    %v848 = vunpack.c.l.b16 %v212
    %v849 = vunpack.c.h.b16 %v212
    %v850 = vunpack.c.l.b16 %v213
    %v851 = vunpack.c.h.b16 %v213
    %v852 = vunpack.c.l.b16 %v214
    %v853 = vunpack.c.h.b16 %v214
    %v854 = vunpack.c.l.b16 %v215
    %v855 = vunpack.c.h.b16 %v215
    %v856 = vunpack.c.l.b16 %v216
    %v857 = vunpack.c.h.b16 %v216
    %v858 = vunpack.c.l.b16 %v217
    %v859 = vunpack.c.h.b16 %v217
    %v860 = vunpack.c.l.b16 %v218
    %v861 = vunpack.c.h.b16 %v218
    %v862 = vunpack.c.l.b16 %v219
    %v863 = vunpack.c.h.b16 %v219
    %v864 = vunpack.c.l.b16 %v220
    %v865 = vunpack.c.h.b16 %v220
    %v866 = vunpack.c.l.b16 %v221
    %v867 = vunpack.c.h.b16 %v221
    %v868 = vunpack.c.l.b16 %v222
    %v869 = vunpack.c.h.b16 %v222
    %v870 = vunpack.c.l.b16 %v223
    %v871 = vunpack.c.h.b16 %v223
    %v872 = vunpack.c.l.b16 %v224
    %v873 = vunpack.c.h.b16 %v224
    %v874 = vunpack.c.l.b16 %v225
    %v875 = vunpack.c.h.b16 %v225
    %v876 = vunpack.c.l.b16 %v226
    %v877 = vunpack.c.h.b16 %v226
    %v878 = vunpack.c.l.b16 %v227
    %v879 = vunpack.c.h.b16 %v227
    %v880 = vunpack.c.l.b16 %v228
    %v881 = vunpack.c.h.b16 %v228
    %v882 = vunpack.c.l.b16 %v229
    %v883 = vunpack.c.h.b16 %v229
    %v884 = vunpack.c.l.b16 %v230
    %v885 = vunpack.c.h.b16 %v230
    %v886 = vunpack.c.l.b16 %v231
    %v887 = vunpack.c.h.b16 %v231
    %v888 = vunpack.c.l.b16 %v232
    %v889 = vunpack.c.h.b16 %v232
    %v890 = vunpack.c.l.b16 %v233
    %v891 = vunpack.c.h.b16 %v233
    %v892 = vunpack.c.l.b16 %v234
    %v893 = vunpack.c.h.b16 %v234
    %v894 = vunpack.c.l.b16 %v235
    %v895 = vunpack.c.h.b16 %v235
    %v896 = vunpack.c.l.b16 %v236
    %v897 = vunpack.c.h.b16 %v236
    %v898 = vunpack.c.l.b16 %v237
    %v899 = vunpack.c.h.b16 %v237
    %v900 = vunpack.c.l.b16 %v238
    %v901 = vunpack.c.h.b16 %v238
    %v902 = vunpack.c.l.b16 %v239
    %v903 = vunpack.c.h.b16 %v239
    %v904 = vunpack.c.l.b16 %v240
    %v905 = vunpack.c.h.b16 %v240
    %v906 = vunpack.c.l.b16 %v241
    %v907 = vunpack.c.h.b16 %v241
    %v908 = vunpack.c.l.b16 %v242
    %v909 = vunpack.c.h.b16 %v242
    %v910 = vunpack.c.l.b16 %v243
    %v911 = vunpack.c.h.b16 %v243
    %v912 = vunpack.c.l.b16 %v244
    %v913 = vunpack.c.h.b16 %v244
    %v914 = vunpack.c.l.b16 %v245
    %v915 = vunpack.c.h.b16 %v245
    %v916 = vunpack.c.l.b16 %v246
    %v917 = vunpack.c.h.b16 %v246
    %v918 = vunpack.c.l.b16 %v247
    %v919 = vunpack.c.h.b16 %v247
    %v920 = vunpack.c.l.b16 %v248
    %v921 = vunpack.c.h.b16 %v248
    %v922 = vunpack.c.l.b16 %v249
    %v923 = vunpack.c.h.b16 %v249
    %v924 = vunpack.c.l.b16 %v250
    %v925 = vunpack.c.h.b16 %v250
    %v926 = vunpack.c.l.b16 %v251
    %v927 = vunpack.c.h.b16 %v251
    %v928 = vunpack.c.l.b16 %v252
    %v929 = vunpack.c.h.b16 %v252
    %v930 = vunpack.c.l.b16 %v253
    %v931 = vunpack.c.h.b16 %v253
    %v932 = vunpack.c.l.b16 %v254
    %v933 = vunpack.c.h.b16 %v254
    %v934 = vunpack.c.l.b16 %v255
    %v935 = vunpack.c.h.b16 %v255
    %v936 = vunpack.c.l.b16 %v256
    %v937 = vunpack.c.h.b16 %v256
    %v938 = vunpack.c.l.b16 %v257
    %v939 = vunpack.c.h.b16 %v257
    %v940 = vunpack.c.l.b16 %v258
    %v941 = vunpack.c.h.b16 %v258
    %v942 = vunpack.c.l.b16 %v259
    %v943 = vunpack.c.h.b16 %v259
    %v944 = vunpack.c.l.b16 %v260
    %v945 = vunpack.c.h.b16 %v260
    %v946 = vunpack.c.l.b16 %v261
    %v947 = vunpack.c.h.b16 %v261
    %v948 = vunpack.c.l.b16 %v262
    %v949 = vunpack.c.h.b16 %v262
    %v950 = vunpack.c.l.b16 %v263
    %v951 = vunpack.c.h.b16 %v263
    %v952 = vunpack.c.l.b16 %v264
    %v953 = vunpack.c.h.b16 %v264
    %v954 = vunpack.c.l.b16 %v265
    %v955 = vunpack.c.h.b16 %v265
    %v956 = vunpack.c.l.b16 %v266
    %v957 = vunpack.c.h.b16 %v266
    %v958 = vunpack.c.l.b16 %v267
    %v959 = vunpack.c.h.b16 %v267
    %v960 = vunpack.c.l.b16 %v268
    %v961 = vunpack.c.h.b16 %v268
    %v962 = vunpack.c.l.b16 %v269
    %v963 = vunpack.c.h.b16 %v269
    %v964 = vunpack.c.l.b16 %v270
    %v965 = vunpack.c.h.b16 %v270
    %v966 = vunpack.c.l.b16 %v271
    %v967 = vunpack.c.h.b16 %v271
    %v968 = vunpack.c.l.b16 %v272
    %v969 = vunpack.c.h.b16 %v272
    %v970 = vunpack.c.l.b16 %v273
    %v971 = vunpack.c.h.b16 %v273
    %v972 = vunpack.c.l.b16 %v274
    %v973 = vunpack.c.h.b16 %v274
    %v974 = vunpack.c.l.b16 %v275
    %v975 = vunpack.c.h.b16 %v275
    %v976 = vunpack.c.l.b16 %v276
    %v977 = vunpack.c.h.b16 %v276
    %v978 = vunpack.c.l.b16 %v277
    %v979 = vunpack.c.h.b16 %v277
    %v980 = vunpack.c.l.b16 %v278
    %v981 = vunpack.c.h.b16 %v278
    %v982 = vunpack.c.l.b16 %v279
    %v983 = vunpack.c.h.b16 %v279
    %v984 = vunpack.c.l.b16 %v280
    %v985 = vunpack.c.h.b16 %v280
    %v986 = vunpack.c.l.b16 %v281
    %v987 = vunpack.c.h.b16 %v281
    %v988 = vunpack.c.l.b16 %v282
    %v989 = vunpack.c.h.b16 %v282
    %v990 = vunpack.c.l.b16 %v283
    %v991 = vunpack.c.h.b16 %v283
    %v992 = vunpack.c.l.b16 %v284
    %v993 = vunpack.c.h.b16 %v284
    %v994 = vunpack.c.l.b16 %v285
    %v995 = vunpack.c.h.b16 %v285
    %v996 = vunpack.c.l.b16 %v286
    %v997 = vunpack.c.h.b16 %v286
    %v998 = vunpack.c.l.b16 %v287
    %v999 = vunpack.c.h.b16 %v287
    %v1000 = vunpack.c.l.b16 %v288
    %v1001 = vunpack.c.h.b16 %v288
    %v1002 = vunpack.c.l.b16 %v289
    %v1003 = vunpack.c.h.b16 %v289
    %v1004 = vunpack.c.l.b16 %v290
    %v1005 = vunpack.c.h.b16 %v290
    %v1006 = vunpack.c.l.b16 %v291
    %v1007 = vunpack.c.h.b16 %v291
    %v1008 = vunpack.c.l.b16 %v292
    %v1009 = vunpack.c.h.b16 %v292
    %v1010 = vunpack.c.l.b16 %v293
    %v1011 = vunpack.c.h.b16 %v293
    %v1012 = vunpack.c.l.b16 %v294
    %v1013 = vunpack.c.h.b16 %v294
    %v1014 = vunpack.c.l.b16 %v295
    %v1015 = vunpack.c.h.b16 %v295
    %v1016 = vunpack.c.l.b16 %v296
    %v1017 = vunpack.c.h.b16 %v296
    %v1018 = vunpack.c.l.b16 %v297
    %v1019 = vunpack.c.h.b16 %v297
    %v1020 = vunpack.c.l.b16 %v298
    %v1021 = vunpack.c.h.b16 %v298
    %v1022 = vunpack.c.l.b16 %v299
    %v1023 = vunpack.c.h.b16 %v299
    %v1024 = vunpack.c.l.b16 %v300
    %v1025 = vunpack.c.h.b16 %v300
    %v1026 = vunpack.c.l.b16 %v301
    %v1027 = vunpack.c.h.b16 %v301
    %v1028 = vunpack.c.l.b16 %v302
    %v1029 = vunpack.c.h.b16 %v302
    %v1030 = vunpack.c.l.b16 %v303
    %v1031 = vunpack.c.h.b16 %v303
    %v1032 = vunpack.c.l.b16 %v304
    %v1033 = vunpack.c.h.b16 %v304
    %v1034 = vunpack.c.l.b16 %v305
    %v1035 = vunpack.c.h.b16 %v305
    %v1036 = vunpack.c.l.b16 %v306
    %v1037 = vunpack.c.h.b16 %v306
    %v1038 = vunpack.c.l.b16 %v307
    %v1039 = vunpack.c.h.b16 %v307
    %v1040 = vunpack.c.l.b16 %v308
    %v1041 = vunpack.c.h.b16 %v308
    %v1042 = vunpack.c.l.b16 %v309
    %v1043 = vunpack.c.h.b16 %v309
    %v1044 = vunpack.c.l.b16 %v310
    %v1045 = vunpack.c.h.b16 %v310
    %v1046 = vunpack.c.l.b16 %v311
    %v1047 = vunpack.c.h.b16 %v311
    %v1048 = vunpack.c.l.b16 %v312
    %v1049 = vunpack.c.h.b16 %v312
    %v1050 = vunpack.c.l.b16 %v313
    %v1051 = vunpack.c.h.b16 %v313
    %v1052 = vunpack.c.l.b16 %v314
    %v1053 = vunpack.c.h.b16 %v314
    %v1054 = vunpack.c.l.b16 %v315
    %v1055 = vunpack.c.h.b16 %v315
    %v1056 = vunpack.c.l.b16 %v316
    %v1057 = vunpack.c.h.b16 %v316
    %v1058 = vunpack.c.l.b16 %v317
    %v1059 = vunpack.c.h.b16 %v317
    %v1060 = vunpack.c.l.b16 %v318
    %v1061 = vunpack.c.h.b16 %v318
    %v1062 = vunpack.c.l.b16 %v319
    %v1063 = vunpack.c.h.b16 %v319
    %v1064 = vunpack.c.l.b16 %v320
    %v1065 = vunpack.c.h.b16 %v320
    %v1066 = vunpack.c.l.b16 %v321
    %v1067 = vunpack.c.h.b16 %v321
    %v1068 = vunpack.c.l.b16 %v322
    %v1069 = vunpack.c.h.b16 %v322
    %v1070 = vunpack.c.l.b16 %v323
    %v1071 = vunpack.c.h.b16 %v323
    %v1072 = vunpack.c.l.b16 %v324
    %v1073 = vunpack.c.h.b16 %v324
    %v1074 = vunpack.c.l.b16 %v325
    %v1075 = vunpack.c.h.b16 %v325
    %v1076 = vunpack.c.l.b16 %v326
    %v1077 = vunpack.c.h.b16 %v326
    %v1078 = vunpack.c.l.b16 %v327
    %v1079 = vunpack.c.h.b16 %v327
    %v1080 = vunpack.c.l.b16 %v328
    %v1081 = vunpack.c.h.b16 %v328
    %v1082 = vunpack.c.l.b16 %v329
    %v1083 = vunpack.c.h.b16 %v329
    %v1084 = vunpack.c.l.b16 %v330
    %v1085 = vunpack.c.h.b16 %v330
    %v1086 = vunpack.c.l.b16 %v331
    %v1087 = vunpack.c.h.b16 %v331
    %v1088 = vunpack.c.l.b16 %v332
    %v1089 = vunpack.c.h.b16 %v332
    %v1090 = vunpack.c.l.b16 %v333
    %v1091 = vunpack.c.h.b16 %v333
    %v1092 = vunpack.c.l.b16 %v334
    %v1093 = vunpack.c.h.b16 %v334
    %v1094 = vunpack.c.l.b16 %v335
    %v1095 = vunpack.c.h.b16 %v335
    %v1096 = vunpack.c.l.b16 %v336
    %v1097 = vunpack.c.h.b16 %v336
    %v1098 = vunpack.c.l.b16 %v337
    %v1099 = vunpack.c.h.b16 %v337
    %v1100 = vunpack.c.l.b16 %v338
    %v1101 = vunpack.c.h.b16 %v338
    %v1102 = vunpack.c.l.b16 %v339
    %v1103 = vunpack.c.h.b16 %v339
    %v1104 = vunpack.c.l.b16 %v340
    %v1105 = vunpack.c.h.b16 %v340
    %v1106 = vunpack.c.l.b16 %v341
    %v1107 = vunpack.c.h.b16 %v341
    %v1108 = vunpack.c.l.b16 %v342
    %v1109 = vunpack.c.h.b16 %v342
    %v1110 = vunpack.c.l.b16 %v343
    %v1111 = vunpack.c.h.b16 %v343
    %v1112 = vunpack.c.l.b16 %v344
    %v1113 = vunpack.c.h.b16 %v344
    %v1114 = vunpack.c.l.b16 %v345
    %v1115 = vunpack.c.h.b16 %v345
    %v1116 = vunpack.c.l.b16 %v346
    %v1117 = vunpack.c.h.b16 %v346
    %v1118 = vunpack.c.l.b16 %v347
    %v1119 = vunpack.c.h.b16 %v347
    %v1120 = vunpack.c.l.b16 %v348
    %v1121 = vunpack.c.h.b16 %v348
    %v1122 = vunpack.c.l.b16 %v349
    %v1123 = vunpack.c.h.b16 %v349
    %v1124 = vunpack.c.l.b16 %v350
    %v1125 = vunpack.c.h.b16 %v350
    %v1126 = vunpack.c.l.b16 %v351
    %v1127 = vunpack.c.h.b16 %v351
    %v1128 = vunpack.c.l.b16 %v352
    %v1129 = vunpack.c.h.b16 %v352
    %v1130 = vunpack.c.l.b16 %v353
    %v1131 = vunpack.c.h.b16 %v353
    %v1132 = vunpack.c.l.b16 %v354
    %v1133 = vunpack.c.h.b16 %v354
    %v1134 = vunpack.c.l.b16 %v355
    %v1135 = vunpack.c.h.b16 %v355
    %v1136 = vunpack.c.l.b16 %v356
    %v1137 = vunpack.c.h.b16 %v356
    %v1138 = vunpack.c.l.b16 %v357
    %v1139 = vunpack.c.h.b16 %v357
    %v1140 = vunpack.c.l.b16 %v358
    %v1141 = vunpack.c.h.b16 %v358
    %v1142 = vunpack.c.l.b16 %v359
    %v1143 = vunpack.c.h.b16 %v359
    %v1144 = vunpack.c.l.b16 %v360
    %v1145 = vunpack.c.h.b16 %v360
    %v1146 = vunpack.c.l.b16 %v361
    %v1147 = vunpack.c.h.b16 %v361
    %v1148 = vunpack.c.l.b16 %v362
    %v1149 = vunpack.c.h.b16 %v362
    %v1150 = vunpack.c.l.b16 %v363
    %v1151 = vunpack.c.h.b16 %v363
    %v1152 = vunpack.c.l.b16 %v364
    %v1153 = vunpack.c.h.b16 %v364
    %v1154 = vunpack.c.l.b16 %v365
    %v1155 = vunpack.c.h.b16 %v365
    %v1156 = vunpack.c.l.b16 %v366
    %v1157 = vunpack.c.h.b16 %v366
    %v1158 = vunpack.c.l.b16 %v367
    %v1159 = vunpack.c.h.b16 %v367
    %v1160 = vunpack.c.l.b16 %v368
    %v1161 = vunpack.c.h.b16 %v368
    %v1162 = vunpack.c.l.b16 %v369
    %v1163 = vunpack.c.h.b16 %v369
    %v1164 = vunpack.c.l.b16 %v370
    %v1165 = vunpack.c.h.b16 %v370
    %v1166 = vunpack.c.l.b16 %v371
    %v1167 = vunpack.c.h.b16 %v371
    %v1168 = vpack.c.b16 %v660, %v656
    %v1169 = vpack.c.b16 %v661, %v657
    %v1170 = vpack.c.b16 %v662, %v658
    %v1171 = vpack.c.b16 %v663, %v659
    %v1172 = vpack.c.b16 %v668, %v664
    %v1173 = vpack.c.b16 %v669, %v665
    %v1174 = vpack.c.b16 %v670, %v666
    %v1175 = vpack.c.b16 %v671, %v667
    %v1176 = vpack.c.b16 %v676, %v672
    %v1177 = vpack.c.b16 %v677, %v673
    %v1178 = vpack.c.b16 %v678, %v674
    %v1179 = vpack.c.b16 %v679, %v675
    %v1180 = vpack.c.b16 %v684, %v680
    %v1181 = vpack.c.b16 %v685, %v681
    %v1182 = vpack.c.b16 %v686, %v682
    %v1183 = vpack.c.b16 %v687, %v683
    %v1184 = vpack.c.b16 %v692, %v688
    %v1185 = vpack.c.b16 %v693, %v689
    %v1186 = vpack.c.b16 %v694, %v690
    %v1187 = vpack.c.b16 %v695, %v691
    %v1188 = vpack.c.b16 %v700, %v696
    %v1189 = vpack.c.b16 %v701, %v697
    %v1190 = vpack.c.b16 %v702, %v698
    %v1191 = vpack.c.b16 %v703, %v699
    %v1192 = vpack.c.b16 %v708, %v704
    %v1193 = vpack.c.b16 %v709, %v705
    %v1194 = vpack.c.b16 %v710, %v706
    %v1195 = vpack.c.b16 %v711, %v707
    %v1196 = vpack.c.b16 %v716, %v712
    %v1197 = vpack.c.b16 %v717, %v713
    %v1198 = vpack.c.b16 %v718, %v714
    %v1199 = vpack.c.b16 %v719, %v715
    %v1200 = vpack.c.b16 %v724, %v720
    %v1201 = vpack.c.b16 %v725, %v721
    %v1202 = vpack.c.b16 %v726, %v722
    %v1203 = vpack.c.b16 %v727, %v723
    %v1204 = vpack.c.b16 %v732, %v728
    %v1205 = vpack.c.b16 %v733, %v729
    %v1206 = vpack.c.b16 %v734, %v730
    %v1207 = vpack.c.b16 %v735, %v731
    %v1208 = vpack.c.b16 %v740, %v736
    %v1209 = vpack.c.b16 %v741, %v737
    %v1210 = vpack.c.b16 %v742, %v738
    %v1211 = vpack.c.b16 %v743, %v739
    %v1212 = vpack.c.b16 %v748, %v744
    %v1213 = vpack.c.b16 %v749, %v745
    %v1214 = vpack.c.b16 %v750, %v746
    %v1215 = vpack.c.b16 %v751, %v747
    %v1216 = vpack.c.b16 %v756, %v752
    %v1217 = vpack.c.b16 %v757, %v753
    %v1218 = vpack.c.b16 %v758, %v754
    %v1219 = vpack.c.b16 %v759, %v755
    %v1220 = vpack.c.b16 %v764, %v760
    %v1221 = vpack.c.b16 %v765, %v761
    %v1222 = vpack.c.b16 %v766, %v762
    %v1223 = vpack.c.b16 %v767, %v763
    %v1224 = vpack.c.b16 %v772, %v768
    %v1225 = vpack.c.b16 %v773, %v769
    %v1226 = vpack.c.b16 %v774, %v770
    %v1227 = vpack.c.b16 %v775, %v771
    %v1228 = vpack.c.b16 %v780, %v776
    %v1229 = vpack.c.b16 %v781, %v777
    %v1230 = vpack.c.b16 %v782, %v778
    %v1231 = vpack.c.b16 %v783, %v779
    %v1232 = vpack.c.b16 %v788, %v784
    %v1233 = vpack.c.b16 %v789, %v785
    %v1234 = vpack.c.b16 %v790, %v786
    %v1235 = vpack.c.b16 %v791, %v787
    %v1236 = vpack.c.b16 %v796, %v792
    %v1237 = vpack.c.b16 %v797, %v793
    %v1238 = vpack.c.b16 %v798, %v794
    %v1239 = vpack.c.b16 %v799, %v795
    %v1240 = vpack.c.b16 %v804, %v800
    %v1241 = vpack.c.b16 %v805, %v801
    %v1242 = vpack.c.b16 %v806, %v802
    %v1243 = vpack.c.b16 %v807, %v803
    %v1244 = vpack.c.b16 %v812, %v808
    %v1245 = vpack.c.b16 %v813, %v809
    %v1246 = vpack.c.b16 %v814, %v810
    %v1247 = vpack.c.b16 %v815, %v811
    %v1248 = vpack.c.b16 %v820, %v816
    %v1249 = vpack.c.b16 %v821, %v817
    %v1250 = vpack.c.b16 %v822, %v818
    %v1251 = vpack.c.b16 %v823, %v819
    %v1252 = vpack.c.b16 %v828, %v824
    %v1253 = vpack.c.b16 %v829, %v825
    %v1254 = vpack.c.b16 %v830, %v826
    %v1255 = vpack.c.b16 %v831, %v827
    %v1256 = vpack.c.b16 %v836, %v832
    %v1257 = vpack.c.b16 %v837, %v833
    %v1258 = vpack.c.b16 %v838, %v834
    %v1259 = vpack.c.b16 %v839, %v835
    %v1260 = vpack.c.b16 %v844, %v840
    %v1261 = vpack.c.b16 %v845, %v841
    %v1262 = vpack.c.b16 %v846, %v842
    %v1263 = vpack.c.b16 %v847, %v843
    %v1264 = vpack.c.b16 %v852, %v848
    %v1265 = vpack.c.b16 %v853, %v849
    %v1266 = vpack.c.b16 %v854, %v850
    %v1267 = vpack.c.b16 %v855, %v851
    %v1268 = vpack.c.b16 %v860, %v856
    %v1269 = vpack.c.b16 %v861, %v857
    %v1270 = vpack.c.b16 %v862, %v858
    %v1271 = vpack.c.b16 %v863, %v859
    %v1272 = vpack.c.b16 %v868, %v864
    %v1273 = vpack.c.b16 %v869, %v865
    %v1274 = vpack.c.b16 %v870, %v866
    %v1275 = vpack.c.b16 %v871, %v867
    %v1276 = vpack.c.b16 %v876, %v872
    %v1277 = vpack.c.b16 %v877, %v873
    %v1278 = vpack.c.b16 %v878, %v874
    %v1279 = vpack.c.b16 %v879, %v875
    %v1280 = vpack.c.b16 %v884, %v880
    %v1281 = vpack.c.b16 %v885, %v881
    %v1282 = vpack.c.b16 %v886, %v882
    %v1283 = vpack.c.b16 %v887, %v883
    %v1284 = vpack.c.b16 %v892, %v888
    %v1285 = vpack.c.b16 %v893, %v889
    %v1286 = vpack.c.b16 %v894, %v890
    %v1287 = vpack.c.b16 %v895, %v891
    %v1288 = vpack.c.b16 %v900, %v896
    %v1289 = vpack.c.b16 %v901, %v897
    %v1290 = vpack.c.b16 %v902, %v898
    %v1291 = vpack.c.b16 %v903, %v899
    %v1292 = vpack.c.b16 %v908, %v904
    %v1293 = vpack.c.b16 %v909, %v905
    %v1294 = vpack.c.b16 %v910, %v906
    %v1295 = vpack.c.b16 %v911, %v907
    %v1296 = vpack.c.b16 %v916, %v912
    %v1297 = vpack.c.b16 %v917, %v913
    %v1298 = vpack.c.b16 %v918, %v914
    %v1299 = vpack.c.b16 %v919, %v915
    %v1300 = vpack.c.b16 %v924, %v920
    %v1301 = vpack.c.b16 %v925, %v921
    %v1302 = vpack.c.b16 %v926, %v922
    %v1303 = vpack.c.b16 %v927, %v923
    %v1304 = vpack.c.b16 %v932, %v928
    %v1305 = vpack.c.b16 %v933, %v929
    %v1306 = vpack.c.b16 %v934, %v930
    %v1307 = vpack.c.b16 %v935, %v931
    %v1308 = vpack.c.b16 %v940, %v936
    %v1309 = vpack.c.b16 %v941, %v937
    %v1310 = vpack.c.b16 %v942, %v938
    %v1311 = vpack.c.b16 %v943, %v939
    %v1312 = vpack.c.b16 %v948, %v944
    %v1313 = vpack.c.b16 %v949, %v945
    %v1314 = vpack.c.b16 %v950, %v946
    %v1315 = vpack.c.b16 %v951, %v947
    %v1316 = vpack.c.b16 %v956, %v952
    %v1317 = vpack.c.b16 %v957, %v953
    %v1318 = vpack.c.b16 %v958, %v954
    %v1319 = vpack.c.b16 %v959, %v955
    %v1320 = vpack.c.b16 %v964, %v960
    %v1321 = vpack.c.b16 %v965, %v961
    %v1322 = vpack.c.b16 %v966, %v962
    %v1323 = vpack.c.b16 %v967, %v963
    %v1324 = vpack.c.b16 %v972, %v968
    %v1325 = vpack.c.b16 %v973, %v969
    %v1326 = vpack.c.b16 %v974, %v970
    %v1327 = vpack.c.b16 %v975, %v971
    %v1328 = vpack.c.b16 %v980, %v976
    %v1329 = vpack.c.b16 %v981, %v977
    %v1330 = vpack.c.b16 %v982, %v978
    %v1331 = vpack.c.b16 %v983, %v979
    %v1332 = vpack.c.b16 %v988, %v984
    %v1333 = vpack.c.b16 %v989, %v985
    %v1334 = vpack.c.b16 %v990, %v986
    %v1335 = vpack.c.b16 %v991, %v987
    %v1336 = vpack.c.b16 %v996, %v992
    %v1337 = vpack.c.b16 %v997, %v993
    %v1338 = vpack.c.b16 %v998, %v994
    %v1339 = vpack.c.b16 %v999, %v995
    %v1340 = vpack.c.b16 %v1004, %v1000
    %v1341 = vpack.c.b16 %v1005, %v1001
    %v1342 = vpack.c.b16 %v1006, %v1002
    %v1343 = vpack.c.b16 %v1007, %v1003
    %v1344 = vpack.c.b16 %v1012, %v1008
    %v1345 = vpack.c.b16 %v1013, %v1009
    %v1346 = vpack.c.b16 %v1014, %v1010
    %v1347 = vpack.c.b16 %v1015, %v1011
    %v1348 = vpack.c.b16 %v1020, %v1016
    %v1349 = vpack.c.b16 %v1021, %v1017
    %v1350 = vpack.c.b16 %v1022, %v1018
    %v1351 = vpack.c.b16 %v1023, %v1019
    %v1352 = vpack.c.b16 %v1028, %v1024
    %v1353 = vpack.c.b16 %v1029, %v1025
    %v1354 = vpack.c.b16 %v1030, %v1026
    %v1355 = vpack.c.b16 %v1031, %v1027
    %v1356 = vpack.c.b16 %v1036, %v1032
    %v1357 = vpack.c.b16 %v1037, %v1033
    %v1358 = vpack.c.b16 %v1038, %v1034
    %v1359 = vpack.c.b16 %v1039, %v1035
    %v1360 = vpack.c.b16 %v1044, %v1040
    %v1361 = vpack.c.b16 %v1045, %v1041
    %v1362 = vpack.c.b16 %v1046, %v1042
    %v1363 = vpack.c.b16 %v1047, %v1043
    %v1364 = vpack.c.b16 %v1052, %v1048
    %v1365 = vpack.c.b16 %v1053, %v1049
    %v1366 = vpack.c.b16 %v1054, %v1050
    %v1367 = vpack.c.b16 %v1055, %v1051
    %v1368 = vpack.c.b16 %v1060, %v1056
    %v1369 = vpack.c.b16 %v1061, %v1057
    %v1370 = vpack.c.b16 %v1062, %v1058
    %v1371 = vpack.c.b16 %v1063, %v1059
    %v1372 = vpack.c.b16 %v1068, %v1064
    %v1373 = vpack.c.b16 %v1069, %v1065
    %v1374 = vpack.c.b16 %v1070, %v1066
    %v1375 = vpack.c.b16 %v1071, %v1067
    %v1376 = vpack.c.b16 %v1076, %v1072
    %v1377 = vpack.c.b16 %v1077, %v1073
    %v1378 = vpack.c.b16 %v1078, %v1074
    %v1379 = vpack.c.b16 %v1079, %v1075
    %v1380 = vpack.c.b16 %v1084, %v1080
    %v1381 = vpack.c.b16 %v1085, %v1081
    %v1382 = vpack.c.b16 %v1086, %v1082
    %v1383 = vpack.c.b16 %v1087, %v1083
    %v1384 = vpack.c.b16 %v1092, %v1088
    %v1385 = vpack.c.b16 %v1093, %v1089
    %v1386 = vpack.c.b16 %v1094, %v1090
    %v1387 = vpack.c.b16 %v1095, %v1091
    %v1388 = vpack.c.b16 %v1100, %v1096
    %v1389 = vpack.c.b16 %v1101, %v1097
    %v1390 = vpack.c.b16 %v1102, %v1098
    %v1391 = vpack.c.b16 %v1103, %v1099
    %v1392 = vpack.c.b16 %v1108, %v1104
    %v1393 = vpack.c.b16 %v1109, %v1105
    %v1394 = vpack.c.b16 %v1110, %v1106
    %v1395 = vpack.c.b16 %v1111, %v1107
    %v1396 = vpack.c.b16 %v1116, %v1112
    %v1397 = vpack.c.b16 %v1117, %v1113
    %v1398 = vpack.c.b16 %v1118, %v1114
    %v1399 = vpack.c.b16 %v1119, %v1115
    %v1400 = vpack.c.b16 %v1124, %v1120
    %v1401 = vpack.c.b16 %v1125, %v1121
    %v1402 = vpack.c.b16 %v1126, %v1122
    %v1403 = vpack.c.b16 %v1127, %v1123
    %v1404 = vpack.c.b16 %v1132, %v1128
    %v1405 = vpack.c.b16 %v1133, %v1129
    %v1406 = vpack.c.b16 %v1134, %v1130
    %v1407 = vpack.c.b16 %v1135, %v1131
    %v1408 = vpack.c.b16 %v1140, %v1136
    %v1409 = vpack.c.b16 %v1141, %v1137
    %v1410 = vpack.c.b16 %v1142, %v1138
    %v1411 = vpack.c.b16 %v1143, %v1139
    %v1412 = vpack.c.b16 %v1148, %v1144
    %v1413 = vpack.c.b16 %v1149, %v1145
    %v1414 = vpack.c.b16 %v1150, %v1146
    %v1415 = vpack.c.b16 %v1151, %v1147
    %v1416 = vpack.c.b16 %v1156, %v1152
    %v1417 = vpack.c.b16 %v1157, %v1153
    %v1418 = vpack.c.b16 %v1158, %v1154
    %v1419 = vpack.c.b16 %v1159, %v1155
    %v1420 = vpack.c.b16 %v1164, %v1160
    %v1421 = vpack.c.b16 %v1165, %v1161
    %v1422 = vpack.c.b16 %v1166, %v1162
    %v1423 = vpack.c.b16 %v1167, %v1163
    %1680 = vmatprep.subr.bf16.mxu0 %v1169
    %1681 = vmatpush1.bf16.msra.mxu0 %v1168
    %1682 = vmatprep.subr.bf16.mxu0 %v1173
    %1683 = vmatpush1.bf16.msra.mxu0 %v1172
    %1684 = vmatprep.subr.bf16.mxu0 %v1177
    %1685 = vmatpush1.bf16.msra.mxu0 %v1176
    %1686 = vmatprep.subr.bf16.mxu0 %v1181
    %1687 = vmatpush1.bf16.msra.mxu0 %v1180
    %1688 = vmatprep.subr.bf16.mxu0 %v1185
    %1689 = vmatpush1.bf16.msra.mxu0 %v1184
    %1690 = vmatprep.subr.bf16.mxu0 %v1189
    %1691 = vmatpush1.bf16.msra.mxu0 %v1188
    %1692 = vmatprep.subr.bf16.mxu0 %v1193
    %1693 = vmatpush1.bf16.msra.mxu0 %v1192
    %1694 = vmatprep.subr.bf16.mxu0 %v1197
    %1695 = vmatpush1.bf16.msra.mxu0 %v1196
    %1696 = vmatprep.subr.bf16.mxu0 %v1201
    %1697 = vmatpush1.bf16.msra.mxu0 %v1200
    %1698 = vmatprep.subr.bf16.mxu0 %v1205
    %1699 = vmatpush1.bf16.msra.mxu0 %v1204
    %1700 = vmatprep.subr.bf16.mxu0 %v1209
    %1701 = vmatpush1.bf16.msra.mxu0 %v1208
    %1702 = vmatprep.subr.bf16.mxu0 %v1213
    %1703 = vmatpush1.bf16.msra.mxu0 %v1212
    %1704 = vmatprep.subr.bf16.mxu0 %v1217
    %1705 = vmatpush1.bf16.msra.mxu0 %v1216
    %1706 = vmatprep.subr.bf16.mxu0 %v1221
    %1707 = vmatpush1.bf16.msra.mxu0 %v1220
    %1708 = vmatprep.subr.bf16.mxu0 %v1225
    %1709 = vmatpush1.bf16.msra.mxu0 %v1224
    %1710 = vmatprep.subr.bf16.mxu0 %v1229
    %1711 = vmatpush1.bf16.msra.mxu0 %v1228
    %1712 = vmatprep.mubr.bf16.mxu0 %v385
    %1713 = vmatmul.mubr.bf16.gmra.mrb[0].mxu0 %v384
    %v1714 = vpop.f32.mrb[0].mxu0
    %v1715 = vadd.f32 0.0, %v1714
    %v1716 = vpop.f32.mrb[0].mxu0
    %v1717 = vadd.f32 0.0, %v1716
    %v1718 = vpop.f32.mrb[0].mxu0
    %v1719 = vpop.f32.mrb[0].mxu0
    %1720 = vdwg.mxu0
    %1721 = vmatprep.subr.bf16.mxu0 %v1233
    %1722 = vmatpush1.bf16.msra.mxu0 %v1232
    %1723 = vmatprep.subr.bf16.mxu0 %v1237
    %1724 = vmatpush1.bf16.msra.mxu0 %v1236
    %1725 = vmatprep.subr.bf16.mxu0 %v1241
    %1726 = vmatpush1.bf16.msra.mxu0 %v1240
    %1727 = vmatprep.subr.bf16.mxu0 %v1245
    %1728 = vmatpush1.bf16.msra.mxu0 %v1244
    %1729 = vmatprep.subr.bf16.mxu0 %v1249
    %1730 = vmatpush1.bf16.msra.mxu0 %v1248
    %1731 = vmatprep.subr.bf16.mxu0 %v1253
    %1732 = vmatpush1.bf16.msra.mxu0 %v1252
    %1733 = vmatprep.subr.bf16.mxu0 %v1257
    %1734 = vmatpush1.bf16.msra.mxu0 %v1256
    %1735 = vmatprep.subr.bf16.mxu0 %v1261
    %1736 = vmatpush1.bf16.msra.mxu0 %v1260
    %1737 = vmatprep.subr.bf16.mxu0 %v1265
    %1738 = vmatpush1.bf16.msra.mxu0 %v1264
    %1739 = vmatprep.subr.bf16.mxu0 %v1269
    %1740 = vmatpush1.bf16.msra.mxu0 %v1268
    %1741 = vmatprep.subr.bf16.mxu0 %v1273
    %1742 = vmatpush1.bf16.msra.mxu0 %v1272
    %1743 = vmatprep.subr.bf16.mxu0 %v1277
    %1744 = vmatpush1.bf16.msra.mxu0 %v1276
    %1745 = vmatprep.subr.bf16.mxu0 %v1281
    %1746 = vmatpush1.bf16.msra.mxu0 %v1280
    %1747 = vmatprep.subr.bf16.mxu0 %v1285
    %1748 = vmatpush1.bf16.msra.mxu0 %v1284
    %1749 = vmatprep.subr.bf16.mxu0 %v1289
    %1750 = vmatpush1.bf16.msra.mxu0 %v1288
    %1751 = vmatprep.subr.bf16.mxu0 %v1293
    %1752 = vmatpush1.bf16.msra.mxu0 %v1292
    %1753 = vmatprep.mubr.bf16.mxu0 %v387
    %1754 = vmatmul.mubr.bf16.gmra.mrb[0].mxu0 %v386
    %v1755 = vpop.f32.mrb[0].mxu0
    %v1756 = vadd.f32 %v1715, %v1755
    %v1757 = vpop.f32.mrb[0].mxu0
    %v1758 = vadd.f32 %v1717, %v1757
    %v1759 = vpop.f32.mrb[0].mxu0
    %v1760 = vpop.f32.mrb[0].mxu0
    %1761 = vdwg.mxu0
    %1762 = vmatprep.subr.bf16.mxu0 %v1297
    %1763 = vmatpush1.bf16.msra.mxu0 %v1296
    %1764 = vmatprep.subr.bf16.mxu0 %v1301
    %1765 = vmatpush1.bf16.msra.mxu0 %v1300
    %1766 = vmatprep.subr.bf16.mxu0 %v1305
    %1767 = vmatpush1.bf16.msra.mxu0 %v1304
    %1768 = vmatprep.subr.bf16.mxu0 %v1309
    %1769 = vmatpush1.bf16.msra.mxu0 %v1308
    %1770 = vmatprep.subr.bf16.mxu0 %v1313
    %1771 = vmatpush1.bf16.msra.mxu0 %v1312
    %1772 = vmatprep.subr.bf16.mxu0 %v1317
    %1773 = vmatpush1.bf16.msra.mxu0 %v1316
    %1774 = vmatprep.subr.bf16.mxu0 %v1321
    %1775 = vmatpush1.bf16.msra.mxu0 %v1320
    %1776 = vmatprep.subr.bf16.mxu0 %v1325
    %1777 = vmatpush1.bf16.msra.mxu0 %v1324
    %1778 = vmatprep.subr.bf16.mxu0 %v1329
    %1779 = vmatpush1.bf16.msra.mxu0 %v1328
    %1780 = vmatprep.subr.bf16.mxu0 %v1333
    %1781 = vmatpush1.bf16.msra.mxu0 %v1332
    %1782 = vmatprep.subr.bf16.mxu0 %v1337
    %1783 = vmatpush1.bf16.msra.mxu0 %v1336
    %1784 = vmatprep.subr.bf16.mxu0 %v1341
    %1785 = vmatpush1.bf16.msra.mxu0 %v1340
    %1786 = vmatprep.subr.bf16.mxu0 %v1345
    %1787 = vmatpush1.bf16.msra.mxu0 %v1344
    %1788 = vmatprep.subr.bf16.mxu0 %v1349
    %1789 = vmatpush1.bf16.msra.mxu0 %v1348
    %1790 = vmatprep.subr.bf16.mxu0 %v1353
    %1791 = vmatpush1.bf16.msra.mxu0 %v1352
    %1792 = vmatprep.subr.bf16.mxu0 %v1357
    %1793 = vmatpush1.bf16.msra.mxu0 %v1356
    %1794 = vmatprep.mubr.bf16.mxu0 %v389
    %1795 = vmatmul.mubr.bf16.gmra.mrb[0].mxu0 %v388
    %v1796 = vpop.f32.mrb[0].mxu0
    %v1797 = vadd.f32 %v1756, %v1796
    %v1798 = vpop.f32.mrb[0].mxu0
    %v1799 = vadd.f32 %v1758, %v1798
    %v1800 = vpop.f32.mrb[0].mxu0
    %v1801 = vpop.f32.mrb[0].mxu0
    %1802 = vdwg.mxu0
    %1803 = vmatprep.subr.bf16.mxu0 %v1361
    %1804 = vmatpush1.bf16.msra.mxu0 %v1360
    %1805 = vmatprep.subr.bf16.mxu0 %v1365
    %1806 = vmatpush1.bf16.msra.mxu0 %v1364
    %1807 = vmatprep.subr.bf16.mxu0 %v1369
    %1808 = vmatpush1.bf16.msra.mxu0 %v1368
    %1809 = vmatprep.subr.bf16.mxu0 %v1373
    %1810 = vmatpush1.bf16.msra.mxu0 %v1372
    %1811 = vmatprep.subr.bf16.mxu0 %v1377
    %1812 = vmatpush1.bf16.msra.mxu0 %v1376
    %1813 = vmatprep.subr.bf16.mxu0 %v1381
    %1814 = vmatpush1.bf16.msra.mxu0 %v1380
    %1815 = vmatprep.subr.bf16.mxu0 %v1385
    %1816 = vmatpush1.bf16.msra.mxu0 %v1384
    %1817 = vmatprep.subr.bf16.mxu0 %v1389
    %1818 = vmatpush1.bf16.msra.mxu0 %v1388
    %1819 = vmatprep.subr.bf16.mxu0 %v1393
    %1820 = vmatpush1.bf16.msra.mxu0 %v1392
    %1821 = vmatprep.subr.bf16.mxu0 %v1397
    %1822 = vmatpush1.bf16.msra.mxu0 %v1396
    %1823 = vmatprep.subr.bf16.mxu0 %v1401
    %1824 = vmatpush1.bf16.msra.mxu0 %v1400
    %1825 = vmatprep.subr.bf16.mxu0 %v1405
    %1826 = vmatpush1.bf16.msra.mxu0 %v1404
    %1827 = vmatprep.subr.bf16.mxu0 %v1409
    %1828 = vmatpush1.bf16.msra.mxu0 %v1408
    %1829 = vmatprep.subr.bf16.mxu0 %v1413
    %1830 = vmatpush1.bf16.msra.mxu0 %v1412
    %1831 = vmatprep.subr.bf16.mxu0 %v1417
    %1832 = vmatpush1.bf16.msra.mxu0 %v1416
    %1833 = vmatprep.subr.bf16.mxu0 %v1421
    %1834 = vmatpush1.bf16.msra.mxu0 %v1420
    %1835 = vmatprep.mubr.bf16.mxu0 %v391
    %1836 = vmatmul.mubr.bf16.gmra.mrb[0].mxu0 %v390
    %v1837 = vpop.f32.mrb[0].mxu0
    %v1838 = vadd.f32 %v1797, %v1837
    %v1839 = vpop.f32.mrb[0].mxu0
    %v1840 = vadd.f32 %v1799, %v1839
    %v1841 = vpop.f32.mrb[0].mxu0
    %v1842 = vpop.f32.mrb[0].mxu0
    %1843 = vdwg.mxu0
    %1844 = vmatprep.subr.bf16.mxu0 %v1171
    %1845 = vmatpush1.bf16.msra.mxu0 %v1170
    %1846 = vmatprep.subr.bf16.mxu0 %v1175
    %1847 = vmatpush1.bf16.msra.mxu0 %v1174
    %1848 = vmatprep.subr.bf16.mxu0 %v1179
    %1849 = vmatpush1.bf16.msra.mxu0 %v1178
    %1850 = vmatprep.subr.bf16.mxu0 %v1183
    %1851 = vmatpush1.bf16.msra.mxu0 %v1182
    %1852 = vmatprep.subr.bf16.mxu0 %v1187
    %1853 = vmatpush1.bf16.msra.mxu0 %v1186
    %1854 = vmatprep.subr.bf16.mxu0 %v1191
    %1855 = vmatpush1.bf16.msra.mxu0 %v1190
    %1856 = vmatprep.subr.bf16.mxu0 %v1195
    %1857 = vmatpush1.bf16.msra.mxu0 %v1194
    %1858 = vmatprep.subr.bf16.mxu0 %v1199
    %1859 = vmatpush1.bf16.msra.mxu0 %v1198
    %1860 = vmatprep.subr.bf16.mxu0 %v1203
    %1861 = vmatpush1.bf16.msra.mxu0 %v1202
    %1862 = vmatprep.subr.bf16.mxu0 %v1207
    %1863 = vmatpush1.bf16.msra.mxu0 %v1206
    %1864 = vmatprep.subr.bf16.mxu0 %v1211
    %1865 = vmatpush1.bf16.msra.mxu0 %v1210
    %1866 = vmatprep.subr.bf16.mxu0 %v1215
    %1867 = vmatpush1.bf16.msra.mxu0 %v1214
    %1868 = vmatprep.subr.bf16.mxu0 %v1219
    %1869 = vmatpush1.bf16.msra.mxu0 %v1218
    %1870 = vmatprep.subr.bf16.mxu0 %v1223
    %1871 = vmatpush1.bf16.msra.mxu0 %v1222
    %1872 = vmatprep.subr.bf16.mxu0 %v1227
    %1873 = vmatpush1.bf16.msra.mxu0 %v1226
    %1874 = vmatprep.subr.bf16.mxu0 %v1231
    %1875 = vmatpush1.bf16.msra.mxu0 %v1230
    %1876 = vmatprep.mubr.bf16.mxu0 %v385
    %1877 = vmatmul.mubr.bf16.gmra.mrb[0].mxu0 %v384
    %v1878 = vpop.f32.mrb[0].mxu0
    %v1879 = vadd.f32 0.0, %v1878
    %v1880 = vpop.f32.mrb[0].mxu0
    %v1881 = vadd.f32 0.0, %v1880
    %v1882 = vpop.f32.mrb[0].mxu0
    %v1883 = vpop.f32.mrb[0].mxu0
    %1884 = vdwg.mxu0
    %1885 = vmatprep.subr.bf16.mxu0 %v1235
    %1886 = vmatpush1.bf16.msra.mxu0 %v1234
    %1887 = vmatprep.subr.bf16.mxu0 %v1239
    %1888 = vmatpush1.bf16.msra.mxu0 %v1238
    %1889 = vmatprep.subr.bf16.mxu0 %v1243
    %1890 = vmatpush1.bf16.msra.mxu0 %v1242
    %1891 = vmatprep.subr.bf16.mxu0 %v1247
    %1892 = vmatpush1.bf16.msra.mxu0 %v1246
    %1893 = vmatprep.subr.bf16.mxu0 %v1251
    %1894 = vmatpush1.bf16.msra.mxu0 %v1250
    %1895 = vmatprep.subr.bf16.mxu0 %v1255
    %1896 = vmatpush1.bf16.msra.mxu0 %v1254
    %1897 = vmatprep.subr.bf16.mxu0 %v1259
    %1898 = vmatpush1.bf16.msra.mxu0 %v1258
    %1899 = vmatprep.subr.bf16.mxu0 %v1263
    %1900 = vmatpush1.bf16.msra.mxu0 %v1262
    %1901 = vmatprep.subr.bf16.mxu0 %v1267
    %1902 = vmatpush1.bf16.msra.mxu0 %v1266
    %1903 = vmatprep.subr.bf16.mxu0 %v1271
    %1904 = vmatpush1.bf16.msra.mxu0 %v1270
    %1905 = vmatprep.subr.bf16.mxu0 %v1275
    %1906 = vmatpush1.bf16.msra.mxu0 %v1274
    %1907 = vmatprep.subr.bf16.mxu0 %v1279
    %1908 = vmatpush1.bf16.msra.mxu0 %v1278
    %1909 = vmatprep.subr.bf16.mxu0 %v1283
    %1910 = vmatpush1.bf16.msra.mxu0 %v1282
    %1911 = vmatprep.subr.bf16.mxu0 %v1287
    %1912 = vmatpush1.bf16.msra.mxu0 %v1286
    %1913 = vmatprep.subr.bf16.mxu0 %v1291
    %1914 = vmatpush1.bf16.msra.mxu0 %v1290
    %1915 = vmatprep.subr.bf16.mxu0 %v1295
    %1916 = vmatpush1.bf16.msra.mxu0 %v1294
    %1917 = vmatprep.mubr.bf16.mxu0 %v387
    %1918 = vmatmul.mubr.bf16.gmra.mrb[0].mxu0 %v386
    %v1919 = vpop.f32.mrb[0].mxu0
    %v1920 = vadd.f32 %v1879, %v1919
    %v1921 = vpop.f32.mrb[0].mxu0
    %v1922 = vadd.f32 %v1881, %v1921
    %v1923 = vpop.f32.mrb[0].mxu0
    %v1924 = vpop.f32.mrb[0].mxu0
    %1925 = vdwg.mxu0
    %1926 = vmatprep.subr.bf16.mxu0 %v1299
    %1927 = vmatpush1.bf16.msra.mxu0 %v1298
    %1928 = vmatprep.subr.bf16.mxu0 %v1303
    %1929 = vmatpush1.bf16.msra.mxu0 %v1302
    %1930 = vmatprep.subr.bf16.mxu0 %v1307
    %1931 = vmatpush1.bf16.msra.mxu0 %v1306
    %1932 = vmatprep.subr.bf16.mxu0 %v1311
    %1933 = vmatpush1.bf16.msra.mxu0 %v1310
    %1934 = vmatprep.subr.bf16.mxu0 %v1315
    %1935 = vmatpush1.bf16.msra.mxu0 %v1314
    %1936 = vmatprep.subr.bf16.mxu0 %v1319
    %1937 = vmatpush1.bf16.msra.mxu0 %v1318
    %1938 = vmatprep.subr.bf16.mxu0 %v1323
    %1939 = vmatpush1.bf16.msra.mxu0 %v1322
    %1940 = vmatprep.subr.bf16.mxu0 %v1327
    %1941 = vmatpush1.bf16.msra.mxu0 %v1326
    %1942 = vmatprep.subr.bf16.mxu0 %v1331
    %1943 = vmatpush1.bf16.msra.mxu0 %v1330
    %1944 = vmatprep.subr.bf16.mxu0 %v1335
    %1945 = vmatpush1.bf16.msra.mxu0 %v1334
    %1946 = vmatprep.subr.bf16.mxu0 %v1339
    %1947 = vmatpush1.bf16.msra.mxu0 %v1338
    %1948 = vmatprep.subr.bf16.mxu0 %v1343
    %1949 = vmatpush1.bf16.msra.mxu0 %v1342
    %1950 = vmatprep.subr.bf16.mxu0 %v1347
    %1951 = vmatpush1.bf16.msra.mxu0 %v1346
    %1952 = vmatprep.subr.bf16.mxu0 %v1351
    %1953 = vmatpush1.bf16.msra.mxu0 %v1350
    %1954 = vmatprep.subr.bf16.mxu0 %v1355
    %1955 = vmatpush1.bf16.msra.mxu0 %v1354
    %1956 = vmatprep.subr.bf16.mxu0 %v1359
    %1957 = vmatpush1.bf16.msra.mxu0 %v1358
    %1958 = vmatprep.mubr.bf16.mxu0 %v389
    %1959 = vmatmul.mubr.bf16.gmra.mrb[0].mxu0 %v388
    %v1960 = vpop.f32.mrb[0].mxu0
    %v1961 = vadd.f32 %v1920, %v1960
    %v1962 = vpop.f32.mrb[0].mxu0
    %v1963 = vadd.f32 %v1922, %v1962
    %v1964 = vpop.f32.mrb[0].mxu0
    %v1965 = vpop.f32.mrb[0].mxu0
    %1966 = vdwg.mxu0
    %1967 = vmatprep.subr.bf16.mxu0 %v1363
    %1968 = vmatpush1.bf16.msra.mxu0 %v1362
    %1969 = vmatprep.subr.bf16.mxu0 %v1367
    %1970 = vmatpush1.bf16.msra.mxu0 %v1366
    %1971 = vmatprep.subr.bf16.mxu0 %v1371
    %1972 = vmatpush1.bf16.msra.mxu0 %v1370
    %1973 = vmatprep.subr.bf16.mxu0 %v1375
    %1974 = vmatpush1.bf16.msra.mxu0 %v1374
    %1975 = vmatprep.subr.bf16.mxu0 %v1379
    %1976 = vmatpush1.bf16.msra.mxu0 %v1378
    %1977 = vmatprep.subr.bf16.mxu0 %v1383
    %1978 = vmatpush1.bf16.msra.mxu0 %v1382
    %1979 = vmatprep.subr.bf16.mxu0 %v1387
    %1980 = vmatpush1.bf16.msra.mxu0 %v1386
    %1981 = vmatprep.subr.bf16.mxu0 %v1391
    %1982 = vmatpush1.bf16.msra.mxu0 %v1390
    %1983 = vmatprep.subr.bf16.mxu0 %v1395
    %1984 = vmatpush1.bf16.msra.mxu0 %v1394
    %1985 = vmatprep.subr.bf16.mxu0 %v1399
    %1986 = vmatpush1.bf16.msra.mxu0 %v1398
    %1987 = vmatprep.subr.bf16.mxu0 %v1403
    %1988 = vmatpush1.bf16.msra.mxu0 %v1402
    %1989 = vmatprep.subr.bf16.mxu0 %v1407
    %1990 = vmatpush1.bf16.msra.mxu0 %v1406
    %1991 = vmatprep.subr.bf16.mxu0 %v1411
    %1992 = vmatpush1.bf16.msra.mxu0 %v1410
    %1993 = vmatprep.subr.bf16.mxu0 %v1415
    %1994 = vmatpush1.bf16.msra.mxu0 %v1414
    %1995 = vmatprep.subr.bf16.mxu0 %v1419
    %1996 = vmatpush1.bf16.msra.mxu0 %v1418
    %1997 = vmatprep.subr.bf16.mxu0 %v1423
    %1998 = vmatpush1.bf16.msra.mxu0 %v1422
    %1999 = vmatprep.mubr.bf16.mxu0 %v391
    %2000 = vmatmul.mubr.bf16.gmra.mrb[0].mxu0 %v390
    %v2001 = vpop.f32.mrb[0].mxu0
    %v2002 = vadd.f32 %v1961, %v2001
    %v2003 = vpop.f32.mrb[0].mxu0
    %v2004 = vadd.f32 %v1963, %v2003
    %v2005 = vpop.f32.mrb[0].mxu0
    %v2006 = vpop.f32.mrb[0].mxu0
    %2007 = vdwg.mxu0
    %v2008 = vadd.f32 %v108, %v1838
    %v2009 = vadd.f32 %v109, %v1840
    %v2010 = vadd.f32 %v110, %v2002
    %v2011 = vadd.f32 %v111, %v2004
    %2012 = vst [vmem:[#allocation2] sm:$0xff] %v2008
    %2013 = vst [vmem:[#allocation2 + $0x8] sm:$0xff] %v2009
    %2014 = vst [vmem:[#allocation2 + $0x10] sm:$0xff] %v2010
    %2015 = vst [vmem:[#allocation2 + $0x18] sm:$0xff] %v2011
    // Predicated region
    $region66: #{_encoder_forward_impl.1} parent=1 // pred_check
      %p2016 = pneg %p100
    $region67: #{_encoder_forward_impl.1} parent=1 // pred_check_branch
      %2018 = sbr.rel (%p2016) target = $region69
    $region68: #{_encoder_forward_impl.1} parent=1 // pred_region
      %v2019 = vld [vmem:[#allocation2] sm:$0xff]
      %v2020 = vld [vmem:[#allocation2 + $0x8] sm:$0xff]
      %v2021 = vld [vmem:[#allocation2 + $0x10] sm:$0xff]
      %v2022 = vld [vmem:[#allocation2 + $0x18] sm:$0xff]
      %v2023 = vld [vmem:[%s2] sm:$0xf]
      %v2025 = vlaneseq
      %v2026 = vshrl.u32 %v2025, 7
      %v2027 = vsub.s32 0, %v2026
      %v2028 = vrot.slane %v2023, %v2027
      %v2029 = vlaneseq
      %v2030 = vshrl.u32 %v2029, 7
      %v2031 = vsub.s32 1, %v2030
      %v2032 = vrot.slane %v2023, %v2031
      %v2033 = vlaneseq
      %v2034 = vshrl.u32 %v2033, 7
      %v2035 = vsub.s32 2, %v2034
      %v2036 = vrot.slane %v2023, %v2035
      %v2037 = vlaneseq
      %v2038 = vshrl.u32 %v2037, 7
      %v2039 = vsub.s32 3, %v2038
      %v2040 = vrot.slane %v2023, %v2039
      %v2045 = vadd.f32 %v2019, %v2028
      %v2046 = vadd.f32 %v2020, %v2032
      %v2047 = vadd.f32 %v2021, %v2036
      %v2048 = vadd.f32 %v2022, %v2040
      %vm2049 = vcmp.gt.f32.partialorder %v2045, 0.0
      %vm2050 = vcmp.gt.f32.partialorder %v2046, 0.0
      %vm2051 = vcmp.gt.f32.partialorder %v2047, 0.0
      %vm2052 = vcmp.gt.f32.partialorder %v2048, 0.0
      %v2053 = vmul.f32 %v2045, 0.2
      %v2054 = vmul.f32 %v2046, 0.2
      %v2055 = vmul.f32 %v2047, 0.2
      %v2056 = vmul.f32 %v2048, 0.2
      %v2057 = vsel %vm2049, %v2045, %v2053
      %v2058 = vsel %vm2050, %v2046, %v2054
      %v2059 = vsel %vm2051, %v2047, %v2055
      %v2060 = vsel %vm2052, %v2048, %v2056
      %v2061 = vpack.c.bf16 %v2057, %v2057
      %v2062 = vpack.c.bf16 %v2058, %v2058
      %v2063 = vpack.c.bf16 %v2059, %v2059
      %v2064 = vpack.c.bf16 %v2060, %v2060
      %v2065 = vld [vmem:[#allocation8] sm:$0xff]
      %v2066 = vld [vmem:[#allocation8 + $0x8] sm:$0xff]
      %v2067 = vld [vmem:[#allocation8 + $0x10] sm:$0xff]
      %v2068 = vld [vmem:[#allocation8 + $0x18] sm:$0xff]
      %v2069 = vld [vmem:[#allocation8 + $0x20] sm:$0xff]
      %v2070 = vld [vmem:[#allocation8 + $0x28] sm:$0xff]
      %v2071 = vld [vmem:[#allocation8 + $0x30] sm:$0xff]
      %v2072 = vld [vmem:[#allocation8 + $0x38] sm:$0xff]
      %v2073 = vld [vmem:[#allocation8 + $0x40] sm:$0xff]
      %v2074 = vld [vmem:[#allocation8 + $0x48] sm:$0xff]
      %v2075 = vld [vmem:[#allocation8 + $0x50] sm:$0xff]
      %v2076 = vld [vmem:[#allocation8 + $0x58] sm:$0xff]
      %v2077 = vld [vmem:[#allocation8 + $0x60] sm:$0xff]
      %v2078 = vld [vmem:[#allocation8 + $0x68] sm:$0xff]
      %v2079 = vld [vmem:[#allocation8 + $0x70] sm:$0xff]
      %v2080 = vld [vmem:[#allocation8 + $0x78] sm:$0xff]
      %v2081 = vld [vmem:[#allocation8 + $0x80] sm:$0xff]
      %v2082 = vld [vmem:[#allocation8 + $0x88] sm:$0xff]
      %v2083 = vld [vmem:[#allocation8 + $0x90] sm:$0xff]
      %v2084 = vld [vmem:[#allocation8 + $0x98] sm:$0xff]
      %v2085 = vld [vmem:[#allocation8 + $0xa0] sm:$0xff]
      %v2086 = vld [vmem:[#allocation8 + $0xa8] sm:$0xff]
      %v2087 = vld [vmem:[#allocation8 + $0xb0] sm:$0xff]
      %v2088 = vld [vmem:[#allocation8 + $0xb8] sm:$0xff]
      %v2089 = vld [vmem:[#allocation8 + $0xc0] sm:$0xff]
      %v2090 = vld [vmem:[#allocation8 + $0xc8] sm:$0xff]
      %v2091 = vld [vmem:[#allocation8 + $0xd0] sm:$0xff]
      %v2092 = vld [vmem:[#allocation8 + $0xd8] sm:$0xff]
      %v2093 = vld [vmem:[#allocation8 + $0xe0] sm:$0xff]
      %v2094 = vld [vmem:[#allocation8 + $0xe8] sm:$0xff]
      %v2095 = vld [vmem:[#allocation8 + $0xf0] sm:$0xff]
      %v2096 = vld [vmem:[#allocation8 + $0xf8] sm:$0xff]
      %v2097 = vld [vmem:[#allocation8 + $0x100] sm:$0xff]
      %v2098 = vld [vmem:[#allocation8 + $0x108] sm:$0xff]
      %v2099 = vld [vmem:[#allocation8 + $0x110] sm:$0xff]
      %v2100 = vld [vmem:[#allocation8 + $0x118] sm:$0xff]
      %v2101 = vld [vmem:[#allocation8 + $0x120] sm:$0xff]
      %v2102 = vld [vmem:[#allocation8 + $0x128] sm:$0xff]
      %v2103 = vld [vmem:[#allocation8 + $0x130] sm:$0xff]
      %v2104 = vld [vmem:[#allocation8 + $0x138] sm:$0xff]
      %v2105 = vld [vmem:[#allocation8 + $0x140] sm:$0xff]
      %v2106 = vld [vmem:[#allocation8 + $0x148] sm:$0xff]
      %v2107 = vld [vmem:[#allocation8 + $0x150] sm:$0xff]
      %v2108 = vld [vmem:[#allocation8 + $0x158] sm:$0xff]
      %v2109 = vld [vmem:[#allocation8 + $0x160] sm:$0xff]
      %v2110 = vld [vmem:[#allocation8 + $0x168] sm:$0xff]
      %v2111 = vld [vmem:[#allocation8 + $0x170] sm:$0xff]
      %v2112 = vld [vmem:[#allocation8 + $0x178] sm:$0xff]
      %v2113 = vld [vmem:[#allocation8 + $0x180] sm:$0xff]
      %v2114 = vld [vmem:[#allocation8 + $0x188] sm:$0xff]
      %v2115 = vld [vmem:[#allocation8 + $0x190] sm:$0xff]
      %v2116 = vld [vmem:[#allocation8 + $0x198] sm:$0xff]
      %v2117 = vld [vmem:[#allocation8 + $0x1a0] sm:$0xff]
      %v2118 = vld [vmem:[#allocation8 + $0x1a8] sm:$0xff]
      %v2119 = vld [vmem:[#allocation8 + $0x1b0] sm:$0xff]
      %v2120 = vld [vmem:[#allocation8 + $0x1b8] sm:$0xff]
      %v2121 = vld [vmem:[#allocation8 + $0x1c0] sm:$0xff]
      %v2122 = vld [vmem:[#allocation8 + $0x1c8] sm:$0xff]
      %v2123 = vld [vmem:[#allocation8 + $0x1d0] sm:$0xff]
      %v2124 = vld [vmem:[#allocation8 + $0x1d8] sm:$0xff]
      %v2125 = vld [vmem:[#allocation8 + $0x1e0] sm:$0xff]
      %v2126 = vld [vmem:[#allocation8 + $0x1e8] sm:$0xff]
      %v2127 = vld [vmem:[#allocation8 + $0x1f0] sm:$0xff]
      %v2128 = vld [vmem:[#allocation8 + $0x1f8] sm:$0xff]
      %v2129 = vld [vmem:[#allocation8 + $0x200] sm:$0xff]
      %v2130 = vld [vmem:[#allocation8 + $0x208] sm:$0xff]
      %v2131 = vld [vmem:[#allocation8 + $0x210] sm:$0xff]
      %v2132 = vld [vmem:[#allocation8 + $0x218] sm:$0xff]
      %v2133 = vld [vmem:[#allocation8 + $0x220] sm:$0xff]
      %v2134 = vld [vmem:[#allocation8 + $0x228] sm:$0xff]
      %v2135 = vld [vmem:[#allocation8 + $0x230] sm:$0xff]
      %v2136 = vld [vmem:[#allocation8 + $0x238] sm:$0xff]
      %v2137 = vld [vmem:[#allocation8 + $0x240] sm:$0xff]
      %v2138 = vld [vmem:[#allocation8 + $0x248] sm:$0xff]
      %v2139 = vld [vmem:[#allocation8 + $0x250] sm:$0xff]
      %v2140 = vld [vmem:[#allocation8 + $0x258] sm:$0xff]
      %v2141 = vld [vmem:[#allocation8 + $0x260] sm:$0xff]
      %v2142 = vld [vmem:[#allocation8 + $0x268] sm:$0xff]
      %v2143 = vld [vmem:[#allocation8 + $0x270] sm:$0xff]
      %v2144 = vld [vmem:[#allocation8 + $0x278] sm:$0xff]
      %v2145 = vld [vmem:[#allocation8 + $0x280] sm:$0xff]
      %v2146 = vld [vmem:[#allocation8 + $0x288] sm:$0xff]
      %v2147 = vld [vmem:[#allocation8 + $0x290] sm:$0xff]
      %v2148 = vld [vmem:[#allocation8 + $0x298] sm:$0xff]
      %v2149 = vld [vmem:[#allocation8 + $0x2a0] sm:$0xff]
      %v2150 = vld [vmem:[#allocation8 + $0x2a8] sm:$0xff]
      %v2151 = vld [vmem:[#allocation8 + $0x2b0] sm:$0xff]
      %v2152 = vld [vmem:[#allocation8 + $0x2b8] sm:$0xff]
      %v2153 = vld [vmem:[#allocation8 + $0x2c0] sm:$0xff]
      %v2154 = vld [vmem:[#allocation8 + $0x2c8] sm:$0xff]
      %v2155 = vld [vmem:[#allocation8 + $0x2d0] sm:$0xff]
      %v2156 = vld [vmem:[#allocation8 + $0x2d8] sm:$0xff]
      %v2157 = vld [vmem:[#allocation8 + $0x2e0] sm:$0xff]
      %v2158 = vld [vmem:[#allocation8 + $0x2e8] sm:$0xff]
      %v2159 = vld [vmem:[#allocation8 + $0x2f0] sm:$0xff]
      %v2160 = vld [vmem:[#allocation8 + $0x2f8] sm:$0xff]
      %v2161 = vld [vmem:[#allocation8 + $0x300] sm:$0xff]
      %v2162 = vld [vmem:[#allocation8 + $0x308] sm:$0xff]
      %v2163 = vld [vmem:[#allocation8 + $0x310] sm:$0xff]
      %v2164 = vld [vmem:[#allocation8 + $0x318] sm:$0xff]
      %v2165 = vld [vmem:[#allocation8 + $0x320] sm:$0xff]
      %v2166 = vld [vmem:[#allocation8 + $0x328] sm:$0xff]
      %v2167 = vld [vmem:[#allocation8 + $0x330] sm:$0xff]
      %v2168 = vld [vmem:[#allocation8 + $0x338] sm:$0xff]
      %v2169 = vld [vmem:[#allocation8 + $0x340] sm:$0xff]
      %v2170 = vld [vmem:[#allocation8 + $0x348] sm:$0xff]
      %v2171 = vld [vmem:[#allocation8 + $0x350] sm:$0xff]
      %v2172 = vld [vmem:[#allocation8 + $0x358] sm:$0xff]
      %v2173 = vld [vmem:[#allocation8 + $0x360] sm:$0xff]
      %v2174 = vld [vmem:[#allocation8 + $0x368] sm:$0xff]
      %v2175 = vld [vmem:[#allocation8 + $0x370] sm:$0xff]
      %v2176 = vld [vmem:[#allocation8 + $0x378] sm:$0xff]
      %v2177 = vld [vmem:[#allocation8 + $0x380] sm:$0xff]
      %v2178 = vld [vmem:[#allocation8 + $0x388] sm:$0xff]
      %v2179 = vld [vmem:[#allocation8 + $0x390] sm:$0xff]
      %v2180 = vld [vmem:[#allocation8 + $0x398] sm:$0xff]
      %v2181 = vld [vmem:[#allocation8 + $0x3a0] sm:$0xff]
      %v2182 = vld [vmem:[#allocation8 + $0x3a8] sm:$0xff]
      %v2183 = vld [vmem:[#allocation8 + $0x3b0] sm:$0xff]
      %v2184 = vld [vmem:[#allocation8 + $0x3b8] sm:$0xff]
      %v2185 = vld [vmem:[#allocation8 + $0x3c0] sm:$0xff]
      %v2186 = vld [vmem:[#allocation8 + $0x3c8] sm:$0xff]
      %v2187 = vld [vmem:[#allocation8 + $0x3d0] sm:$0xff]
      %v2188 = vld [vmem:[#allocation8 + $0x3d8] sm:$0xff]
      %v2189 = vld [vmem:[#allocation8 + $0x3e0] sm:$0xff]
      %v2190 = vld [vmem:[#allocation8 + $0x3e8] sm:$0xff]
      %v2191 = vld [vmem:[#allocation8 + $0x3f0] sm:$0xff]
      %v2192 = vld [vmem:[#allocation8 + $0x3f8] sm:$0xff]
      %v2193 = vld [vmem:[%s4] sm:$0xf]
      %v2195 = vlaneseq
      %v2196 = vshrl.u32 %v2195, 7
      %v2197 = vsub.s32 0, %v2196
      %v2198 = vrot.slane %v2193, %v2197
      %v2199 = vlaneseq
      %v2200 = vshrl.u32 %v2199, 7
      %v2201 = vsub.s32 1, %v2200
      %v2202 = vrot.slane %v2193, %v2201
      %v2203 = vlaneseq
      %v2204 = vshrl.u32 %v2203, 7
      %v2205 = vsub.s32 2, %v2204
      %v2206 = vrot.slane %v2193, %v2205
      %v2207 = vlaneseq
      %v2208 = vshrl.u32 %v2207, 7
      %v2209 = vsub.s32 3, %v2208
      %v2210 = vrot.slane %v2193, %v2209
      %v2343 = vunpack.c.l.b16 %v2065
      %v2344 = vunpack.c.h.b16 %v2065
      %v2345 = vunpack.c.l.b16 %v2066
      %v2346 = vunpack.c.h.b16 %v2066
      %v2347 = vunpack.c.l.b16 %v2067
      %v2348 = vunpack.c.h.b16 %v2067
      %v2349 = vunpack.c.l.b16 %v2068
      %v2350 = vunpack.c.h.b16 %v2068
      %v2351 = vunpack.c.l.b16 %v2069
      %v2352 = vunpack.c.h.b16 %v2069
      %v2353 = vunpack.c.l.b16 %v2070
      %v2354 = vunpack.c.h.b16 %v2070
      %v2355 = vunpack.c.l.b16 %v2071
      %v2356 = vunpack.c.h.b16 %v2071
      %v2357 = vunpack.c.l.b16 %v2072
      %v2358 = vunpack.c.h.b16 %v2072
      %v2359 = vunpack.c.l.b16 %v2073
      %v2360 = vunpack.c.h.b16 %v2073
      %v2361 = vunpack.c.l.b16 %v2074
      %v2362 = vunpack.c.h.b16 %v2074
      %v2363 = vunpack.c.l.b16 %v2075
      %v2364 = vunpack.c.h.b16 %v2075
      %v2365 = vunpack.c.l.b16 %v2076
      %v2366 = vunpack.c.h.b16 %v2076
      %v2367 = vunpack.c.l.b16 %v2077
      %v2368 = vunpack.c.h.b16 %v2077
      %v2369 = vunpack.c.l.b16 %v2078
      %v2370 = vunpack.c.h.b16 %v2078
      %v2371 = vunpack.c.l.b16 %v2079
      %v2372 = vunpack.c.h.b16 %v2079
      %v2373 = vunpack.c.l.b16 %v2080
      %v2374 = vunpack.c.h.b16 %v2080
      %v2375 = vunpack.c.l.b16 %v2081
      %v2376 = vunpack.c.h.b16 %v2081
      %v2377 = vunpack.c.l.b16 %v2082
      %v2378 = vunpack.c.h.b16 %v2082
      %v2379 = vunpack.c.l.b16 %v2083
      %v2380 = vunpack.c.h.b16 %v2083
      %v2381 = vunpack.c.l.b16 %v2084
      %v2382 = vunpack.c.h.b16 %v2084
      %v2383 = vunpack.c.l.b16 %v2085
      %v2384 = vunpack.c.h.b16 %v2085
      %v2385 = vunpack.c.l.b16 %v2086
      %v2386 = vunpack.c.h.b16 %v2086
      %v2387 = vunpack.c.l.b16 %v2087
      %v2388 = vunpack.c.h.b16 %v2087
      %v2389 = vunpack.c.l.b16 %v2088
      %v2390 = vunpack.c.h.b16 %v2088
      %v2391 = vunpack.c.l.b16 %v2089
      %v2392 = vunpack.c.h.b16 %v2089
      %v2393 = vunpack.c.l.b16 %v2090
      %v2394 = vunpack.c.h.b16 %v2090
      %v2395 = vunpack.c.l.b16 %v2091
      %v2396 = vunpack.c.h.b16 %v2091
      %v2397 = vunpack.c.l.b16 %v2092
      %v2398 = vunpack.c.h.b16 %v2092
      %v2399 = vunpack.c.l.b16 %v2093
      %v2400 = vunpack.c.h.b16 %v2093
      %v2401 = vunpack.c.l.b16 %v2094
      %v2402 = vunpack.c.h.b16 %v2094
      %v2403 = vunpack.c.l.b16 %v2095
      %v2404 = vunpack.c.h.b16 %v2095
      %v2405 = vunpack.c.l.b16 %v2096
      %v2406 = vunpack.c.h.b16 %v2096
      %v2407 = vunpack.c.l.b16 %v2097
      %v2408 = vunpack.c.h.b16 %v2097
      %v2409 = vunpack.c.l.b16 %v2098
      %v2410 = vunpack.c.h.b16 %v2098
      %v2411 = vunpack.c.l.b16 %v2099
      %v2412 = vunpack.c.h.b16 %v2099
      %v2413 = vunpack.c.l.b16 %v2100
      %v2414 = vunpack.c.h.b16 %v2100
      %v2415 = vunpack.c.l.b16 %v2101
      %v2416 = vunpack.c.h.b16 %v2101
      %v2417 = vunpack.c.l.b16 %v2102
      %v2418 = vunpack.c.h.b16 %v2102
      %v2419 = vunpack.c.l.b16 %v2103
      %v2420 = vunpack.c.h.b16 %v2103
      %v2421 = vunpack.c.l.b16 %v2104
      %v2422 = vunpack.c.h.b16 %v2104
      %v2423 = vunpack.c.l.b16 %v2105
      %v2424 = vunpack.c.h.b16 %v2105
      %v2425 = vunpack.c.l.b16 %v2106
      %v2426 = vunpack.c.h.b16 %v2106
      %v2427 = vunpack.c.l.b16 %v2107
      %v2428 = vunpack.c.h.b16 %v2107
      %v2429 = vunpack.c.l.b16 %v2108
      %v2430 = vunpack.c.h.b16 %v2108
      %v2431 = vunpack.c.l.b16 %v2109
      %v2432 = vunpack.c.h.b16 %v2109
      %v2433 = vunpack.c.l.b16 %v2110
      %v2434 = vunpack.c.h.b16 %v2110
      %v2435 = vunpack.c.l.b16 %v2111
      %v2436 = vunpack.c.h.b16 %v2111
      %v2437 = vunpack.c.l.b16 %v2112
      %v2438 = vunpack.c.h.b16 %v2112
      %v2439 = vunpack.c.l.b16 %v2113
      %v2440 = vunpack.c.h.b16 %v2113
      %v2441 = vunpack.c.l.b16 %v2114
      %v2442 = vunpack.c.h.b16 %v2114
      %v2443 = vunpack.c.l.b16 %v2115
      %v2444 = vunpack.c.h.b16 %v2115
      %v2445 = vunpack.c.l.b16 %v2116
      %v2446 = vunpack.c.h.b16 %v2116
      %v2447 = vunpack.c.l.b16 %v2117
      %v2448 = vunpack.c.h.b16 %v2117
      %v2449 = vunpack.c.l.b16 %v2118
      %v2450 = vunpack.c.h.b16 %v2118
      %v2451 = vunpack.c.l.b16 %v2119
      %v2452 = vunpack.c.h.b16 %v2119
      %v2453 = vunpack.c.l.b16 %v2120
      %v2454 = vunpack.c.h.b16 %v2120
      %v2455 = vunpack.c.l.b16 %v2121
      %v2456 = vunpack.c.h.b16 %v2121
      %v2457 = vunpack.c.l.b16 %v2122
      %v2458 = vunpack.c.h.b16 %v2122
      %v2459 = vunpack.c.l.b16 %v2123
      %v2460 = vunpack.c.h.b16 %v2123
      %v2461 = vunpack.c.l.b16 %v2124
      %v2462 = vunpack.c.h.b16 %v2124
      %v2463 = vunpack.c.l.b16 %v2125
      %v2464 = vunpack.c.h.b16 %v2125
      %v2465 = vunpack.c.l.b16 %v2126
      %v2466 = vunpack.c.h.b16 %v2126
      %v2467 = vunpack.c.l.b16 %v2127
      %v2468 = vunpack.c.h.b16 %v2127
      %v2469 = vunpack.c.l.b16 %v2128
      %v2470 = vunpack.c.h.b16 %v2128
      %v2471 = vunpack.c.l.b16 %v2129
      %v2472 = vunpack.c.h.b16 %v2129
      %v2473 = vunpack.c.l.b16 %v2130
      %v2474 = vunpack.c.h.b16 %v2130
      %v2475 = vunpack.c.l.b16 %v2131
      %v2476 = vunpack.c.h.b16 %v2131
      %v2477 = vunpack.c.l.b16 %v2132
      %v2478 = vunpack.c.h.b16 %v2132
      %v2479 = vunpack.c.l.b16 %v2133
      %v2480 = vunpack.c.h.b16 %v2133
      %v2481 = vunpack.c.l.b16 %v2134
      %v2482 = vunpack.c.h.b16 %v2134
      %v2483 = vunpack.c.l.b16 %v2135
      %v2484 = vunpack.c.h.b16 %v2135
      %v2485 = vunpack.c.l.b16 %v2136
      %v2486 = vunpack.c.h.b16 %v2136
      %v2487 = vunpack.c.l.b16 %v2137
      %v2488 = vunpack.c.h.b16 %v2137
      %v2489 = vunpack.c.l.b16 %v2138
      %v2490 = vunpack.c.h.b16 %v2138
      %v2491 = vunpack.c.l.b16 %v2139
      %v2492 = vunpack.c.h.b16 %v2139
      %v2493 = vunpack.c.l.b16 %v2140
      %v2494 = vunpack.c.h.b16 %v2140
      %v2495 = vunpack.c.l.b16 %v2141
      %v2496 = vunpack.c.h.b16 %v2141
      %v2497 = vunpack.c.l.b16 %v2142
      %v2498 = vunpack.c.h.b16 %v2142
      %v2499 = vunpack.c.l.b16 %v2143
      %v2500 = vunpack.c.h.b16 %v2143
      %v2501 = vunpack.c.l.b16 %v2144
      %v2502 = vunpack.c.h.b16 %v2144
      %v2503 = vunpack.c.l.b16 %v2145
      %v2504 = vunpack.c.h.b16 %v2145
      %v2505 = vunpack.c.l.b16 %v2146
      %v2506 = vunpack.c.h.b16 %v2146
      %v2507 = vunpack.c.l.b16 %v2147
      %v2508 = vunpack.c.h.b16 %v2147
      %v2509 = vunpack.c.l.b16 %v2148
      %v2510 = vunpack.c.h.b16 %v2148
      %v2511 = vunpack.c.l.b16 %v2149
      %v2512 = vunpack.c.h.b16 %v2149
      %v2513 = vunpack.c.l.b16 %v2150
      %v2514 = vunpack.c.h.b16 %v2150
      %v2515 = vunpack.c.l.b16 %v2151
      %v2516 = vunpack.c.h.b16 %v2151
      %v2517 = vunpack.c.l.b16 %v2152
      %v2518 = vunpack.c.h.b16 %v2152
      %v2519 = vunpack.c.l.b16 %v2153
      %v2520 = vunpack.c.h.b16 %v2153
      %v2521 = vunpack.c.l.b16 %v2154
      %v2522 = vunpack.c.h.b16 %v2154
      %v2523 = vunpack.c.l.b16 %v2155
      %v2524 = vunpack.c.h.b16 %v2155
      %v2525 = vunpack.c.l.b16 %v2156
      %v2526 = vunpack.c.h.b16 %v2156
      %v2527 = vunpack.c.l.b16 %v2157
      %v2528 = vunpack.c.h.b16 %v2157
      %v2529 = vunpack.c.l.b16 %v2158
      %v2530 = vunpack.c.h.b16 %v2158
      %v2531 = vunpack.c.l.b16 %v2159
      %v2532 = vunpack.c.h.b16 %v2159
      %v2533 = vunpack.c.l.b16 %v2160
      %v2534 = vunpack.c.h.b16 %v2160
      %v2535 = vunpack.c.l.b16 %v2161
      %v2536 = vunpack.c.h.b16 %v2161
      %v2537 = vunpack.c.l.b16 %v2162
      %v2538 = vunpack.c.h.b16 %v2162
      %v2539 = vunpack.c.l.b16 %v2163
      %v2540 = vunpack.c.h.b16 %v2163
      %v2541 = vunpack.c.l.b16 %v2164
      %v2542 = vunpack.c.h.b16 %v2164
      %v2543 = vunpack.c.l.b16 %v2165
      %v2544 = vunpack.c.h.b16 %v2165
      %v2545 = vunpack.c.l.b16 %v2166
      %v2546 = vunpack.c.h.b16 %v2166
      %v2547 = vunpack.c.l.b16 %v2167
      %v2548 = vunpack.c.h.b16 %v2167
      %v2549 = vunpack.c.l.b16 %v2168
      %v2550 = vunpack.c.h.b16 %v2168
      %v2551 = vunpack.c.l.b16 %v2169
      %v2552 = vunpack.c.h.b16 %v2169
      %v2553 = vunpack.c.l.b16 %v2170
      %v2554 = vunpack.c.h.b16 %v2170
      %v2555 = vunpack.c.l.b16 %v2171
      %v2556 = vunpack.c.h.b16 %v2171
      %v2557 = vunpack.c.l.b16 %v2172
      %v2558 = vunpack.c.h.b16 %v2172
      %v2559 = vunpack.c.l.b16 %v2173
      %v2560 = vunpack.c.h.b16 %v2173
      %v2561 = vunpack.c.l.b16 %v2174
      %v2562 = vunpack.c.h.b16 %v2174
      %v2563 = vunpack.c.l.b16 %v2175
      %v2564 = vunpack.c.h.b16 %v2175
      %v2565 = vunpack.c.l.b16 %v2176
      %v2566 = vunpack.c.h.b16 %v2176
      %v2567 = vunpack.c.l.b16 %v2177
      %v2568 = vunpack.c.h.b16 %v2177
      %v2569 = vunpack.c.l.b16 %v2178
      %v2570 = vunpack.c.h.b16 %v2178
      %v2571 = vunpack.c.l.b16 %v2179
      %v2572 = vunpack.c.h.b16 %v2179
      %v2573 = vunpack.c.l.b16 %v2180
      %v2574 = vunpack.c.h.b16 %v2180
      %v2575 = vunpack.c.l.b16 %v2181
      %v2576 = vunpack.c.h.b16 %v2181
      %v2577 = vunpack.c.l.b16 %v2182
      %v2578 = vunpack.c.h.b16 %v2182
      %v2579 = vunpack.c.l.b16 %v2183
      %v2580 = vunpack.c.h.b16 %v2183
      %v2581 = vunpack.c.l.b16 %v2184
      %v2582 = vunpack.c.h.b16 %v2184
      %v2583 = vunpack.c.l.b16 %v2185
      %v2584 = vunpack.c.h.b16 %v2185
      %v2585 = vunpack.c.l.b16 %v2186
      %v2586 = vunpack.c.h.b16 %v2186
      %v2587 = vunpack.c.l.b16 %v2187
      %v2588 = vunpack.c.h.b16 %v2187
      %v2589 = vunpack.c.l.b16 %v2188
      %v2590 = vunpack.c.h.b16 %v2188
      %v2591 = vunpack.c.l.b16 %v2189
      %v2592 = vunpack.c.h.b16 %v2189
      %v2593 = vunpack.c.l.b16 %v2190
      %v2594 = vunpack.c.h.b16 %v2190
      %v2595 = vunpack.c.l.b16 %v2191
      %v2596 = vunpack.c.h.b16 %v2191
      %v2597 = vunpack.c.l.b16 %v2192
      %v2598 = vunpack.c.h.b16 %v2192
      %v2599 = vpack.c.b16 %v2347, %v2343
      %v2600 = vpack.c.b16 %v2348, %v2344
      %v2601 = vpack.c.b16 %v2349, %v2345
      %v2602 = vpack.c.b16 %v2350, %v2346
      %v2603 = vpack.c.b16 %v2355, %v2351
      %v2604 = vpack.c.b16 %v2356, %v2352
      %v2605 = vpack.c.b16 %v2357, %v2353
      %v2606 = vpack.c.b16 %v2358, %v2354
      %v2607 = vpack.c.b16 %v2363, %v2359
      %v2608 = vpack.c.b16 %v2364, %v2360
      %v2609 = vpack.c.b16 %v2365, %v2361
      %v2610 = vpack.c.b16 %v2366, %v2362
      %v2611 = vpack.c.b16 %v2371, %v2367
      %v2612 = vpack.c.b16 %v2372, %v2368
      %v2613 = vpack.c.b16 %v2373, %v2369
      %v2614 = vpack.c.b16 %v2374, %v2370
      %v2615 = vpack.c.b16 %v2379, %v2375
      %v2616 = vpack.c.b16 %v2380, %v2376
      %v2617 = vpack.c.b16 %v2381, %v2377
      %v2618 = vpack.c.b16 %v2382, %v2378
      %v2619 = vpack.c.b16 %v2387, %v2383
      %v2620 = vpack.c.b16 %v2388, %v2384
      %v2621 = vpack.c.b16 %v2389, %v2385
      %v2622 = vpack.c.b16 %v2390, %v2386
      %v2623 = vpack.c.b16 %v2395, %v2391
      %v2624 = vpack.c.b16 %v2396, %v2392
      %v2625 = vpack.c.b16 %v2397, %v2393
      %v2626 = vpack.c.b16 %v2398, %v2394
      %v2627 = vpack.c.b16 %v2403, %v2399
      %v2628 = vpack.c.b16 %v2404, %v2400
      %v2629 = vpack.c.b16 %v2405, %v2401
      %v2630 = vpack.c.b16 %v2406, %v2402
      %v2631 = vpack.c.b16 %v2411, %v2407
      %v2632 = vpack.c.b16 %v2412, %v2408
      %v2633 = vpack.c.b16 %v2413, %v2409
      %v2634 = vpack.c.b16 %v2414, %v2410
      %v2635 = vpack.c.b16 %v2419, %v2415
      %v2636 = vpack.c.b16 %v2420, %v2416
      %v2637 = vpack.c.b16 %v2421, %v2417
      %v2638 = vpack.c.b16 %v2422, %v2418
      %v2639 = vpack.c.b16 %v2427, %v2423
      %v2640 = vpack.c.b16 %v2428, %v2424
      %v2641 = vpack.c.b16 %v2429, %v2425
      %v2642 = vpack.c.b16 %v2430, %v2426
      %v2643 = vpack.c.b16 %v2435, %v2431
      %v2644 = vpack.c.b16 %v2436, %v2432
      %v2645 = vpack.c.b16 %v2437, %v2433
      %v2646 = vpack.c.b16 %v2438, %v2434
      %v2647 = vpack.c.b16 %v2443, %v2439
      %v2648 = vpack.c.b16 %v2444, %v2440
      %v2649 = vpack.c.b16 %v2445, %v2441
      %v2650 = vpack.c.b16 %v2446, %v2442
      %v2651 = vpack.c.b16 %v2451, %v2447
      %v2652 = vpack.c.b16 %v2452, %v2448
      %v2653 = vpack.c.b16 %v2453, %v2449
      %v2654 = vpack.c.b16 %v2454, %v2450
      %v2655 = vpack.c.b16 %v2459, %v2455
      %v2656 = vpack.c.b16 %v2460, %v2456
      %v2657 = vpack.c.b16 %v2461, %v2457
      %v2658 = vpack.c.b16 %v2462, %v2458
      %v2659 = vpack.c.b16 %v2467, %v2463
      %v2660 = vpack.c.b16 %v2468, %v2464
      %v2661 = vpack.c.b16 %v2469, %v2465
      %v2662 = vpack.c.b16 %v2470, %v2466
      %v2663 = vpack.c.b16 %v2475, %v2471
      %v2664 = vpack.c.b16 %v2476, %v2472
      %v2665 = vpack.c.b16 %v2477, %v2473
      %v2666 = vpack.c.b16 %v2478, %v2474
      %v2667 = vpack.c.b16 %v2483, %v2479
      %v2668 = vpack.c.b16 %v2484, %v2480
      %v2669 = vpack.c.b16 %v2485, %v2481
      %v2670 = vpack.c.b16 %v2486, %v2482
      %v2671 = vpack.c.b16 %v2491, %v2487
      %v2672 = vpack.c.b16 %v2492, %v2488
      %v2673 = vpack.c.b16 %v2493, %v2489
      %v2674 = vpack.c.b16 %v2494, %v2490
      %v2675 = vpack.c.b16 %v2499, %v2495
      %v2676 = vpack.c.b16 %v2500, %v2496
      %v2677 = vpack.c.b16 %v2501, %v2497
      %v2678 = vpack.c.b16 %v2502, %v2498
      %v2679 = vpack.c.b16 %v2507, %v2503
      %v2680 = vpack.c.b16 %v2508, %v2504
      %v2681 = vpack.c.b16 %v2509, %v2505
      %v2682 = vpack.c.b16 %v2510, %v2506
      %v2683 = vpack.c.b16 %v2515, %v2511
      %v2684 = vpack.c.b16 %v2516, %v2512
      %v2685 = vpack.c.b16 %v2517, %v2513
      %v2686 = vpack.c.b16 %v2518, %v2514
      %v2687 = vpack.c.b16 %v2523, %v2519
      %v2688 = vpack.c.b16 %v2524, %v2520
      %v2689 = vpack.c.b16 %v2525, %v2521
      %v2690 = vpack.c.b16 %v2526, %v2522
      %v2691 = vpack.c.b16 %v2531, %v2527
      %v2692 = vpack.c.b16 %v2532, %v2528
      %v2693 = vpack.c.b16 %v2533, %v2529
      %v2694 = vpack.c.b16 %v2534, %v2530
      %v2695 = vpack.c.b16 %v2539, %v2535
      %v2696 = vpack.c.b16 %v2540, %v2536
      %v2697 = vpack.c.b16 %v2541, %v2537
      %v2698 = vpack.c.b16 %v2542, %v2538
      %v2699 = vpack.c.b16 %v2547, %v2543
      %v2700 = vpack.c.b16 %v2548, %v2544
      %v2701 = vpack.c.b16 %v2549, %v2545
      %v2702 = vpack.c.b16 %v2550, %v2546
      %v2703 = vpack.c.b16 %v2555, %v2551
      %v2704 = vpack.c.b16 %v2556, %v2552
      %v2705 = vpack.c.b16 %v2557, %v2553
      %v2706 = vpack.c.b16 %v2558, %v2554
      %v2707 = vpack.c.b16 %v2563, %v2559
      %v2708 = vpack.c.b16 %v2564, %v2560
      %v2709 = vpack.c.b16 %v2565, %v2561
      %v2710 = vpack.c.b16 %v2566, %v2562
      %v2711 = vpack.c.b16 %v2571, %v2567
      %v2712 = vpack.c.b16 %v2572, %v2568
      %v2713 = vpack.c.b16 %v2573, %v2569
      %v2714 = vpack.c.b16 %v2574, %v2570
      %v2715 = vpack.c.b16 %v2579, %v2575
      %v2716 = vpack.c.b16 %v2580, %v2576
      %v2717 = vpack.c.b16 %v2581, %v2577
      %v2718 = vpack.c.b16 %v2582, %v2578
      %v2719 = vpack.c.b16 %v2587, %v2583
      %v2720 = vpack.c.b16 %v2588, %v2584
      %v2721 = vpack.c.b16 %v2589, %v2585
      %v2722 = vpack.c.b16 %v2590, %v2586
      %v2723 = vpack.c.b16 %v2595, %v2591
      %v2724 = vpack.c.b16 %v2596, %v2592
      %v2725 = vpack.c.b16 %v2597, %v2593
      %v2726 = vpack.c.b16 %v2598, %v2594
      %2855 = vmatprep.subr.bf16.mxu0 %v2600
      %2856 = vmatpush1.bf16.msra.mxu0 %v2599
      %2857 = vmatprep.subr.bf16.mxu0 %v2604
      %2858 = vmatpush1.bf16.msra.mxu0 %v2603
      %2859 = vmatprep.subr.bf16.mxu0 %v2608
      %2860 = vmatpush1.bf16.msra.mxu0 %v2607
      %2861 = vmatprep.subr.bf16.mxu0 %v2612
      %2862 = vmatpush1.bf16.msra.mxu0 %v2611
      %2863 = vmatprep.subr.bf16.mxu0 %v2616
      %2864 = vmatpush1.bf16.msra.mxu0 %v2615
      %2865 = vmatprep.subr.bf16.mxu0 %v2620
      %2866 = vmatpush1.bf16.msra.mxu0 %v2619
      %2867 = vmatprep.subr.bf16.mxu0 %v2624
      %2868 = vmatpush1.bf16.msra.mxu0 %v2623
      %2869 = vmatprep.subr.bf16.mxu0 %v2628
      %2870 = vmatpush1.bf16.msra.mxu0 %v2627
      %2871 = vmatprep.subr.bf16.mxu0 %v2632
      %2872 = vmatpush1.bf16.msra.mxu0 %v2631
      %2873 = vmatprep.subr.bf16.mxu0 %v2636
      %2874 = vmatpush1.bf16.msra.mxu0 %v2635
      %2875 = vmatprep.subr.bf16.mxu0 %v2640
      %2876 = vmatpush1.bf16.msra.mxu0 %v2639
      %2877 = vmatprep.subr.bf16.mxu0 %v2644
      %2878 = vmatpush1.bf16.msra.mxu0 %v2643
      %2879 = vmatprep.subr.bf16.mxu0 %v2648
      %2880 = vmatpush1.bf16.msra.mxu0 %v2647
      %2881 = vmatprep.subr.bf16.mxu0 %v2652
      %2882 = vmatpush1.bf16.msra.mxu0 %v2651
      %2883 = vmatprep.subr.bf16.mxu0 %v2656
      %2884 = vmatpush1.bf16.msra.mxu0 %v2655
      %2885 = vmatprep.subr.bf16.mxu0 %v2660
      %2886 = vmatpush1.bf16.msra.mxu0 %v2659
      %2887 = vmatprep.mubr.bf16.mxu0 %v2062
      %2888 = vmatmul.mubr.bf16.gmra.mrb[0].mxu0 %v2061
      %v2889 = vpop.f32.mrb[0].mxu0
      %v2890 = vadd.f32 %v2198, %v2889
      %v2891 = vpop.f32.mrb[0].mxu0
      %v2892 = vadd.f32 %v2202, %v2891
      %v2893 = vpop.f32.mrb[0].mxu0
      %v2894 = vpop.f32.mrb[0].mxu0
      %2895 = vdwg.mxu0
      %2896 = vmatprep.subr.bf16.mxu0 %v2664
      %2897 = vmatpush1.bf16.msra.mxu0 %v2663
      %2898 = vmatprep.subr.bf16.mxu0 %v2668
      %2899 = vmatpush1.bf16.msra.mxu0 %v2667
      %2900 = vmatprep.subr.bf16.mxu0 %v2672
      %2901 = vmatpush1.bf16.msra.mxu0 %v2671
      %2902 = vmatprep.subr.bf16.mxu0 %v2676
      %2903 = vmatpush1.bf16.msra.mxu0 %v2675
      %2904 = vmatprep.subr.bf16.mxu0 %v2680
      %2905 = vmatpush1.bf16.msra.mxu0 %v2679
      %2906 = vmatprep.subr.bf16.mxu0 %v2684
      %2907 = vmatpush1.bf16.msra.mxu0 %v2683
      %2908 = vmatprep.subr.bf16.mxu0 %v2688
      %2909 = vmatpush1.bf16.msra.mxu0 %v2687
      %2910 = vmatprep.subr.bf16.mxu0 %v2692
      %2911 = vmatpush1.bf16.msra.mxu0 %v2691
      %2912 = vmatprep.subr.bf16.mxu0 %v2696
      %2913 = vmatpush1.bf16.msra.mxu0 %v2695
      %2914 = vmatprep.subr.bf16.mxu0 %v2700
      %2915 = vmatpush1.bf16.msra.mxu0 %v2699
      %2916 = vmatprep.subr.bf16.mxu0 %v2704
      %2917 = vmatpush1.bf16.msra.mxu0 %v2703
      %2918 = vmatprep.subr.bf16.mxu0 %v2708
      %2919 = vmatpush1.bf16.msra.mxu0 %v2707
      %2920 = vmatprep.subr.bf16.mxu0 %v2712
      %2921 = vmatpush1.bf16.msra.mxu0 %v2711
      %2922 = vmatprep.subr.bf16.mxu0 %v2716
      %2923 = vmatpush1.bf16.msra.mxu0 %v2715
      %2924 = vmatprep.subr.bf16.mxu0 %v2720
      %2925 = vmatpush1.bf16.msra.mxu0 %v2719
      %2926 = vmatprep.subr.bf16.mxu0 %v2724
      %2927 = vmatpush1.bf16.msra.mxu0 %v2723
      %2928 = vmatprep.mubr.bf16.mxu0 %v2064
      %2929 = vmatmul.mubr.bf16.gmra.mrb[0].mxu0 %v2063
      %v2930 = vpop.f32.mrb[0].mxu0
      %v2931 = vadd.f32 %v2890, %v2930
      %v2932 = vpop.f32.mrb[0].mxu0
      %v2933 = vadd.f32 %v2892, %v2932
      %v2934 = vpop.f32.mrb[0].mxu0
      %v2935 = vpop.f32.mrb[0].mxu0
      %2936 = vdwg.mxu0
      %2937 = vmatprep.subr.bf16.mxu0 %v2602
      %2938 = vmatpush1.bf16.msra.mxu0 %v2601
      %2939 = vmatprep.subr.bf16.mxu0 %v2606
      %2940 = vmatpush1.bf16.msra.mxu0 %v2605
      %2941 = vmatprep.subr.bf16.mxu0 %v2610
      %2942 = vmatpush1.bf16.msra.mxu0 %v2609
      %2943 = vmatprep.subr.bf16.mxu0 %v2614
      %2944 = vmatpush1.bf16.msra.mxu0 %v2613
      %2945 = vmatprep.subr.bf16.mxu0 %v2618
      %2946 = vmatpush1.bf16.msra.mxu0 %v2617
      %2947 = vmatprep.subr.bf16.mxu0 %v2622
      %2948 = vmatpush1.bf16.msra.mxu0 %v2621
      %2949 = vmatprep.subr.bf16.mxu0 %v2626
      %2950 = vmatpush1.bf16.msra.mxu0 %v2625
      %2951 = vmatprep.subr.bf16.mxu0 %v2630
      %2952 = vmatpush1.bf16.msra.mxu0 %v2629
      %2953 = vmatprep.subr.bf16.mxu0 %v2634
      %2954 = vmatpush1.bf16.msra.mxu0 %v2633
      %2955 = vmatprep.subr.bf16.mxu0 %v2638
      %2956 = vmatpush1.bf16.msra.mxu0 %v2637
      %2957 = vmatprep.subr.bf16.mxu0 %v2642
      %2958 = vmatpush1.bf16.msra.mxu0 %v2641
      %2959 = vmatprep.subr.bf16.mxu0 %v2646
      %2960 = vmatpush1.bf16.msra.mxu0 %v2645
      %2961 = vmatprep.subr.bf16.mxu0 %v2650
      %2962 = vmatpush1.bf16.msra.mxu0 %v2649
      %2963 = vmatprep.subr.bf16.mxu0 %v2654
      %2964 = vmatpush1.bf16.msra.mxu0 %v2653
      %2965 = vmatprep.subr.bf16.mxu0 %v2658
      %2966 = vmatpush1.bf16.msra.mxu0 %v2657
      %2967 = vmatprep.subr.bf16.mxu0 %v2662
      %2968 = vmatpush1.bf16.msra.mxu0 %v2661
      %2969 = vmatprep.mubr.bf16.mxu0 %v2062
      %2970 = vmatmul.mubr.bf16.gmra.mrb[0].mxu0 %v2061
      %v2971 = vpop.f32.mrb[0].mxu0
      %v2972 = vadd.f32 %v2206, %v2971
      %v2973 = vpop.f32.mrb[0].mxu0
      %v2974 = vadd.f32 %v2210, %v2973
      %v2975 = vpop.f32.mrb[0].mxu0
      %v2976 = vpop.f32.mrb[0].mxu0
      %2977 = vdwg.mxu0
      %2978 = vmatprep.subr.bf16.mxu0 %v2666
      %2979 = vmatpush1.bf16.msra.mxu0 %v2665
      %2980 = vmatprep.subr.bf16.mxu0 %v2670
      %2981 = vmatpush1.bf16.msra.mxu0 %v2669
      %2982 = vmatprep.subr.bf16.mxu0 %v2674
      %2983 = vmatpush1.bf16.msra.mxu0 %v2673
      %2984 = vmatprep.subr.bf16.mxu0 %v2678
      %2985 = vmatpush1.bf16.msra.mxu0 %v2677
      %2986 = vmatprep.subr.bf16.mxu0 %v2682
      %2987 = vmatpush1.bf16.msra.mxu0 %v2681
      %2988 = vmatprep.subr.bf16.mxu0 %v2686
      %2989 = vmatpush1.bf16.msra.mxu0 %v2685
      %2990 = vmatprep.subr.bf16.mxu0 %v2690
      %2991 = vmatpush1.bf16.msra.mxu0 %v2689
      %2992 = vmatprep.subr.bf16.mxu0 %v2694
      %2993 = vmatpush1.bf16.msra.mxu0 %v2693
      %2994 = vmatprep.subr.bf16.mxu0 %v2698
      %2995 = vmatpush1.bf16.msra.mxu0 %v2697
      %2996 = vmatprep.subr.bf16.mxu0 %v2702
      %2997 = vmatpush1.bf16.msra.mxu0 %v2701
      %2998 = vmatprep.subr.bf16.mxu0 %v2706
      %2999 = vmatpush1.bf16.msra.mxu0 %v2705
      %3000 = vmatprep.subr.bf16.mxu0 %v2710
      %3001 = vmatpush1.bf16.msra.mxu0 %v2709
      %3002 = vmatprep.subr.bf16.mxu0 %v2714
      %3003 = vmatpush1.bf16.msra.mxu0 %v2713
      %3004 = vmatprep.subr.bf16.mxu0 %v2718
      %3005 = vmatpush1.bf16.msra.mxu0 %v2717
      %3006 = vmatprep.subr.bf16.mxu0 %v2722
      %3007 = vmatpush1.bf16.msra.mxu0 %v2721
      %3008 = vmatprep.subr.bf16.mxu0 %v2726
      %3009 = vmatpush1.bf16.msra.mxu0 %v2725
      %3010 = vmatprep.mubr.bf16.mxu0 %v2064
      %3011 = vmatmul.mubr.bf16.gmra.mrb[0].mxu0 %v2063
      %v3012 = vpop.f32.mrb[0].mxu0
      %v3013 = vadd.f32 %v2972, %v3012
      %v3014 = vpop.f32.mrb[0].mxu0
      %v3015 = vadd.f32 %v2974, %v3014
      %v3016 = vpop.f32.mrb[0].mxu0
      %v3017 = vpop.f32.mrb[0].mxu0
      %3018 = vdwg.mxu0
      %v3019 = vlaneseq
      %v3020 = vshrl.u32 %v3019, 7
      %vm3021 = vcmp.lt.s32.totalorder %v3020, 2
      %v3022 = vsel %vm3021, 1, 0
      %v3023 = vcvt.s32.f32 %v3022
      %v3024 = vmul.f32 %v2931, %v3023
      %v3025 = vmul.f32 %v2933, %v3023
      %v3026 = vmul.f32 %v3013, %v3023
      %v3027 = vmul.f32 %v3015, %v3023
      %v3028 = vrot.slane %v3024, 4
      %v3029 = vadd.f32 %v3024, %v3028
      %v3030 = vrot.slane %v3029, 2
      %v3031 = vadd.f32 %v3029, %v3030
      %v3032 = vrot.slane %v3031, 1
      %v3033 = vadd.f32 %v3031, %v3032
      %v3034 = vrot.slane %v3025, 4
      %v3035 = vadd.f32 %v3025, %v3034
      %v3036 = vrot.slane %v3035, 2
      %v3037 = vadd.f32 %v3035, %v3036
      %v3038 = vrot.slane %v3037, 1
      %v3039 = vadd.f32 %v3037, %v3038
      %v3040 = vrot.slane %v3026, 4
      %v3041 = vadd.f32 %v3026, %v3040
      %v3042 = vrot.slane %v3041, 2
      %v3043 = vadd.f32 %v3041, %v3042
      %v3044 = vrot.slane %v3043, 1
      %v3045 = vadd.f32 %v3043, %v3044
      %v3046 = vrot.slane %v3027, 4
      %v3047 = vadd.f32 %v3027, %v3046
      %v3048 = vrot.slane %v3047, 2
      %v3049 = vadd.f32 %v3047, %v3048
      %v3050 = vrot.slane %v3049, 1
      %v3051 = vadd.f32 %v3049, %v3050
      %v3052 = vmul.f32 %v3033, 0.5
      %v3053 = vmul.f32 %v3039, 0.5
      %v3054 = vmul.f32 %v3045, 0.5
      %v3055 = vmul.f32 %v3051, 0.5
      %v3056 = vsub.f32 %v2931, %v3052
      %v3057 = vsub.f32 %v2933, %v3053
      %v3058 = vsub.f32 %v3013, %v3054
      %v3059 = vsub.f32 %v3015, %v3055
      %v3060 = vmul.f32 %v3056, %v3023
      %v3061 = vmul.f32 %v3057, %v3023
      %v3062 = vmul.f32 %v3058, %v3023
      %v3063 = vmul.f32 %v3059, %v3023
      %v3064 = vmul.f32 %v3060, %v3060
      %v3065 = vmul.f32 %v3061, %v3061
      %v3066 = vmul.f32 %v3062, %v3062
      %v3067 = vmul.f32 %v3063, %v3063
      %v3068 = vrot.slane %v3064, 4
      %v3069 = vadd.f32 %v3064, %v3068
      %v3070 = vrot.slane %v3069, 2
      %v3071 = vadd.f32 %v3069, %v3070
      %v3072 = vrot.slane %v3071, 1
      %v3073 = vadd.f32 %v3071, %v3072
      %v3074 = vrot.slane %v3065, 4
      %v3075 = vadd.f32 %v3065, %v3074
      %v3076 = vrot.slane %v3075, 2
      %v3077 = vadd.f32 %v3075, %v3076
      %v3078 = vrot.slane %v3077, 1
      %v3079 = vadd.f32 %v3077, %v3078
      %v3080 = vrot.slane %v3066, 4
      %v3081 = vadd.f32 %v3066, %v3080
      %v3082 = vrot.slane %v3081, 2
      %v3083 = vadd.f32 %v3081, %v3082
      %v3084 = vrot.slane %v3083, 1
      %v3085 = vadd.f32 %v3083, %v3084
      %v3086 = vrot.slane %v3067, 4
      %v3087 = vadd.f32 %v3067, %v3086
      %v3088 = vrot.slane %v3087, 2
      %v3089 = vadd.f32 %v3087, %v3088
      %v3090 = vrot.slane %v3089, 1
      %v3091 = vadd.f32 %v3089, %v3090
      %v3092 = vmul.f32 %v3073, 0.5
      %v3093 = vmul.f32 %v3079, 0.5
      %v3094 = vmul.f32 %v3085, 0.5
      %v3095 = vmul.f32 %v3091, 0.5
      %v3096 = vadd.f32 %v3092, 1e-05
      %v3097 = vadd.f32 %v3093, 1e-05
      %v3098 = vadd.f32 %v3094, 1e-05
      %v3099 = vadd.f32 %v3095, 1e-05
      %v3100 = vrsqrt.pop %v3096
      %v3101 = vrsqrt.pop %v3097
      %v3102 = vrsqrt.pop %v3098
      %v3103 = vrsqrt.pop %v3099
      %v3104 = vmul.f32 %v3056, %v3100
      %v3105 = vmul.f32 %v3057, %v3101
      %v3106 = vmul.f32 %v3058, %v3102
      %v3107 = vmul.f32 %v3059, %v3103
      %v3108 = vld [vmem:[%s5] sm:$0xf]
      %v3110 = vlaneseq
      %v3111 = vshrl.u32 %v3110, 7
      %v3112 = vsub.s32 0, %v3111
      %v3113 = vrot.slane %v3108, %v3112
      %v3114 = vlaneseq
      %v3115 = vshrl.u32 %v3114, 7
      %v3116 = vsub.s32 1, %v3115
      %v3117 = vrot.slane %v3108, %v3116
      %v3118 = vlaneseq
      %v3119 = vshrl.u32 %v3118, 7
      %v3120 = vsub.s32 2, %v3119
      %v3121 = vrot.slane %v3108, %v3120
      %v3122 = vlaneseq
      %v3123 = vshrl.u32 %v3122, 7
      %v3124 = vsub.s32 3, %v3123
      %v3125 = vrot.slane %v3108, %v3124
      %v3130 = vmul.f32 %v3104, %v3113
      %v3131 = vmul.f32 %v3105, %v3117
      %v3132 = vmul.f32 %v3106, %v3121
      %v3133 = vmul.f32 %v3107, %v3125
      %v3134 = vld [vmem:[%s6] sm:$0xf]
      %v3136 = vlaneseq
      %v3137 = vshrl.u32 %v3136, 7
      %v3138 = vsub.s32 0, %v3137
      %v3139 = vrot.slane %v3134, %v3138
      %v3140 = vlaneseq
      %v3141 = vshrl.u32 %v3140, 7
      %v3142 = vsub.s32 1, %v3141
      %v3143 = vrot.slane %v3134, %v3142
      %v3144 = vlaneseq
      %v3145 = vshrl.u32 %v3144, 7
      %v3146 = vsub.s32 2, %v3145
      %v3147 = vrot.slane %v3134, %v3146
      %v3148 = vlaneseq
      %v3149 = vshrl.u32 %v3148, 7
      %v3150 = vsub.s32 3, %v3149
      %v3151 = vrot.slane %v3134, %v3150
      %v3156 = vadd.f32 %v3130, %v3139
      %v3157 = vadd.f32 %v3131, %v3143
      %v3158 = vadd.f32 %v3132, %v3147
      %v3159 = vadd.f32 %v3133, %v3151
      %vm3160 = vcmp.gt.f32.partialorder %v3156, 0.0
      %vm3161 = vcmp.gt.f32.partialorder %v3157, 0.0
      %vm3162 = vcmp.gt.f32.partialorder %v3158, 0.0
      %vm3163 = vcmp.gt.f32.partialorder %v3159, 0.0
      %v3164 = vmul.f32 %v3156, 0.2
      %v3165 = vmul.f32 %v3157, 0.2
      %v3166 = vmul.f32 %v3158, 0.2
      %v3167 = vmul.f32 %v3159, 0.2
      %v3168 = vsel %vm3160, %v3156, %v3164
      %v3169 = vsel %vm3161, %v3157, %v3165
      %v3170 = vsel %vm3162, %v3158, %v3166
      %v3171 = vsel %vm3163, %v3159, %v3167
      %v3172 = vpack.c.bf16 %v3168, %v3168
      %v3173 = vpack.c.bf16 %v3169, %v3169
      %v3174 = vpack.c.bf16 %v3170, %v3170
      %v3175 = vpack.c.bf16 %v3171, %v3171
      %v3176 = vld [vmem:[#allocation9] sm:$0xff]
      %v3177 = vld [vmem:[#allocation9 + $0x8] sm:$0xff]
      %v3178 = vld [vmem:[#allocation9 + $0x10] sm:$0xff]
      %v3179 = vld [vmem:[#allocation9 + $0x18] sm:$0xff]
      %v3180 = vld [vmem:[#allocation9 + $0x20] sm:$0xff]
      %v3181 = vld [vmem:[#allocation9 + $0x28] sm:$0xff]
      %v3182 = vld [vmem:[#allocation9 + $0x30] sm:$0xff]
      %v3183 = vld [vmem:[#allocation9 + $0x38] sm:$0xff]
      %v3184 = vld [vmem:[#allocation9 + $0x40] sm:$0xff]
      %v3185 = vld [vmem:[#allocation9 + $0x48] sm:$0xff]
      %v3186 = vld [vmem:[#allocation9 + $0x50] sm:$0xff]
      %v3187 = vld [vmem:[#allocation9 + $0x58] sm:$0xff]
      %v3188 = vld [vmem:[#allocation9 + $0x60] sm:$0xff]
      %v3189 = vld [vmem:[#allocation9 + $0x68] sm:$0xff]
      %v3190 = vld [vmem:[#allocation9 + $0x70] sm:$0xff]
      %v3191 = vld [vmem:[#allocation9 + $0x78] sm:$0xff]
      %v3192 = vld [vmem:[#allocation9 + $0x80] sm:$0xff]
      %v3193 = vld [vmem:[#allocation9 + $0x88] sm:$0xff]
      %v3194 = vld [vmem:[#allocation9 + $0x90] sm:$0xff]
      %v3195 = vld [vmem:[#allocation9 + $0x98] sm:$0xff]
      %v3196 = vld [vmem:[#allocation9 + $0xa0] sm:$0xff]
      %v3197 = vld [vmem:[#allocation9 + $0xa8] sm:$0xff]
      %v3198 = vld [vmem:[#allocation9 + $0xb0] sm:$0xff]
      %v3199 = vld [vmem:[#allocation9 + $0xb8] sm:$0xff]
      %v3200 = vld [vmem:[#allocation9 + $0xc0] sm:$0xff]
      %v3201 = vld [vmem:[#allocation9 + $0xc8] sm:$0xff]
      %v3202 = vld [vmem:[#allocation9 + $0xd0] sm:$0xff]
      %v3203 = vld [vmem:[#allocation9 + $0xd8] sm:$0xff]
      %v3204 = vld [vmem:[#allocation9 + $0xe0] sm:$0xff]
      %v3205 = vld [vmem:[#allocation9 + $0xe8] sm:$0xff]
      %v3206 = vld [vmem:[#allocation9 + $0xf0] sm:$0xff]
      %v3207 = vld [vmem:[#allocation9 + $0xf8] sm:$0xff]
      %v3208 = vld [vmem:[#allocation9 + $0x100] sm:$0xff]
      %v3209 = vld [vmem:[#allocation9 + $0x108] sm:$0xff]
      %v3210 = vld [vmem:[#allocation9 + $0x110] sm:$0xff]
      %v3211 = vld [vmem:[#allocation9 + $0x118] sm:$0xff]
      %v3212 = vld [vmem:[#allocation9 + $0x120] sm:$0xff]
      %v3213 = vld [vmem:[#allocation9 + $0x128] sm:$0xff]
      %v3214 = vld [vmem:[#allocation9 + $0x130] sm:$0xff]
      %v3215 = vld [vmem:[#allocation9 + $0x138] sm:$0xff]
      %v3216 = vld [vmem:[#allocation9 + $0x140] sm:$0xff]
      %v3217 = vld [vmem:[#allocation9 + $0x148] sm:$0xff]
      %v3218 = vld [vmem:[#allocation9 + $0x150] sm:$0xff]
      %v3219 = vld [vmem:[#allocation9 + $0x158] sm:$0xff]
      %v3220 = vld [vmem:[#allocation9 + $0x160] sm:$0xff]
      %v3221 = vld [vmem:[#allocation9 + $0x168] sm:$0xff]
      %v3222 = vld [vmem:[#allocation9 + $0x170] sm:$0xff]
      %v3223 = vld [vmem:[#allocation9 + $0x178] sm:$0xff]
      %v3224 = vld [vmem:[#allocation9 + $0x180] sm:$0xff]
      %v3225 = vld [vmem:[#allocation9 + $0x188] sm:$0xff]
      %v3226 = vld [vmem:[#allocation9 + $0x190] sm:$0xff]
      %v3227 = vld [vmem:[#allocation9 + $0x198] sm:$0xff]
      %v3228 = vld [vmem:[#allocation9 + $0x1a0] sm:$0xff]
      %v3229 = vld [vmem:[#allocation9 + $0x1a8] sm:$0xff]
      %v3230 = vld [vmem:[#allocation9 + $0x1b0] sm:$0xff]
      %v3231 = vld [vmem:[#allocation9 + $0x1b8] sm:$0xff]
      %v3232 = vld [vmem:[#allocation9 + $0x1c0] sm:$0xff]
      %v3233 = vld [vmem:[#allocation9 + $0x1c8] sm:$0xff]
      %v3234 = vld [vmem:[#allocation9 + $0x1d0] sm:$0xff]
      %v3235 = vld [vmem:[#allocation9 + $0x1d8] sm:$0xff]
      %v3236 = vld [vmem:[#allocation9 + $0x1e0] sm:$0xff]
      %v3237 = vld [vmem:[#allocation9 + $0x1e8] sm:$0xff]
      %v3238 = vld [vmem:[#allocation9 + $0x1f0] sm:$0xff]
      %v3239 = vld [vmem:[#allocation9 + $0x1f8] sm:$0xff]
      %v3240 = vld [vmem:[%s8] sm:$0x3]
      %v3242 = vlaneseq
      %v3243 = vshrl.u32 %v3242, 7
      %v3244 = vsub.s32 0, %v3243
      %v3245 = vrot.slane %v3240, %v3244
      %v3246 = vlaneseq
      %v3247 = vshrl.u32 %v3246, 7
      %v3248 = vsub.s32 1, %v3247
      %v3249 = vrot.slane %v3240, %v3248
      %v3316 = vunpack.c.l.b16 %v3176
      %v3317 = vunpack.c.h.b16 %v3176
      %v3318 = vunpack.c.l.b16 %v3177
      %v3319 = vunpack.c.h.b16 %v3177
      %v3320 = vunpack.c.l.b16 %v3178
      %v3321 = vunpack.c.h.b16 %v3178
      %v3322 = vunpack.c.l.b16 %v3179
      %v3323 = vunpack.c.h.b16 %v3179
      %v3324 = vunpack.c.l.b16 %v3180
      %v3325 = vunpack.c.h.b16 %v3180
      %v3326 = vunpack.c.l.b16 %v3181
      %v3327 = vunpack.c.h.b16 %v3181
      %v3328 = vunpack.c.l.b16 %v3182
      %v3329 = vunpack.c.h.b16 %v3182
      %v3330 = vunpack.c.l.b16 %v3183
      %v3331 = vunpack.c.h.b16 %v3183
      %v3332 = vunpack.c.l.b16 %v3184
      %v3333 = vunpack.c.h.b16 %v3184
      %v3334 = vunpack.c.l.b16 %v3185
      %v3335 = vunpack.c.h.b16 %v3185
      %v3336 = vunpack.c.l.b16 %v3186
      %v3337 = vunpack.c.h.b16 %v3186
      %v3338 = vunpack.c.l.b16 %v3187
      %v3339 = vunpack.c.h.b16 %v3187
      %v3340 = vunpack.c.l.b16 %v3188
      %v3341 = vunpack.c.h.b16 %v3188
      %v3342 = vunpack.c.l.b16 %v3189
      %v3343 = vunpack.c.h.b16 %v3189
      %v3344 = vunpack.c.l.b16 %v3190
      %v3345 = vunpack.c.h.b16 %v3190
      %v3346 = vunpack.c.l.b16 %v3191
      %v3347 = vunpack.c.h.b16 %v3191
      %v3348 = vunpack.c.l.b16 %v3192
      %v3349 = vunpack.c.h.b16 %v3192
      %v3350 = vunpack.c.l.b16 %v3193
      %v3351 = vunpack.c.h.b16 %v3193
      %v3352 = vunpack.c.l.b16 %v3194
      %v3353 = vunpack.c.h.b16 %v3194
      %v3354 = vunpack.c.l.b16 %v3195
      %v3355 = vunpack.c.h.b16 %v3195
      %v3356 = vunpack.c.l.b16 %v3196
      %v3357 = vunpack.c.h.b16 %v3196
      %v3358 = vunpack.c.l.b16 %v3197
      %v3359 = vunpack.c.h.b16 %v3197
      %v3360 = vunpack.c.l.b16 %v3198
      %v3361 = vunpack.c.h.b16 %v3198
      %v3362 = vunpack.c.l.b16 %v3199
      %v3363 = vunpack.c.h.b16 %v3199
      %v3364 = vunpack.c.l.b16 %v3200
      %v3365 = vunpack.c.h.b16 %v3200
      %v3366 = vunpack.c.l.b16 %v3201
      %v3367 = vunpack.c.h.b16 %v3201
      %v3368 = vunpack.c.l.b16 %v3202
      %v3369 = vunpack.c.h.b16 %v3202
      %v3370 = vunpack.c.l.b16 %v3203
      %v3371 = vunpack.c.h.b16 %v3203
      %v3372 = vunpack.c.l.b16 %v3204
      %v3373 = vunpack.c.h.b16 %v3204
      %v3374 = vunpack.c.l.b16 %v3205
      %v3375 = vunpack.c.h.b16 %v3205
      %v3376 = vunpack.c.l.b16 %v3206
      %v3377 = vunpack.c.h.b16 %v3206
      %v3378 = vunpack.c.l.b16 %v3207
      %v3379 = vunpack.c.h.b16 %v3207
      %v3380 = vunpack.c.l.b16 %v3208
      %v3381 = vunpack.c.h.b16 %v3208
      %v3382 = vunpack.c.l.b16 %v3209
      %v3383 = vunpack.c.h.b16 %v3209
      %v3384 = vunpack.c.l.b16 %v3210
      %v3385 = vunpack.c.h.b16 %v3210
      %v3386 = vunpack.c.l.b16 %v3211
      %v3387 = vunpack.c.h.b16 %v3211
      %v3388 = vunpack.c.l.b16 %v3212
      %v3389 = vunpack.c.h.b16 %v3212
      %v3390 = vunpack.c.l.b16 %v3213
      %v3391 = vunpack.c.h.b16 %v3213
      %v3392 = vunpack.c.l.b16 %v3214
      %v3393 = vunpack.c.h.b16 %v3214
      %v3394 = vunpack.c.l.b16 %v3215
      %v3395 = vunpack.c.h.b16 %v3215
      %v3396 = vunpack.c.l.b16 %v3216
      %v3397 = vunpack.c.h.b16 %v3216
      %v3398 = vunpack.c.l.b16 %v3217
      %v3399 = vunpack.c.h.b16 %v3217
      %v3400 = vunpack.c.l.b16 %v3218
      %v3401 = vunpack.c.h.b16 %v3218
      %v3402 = vunpack.c.l.b16 %v3219
      %v3403 = vunpack.c.h.b16 %v3219
      %v3404 = vunpack.c.l.b16 %v3220
      %v3405 = vunpack.c.h.b16 %v3220
      %v3406 = vunpack.c.l.b16 %v3221
      %v3407 = vunpack.c.h.b16 %v3221
      %v3408 = vunpack.c.l.b16 %v3222
      %v3409 = vunpack.c.h.b16 %v3222
      %v3410 = vunpack.c.l.b16 %v3223
      %v3411 = vunpack.c.h.b16 %v3223
      %v3412 = vunpack.c.l.b16 %v3224
      %v3413 = vunpack.c.h.b16 %v3224
      %v3414 = vunpack.c.l.b16 %v3225
      %v3415 = vunpack.c.h.b16 %v3225
      %v3416 = vunpack.c.l.b16 %v3226
      %v3417 = vunpack.c.h.b16 %v3226
      %v3418 = vunpack.c.l.b16 %v3227
      %v3419 = vunpack.c.h.b16 %v3227
      %v3420 = vunpack.c.l.b16 %v3228
      %v3421 = vunpack.c.h.b16 %v3228
      %v3422 = vunpack.c.l.b16 %v3229
      %v3423 = vunpack.c.h.b16 %v3229
      %v3424 = vunpack.c.l.b16 %v3230
      %v3425 = vunpack.c.h.b16 %v3230
      %v3426 = vunpack.c.l.b16 %v3231
      %v3427 = vunpack.c.h.b16 %v3231
      %v3428 = vunpack.c.l.b16 %v3232
      %v3429 = vunpack.c.h.b16 %v3232
      %v3430 = vunpack.c.l.b16 %v3233
      %v3431 = vunpack.c.h.b16 %v3233
      %v3432 = vunpack.c.l.b16 %v3234
      %v3433 = vunpack.c.h.b16 %v3234
      %v3434 = vunpack.c.l.b16 %v3235
      %v3435 = vunpack.c.h.b16 %v3235
      %v3436 = vunpack.c.l.b16 %v3236
      %v3437 = vunpack.c.h.b16 %v3236
      %v3438 = vunpack.c.l.b16 %v3237
      %v3439 = vunpack.c.h.b16 %v3237
      %v3440 = vunpack.c.l.b16 %v3238
      %v3441 = vunpack.c.h.b16 %v3238
      %v3442 = vunpack.c.l.b16 %v3239
      %v3443 = vunpack.c.h.b16 %v3239
      %v3444 = vpack.c.b16 %v3318, %v3316
      %v3445 = vpack.c.b16 %v3319, %v3317
      %v3446 = vpack.c.b16 %v3322, %v3320
      %v3447 = vpack.c.b16 %v3323, %v3321
      %v3448 = vpack.c.b16 %v3326, %v3324
      %v3449 = vpack.c.b16 %v3327, %v3325
      %v3450 = vpack.c.b16 %v3330, %v3328
      %v3451 = vpack.c.b16 %v3331, %v3329
      %v3452 = vpack.c.b16 %v3334, %v3332
      %v3453 = vpack.c.b16 %v3335, %v3333
      %v3454 = vpack.c.b16 %v3338, %v3336
      %v3455 = vpack.c.b16 %v3339, %v3337
      %v3456 = vpack.c.b16 %v3342, %v3340
      %v3457 = vpack.c.b16 %v3343, %v3341
      %v3458 = vpack.c.b16 %v3346, %v3344
      %v3459 = vpack.c.b16 %v3347, %v3345
      %v3460 = vpack.c.b16 %v3350, %v3348
      %v3461 = vpack.c.b16 %v3351, %v3349
      %v3462 = vpack.c.b16 %v3354, %v3352
      %v3463 = vpack.c.b16 %v3355, %v3353
      %v3464 = vpack.c.b16 %v3358, %v3356
      %v3465 = vpack.c.b16 %v3359, %v3357
      %v3466 = vpack.c.b16 %v3362, %v3360
      %v3467 = vpack.c.b16 %v3363, %v3361
      %v3468 = vpack.c.b16 %v3366, %v3364
      %v3469 = vpack.c.b16 %v3367, %v3365
      %v3470 = vpack.c.b16 %v3370, %v3368
      %v3471 = vpack.c.b16 %v3371, %v3369
      %v3472 = vpack.c.b16 %v3374, %v3372
      %v3473 = vpack.c.b16 %v3375, %v3373
      %v3474 = vpack.c.b16 %v3378, %v3376
      %v3475 = vpack.c.b16 %v3379, %v3377
      %v3476 = vpack.c.b16 %v3382, %v3380
      %v3477 = vpack.c.b16 %v3383, %v3381
      %v3478 = vpack.c.b16 %v3386, %v3384
      %v3479 = vpack.c.b16 %v3387, %v3385
      %v3480 = vpack.c.b16 %v3390, %v3388
      %v3481 = vpack.c.b16 %v3391, %v3389
      %v3482 = vpack.c.b16 %v3394, %v3392
      %v3483 = vpack.c.b16 %v3395, %v3393
      %v3484 = vpack.c.b16 %v3398, %v3396
      %v3485 = vpack.c.b16 %v3399, %v3397
      %v3486 = vpack.c.b16 %v3402, %v3400
      %v3487 = vpack.c.b16 %v3403, %v3401
      %v3488 = vpack.c.b16 %v3406, %v3404
      %v3489 = vpack.c.b16 %v3407, %v3405
      %v3490 = vpack.c.b16 %v3410, %v3408
      %v3491 = vpack.c.b16 %v3411, %v3409
      %v3492 = vpack.c.b16 %v3414, %v3412
      %v3493 = vpack.c.b16 %v3415, %v3413
      %v3494 = vpack.c.b16 %v3418, %v3416
      %v3495 = vpack.c.b16 %v3419, %v3417
      %v3496 = vpack.c.b16 %v3422, %v3420
      %v3497 = vpack.c.b16 %v3423, %v3421
      %v3498 = vpack.c.b16 %v3426, %v3424
      %v3499 = vpack.c.b16 %v3427, %v3425
      %v3500 = vpack.c.b16 %v3430, %v3428
      %v3501 = vpack.c.b16 %v3431, %v3429
      %v3502 = vpack.c.b16 %v3434, %v3432
      %v3503 = vpack.c.b16 %v3435, %v3433
      %v3504 = vpack.c.b16 %v3438, %v3436
      %v3505 = vpack.c.b16 %v3439, %v3437
      %v3506 = vpack.c.b16 %v3442, %v3440
      %v3507 = vpack.c.b16 %v3443, %v3441
      %3572 = vmatprep.subr.bf16.mxu0 %v3445
      %3573 = vmatpush1.bf16.msra.mxu0 %v3444
      %3574 = vmatprep.subr.bf16.mxu0 %v3447
      %3575 = vmatpush1.bf16.msra.mxu0 %v3446
      %3576 = vmatprep.subr.bf16.mxu0 %v3449
      %3577 = vmatpush1.bf16.msra.mxu0 %v3448
      %3578 = vmatprep.subr.bf16.mxu0 %v3451
      %3579 = vmatpush1.bf16.msra.mxu0 %v3450
      %3580 = vmatprep.subr.bf16.mxu0 %v3453
      %3581 = vmatpush1.bf16.msra.mxu0 %v3452
      %3582 = vmatprep.subr.bf16.mxu0 %v3455
      %3583 = vmatpush1.bf16.msra.mxu0 %v3454
      %3584 = vmatprep.subr.bf16.mxu0 %v3457
      %3585 = vmatpush1.bf16.msra.mxu0 %v3456
      %3586 = vmatprep.subr.bf16.mxu0 %v3459
      %3587 = vmatpush1.bf16.msra.mxu0 %v3458
      %3588 = vmatprep.subr.bf16.mxu0 %v3461
      %3589 = vmatpush1.bf16.msra.mxu0 %v3460
      %3590 = vmatprep.subr.bf16.mxu0 %v3463
      %3591 = vmatpush1.bf16.msra.mxu0 %v3462
      %3592 = vmatprep.subr.bf16.mxu0 %v3465
      %3593 = vmatpush1.bf16.msra.mxu0 %v3464
      %3594 = vmatprep.subr.bf16.mxu0 %v3467
      %3595 = vmatpush1.bf16.msra.mxu0 %v3466
      %3596 = vmatprep.subr.bf16.mxu0 %v3469
      %3597 = vmatpush1.bf16.msra.mxu0 %v3468
      %3598 = vmatprep.subr.bf16.mxu0 %v3471
      %3599 = vmatpush1.bf16.msra.mxu0 %v3470
      %3600 = vmatprep.subr.bf16.mxu0 %v3473
      %3601 = vmatpush1.bf16.msra.mxu0 %v3472
      %3602 = vmatprep.subr.bf16.mxu0 %v3475
      %3603 = vmatpush1.bf16.msra.mxu0 %v3474
      %3604 = vmatprep.mubr.bf16.mxu0 %v3173
      %3605 = vmatmul.mubr.bf16.gmra.mrb[0].mxu0 %v3172
      %v3606 = vpop.f32.mrb[0].mxu0
      %v3607 = vadd.f32 %v3245, %v3606
      %v3608 = vpop.f32.mrb[0].mxu0
      %v3609 = vadd.f32 %v3249, %v3608
      %v3610 = vpop.f32.mrb[0].mxu0
      %v3611 = vpop.f32.mrb[0].mxu0
      %3612 = vdwg.mxu0
      %3613 = vmatprep.subr.bf16.mxu0 %v3477
      %3614 = vmatpush1.bf16.msra.mxu0 %v3476
      %3615 = vmatprep.subr.bf16.mxu0 %v3479
      %3616 = vmatpush1.bf16.msra.mxu0 %v3478
      %3617 = vmatprep.subr.bf16.mxu0 %v3481
      %3618 = vmatpush1.bf16.msra.mxu0 %v3480
      %3619 = vmatprep.subr.bf16.mxu0 %v3483
      %3620 = vmatpush1.bf16.msra.mxu0 %v3482
      %3621 = vmatprep.subr.bf16.mxu0 %v3485
      %3622 = vmatpush1.bf16.msra.mxu0 %v3484
      %3623 = vmatprep.subr.bf16.mxu0 %v3487
      %3624 = vmatpush1.bf16.msra.mxu0 %v3486
      %3625 = vmatprep.subr.bf16.mxu0 %v3489
      %3626 = vmatpush1.bf16.msra.mxu0 %v3488
      %3627 = vmatprep.subr.bf16.mxu0 %v3491
      %3628 = vmatpush1.bf16.msra.mxu0 %v3490
      %3629 = vmatprep.subr.bf16.mxu0 %v3493
      %3630 = vmatpush1.bf16.msra.mxu0 %v3492
      %3631 = vmatprep.subr.bf16.mxu0 %v3495
      %3632 = vmatpush1.bf16.msra.mxu0 %v3494
      %3633 = vmatprep.subr.bf16.mxu0 %v3497
      %3634 = vmatpush1.bf16.msra.mxu0 %v3496
      %3635 = vmatprep.subr.bf16.mxu0 %v3499
      %3636 = vmatpush1.bf16.msra.mxu0 %v3498
      %3637 = vmatprep.subr.bf16.mxu0 %v3501
      %3638 = vmatpush1.bf16.msra.mxu0 %v3500
      %3639 = vmatprep.subr.bf16.mxu0 %v3503
      %3640 = vmatpush1.bf16.msra.mxu0 %v3502
      %3641 = vmatprep.subr.bf16.mxu0 %v3505
      %3642 = vmatpush1.bf16.msra.mxu0 %v3504
      %3643 = vmatprep.subr.bf16.mxu0 %v3507
      %3644 = vmatpush1.bf16.msra.mxu0 %v3506
      %3645 = vmatprep.mubr.bf16.mxu0 %v3175
      %3646 = vmatmul.mubr.bf16.gmra.mrb[0].mxu0 %v3174
      %v3647 = vpop.f32.mrb[0].mxu0
      %v3648 = vadd.f32 %v3607, %v3647
      %v3649 = vpop.f32.mrb[0].mxu0
      %v3650 = vadd.f32 %v3609, %v3649
      %v3651 = vpop.f32.mrb[0].mxu0
      %v3652 = vpop.f32.mrb[0].mxu0
      %3653 = vdwg.mxu0
      %v3654 = vld [vmem:[#allocation11] sm:$0xff]
      %v3655 = vmul.f32 %v3650, 0.5
      %v3656 = vmul.f32 %v3655, 1.442695
      %v3657 = vpow.pop %v3656
      %v3658 = vmul.f32 %v3654, %v3657
      %v3659 = vadd.f32 %v3658, %v3648
      %3660 = vst [vmem:[#allocation12] sm:$0xff] %v3659
    $region69: #{_encoder_forward_impl.1} parent=1 // pred_fallthru
      _
    // Predicated region
    $region70: #{_encoder_forward_impl.1} parent=1 // pred_check
      _
    $region71: #{_encoder_forward_impl.1} parent=1 // pred_check_branch
      %3662 = sbr.rel (0) target = $region73
    $region72: #{_encoder_forward_impl.1} parent=1 // pred_region
      %s3664 = ssub.s32 128, 128
      %3665 = vsyncadd [#allocation5], %s3664
      %s3667 = sshll.u32 [#allocation12], 4
      %s3668 = int_to_ptr.vmem [resolvable:$true] %s3667
      %3670 = dma.vmem_to_hbm [thread:$0]  %s3668, 128, %s10, [#allocation5]
    $region73: #{_encoder_forward_impl.1} parent=1 // pred_fallthru
      _
    // Predicated region
    $region74: #{_encoder_forward_impl.1} parent=1 // pred_check
      _
    $region75: #{_encoder_forward_impl.1} parent=1 // pred_check_branch
      %3672 = sbr.rel (0) target = $region77
    $region76: #{_encoder_forward_impl.1} parent=1 // pred_region
      %3673 = dma.done [#allocation5], 128
    $region77: #{_encoder_forward_impl.1} parent=1 // pred_fallthru
      _
    %3674 = vsyncpa [#allocation4], 1
    %3675 = vsyncpa [#allocation7], 1
    %3676 = vsyncpa [#allocation10], 1
    %3677 = vsyncpa [#allocation5], 1

</llo_original>
